<compile_context>
chip_gen: v7x
topology: tpu7x:2x2x1
jax: 0.10.0
libtpu: 0.0.40
codegen_flags: <defaults>
</compile_context>

<pallas_src>
import jax
import jax.numpy as jnp
from jax import lax
from jax.experimental import pallas as pl
from jax.experimental.pallas import tpu as pltpu

IN_EPS = 1e-5  # InstanceNorm2d default eps


def _conv3x3_im2col(pad, w_ref, b_ref, H, W):
    """3x3 'same' conv as a single im2col matmul.

    pad:   (H+2, W+2, Cin) zero-padded activation (value).
    w_ref: (9*Cin, Cout) ref — rows ordered (ky, kx, cin), matching the tap
           concatenation below (wrapper does the reshape).
    b_ref: (1, Cout) ref.
    Returns (H, W, Cout) f32.
    """
    taps = [pad[ky:ky + H, kx:kx + W, :] for ky in range(3) for kx in range(3)]
    patches = jnp.concatenate(taps, axis=-1)                 # (H, W, 9*Cin)
    y = jnp.einsum("hwk,ko->hwo", patches, w_ref[...],
                   preferred_element_type=jnp.float32)       # one MXU matmul, K=9*Cin
    return y + b_ref[...]                                    # (1,Cout) broadcasts


def _instance_norm(y, inv_hw):
    """Single-pass InstanceNorm over spatial dims. y: (H, W, C) f32."""
    s = jnp.sum(y, axis=(0, 1), keepdims=True)               # (1, 1, C)
    ss = jnp.sum(y * y, axis=(0, 1), keepdims=True)
    mean = s * inv_hw
    var = ss * inv_hw - mean * mean                          # biased variance
    return (y - mean) * lax.rsqrt(var + IN_EPS)


def _ib_kernel(x_ref,
               w15_ref, b15_ref, w2_ref, b2_ref, w3_ref, b3_ref, w4_ref, b4_ref,
               o_ref,
               pad_ref):
    nb = x_ref.shape[0]
    H = o_ref.shape[1]
    W = o_ref.shape[2]
    cout = o_ref.shape[3]
    inv_hw = 1.0 / float(H * W)

    # Zero the padded scratch ONCE per grid step. Invariant: only the interior
    # [1:H+1, 1:W+1, :] is ever written below, so the zero border is preserved
    # for every conv and every image in the block.
    pad_ref[...] = jnp.zeros_like(pad_ref)

    for b in range(nb):                                       # static, small
        xp = x_ref[b]                                         # (H+2, W+2, Cin), pre-padded

        # ---- fused c1 || c5 over the same padded input (N = 2*Cout) ----
        y15 = _conv3x3_im2col(xp, w15_ref, b15_ref, H, W)     # (H, W, 2*Cout)
        y = _instance_norm(y15[:, :, :cout], inv_hw)          # path1 after c1 + IN
        y5 = y15[:, :, cout:]                                 # path2 = c5(x)

        # ---- c2 -> IN -> c3 -> IN -> c4 ----
        for w_ref, b_ref, norm in ((w2_ref, b2_ref, True),
                                   (w3_ref, b3_ref, True),
                                   (w4_ref, b4_ref, False)):
            pad_ref[1:H + 1, 1:W + 1, :] = y                  # interior only
            y = _conv3x3_im2col(pad_ref[...], w_ref, b_ref, H, W)
            if norm:
                y = _instance_norm(y, inv_hw)

        o_ref[b] = (y + y5).astype(o_ref.dtype)


def _pick_batch_per_block(N, H, W, Cin, Cout, vmem_budget_bytes=8 << 20):
    """Largest nb that divides N, keeps >=2 grid steps when N>=2 (v7x: 2 TCs),
    and keeps double-buffered input+output blocks inside a modest VMEM budget."""
    per_image = 4 * 2 * ((H + 2) * (W + 2) * Cin + H * W * Cout)
    best = 1
    for nb in range(1, N + 1):
        if N % nb:
            continue
        if N >= 2 and N // nb < 2:
            continue
        if nb * per_image > vmem_budget_bytes:
            continue
        best = nb
    return best


def ib_forward_pallas(x_nchw, params, batch_per_block=None):
    """x_nchw: (N, Cin, H, W). params: spectral-normalized weights/biases."""
    N, Cin, H, W = x_nchw.shape
    Cout = params["w1"].shape[-1]

    # NCHW -> NHWC, zero-pad spatially (padding=1, padding_mode='zeros').
    x_nhwc = jnp.transpose(x_nchw, (0, 2, 3, 1)).astype(jnp.float32)
    x_pad = jnp.pad(x_nhwc, ((0, 0), (1, 1), (1, 1), (0, 0)))

    # ---- weight prep (wrapper-side, plain XLA): im2col layout + c1||c5 fusion ----
    # (3,3,Cin,Cout) -> (9*Cin, Cout); row order (ky, kx, cin) matches the kernel.
    w15 = jnp.concatenate([params["w1"], params["w5"]], axis=-1).reshape(9 * Cin, 2 * Cout)
    b15 = jnp.concatenate([params["b1"], params["b5"]], axis=-1)          # (1, 2*Cout)
    w2 = params["w2"].reshape(9 * Cout, Cout)
    w3 = params["w3"].reshape(9 * Cout, Cout)
    w4 = params["w4"].reshape(9 * Cout, Cout)
    b2, b3, b4 = params["b2"], params["b3"], params["b4"]

    nb = batch_per_block if batch_per_block is not None else _pick_batch_per_block(
        N, H, W, Cin, Cout)
    assert N % nb == 0
    grid = (N // nb,)

    def full_spec(shape):
        nd = len(shape)
        return pl.BlockSpec(shape, lambda n, _nd=nd: (0,) * _nd)

    in_specs = [pl.BlockSpec((nb, H + 2, W + 2, Cin), lambda n: (n, 0, 0, 0))]
    args = [x_pad]
    for w, b in ((w15, b15), (w2, b2), (w3, b3), (w4, b4)):
        in_specs += [full_spec(w.shape), full_spec(b.shape)]
        args += [w, b]

    out = pl.pallas_call(
        _ib_kernel,
        out_shape=jax.ShapeDtypeStruct((N, H, W, Cout), jnp.float32),
        grid_spec=pltpu.PrefetchScalarGridSpec(
            num_scalar_prefetch=0,
            grid=grid,
            in_specs=in_specs,
            out_specs=pl.BlockSpec((nb, H, W, Cout), lambda n: (n, 0, 0, 0)),
            scratch_shapes=[pltpu.VMEM((H + 2, W + 2, Cout), jnp.float32)],
        ),
        compiler_params=pltpu.CompilerParams(dimension_semantics=("parallel",)),
    )(*args)

    # NHWC -> NCHW for the caller.
    return jnp.transpose(out, (0, 3, 1, 2))


# ---------------- parameter setup (glue, plain JAX) ----------------

def _spectral_normalize(w_oihw, key, n_iters=30, eps=1e-4):
    """Deterministic power-iteration replica of torch spectral_norm (eps=1e-4)."""
    O = w_oihw.shape[0]
    w_mat = w_oihw.reshape(O, -1)
    u = jax.random.normal(key, (O,), jnp.float32)
    u = u / jnp.maximum(jnp.linalg.norm(u), eps)
    for _ in range(n_iters):
        v = w_mat.T @ u
        v = v / jnp.maximum(jnp.linalg.norm(v), eps)
        u = w_mat @ v
        u = u / jnp.maximum(jnp.linalg.norm(u), eps)
    sigma = u @ (w_mat @ v)
    return w_oihw / sigma


def make_params(key, in_c, out_c):
    """Deterministic synthetic params; torch OIHW conv weights, spectral-normalized,
    then transposed to (kh, kw, Cin, Cout) for the kernel wrapper."""
    params = {}
    cins = {1: in_c, 2: out_c, 3: out_c, 4: out_c, 5: in_c}
    for i in range(1, 6):
        key, kw_, kb_, ku_ = jax.random.split(key, 4)
        cin = cins[i]
        fan_in = cin * 9
        bound = 1.0 / jnp.sqrt(fan_in)
        w = jax.random.uniform(kw_, (out_c, cin, 3, 3), jnp.float32, -bound, bound)
        b = jax.random.uniform(kb_, (out_c,), jnp.float32, -bound, bound)
        w_sn = _spectral_normalize(w, ku_)
        params[f"w{i}"] = jnp.transpose(w_sn, (2, 3, 1, 0))   # (3,3,Cin,Cout)
        params[f"b{i}"] = b.reshape(1, out_c)
        params[f"w{i}_oihw"] = w_sn                            # for the reference check
    return params


# ---------------- pure-JAX reference (correctness check) ----------------

def _conv_ref(x_nchw, w_oihw, b):
    y = lax.conv_general_dilated(
        x_nchw, w_oihw, window_strides=(1, 1), padding="SAME",
        dimension_numbers=("NCHW", "OIHW", "NCHW"))
    return y + b.reshape(1, -1, 1, 1)


def _instnorm_ref(y):
    mean = jnp.mean(y, axis=(2, 3), keepdims=True)
    var = jnp.mean((y - mean) ** 2, axis=(2, 3), keepdims=True)
    return (y - mean) / jnp.sqrt(var + IN_EPS)


def ib_forward_ref(x, p):
    y = _conv_ref(x, p["w1_oihw"], p["b1"].ravel())
    y = _instnorm_ref(y)
    y = _conv_ref(y, p["w2_oihw"], p["b2"].ravel())
    y = _instnorm_ref(y)
    y = _conv_ref(y, p["w3_oihw"], p["b3"].ravel())
    y = _instnorm_ref(y)
    y = _conv_ref(y, p["w4_oihw"], p["b4"].ravel())
    y5 = _conv_ref(x, p["w5_oihw"], p["b5"].ravel())
    return y + y5


if __name__ == "__main__":
    N, IN_C, OUT_C, H, W = 2, 4, 8, 16, 16

    key = jax.random.PRNGKey(0)
    kx, kp = jax.random.split(key)
    x = jax.random.normal(kx, (N, IN_C, H, W), jnp.float32)
    params = make_params(kp, IN_C, OUT_C)

    out = jax.block_until_ready(ib_forward_pallas(x, params))
    ref = jax.block_until_ready(ib_forward_ref(x, params))

    assert out.shape == (N, OUT_C, H, W)
    err = float(jnp.max(jnp.abs(out - ref)))
    assert jnp.allclose(out, ref, atol=2e-4, rtol=2e-4), err

    print("KERNEL_OK")
</pallas_src>

<mosaic_0001>
module attributes {stable_mosaic.version = 11 : i64} {
  func.func @_ib_kernel(%arg0: i32, %arg1: memref<1x18x18x4xf32, #tpu.memory_space<vmem>>, %arg2: memref<36x16xf32, #tpu.memory_space<vmem>>, %arg3: memref<1x16xf32, #tpu.memory_space<vmem>>, %arg4: memref<72x8xf32, #tpu.memory_space<vmem>>, %arg5: memref<1x8xf32, #tpu.memory_space<vmem>>, %arg6: memref<72x8xf32, #tpu.memory_space<vmem>>, %arg7: memref<1x8xf32, #tpu.memory_space<vmem>>, %arg8: memref<72x8xf32, #tpu.memory_space<vmem>>, %arg9: memref<1x8xf32, #tpu.memory_space<vmem>>, %arg10: memref<1x16x16x8xf32, #tpu.memory_space<vmem>>, %arg11: memref<18x18x8xf32, #tpu.memory_space<vmem>>) attributes {dimension_semantics = [#tpu.dimension_semantics<parallel>], iteration_bounds = array<i64: 2>, scalar_prefetch = 0 : i64, scratch_operands = 1 : i64, tpu.core_type = #tpu.core_type<tc>, window_params = [{transform_indices = @transform_0, window_bounds = array<i64: 1, 18, 18, 4>}, {pipeline_mode = #tpu.pipeline_mode<synchronous>, transform_indices = @transform_1, window_bounds = array<i64: 36, 16>}, {pipeline_mode = #tpu.pipeline_mode<synchronous>, transform_indices = @transform_2, window_bounds = array<i64: 1, 16>}, {pipeline_mode = #tpu.pipeline_mode<synchronous>, transform_indices = @transform_3, window_bounds = array<i64: 72, 8>}, {pipeline_mode = #tpu.pipeline_mode<synchronous>, transform_indices = @transform_4, window_bounds = array<i64: 1, 8>}, {pipeline_mode = #tpu.pipeline_mode<synchronous>, transform_indices = @transform_5, window_bounds = array<i64: 72, 8>}, {pipeline_mode = #tpu.pipeline_mode<synchronous>, transform_indices = @transform_6, window_bounds = array<i64: 1, 8>}, {pipeline_mode = #tpu.pipeline_mode<synchronous>, transform_indices = @transform_7, window_bounds = array<i64: 72, 8>}, {pipeline_mode = #tpu.pipeline_mode<synchronous>, transform_indices = @transform_8, window_bounds = array<i64: 1, 8>}, {transform_indices = @transform_9, window_bounds = array<i64: 1, 16, 16, 8>}]} {
    %cst = arith.constant 0.000000e+00 : f32
    %0 = vector.broadcast %cst : f32 to vector<18x18x8xf32>
    %c0 = arith.constant 0 : index
    %c0_0 = arith.constant 0 : index
    %c0_1 = arith.constant 0 : index
    %1 = vector.load %arg11[%c0, %c0_0, %c0_1] : memref<18x18x8xf32, #tpu.memory_space<vmem>>, vector<18x18x8xf32>
    tpu.vector_store %arg11[%c0, %c0_0, %c0_1], %0 {strides = array<i32>} : memref<18x18x8xf32, #tpu.memory_space<vmem>>, vector<18x18x8xf32>,
    %c0_2 = arith.constant 0 : index
    %c0_3 = arith.constant 0 : index
    %c0_4 = arith.constant 0 : index
    %c0_5 = arith.constant 0 : index
    %2 = vector.load %arg1[%c0_2, %c0_3, %c0_4, %c0_5] : memref<1x18x18x4xf32, #tpu.memory_space<vmem>>, vector<1x18x18x4xf32>
    %3 = vector.shape_cast %2 : vector<1x18x18x4xf32> to vector<18x18x4xf32>
    %4 = vector.extract_strided_slice %3 {offsets = [0, 0, 0], sizes = [16, 16, 4], strides = [1, 1, 1]} : vector<18x18x4xf32> to vector<16x16x4xf32>
    %5 = vector.extract_strided_slice %3 {offsets = [0, 1, 0], sizes = [16, 16, 4], strides = [1, 1, 1]} : vector<18x18x4xf32> to vector<16x16x4xf32>
    %6 = vector.extract_strided_slice %3 {offsets = [0, 2, 0], sizes = [16, 16, 4], strides = [1, 1, 1]} : vector<18x18x4xf32> to vector<16x16x4xf32>
    %7 = vector.extract_strided_slice %3 {offsets = [1, 0, 0], sizes = [16, 16, 4], strides = [1, 1, 1]} : vector<18x18x4xf32> to vector<16x16x4xf32>
    %8 = vector.extract_strided_slice %3 {offsets = [1, 1, 0], sizes = [16, 16, 4], strides = [1, 1, 1]} : vector<18x18x4xf32> to vector<16x16x4xf32>
    %9 = vector.extract_strided_slice %3 {offsets = [1, 2, 0], sizes = [16, 16, 4], strides = [1, 1, 1]} : vector<18x18x4xf32> to vector<16x16x4xf32>
    %10 = vector.extract_strided_slice %3 {offsets = [2, 0, 0], sizes = [16, 16, 4], strides = [1, 1, 1]} : vector<18x18x4xf32> to vector<16x16x4xf32>
    %11 = vector.extract_strided_slice %3 {offsets = [2, 1, 0], sizes = [16, 16, 4], strides = [1, 1, 1]} : vector<18x18x4xf32> to vector<16x16x4xf32>
    %12 = vector.extract_strided_slice %3 {offsets = [2, 2, 0], sizes = [16, 16, 4], strides = [1, 1, 1]} : vector<18x18x4xf32> to vector<16x16x4xf32>
    %13 = tpu.concatenate %4, %5, %6, %7, %8, %9, %10, %11, %12 in 2 : vector<16x16x4xf32>, vector<16x16x4xf32>, vector<16x16x4xf32>, vector<16x16x4xf32>, vector<16x16x4xf32>, vector<16x16x4xf32>, vector<16x16x4xf32>, vector<16x16x4xf32>, vector<16x16x4xf32> -> vector<16x16x36xf32>
    %c0_6 = arith.constant 0 : index
    %c0_7 = arith.constant 0 : index
    %14 = vector.load %arg2[%c0_6, %c0_7] : memref<36x16xf32, #tpu.memory_space<vmem>>, vector<36x16xf32>
    "tpu.trace_start"() <{level = 10 : i32, message = "hwk,ko->hwo"}> : () -> ()
    %cst_8 = arith.constant dense<0.000000e+00> : vector<16x16x16xf32>
    %15 = tpu.matmul %13, %14, %cst_8 {dimension_numbers = #tpu.dot_dimension_numbers<[2], [0], [0, 1], [1], [0, 0, 0, 1, 1, 1], [], []>} : vector<16x16x36xf32>, vector<36x16xf32>, vector<16x16x16xf32> -> vector<16x16x16xf32>
    "tpu.trace_stop"() : () -> ()
    %c0_9 = arith.constant 0 : index
    %c0_10 = arith.constant 0 : index
    %16 = vector.load %arg3[%c0_9, %c0_10] : memref<1x16xf32, #tpu.memory_space<vmem>>, vector<1x16xf32>
    %17 = vector.shape_cast %16 : vector<1x16xf32> to vector<1x1x16xf32>
    %18 = vector.broadcast %17 : vector<1x1x16xf32> to vector<16x16x16xf32>
    %19 = arith.addf %15, %18 : vector<16x16x16xf32>
    %20 = vector.extract_strided_slice %19 {offsets = [0, 0, 0], sizes = [16, 16, 8], strides = [1, 1, 1]} : vector<16x16x16xf32> to vector<16x16x8xf32>
    %cst_11 = arith.constant dense<0.000000e+00> : vector<8xf32>
    %21 = vector.multi_reduction <add>, %20, %cst_11 [0, 1] : vector<16x16x8xf32> to vector<8xf32>
    %22 = vector.shape_cast %21 : vector<8xf32> to vector<1x1x8xf32>
    %23 = arith.mulf %20, %20 : vector<16x16x8xf32>
    %cst_12 = arith.constant dense<0.000000e+00> : vector<8xf32>
    %24 = vector.multi_reduction <add>, %23, %cst_12 [0, 1] : vector<16x16x8xf32> to vector<8xf32>
    %25 = vector.shape_cast %24 : vector<8xf32> to vector<1x1x8xf32>
    %cst_13 = arith.constant 3.906250e-03 : f32
    %26 = vector.broadcast %cst_13 : f32 to vector<1x1x8xf32>
    %27 = arith.mulf %22, %26 : vector<1x1x8xf32>
    %cst_14 = arith.constant 3.906250e-03 : f32
    %28 = vector.broadcast %cst_14 : f32 to vector<1x1x8xf32>
    %29 = arith.mulf %25, %28 : vector<1x1x8xf32>
    %30 = arith.mulf %27, %27 : vector<1x1x8xf32>
    %31 = arith.subf %29, %30 : vector<1x1x8xf32>
    %32 = vector.broadcast %27 : vector<1x1x8xf32> to vector<16x16x8xf32>
    %33 = arith.subf %20, %32 : vector<16x16x8xf32>
    %cst_15 = arith.constant 9.99999974E-6 : f32
    %34 = vector.broadcast %cst_15 : f32 to vector<1x1x8xf32>
    %35 = arith.addf %31, %34 : vector<1x1x8xf32>
    %36 = math.rsqrt %35 : vector<1x1x8xf32>
    %37 = vector.broadcast %36 : vector<1x1x8xf32> to vector<16x16x8xf32>
    %38 = arith.mulf %33, %37 : vector<16x16x8xf32>
    %39 = vector.extract_strided_slice %19 {offsets = [0, 0, 8], sizes = [16, 16, 8], strides = [1, 1, 1]} : vector<16x16x16xf32> to vector<16x16x8xf32>
    %c1 = arith.constant 1 : index
    %c1_16 = arith.constant 1 : index
    %c0_17 = arith.constant 0 : index
    %40 = vector.load %arg11[%c1, %c1_16, %c0_17] : memref<18x18x8xf32, #tpu.memory_space<vmem>>, vector<16x16x8xf32>
    tpu.vector_store %arg11[%c1, %c1_16, %c0_17], %38 {strides = array<i32>} : memref<18x18x8xf32, #tpu.memory_space<vmem>>, vector<16x16x8xf32>,
    %c0_18 = arith.constant 0 : index
    %c0_19 = arith.constant 0 : index
    %c0_20 = arith.constant 0 : index
    %41 = vector.load %arg11[%c0_18, %c0_19, %c0_20] : memref<18x18x8xf32, #tpu.memory_space<vmem>>, vector<18x18x8xf32>
    %42 = vector.extract_strided_slice %41 {offsets = [0, 0, 0], sizes = [16, 16, 8], strides = [1, 1, 1]} : vector<18x18x8xf32> to vector<16x16x8xf32>
    %43 = vector.extract_strided_slice %41 {offsets = [0, 1, 0], sizes = [16, 16, 8], strides = [1, 1, 1]} : vector<18x18x8xf32> to vector<16x16x8xf32>
    %44 = vector.extract_strided_slice %41 {offsets = [0, 2, 0], sizes = [16, 16, 8], strides = [1, 1, 1]} : vector<18x18x8xf32> to vector<16x16x8xf32>
    %45 = vector.extract_strided_slice %41 {offsets = [1, 0, 0], sizes = [16, 16, 8], strides = [1, 1, 1]} : vector<18x18x8xf32> to vector<16x16x8xf32>
    %46 = vector.extract_strided_slice %41 {offsets = [1, 1, 0], sizes = [16, 16, 8], strides = [1, 1, 1]} : vector<18x18x8xf32> to vector<16x16x8xf32>
    %47 = vector.extract_strided_slice %41 {offsets = [1, 2, 0], sizes = [16, 16, 8], strides = [1, 1, 1]} : vector<18x18x8xf32> to vector<16x16x8xf32>
    %48 = vector.extract_strided_slice %41 {offsets = [2, 0, 0], sizes = [16, 16, 8], strides = [1, 1, 1]} : vector<18x18x8xf32> to vector<16x16x8xf32>
    %49 = vector.extract_strided_slice %41 {offsets = [2, 1, 0], sizes = [16, 16, 8], strides = [1, 1, 1]} : vector<18x18x8xf32> to vector<16x16x8xf32>
    %50 = vector.extract_strided_slice %41 {offsets = [2, 2, 0], sizes = [16, 16, 8], strides = [1, 1, 1]} : vector<18x18x8xf32> to vector<16x16x8xf32>
    %51 = tpu.concatenate %42, %43, %44, %45, %46, %47, %48, %49, %50 in 2 : vector<16x16x8xf32>, vector<16x16x8xf32>, vector<16x16x8xf32>, vector<16x16x8xf32>, vector<16x16x8xf32>, vector<16x16x8xf32>, vector<16x16x8xf32>, vector<16x16x8xf32>, vector<16x16x8xf32> -> vector<16x16x72xf32>
    %c0_21 = arith.constant 0 : index
    %c0_22 = arith.constant 0 : index
    %52 = vector.load %arg4[%c0_21, %c0_22] : memref<72x8xf32, #tpu.memory_space<vmem>>, vector<72x8xf32>
    "tpu.trace_start"() <{level = 10 : i32, message = "hwk,ko->hwo"}> : () -> ()
    %cst_23 = arith.constant dense<0.000000e+00> : vector<16x16x8xf32>
    %53 = tpu.matmul %51, %52, %cst_23 {dimension_numbers = #tpu.dot_dimension_numbers<[2], [0], [0, 1], [1], [0, 0, 0, 1, 1, 1], [], []>} : vector<16x16x72xf32>, vector<72x8xf32>, vector<16x16x8xf32> -> vector<16x16x8xf32>
    "tpu.trace_stop"() : () -> ()
    %c0_24 = arith.constant 0 : index
    %c0_25 = arith.constant 0 : index
    %54 = vector.load %arg5[%c0_24, %c0_25] : memref<1x8xf32, #tpu.memory_space<vmem>>, vector<1x8xf32>
    %55 = vector.shape_cast %54 : vector<1x8xf32> to vector<1x1x8xf32>
    %56 = vector.broadcast %55 : vector<1x1x8xf32> to vector<16x16x8xf32>
    %57 = arith.addf %53, %56 : vector<16x16x8xf32>
    %cst_26 = arith.constant dense<0.000000e+00> : vector<8xf32>
    %58 = vector.multi_reduction <add>, %57, %cst_26 [0, 1] : vector<16x16x8xf32> to vector<8xf32>
    %59 = vector.shape_cast %58 : vector<8xf32> to vector<1x1x8xf32>
    %60 = arith.mulf %57, %57 : vector<16x16x8xf32>
    %cst_27 = arith.constant dense<0.000000e+00> : vector<8xf32>
    %61 = vector.multi_reduction <add>, %60, %cst_27 [0, 1] : vector<16x16x8xf32> to vector<8xf32>
    %62 = vector.shape_cast %61 : vector<8xf32> to vector<1x1x8xf32>
    %cst_28 = arith.constant 3.906250e-03 : f32
    %63 = vector.broadcast %cst_28 : f32 to vector<1x1x8xf32>
    %64 = arith.mulf %59, %63 : vector<1x1x8xf32>
    %cst_29 = arith.constant 3.906250e-03 : f32
    %65 = vector.broadcast %cst_29 : f32 to vector<1x1x8xf32>
    %66 = arith.mulf %62, %65 : vector<1x1x8xf32>
    %67 = arith.mulf %64, %64 : vector<1x1x8xf32>
    %68 = arith.subf %66, %67 : vector<1x1x8xf32>
    %69 = vector.broadcast %64 : vector<1x1x8xf32> to vector<16x16x8xf32>
    %70 = arith.subf %57, %69 : vector<16x16x8xf32>
    %cst_30 = arith.constant 9.99999974E-6 : f32
    %71 = vector.broadcast %cst_30 : f32 to vector<1x1x8xf32>
    %72 = arith.addf %68, %71 : vector<1x1x8xf32>
    %73 = math.rsqrt %72 : vector<1x1x8xf32>
    %74 = vector.broadcast %73 : vector<1x1x8xf32> to vector<16x16x8xf32>
    %75 = arith.mulf %70, %74 : vector<16x16x8xf32>
    %c1_31 = arith.constant 1 : index
    %c1_32 = arith.constant 1 : index
    %c0_33 = arith.constant 0 : index
    %76 = vector.load %arg11[%c1_31, %c1_32, %c0_33] : memref<18x18x8xf32, #tpu.memory_space<vmem>>, vector<16x16x8xf32>
    tpu.vector_store %arg11[%c1_31, %c1_32, %c0_33], %75 {strides = array<i32>} : memref<18x18x8xf32, #tpu.memory_space<vmem>>, vector<16x16x8xf32>,
    %c0_34 = arith.constant 0 : index
    %c0_35 = arith.constant 0 : index
    %c0_36 = arith.constant 0 : index
    %77 = vector.load %arg11[%c0_34, %c0_35, %c0_36] : memref<18x18x8xf32, #tpu.memory_space<vmem>>, vector<18x18x8xf32>
    %78 = vector.extract_strided_slice %77 {offsets = [0, 0, 0], sizes = [16, 16, 8], strides = [1, 1, 1]} : vector<18x18x8xf32> to vector<16x16x8xf32>
    %79 = vector.extract_strided_slice %77 {offsets = [0, 1, 0], sizes = [16, 16, 8], strides = [1, 1, 1]} : vector<18x18x8xf32> to vector<16x16x8xf32>
    %80 = vector.extract_strided_slice %77 {offsets = [0, 2, 0], sizes = [16, 16, 8], strides = [1, 1, 1]} : vector<18x18x8xf32> to vector<16x16x8xf32>
    %81 = vector.extract_strided_slice %77 {offsets = [1, 0, 0], sizes = [16, 16, 8], strides = [1, 1, 1]} : vector<18x18x8xf32> to vector<16x16x8xf32>
    %82 = vector.extract_strided_slice %77 {offsets = [1, 1, 0], sizes = [16, 16, 8], strides = [1, 1, 1]} : vector<18x18x8xf32> to vector<16x16x8xf32>
    %83 = vector.extract_strided_slice %77 {offsets = [1, 2, 0], sizes = [16, 16, 8], strides = [1, 1, 1]} : vector<18x18x8xf32> to vector<16x16x8xf32>
    %84 = vector.extract_strided_slice %77 {offsets = [2, 0, 0], sizes = [16, 16, 8], strides = [1, 1, 1]} : vector<18x18x8xf32> to vector<16x16x8xf32>
    %85 = vector.extract_strided_slice %77 {offsets = [2, 1, 0], sizes = [16, 16, 8], strides = [1, 1, 1]} : vector<18x18x8xf32> to vector<16x16x8xf32>
    %86 = vector.extract_strided_slice %77 {offsets = [2, 2, 0], sizes = [16, 16, 8], strides = [1, 1, 1]} : vector<18x18x8xf32> to vector<16x16x8xf32>
    %87 = tpu.concatenate %78, %79, %80, %81, %82, %83, %84, %85, %86 in 2 : vector<16x16x8xf32>, vector<16x16x8xf32>, vector<16x16x8xf32>, vector<16x16x8xf32>, vector<16x16x8xf32>, vector<16x16x8xf32>, vector<16x16x8xf32>, vector<16x16x8xf32>, vector<16x16x8xf32> -> vector<16x16x72xf32>
    %c0_37 = arith.constant 0 : index
    %c0_38 = arith.constant 0 : index
    %88 = vector.load %arg6[%c0_37, %c0_38] : memref<72x8xf32, #tpu.memory_space<vmem>>, vector<72x8xf32>
    "tpu.trace_start"() <{level = 10 : i32, message = "hwk,ko->hwo"}> : () -> ()
    %cst_39 = arith.constant dense<0.000000e+00> : vector<16x16x8xf32>
    %89 = tpu.matmul %87, %88, %cst_39 {dimension_numbers = #tpu.dot_dimension_numbers<[2], [0], [0, 1], [1], [0, 0, 0, 1, 1, 1], [], []>} : vector<16x16x72xf32>, vector<72x8xf32>, vector<16x16x8xf32> -> vector<16x16x8xf32>
    "tpu.trace_stop"() : () -> ()
    %c0_40 = arith.constant 0 : index
    %c0_41 = arith.constant 0 : index
    %90 = vector.load %arg7[%c0_40, %c0_41] : memref<1x8xf32, #tpu.memory_space<vmem>>, vector<1x8xf32>
    %91 = vector.shape_cast %90 : vector<1x8xf32> to vector<1x1x8xf32>
    %92 = vector.broadcast %91 : vector<1x1x8xf32> to vector<16x16x8xf32>
    %93 = arith.addf %89, %92 : vector<16x16x8xf32>
    %cst_42 = arith.constant dense<0.000000e+00> : vector<8xf32>
    %94 = vector.multi_reduction <add>, %93, %cst_42 [0, 1] : vector<16x16x8xf32> to vector<8xf32>
    %95 = vector.shape_cast %94 : vector<8xf32> to vector<1x1x8xf32>
    %96 = arith.mulf %93, %93 : vector<16x16x8xf32>
    %cst_43 = arith.constant dense<0.000000e+00> : vector<8xf32>
    %97 = vector.multi_reduction <add>, %96, %cst_43 [0, 1] : vector<16x16x8xf32> to vector<8xf32>
    %98 = vector.shape_cast %97 : vector<8xf32> to vector<1x1x8xf32>
    %cst_44 = arith.constant 3.906250e-03 : f32
    %99 = vector.broadcast %cst_44 : f32 to vector<1x1x8xf32>
    %100 = arith.mulf %95, %99 : vector<1x1x8xf32>
    %cst_45 = arith.constant 3.906250e-03 : f32
    %101 = vector.broadcast %cst_45 : f32 to vector<1x1x8xf32>
    %102 = arith.mulf %98, %101 : vector<1x1x8xf32>
    %103 = arith.mulf %100, %100 : vector<1x1x8xf32>
    %104 = arith.subf %102, %103 : vector<1x1x8xf32>
    %105 = vector.broadcast %100 : vector<1x1x8xf32> to vector<16x16x8xf32>
    %106 = arith.subf %93, %105 : vector<16x16x8xf32>
    %cst_46 = arith.constant 9.99999974E-6 : f32
    %107 = vector.broadcast %cst_46 : f32 to vector<1x1x8xf32>
    %108 = arith.addf %104, %107 : vector<1x1x8xf32>
    %109 = math.rsqrt %108 : vector<1x1x8xf32>
    %110 = vector.broadcast %109 : vector<1x1x8xf32> to vector<16x16x8xf32>
    %111 = arith.mulf %106, %110 : vector<16x16x8xf32>
    %c1_47 = arith.constant 1 : index
    %c1_48 = arith.constant 1 : index
    %c0_49 = arith.constant 0 : index
    %112 = vector.load %arg11[%c1_47, %c1_48, %c0_49] : memref<18x18x8xf32, #tpu.memory_space<vmem>>, vector<16x16x8xf32>
    tpu.vector_store %arg11[%c1_47, %c1_48, %c0_49], %111 {strides = array<i32>} : memref<18x18x8xf32, #tpu.memory_space<vmem>>, vector<16x16x8xf32>,
    %c0_50 = arith.constant 0 : index
    %c0_51 = arith.constant 0 : index
    %c0_52 = arith.constant 0 : index
    %113 = vector.load %arg11[%c0_50, %c0_51, %c0_52] : memref<18x18x8xf32, #tpu.memory_space<vmem>>, vector<18x18x8xf32>
    %114 = vector.extract_strided_slice %113 {offsets = [0, 0, 0], sizes = [16, 16, 8], strides = [1, 1, 1]} : vector<18x18x8xf32> to vector<16x16x8xf32>
    %115 = vector.extract_strided_slice %113 {offsets = [0, 1, 0], sizes = [16, 16, 8], strides = [1, 1, 1]} : vector<18x18x8xf32> to vector<16x16x8xf32>
    %116 = vector.extract_strided_slice %113 {offsets = [0, 2, 0], sizes = [16, 16, 8], strides = [1, 1, 1]} : vector<18x18x8xf32> to vector<16x16x8xf32>
    %117 = vector.extract_strided_slice %113 {offsets = [1, 0, 0], sizes = [16, 16, 8], strides = [1, 1, 1]} : vector<18x18x8xf32> to vector<16x16x8xf32>
    %118 = vector.extract_strided_slice %113 {offsets = [1, 1, 0], sizes = [16, 16, 8], strides = [1, 1, 1]} : vector<18x18x8xf32> to vector<16x16x8xf32>
    %119 = vector.extract_strided_slice %113 {offsets = [1, 2, 0], sizes = [16, 16, 8], strides = [1, 1, 1]} : vector<18x18x8xf32> to vector<16x16x8xf32>
    %120 = vector.extract_strided_slice %113 {offsets = [2, 0, 0], sizes = [16, 16, 8], strides = [1, 1, 1]} : vector<18x18x8xf32> to vector<16x16x8xf32>
    %121 = vector.extract_strided_slice %113 {offsets = [2, 1, 0], sizes = [16, 16, 8], strides = [1, 1, 1]} : vector<18x18x8xf32> to vector<16x16x8xf32>
    %122 = vector.extract_strided_slice %113 {offsets = [2, 2, 0], sizes = [16, 16, 8], strides = [1, 1, 1]} : vector<18x18x8xf32> to vector<16x16x8xf32>
    %123 = tpu.concatenate %114, %115, %116, %117, %118, %119, %120, %121, %122 in 2 : vector<16x16x8xf32>, vector<16x16x8xf32>, vector<16x16x8xf32>, vector<16x16x8xf32>, vector<16x16x8xf32>, vector<16x16x8xf32>, vector<16x16x8xf32>, vector<16x16x8xf32>, vector<16x16x8xf32> -> vector<16x16x72xf32>
    %c0_53 = arith.constant 0 : index
    %c0_54 = arith.constant 0 : index
    %124 = vector.load %arg8[%c0_53, %c0_54] : memref<72x8xf32, #tpu.memory_space<vmem>>, vector<72x8xf32>
    "tpu.trace_start"() <{level = 10 : i32, message = "hwk,ko->hwo"}> : () -> ()
    %cst_55 = arith.constant dense<0.000000e+00> : vector<16x16x8xf32>
    %125 = tpu.matmul %123, %124, %cst_55 {dimension_numbers = #tpu.dot_dimension_numbers<[2], [0], [0, 1], [1], [0, 0, 0, 1, 1, 1], [], []>} : vector<16x16x72xf32>, vector<72x8xf32>, vector<16x16x8xf32> -> vector<16x16x8xf32>
    "tpu.trace_stop"() : () -> ()
    %c0_56 = arith.constant 0 : index
    %c0_57 = arith.constant 0 : index
    %126 = vector.load %arg9[%c0_56, %c0_57] : memref<1x8xf32, #tpu.memory_space<vmem>>, vector<1x8xf32>
    %127 = vector.shape_cast %126 : vector<1x8xf32> to vector<1x1x8xf32>
    %128 = vector.broadcast %127 : vector<1x1x8xf32> to vector<16x16x8xf32>
    %129 = arith.addf %125, %128 : vector<16x16x8xf32>
    %130 = arith.addf %129, %39 : vector<16x16x8xf32>
    %c0_58 = arith.constant 0 : index
    %c0_59 = arith.constant 0 : index
    %c0_60 = arith.constant 0 : index
    %c0_61 = arith.constant 0 : index
    %131 = vector.load %arg10[%c0_58, %c0_59, %c0_60, %c0_61] : memref<1x16x16x8xf32, #tpu.memory_space<vmem>>, vector<1x16x16x8xf32>
    %132 = vector.shape_cast %131 : vector<1x16x16x8xf32> to vector<16x16x8xf32>
    %133 = vector.shape_cast %130 : vector<16x16x8xf32> to vector<1x16x16x8xf32>
    tpu.vector_store %arg10[%c0_58, %c0_59, %c0_60, %c0_61], %133 {strides = array<i32>} : memref<1x16x16x8xf32, #tpu.memory_space<vmem>>, vector<1x16x16x8xf32>,
    return
  }
  func.func @transform_0(%arg0: i32) -> (i32, i32, i32, i32) {
    %c0_i32 = arith.constant 0 : i32
    %c0_i32_0 = arith.constant 0 : i32
    %c0_i32_1 = arith.constant 0 : i32
    %c0_i32_2 = arith.constant 0 : i32
    return %arg0, %c0_i32, %c0_i32_0, %c0_i32_1 : i32, i32, i32, i32
  }
  func.func @transform_1(%arg0: i32) -> (i32, i32) {
    %c0_i32 = arith.constant 0 : i32
    %c0_i32_0 = arith.constant 0 : i32
    %c0_i32_1 = arith.constant 0 : i32
    return %c0_i32, %c0_i32_0 : i32, i32
  }
  func.func @transform_2(%arg0: i32) -> (i32, i32) {
    %c0_i32 = arith.constant 0 : i32
    %c0_i32_0 = arith.constant 0 : i32
    %c0_i32_1 = arith.constant 0 : i32
    return %c0_i32, %c0_i32_0 : i32, i32
  }
  func.func @transform_3(%arg0: i32) -> (i32, i32) {
    %c0_i32 = arith.constant 0 : i32
    %c0_i32_0 = arith.constant 0 : i32
    %c0_i32_1 = arith.constant 0 : i32
    return %c0_i32, %c0_i32_0 : i32, i32
  }
  func.func @transform_4(%arg0: i32) -> (i32, i32) {
    %c0_i32 = arith.constant 0 : i32
    %c0_i32_0 = arith.constant 0 : i32
    %c0_i32_1 = arith.constant 0 : i32
    return %c0_i32, %c0_i32_0 : i32, i32
  }
  func.func @transform_5(%arg0: i32) -> (i32, i32) {
    %c0_i32 = arith.constant 0 : i32
    %c0_i32_0 = arith.constant 0 : i32
    %c0_i32_1 = arith.constant 0 : i32
    return %c0_i32, %c0_i32_0 : i32, i32
  }
  func.func @transform_6(%arg0: i32) -> (i32, i32) {
    %c0_i32 = arith.constant 0 : i32
    %c0_i32_0 = arith.constant 0 : i32
    %c0_i32_1 = arith.constant 0 : i32
    return %c0_i32, %c0_i32_0 : i32, i32
  }
  func.func @transform_7(%arg0: i32) -> (i32, i32) {
    %c0_i32 = arith.constant 0 : i32
    %c0_i32_0 = arith.constant 0 : i32
    %c0_i32_1 = arith.constant 0 : i32
    return %c0_i32, %c0_i32_0 : i32, i32
  }
  func.func @transform_8(%arg0: i32) -> (i32, i32) {
    %c0_i32 = arith.constant 0 : i32
    %c0_i32_0 = arith.constant 0 : i32
    %c0_i32_1 = arith.constant 0 : i32
    return %c0_i32, %c0_i32_0 : i32, i32
  }
  func.func @transform_9(%arg0: i32) -> (i32, i32, i32, i32) {
    %c0_i32 = arith.constant 0 : i32
    %c0_i32_0 = arith.constant 0 : i32
    %c0_i32_1 = arith.constant 0 : i32
    %c0_i32_2 = arith.constant 0 : i32
    return %arg0, %c0_i32, %c0_i32_0, %c0_i32_1 : i32, i32, i32, i32
  }
}

</mosaic_0001>

<llo_original>
// kernel: tpu_custom_call.1
$region0: #{tpu_custom_call.1}
  #allocation0 [shape = 'u32[]', space=smem, size = 0x4, offset = 0x4, fixed_abs, tag = 'smem constant byte address 0x4 - core index']
  #allocation1 [shape = 'u32[144,128]{1,0:T(1,128)}', space=vmem, size = 0x12000, scoped, tag = 'internal scratch']
  #allocation2 [shape = 'f32[18,18,8]{2,1,0:T(8,128)}', space=vmem, size = 0x36000, scoped, tag = 'scratch operand']
  %s0 = inlined_call_operand.vmem [shape: f32[2,18,18,4], index: 0, kind: input, shape index: {}]
  %s1 = inlined_call_operand.vmem [shape: f32[36,16], index: 1, kind: input, shape index: {}]
  %s2 = inlined_call_operand.vmem [shape: f32[1,16], index: 2, kind: input, shape index: {}]
  %s3 = inlined_call_operand.vmem [shape: f32[72,8], index: 3, kind: input, shape index: {}]
  %s4 = inlined_call_operand.vmem [shape: f32[1,8], index: 4, kind: input, shape index: {}]
  %s5 = inlined_call_operand.vmem [shape: f32[72,8], index: 5, kind: input, shape index: {}]
  %s6 = inlined_call_operand.vmem [shape: f32[1,8], index: 6, kind: input, shape index: {}]
  %s7 = inlined_call_operand.vmem [shape: f32[72,8], index: 7, kind: input, shape index: {}]
  %s8 = inlined_call_operand.vmem [shape: f32[1,8], index: 8, kind: input, shape index: {}]
  %s9 = inlined_call_operand.vmem [shape: f32[2,16,16,8], index: 9, kind: output, shape index: {}]
  %s10 = sld [smem:[#allocation0]]
  $region69: #{tpu_custom_call.1} parent=0
    _
  %s12 = ssub.s32 1, %s10
  %s13 = scalar_select 0, %s12, %s10
  loop: start=0, step=1, limit=4
  $region2: #{tpu_custom_call.1} parent=0 // loop_pre_header
    _
  $region3: #{tpu_custom_call.1} parent=0 // loop_header
    %s15 = sphi 0, %s19
    %p16 = scmp.ge.s32.totalorder %s15, 4
    %s25 = sphi 0, %s27
    %s28 = sphi 0, %s25
    %s29 = sphi 0, %s28
    %s45 = sphi 0, %s29
    %s49 = sphi 0, %s49
    %s51 = sphi 0, %s49
    %s52 = sphi 0, %s51
    %s66 = sphi 0, %s52
    %s70 = sphi 0, %s70
    %s72 = sphi 0, %s70
    %s73 = sphi 0, %s72
    %s87 = sphi 0, %s73
    %s91 = sphi 0, %s91
    %s93 = sphi 0, %s91
    %s94 = sphi 0, %s93
    %s108 = sphi 0, %s94
    %s112 = sphi 0, %s112
    %s114 = sphi 0, %s112
    %s115 = sphi 0, %s114
    %s129 = sphi 0, %s115
    %s133 = sphi 0, %s133
    %s135 = sphi 0, %s133
    %s136 = sphi 0, %s135
    %s150 = sphi 0, %s136
    %s154 = sphi 0, %s154
    %s156 = sphi 0, %s154
    %s157 = sphi 0, %s156
    %s171 = sphi 0, %s157
    %s175 = sphi 0, %s175
    %s177 = sphi 0, %s175
    %s178 = sphi 0, %s177
    %s192 = sphi 0, %s178
    %s196 = sphi 0, %s196
    %s198 = sphi 0, %s196
    %s199 = sphi 0, %s198
    %s213 = sphi 0, %s199
    %s219 = sphi 0, %s221
    %s222 = sphi 0, %s219
    %s223 = sphi 0, %s222
    %s239 = sphi 0, %s223
  $region4: #{tpu_custom_call.1} parent=0 // loop_header_branch
    %18 = sbr.rel (%p16) target = $region8
  $region5: #{tpu_custom_call.1} parent=0 // loop_body
    %s20 = ssub.s32 %s15, 1
    %s21 = ssub.s32 %s15, 2
    %s22 = sadd.s32 %s15, 1
    %s23 = ssub.s32 %s15, %s22
    %p24 = scmp.eq.s32.totalorder %s23, 0
    %s26 = sadd.s32 %s25, 1
    %s27 = scalar_select %p24, %s25, %s26
    %p30 = pneg %p24
    %p31 = scmp.eq.s32.totalorder %s15, 1
    %p32 = por %p30, %p31
    %p33 = scmp.ne.s32.totalorder %s25, %s28
    %p34 = scmp.eq.s32.totalorder %s15, 0
    %p35 = por %p33, %p34
    %p36 = scmp.ne.s32.totalorder %s25, %s28
    %p37 = scmp.eq.s32.totalorder %s20, 1
    %p38 = por %p36, %p37
    %p39 = scmp.ne.s32.totalorder %s28, %s29
    %p40 = scmp.eq.s32.totalorder %s20, 0
    %p41 = por %p39, %p40
    %p42 = scmp.ne.s32.totalorder %s28, %s29
    %p43 = scmp.eq.s32.totalorder %s21, 1
    %p44 = por %p42, %p43
    %p46 = scmp.ne.s32.totalorder %s29, %s45
    %p47 = scmp.eq.s32.totalorder %s21, 0
    %p48 = por %p46, %p47
    %s50 = sadd.s32 %s49, 1
    %p53 = scmp.eq.s32.totalorder %s15, 1
    %p54 = scmp.ne.s32.totalorder %s49, %s51
    %p55 = scmp.eq.s32.totalorder %s15, 0
    %p56 = por %p54, %p55
    %p57 = scmp.ne.s32.totalorder %s49, %s51
    %p58 = scmp.eq.s32.totalorder %s20, 1
    %p59 = por %p57, %p58
    %p60 = scmp.ne.s32.totalorder %s51, %s52
    %p61 = scmp.eq.s32.totalorder %s20, 0
    %p62 = por %p60, %p61
    %p63 = scmp.ne.s32.totalorder %s51, %s52
    %p64 = scmp.eq.s32.totalorder %s21, 1
    %p65 = por %p63, %p64
    %p67 = scmp.ne.s32.totalorder %s52, %s66
    %p68 = scmp.eq.s32.totalorder %s21, 0
    %p69 = por %p67, %p68
    %s71 = sadd.s32 %s70, 1
    %p74 = scmp.eq.s32.totalorder %s15, 1
    %p75 = scmp.ne.s32.totalorder %s70, %s72
    %p76 = scmp.eq.s32.totalorder %s15, 0
    %p77 = por %p75, %p76
    %p78 = scmp.ne.s32.totalorder %s70, %s72
    %p79 = scmp.eq.s32.totalorder %s20, 1
    %p80 = por %p78, %p79
    %p81 = scmp.ne.s32.totalorder %s72, %s73
    %p82 = scmp.eq.s32.totalorder %s20, 0
    %p83 = por %p81, %p82
    %p84 = scmp.ne.s32.totalorder %s72, %s73
    %p85 = scmp.eq.s32.totalorder %s21, 1
    %p86 = por %p84, %p85
    %p88 = scmp.ne.s32.totalorder %s73, %s87
    %p89 = scmp.eq.s32.totalorder %s21, 0
    %p90 = por %p88, %p89
    %s92 = sadd.s32 %s91, 1
    %p95 = scmp.eq.s32.totalorder %s15, 1
    %p96 = scmp.ne.s32.totalorder %s91, %s93
    %p97 = scmp.eq.s32.totalorder %s15, 0
    %p98 = por %p96, %p97
    %p99 = scmp.ne.s32.totalorder %s91, %s93
    %p100 = scmp.eq.s32.totalorder %s20, 1
    %p101 = por %p99, %p100
    %p102 = scmp.ne.s32.totalorder %s93, %s94
    %p103 = scmp.eq.s32.totalorder %s20, 0
    %p104 = por %p102, %p103
    %p105 = scmp.ne.s32.totalorder %s93, %s94
    %p106 = scmp.eq.s32.totalorder %s21, 1
    %p107 = por %p105, %p106
    %p109 = scmp.ne.s32.totalorder %s94, %s108
    %p110 = scmp.eq.s32.totalorder %s21, 0
    %p111 = por %p109, %p110
    %s113 = sadd.s32 %s112, 1
    %p116 = scmp.eq.s32.totalorder %s15, 1
    %p117 = scmp.ne.s32.totalorder %s112, %s114
    %p118 = scmp.eq.s32.totalorder %s15, 0
    %p119 = por %p117, %p118
    %p120 = scmp.ne.s32.totalorder %s112, %s114
    %p121 = scmp.eq.s32.totalorder %s20, 1
    %p122 = por %p120, %p121
    %p123 = scmp.ne.s32.totalorder %s114, %s115
    %p124 = scmp.eq.s32.totalorder %s20, 0
    %p125 = por %p123, %p124
    %p126 = scmp.ne.s32.totalorder %s114, %s115
    %p127 = scmp.eq.s32.totalorder %s21, 1
    %p128 = por %p126, %p127
    %p130 = scmp.ne.s32.totalorder %s115, %s129
    %p131 = scmp.eq.s32.totalorder %s21, 0
    %p132 = por %p130, %p131
    %s134 = sadd.s32 %s133, 1
    %p137 = scmp.eq.s32.totalorder %s15, 1
    %p138 = scmp.ne.s32.totalorder %s133, %s135
    %p139 = scmp.eq.s32.totalorder %s15, 0
    %p140 = por %p138, %p139
    %p141 = scmp.ne.s32.totalorder %s133, %s135
    %p142 = scmp.eq.s32.totalorder %s20, 1
    %p143 = por %p141, %p142
    %p144 = scmp.ne.s32.totalorder %s135, %s136
    %p145 = scmp.eq.s32.totalorder %s20, 0
    %p146 = por %p144, %p145
    %p147 = scmp.ne.s32.totalorder %s135, %s136
    %p148 = scmp.eq.s32.totalorder %s21, 1
    %p149 = por %p147, %p148
    %p151 = scmp.ne.s32.totalorder %s136, %s150
    %p152 = scmp.eq.s32.totalorder %s21, 0
    %p153 = por %p151, %p152
    %s155 = sadd.s32 %s154, 1
    %p158 = scmp.eq.s32.totalorder %s15, 1
    %p159 = scmp.ne.s32.totalorder %s154, %s156
    %p160 = scmp.eq.s32.totalorder %s15, 0
    %p161 = por %p159, %p160
    %p162 = scmp.ne.s32.totalorder %s154, %s156
    %p163 = scmp.eq.s32.totalorder %s20, 1
    %p164 = por %p162, %p163
    %p165 = scmp.ne.s32.totalorder %s156, %s157
    %p166 = scmp.eq.s32.totalorder %s20, 0
    %p167 = por %p165, %p166
    %p168 = scmp.ne.s32.totalorder %s156, %s157
    %p169 = scmp.eq.s32.totalorder %s21, 1
    %p170 = por %p168, %p169
    %p172 = scmp.ne.s32.totalorder %s157, %s171
    %p173 = scmp.eq.s32.totalorder %s21, 0
    %p174 = por %p172, %p173
    %s176 = sadd.s32 %s175, 1
    %p179 = scmp.eq.s32.totalorder %s15, 1
    %p180 = scmp.ne.s32.totalorder %s175, %s177
    %p181 = scmp.eq.s32.totalorder %s15, 0
    %p182 = por %p180, %p181
    %p183 = scmp.ne.s32.totalorder %s175, %s177
    %p184 = scmp.eq.s32.totalorder %s20, 1
    %p185 = por %p183, %p184
    %p186 = scmp.ne.s32.totalorder %s177, %s178
    %p187 = scmp.eq.s32.totalorder %s20, 0
    %p188 = por %p186, %p187
    %p189 = scmp.ne.s32.totalorder %s177, %s178
    %p190 = scmp.eq.s32.totalorder %s21, 1
    %p191 = por %p189, %p190
    %p193 = scmp.ne.s32.totalorder %s178, %s192
    %p194 = scmp.eq.s32.totalorder %s21, 0
    %p195 = por %p193, %p194
    %s197 = sadd.s32 %s196, 1
    %p200 = scmp.eq.s32.totalorder %s15, 1
    %p201 = scmp.ne.s32.totalorder %s196, %s198
    %p202 = scmp.eq.s32.totalorder %s15, 0
    %p203 = por %p201, %p202
    %p204 = scmp.ne.s32.totalorder %s196, %s198
    %p205 = scmp.eq.s32.totalorder %s20, 1
    %p206 = por %p204, %p205
    %p207 = scmp.ne.s32.totalorder %s198, %s199
    %p208 = scmp.eq.s32.totalorder %s20, 0
    %p209 = por %p207, %p208
    %p210 = scmp.ne.s32.totalorder %s198, %s199
    %p211 = scmp.eq.s32.totalorder %s21, 1
    %p212 = por %p210, %p211
    %p214 = scmp.ne.s32.totalorder %s199, %s213
    %p215 = scmp.eq.s32.totalorder %s21, 0
    %p216 = por %p214, %p215
    %s217 = ssub.s32 %s15, %s22
    %p218 = scmp.eq.s32.totalorder %s217, 0
    %s220 = sadd.s32 %s219, 1
    %s221 = scalar_select %p218, %s219, %s220
    %p224 = pneg %p218
    %p225 = scmp.eq.s32.totalorder %s15, 1
    %p226 = por %p224, %p225
    %p227 = scmp.ne.s32.totalorder %s219, %s222
    %p228 = scmp.eq.s32.totalorder %s15, 0
    %p229 = por %p227, %p228
    %p230 = scmp.ne.s32.totalorder %s219, %s222
    %p231 = scmp.eq.s32.totalorder %s20, 1
    %p232 = por %p230, %p231
    %p233 = scmp.ne.s32.totalorder %s222, %s223
    %p234 = scmp.eq.s32.totalorder %s20, 0
    %p235 = por %p233, %p234
    %p236 = scmp.ne.s32.totalorder %s222, %s223
    %p237 = scmp.eq.s32.totalorder %s21, 1
    %p238 = por %p236, %p237
    %p240 = scmp.ne.s32.totalorder %s223, %s239
    %p241 = scmp.eq.s32.totalorder %s21, 0
    %p242 = por %p240, %p241
    %p243 = scmp.le.s32.totalorder 1, %s15
    %p244 = scmp.lt.s32.totalorder %s15, 3
    %p245 = pnand %p243, %p244
    %p246 = pneg %p245
    // Predicated region
    $region9: #{tpu_custom_call.1} parent=5 // pred_check
      _
    $region10: #{tpu_custom_call.1} parent=5 // pred_check_branch
      %248 = sbr.rel (%p245) target = $region12
    $region11: #{tpu_custom_call.1} parent=5 // pred_region
      %s249 = ssub.s32 %s15, 1
      // Predicated region
      $region13: #{tpu_custom_call.1} parent=11 // pred_check
        %p250 = pneg %p62
      $region14: #{tpu_custom_call.1} parent=11 // pred_check_branch
        %252 = sbr.rel (%p250) target = $region16
      $region15: #{tpu_custom_call.1} parent=11 // pred_region
        _
      $region16: #{tpu_custom_call.1} parent=11 // pred_fallthru
        _
      // Predicated region
      $region17: #{tpu_custom_call.1} parent=11 // pred_check
        %p253 = pneg %p83
      $region18: #{tpu_custom_call.1} parent=11 // pred_check_branch
        %255 = sbr.rel (%p253) target = $region20
      $region19: #{tpu_custom_call.1} parent=11 // pred_region
        _
      $region20: #{tpu_custom_call.1} parent=11 // pred_fallthru
        _
      // Predicated region
      $region21: #{tpu_custom_call.1} parent=11 // pred_check
        %p256 = pneg %p104
      $region22: #{tpu_custom_call.1} parent=11 // pred_check_branch
        %258 = sbr.rel (%p256) target = $region24
      $region23: #{tpu_custom_call.1} parent=11 // pred_region
        _
      $region24: #{tpu_custom_call.1} parent=11 // pred_fallthru
        _
      // Predicated region
      $region25: #{tpu_custom_call.1} parent=11 // pred_check
        %p259 = pneg %p125
      $region26: #{tpu_custom_call.1} parent=11 // pred_check_branch
        %261 = sbr.rel (%p259) target = $region28
      $region27: #{tpu_custom_call.1} parent=11 // pred_region
        _
      $region28: #{tpu_custom_call.1} parent=11 // pred_fallthru
        _
      // Predicated region
      $region29: #{tpu_custom_call.1} parent=11 // pred_check
        %p262 = pneg %p146
      $region30: #{tpu_custom_call.1} parent=11 // pred_check_branch
        %264 = sbr.rel (%p262) target = $region32
      $region31: #{tpu_custom_call.1} parent=11 // pred_region
        _
      $region32: #{tpu_custom_call.1} parent=11 // pred_fallthru
        _
      // Predicated region
      $region33: #{tpu_custom_call.1} parent=11 // pred_check
        %p265 = pneg %p167
      $region34: #{tpu_custom_call.1} parent=11 // pred_check_branch
        %267 = sbr.rel (%p265) target = $region36
      $region35: #{tpu_custom_call.1} parent=11 // pred_region
        _
      $region36: #{tpu_custom_call.1} parent=11 // pred_fallthru
        _
      // Predicated region
      $region37: #{tpu_custom_call.1} parent=11 // pred_check
        %p268 = pneg %p188
      $region38: #{tpu_custom_call.1} parent=11 // pred_check_branch
        %270 = sbr.rel (%p268) target = $region40
      $region39: #{tpu_custom_call.1} parent=11 // pred_region
        _
      $region40: #{tpu_custom_call.1} parent=11 // pred_fallthru
        _
      // Predicated region
      $region41: #{tpu_custom_call.1} parent=11 // pred_check
        %p271 = pneg %p209
      $region42: #{tpu_custom_call.1} parent=11 // pred_check_branch
        %273 = sbr.rel (%p271) target = $region44
      $region43: #{tpu_custom_call.1} parent=11 // pred_region
        _
      $region44: #{tpu_custom_call.1} parent=11 // pred_fallthru
        _
    $region12: #{tpu_custom_call.1} parent=5 // pred_fallthru
      _
    %p274 = scmp.lt.s32.totalorder %s15, 2
    // Predicated region
    $region45: #{tpu_custom_call.1} parent=5 // pred_check
      %p275 = pneg %p274
    $region46: #{tpu_custom_call.1} parent=5 // pred_check_branch
      %277 = sbr.rel (%p275) target = $region48
    $region47: #{tpu_custom_call.1} parent=5 // pred_region
      // Predicated region
      $region49: #{tpu_custom_call.1} parent=47 // pred_check
        %p278 = pneg %p35
      $region50: #{tpu_custom_call.1} parent=47 // pred_check_branch
        %280 = sbr.rel (%p278) target = $region52
      $region51: #{tpu_custom_call.1} parent=47 // pred_region
        %p281 = scmp.lt.s32.totalorder %s15, 1
        %s282 = scalar_select %p281, %s15, 1
        %s283 = smul.addr %s282, 54
        %s284 = smul.addr %s283, 8
        %s285 = scalar_lea.vmem %s0, %s284
      $region52: #{tpu_custom_call.1} parent=47 // pred_fallthru
        _
    $region48: #{tpu_custom_call.1} parent=5 // pred_fallthru
      _
    %p286 = scmp.le.s32.totalorder 1, %s15
    %p287 = scmp.lt.s32.totalorder %s15, 3
    %p288 = pnand %p286, %p287
    %p289 = pneg %p288
    // Predicated region
    $region53: #{tpu_custom_call.1} parent=5 // pred_check
      _
    $region54: #{tpu_custom_call.1} parent=5 // pred_check_branch
      %291 = sbr.rel (%p288) target = $region56
    $region55: #{tpu_custom_call.1} parent=5 // pred_region
      %s292 = ssub.s32 %s15, 1
      %p293 = scmp.lt.s32.totalorder %s20, 1
      %s294 = scalar_select %p293, %s20, 1
      %s295 = smul.addr %s294, 54
      %s296 = smul.addr %s295, 8
      %s297 = scalar_lea.vmem %s0, %s296
      %p298 = pneg %p41
      %p299 = pneg %p38
      %p300 = pneg %p62
      %p301 = pneg %p59
      %p302 = pneg %p83
      %p303 = pneg %p80
      %p304 = pneg %p104
      %p305 = pneg %p101
      %p306 = pneg %p125
      %p307 = pneg %p122
      %p308 = pneg %p146
      %p309 = pneg %p143
      %p310 = pneg %p167
      %p311 = pneg %p164
      %p312 = pneg %p188
      %p313 = pneg %p185
      %p314 = pneg %p209
      %p315 = pneg %p206
      %p316 = pneg %p235
      %p317 = pneg %p232
      %p318 = scmp.lt.s32.totalorder %s20, 1
      %s319 = scalar_select %p318, %s20, 1
      %s320 = smul.addr %s319, 32
      %s321 = smul.addr %s320, 8
      %s322 = scalar_lea.vmem %s9, %s321
      %p323 = scmp.lt.s32.totalorder %s20, 1
      %s324 = scalar_select %p323, %s20, 1
      %s325 = smul.addr %s324, 54
      %s326 = smul.addr %s325, 8
      %s327 = scalar_lea.vmem %s0, %s326
      %p328 = scmp.lt.s32.totalorder %s20, 1
      %s329 = scalar_select %p328, %s20, 1
      %s330 = smul.addr %s329, 32
      %s331 = smul.addr %s330, 8
      %s332 = scalar_lea.vmem %s9, %s331
      %vm333 = vcmask 64512
      %334 = vst.msk [vmem:[#allocation2] sm:$0xff] %vm333, 0.0
      %335 = vst.msk [vmem:[#allocation2 + $0x8] sm:$0xff] %vm333, 0.0
      %vm336 = vcmask 58368
      %337 = vst.msk [vmem:[#allocation2 + $0x10] sm:$0x3] %vm336, 0.0
      %338 = vst.msk [vmem:[#allocation2 + $0x18] sm:$0xff] %vm333, 0.0
      %339 = vst.msk [vmem:[#allocation2 + $0x20] sm:$0xff] %vm333, 0.0
      %340 = vst.msk [vmem:[#allocation2 + $0x28] sm:$0x3] %vm336, 0.0
      %341 = vst.msk [vmem:[#allocation2 + $0x30] sm:$0xff] %vm333, 0.0
      %342 = vst.msk [vmem:[#allocation2 + $0x38] sm:$0xff] %vm333, 0.0
      %343 = vst.msk [vmem:[#allocation2 + $0x40] sm:$0x3] %vm336, 0.0
      %344 = vst.msk [vmem:[#allocation2 + $0x48] sm:$0xff] %vm333, 0.0
      %345 = vst.msk [vmem:[#allocation2 + $0x50] sm:$0xff] %vm333, 0.0
      %346 = vst.msk [vmem:[#allocation2 + $0x58] sm:$0x3] %vm336, 0.0
      %347 = vst.msk [vmem:[#allocation2 + $0x60] sm:$0xff] %vm333, 0.0
      %348 = vst.msk [vmem:[#allocation2 + $0x68] sm:$0xff] %vm333, 0.0
      %349 = vst.msk [vmem:[#allocation2 + $0x70] sm:$0x3] %vm336, 0.0
      %350 = vst.msk [vmem:[#allocation2 + $0x78] sm:$0xff] %vm333, 0.0
      %351 = vst.msk [vmem:[#allocation2 + $0x80] sm:$0xff] %vm333, 0.0
      %352 = vst.msk [vmem:[#allocation2 + $0x88] sm:$0x3] %vm336, 0.0
      %353 = vst.msk [vmem:[#allocation2 + $0x90] sm:$0xff] %vm333, 0.0
      %354 = vst.msk [vmem:[#allocation2 + $0x98] sm:$0xff] %vm333, 0.0
      %355 = vst.msk [vmem:[#allocation2 + $0xa0] sm:$0x3] %vm336, 0.0
      %356 = vst.msk [vmem:[#allocation2 + $0xa8] sm:$0xff] %vm333, 0.0
      %357 = vst.msk [vmem:[#allocation2 + $0xb0] sm:$0xff] %vm333, 0.0
      %358 = vst.msk [vmem:[#allocation2 + $0xb8] sm:$0x3] %vm336, 0.0
      %359 = vst.msk [vmem:[#allocation2 + $0xc0] sm:$0xff] %vm333, 0.0
      %360 = vst.msk [vmem:[#allocation2 + $0xc8] sm:$0xff] %vm333, 0.0
      %361 = vst.msk [vmem:[#allocation2 + $0xd0] sm:$0x3] %vm336, 0.0
      %362 = vst.msk [vmem:[#allocation2 + $0xd8] sm:$0xff] %vm333, 0.0
      %363 = vst.msk [vmem:[#allocation2 + $0xe0] sm:$0xff] %vm333, 0.0
      %364 = vst.msk [vmem:[#allocation2 + $0xe8] sm:$0x3] %vm336, 0.0
      %365 = vst.msk [vmem:[#allocation2 + $0xf0] sm:$0xff] %vm333, 0.0
      %366 = vst.msk [vmem:[#allocation2 + $0xf8] sm:$0xff] %vm333, 0.0
      %367 = vst.msk [vmem:[#allocation2 + $0x100] sm:$0x3] %vm336, 0.0
      %368 = vst.msk [vmem:[#allocation2 + $0x108] sm:$0xff] %vm333, 0.0
      %369 = vst.msk [vmem:[#allocation2 + $0x110] sm:$0xff] %vm333, 0.0
      %370 = vst.msk [vmem:[#allocation2 + $0x118] sm:$0x3] %vm336, 0.0
      %371 = vst.msk [vmem:[#allocation2 + $0x120] sm:$0xff] %vm333, 0.0
      %372 = vst.msk [vmem:[#allocation2 + $0x128] sm:$0xff] %vm333, 0.0
      %373 = vst.msk [vmem:[#allocation2 + $0x130] sm:$0x3] %vm336, 0.0
      %374 = vst.msk [vmem:[#allocation2 + $0x138] sm:$0xff] %vm333, 0.0
      %375 = vst.msk [vmem:[#allocation2 + $0x140] sm:$0xff] %vm333, 0.0
      %376 = vst.msk [vmem:[#allocation2 + $0x148] sm:$0x3] %vm336, 0.0
      %377 = vst.msk [vmem:[#allocation2 + $0x150] sm:$0xff] %vm333, 0.0
      %378 = vst.msk [vmem:[#allocation2 + $0x158] sm:$0xff] %vm333, 0.0
      %379 = vst.msk [vmem:[#allocation2 + $0x160] sm:$0x3] %vm336, 0.0
      %380 = vst.msk [vmem:[#allocation2 + $0x168] sm:$0xff] %vm333, 0.0
      %381 = vst.msk [vmem:[#allocation2 + $0x170] sm:$0xff] %vm333, 0.0
      %382 = vst.msk [vmem:[#allocation2 + $0x178] sm:$0x3] %vm336, 0.0
      %383 = vst.msk [vmem:[#allocation2 + $0x180] sm:$0xff] %vm333, 0.0
      %384 = vst.msk [vmem:[#allocation2 + $0x188] sm:$0xff] %vm333, 0.0
      %385 = vst.msk [vmem:[#allocation2 + $0x190] sm:$0x3] %vm336, 0.0
      %386 = vst.msk [vmem:[#allocation2 + $0x198] sm:$0xff] %vm333, 0.0
      %387 = vst.msk [vmem:[#allocation2 + $0x1a0] sm:$0xff] %vm333, 0.0
      %388 = vst.msk [vmem:[#allocation2 + $0x1a8] sm:$0x3] %vm336, 0.0
      %v389 = vld [vmem:[%s327] sm:$0xff]
      %v390 = vld [vmem:[%s327 + $0x8] sm:$0xff]
      %v391 = vld [vmem:[%s327 + $0x10] sm:$0x3]
      %v392 = vld [vmem:[%s327 + $0x18] sm:$0xff]
      %v393 = vld [vmem:[%s327 + $0x20] sm:$0xff]
      %v394 = vld [vmem:[%s327 + $0x28] sm:$0x3]
      %v395 = vld [vmem:[%s327 + $0x30] sm:$0xff]
      %v396 = vld [vmem:[%s327 + $0x38] sm:$0xff]
      %v397 = vld [vmem:[%s327 + $0x40] sm:$0x3]
      %v398 = vld [vmem:[%s327 + $0x48] sm:$0xff]
      %v399 = vld [vmem:[%s327 + $0x50] sm:$0xff]
      %v400 = vld [vmem:[%s327 + $0x58] sm:$0x3]
      %v401 = vld [vmem:[%s327 + $0x60] sm:$0xff]
      %v402 = vld [vmem:[%s327 + $0x68] sm:$0xff]
      %v403 = vld [vmem:[%s327 + $0x70] sm:$0x3]
      %v404 = vld [vmem:[%s327 + $0x78] sm:$0xff]
      %v405 = vld [vmem:[%s327 + $0x80] sm:$0xff]
      %v406 = vld [vmem:[%s327 + $0x88] sm:$0x3]
      %v407 = vld [vmem:[%s327 + $0x90] sm:$0xff]
      %v408 = vld [vmem:[%s327 + $0x98] sm:$0xff]
      %v409 = vld [vmem:[%s327 + $0xa0] sm:$0x3]
      %v410 = vld [vmem:[%s327 + $0xa8] sm:$0xff]
      %v411 = vld [vmem:[%s327 + $0xb0] sm:$0xff]
      %v412 = vld [vmem:[%s327 + $0xb8] sm:$0x3]
      %v413 = vld [vmem:[%s327 + $0xc0] sm:$0xff]
      %v414 = vld [vmem:[%s327 + $0xc8] sm:$0xff]
      %v415 = vld [vmem:[%s327 + $0xd0] sm:$0x3]
      %v416 = vld [vmem:[%s327 + $0xd8] sm:$0xff]
      %v417 = vld [vmem:[%s327 + $0xe0] sm:$0xff]
      %v418 = vld [vmem:[%s327 + $0xe8] sm:$0x3]
      %v419 = vld [vmem:[%s327 + $0xf0] sm:$0xff]
      %v420 = vld [vmem:[%s327 + $0xf8] sm:$0xff]
      %v421 = vld [vmem:[%s327 + $0x100] sm:$0x3]
      %v422 = vld [vmem:[%s327 + $0x108] sm:$0xff]
      %v423 = vld [vmem:[%s327 + $0x110] sm:$0xff]
      %v424 = vld [vmem:[%s327 + $0x118] sm:$0x3]
      %v425 = vld [vmem:[%s327 + $0x120] sm:$0xff]
      %v426 = vld [vmem:[%s327 + $0x128] sm:$0xff]
      %v427 = vld [vmem:[%s327 + $0x130] sm:$0x3]
      %v428 = vld [vmem:[%s327 + $0x138] sm:$0xff]
      %v429 = vld [vmem:[%s327 + $0x140] sm:$0xff]
      %v430 = vld [vmem:[%s327 + $0x148] sm:$0x3]
      %v431 = vld [vmem:[%s327 + $0x150] sm:$0xff]
      %v432 = vld [vmem:[%s327 + $0x158] sm:$0xff]
      %v433 = vld [vmem:[%s327 + $0x160] sm:$0x3]
      %v434 = vld [vmem:[%s327 + $0x168] sm:$0xff]
      %v435 = vld [vmem:[%s327 + $0x170] sm:$0xff]
      %v436 = vld [vmem:[%s327 + $0x178] sm:$0x3]
      %v437 = vld [vmem:[%s327 + $0x180] sm:$0xff]
      %v438 = vld [vmem:[%s327 + $0x188] sm:$0xff]
      %v439 = vld [vmem:[%s327 + $0x190] sm:$0x3]
      %v440 = vld [vmem:[%s327 + $0x198] sm:$0xff]
      %v441 = vld [vmem:[%s327 + $0x1a0] sm:$0xff]
      %v442 = vld [vmem:[%s327 + $0x1a8] sm:$0x3]
      %vm491 = vcmask 1046528
      %v492 = vrot.slane %v389, 1
      %v493 = vrot.slane %v390, 1
      %v494 = vsel %vm491, %v492, %v493
      %v495 = vrot.slane %v391, 1
      %v496 = vsel %vm491, %v493, %v495
      %v497 = vrot.slane %v392, 1
      %v498 = vrot.slane %v393, 1
      %v499 = vsel %vm491, %v497, %v498
      %v500 = vrot.slane %v394, 1
      %v501 = vsel %vm491, %v498, %v500
      %v502 = vrot.slane %v395, 1
      %v503 = vrot.slane %v396, 1
      %v504 = vsel %vm491, %v502, %v503
      %v505 = vrot.slane %v397, 1
      %v506 = vsel %vm491, %v503, %v505
      %v507 = vrot.slane %v398, 1
      %v508 = vrot.slane %v399, 1
      %v509 = vsel %vm491, %v507, %v508
      %v510 = vrot.slane %v400, 1
      %v511 = vsel %vm491, %v508, %v510
      %v512 = vrot.slane %v401, 1
      %v513 = vrot.slane %v402, 1
      %v514 = vsel %vm491, %v512, %v513
      %v515 = vrot.slane %v403, 1
      %v516 = vsel %vm491, %v513, %v515
      %v517 = vrot.slane %v404, 1
      %v518 = vrot.slane %v405, 1
      %v519 = vsel %vm491, %v517, %v518
      %v520 = vrot.slane %v406, 1
      %v521 = vsel %vm491, %v518, %v520
      %v522 = vrot.slane %v407, 1
      %v523 = vrot.slane %v408, 1
      %v524 = vsel %vm491, %v522, %v523
      %v525 = vrot.slane %v409, 1
      %v526 = vsel %vm491, %v523, %v525
      %v527 = vrot.slane %v410, 1
      %v528 = vrot.slane %v411, 1
      %v529 = vsel %vm491, %v527, %v528
      %v530 = vrot.slane %v412, 1
      %v531 = vsel %vm491, %v528, %v530
      %v532 = vrot.slane %v413, 1
      %v533 = vrot.slane %v414, 1
      %v534 = vsel %vm491, %v532, %v533
      %v535 = vrot.slane %v415, 1
      %v536 = vsel %vm491, %v533, %v535
      %v537 = vrot.slane %v416, 1
      %v538 = vrot.slane %v417, 1
      %v539 = vsel %vm491, %v537, %v538
      %v540 = vrot.slane %v418, 1
      %v541 = vsel %vm491, %v538, %v540
      %v542 = vrot.slane %v419, 1
      %v543 = vrot.slane %v420, 1
      %v544 = vsel %vm491, %v542, %v543
      %v545 = vrot.slane %v421, 1
      %v546 = vsel %vm491, %v543, %v545
      %v547 = vrot.slane %v422, 1
      %v548 = vrot.slane %v423, 1
      %v549 = vsel %vm491, %v547, %v548
      %v550 = vrot.slane %v424, 1
      %v551 = vsel %vm491, %v548, %v550
      %v552 = vrot.slane %v425, 1
      %v553 = vrot.slane %v426, 1
      %v554 = vsel %vm491, %v552, %v553
      %v555 = vrot.slane %v427, 1
      %v556 = vsel %vm491, %v553, %v555
      %v557 = vrot.slane %v428, 1
      %v558 = vrot.slane %v429, 1
      %v559 = vsel %vm491, %v557, %v558
      %v560 = vrot.slane %v430, 1
      %v561 = vsel %vm491, %v558, %v560
      %v562 = vrot.slane %v431, 1
      %v563 = vrot.slane %v432, 1
      %v564 = vsel %vm491, %v562, %v563
      %v565 = vrot.slane %v433, 1
      %v566 = vsel %vm491, %v563, %v565
      %v567 = vrot.slane %v434, 1
      %v568 = vrot.slane %v435, 1
      %v569 = vsel %vm491, %v567, %v568
      %v570 = vrot.slane %v436, 1
      %v571 = vsel %vm491, %v568, %v570
      %572 = vrot.lane.b32.xlu0 %v494, 4
      %v573 = vpop.permute.xlu0 %572
      %574 = vrot.lane.b32.xlu0 %v496, 4
      %v575 = vpop.permute.xlu0 %574
      %576 = vrot.lane.b32.xlu0 %v499, 4
      %v577 = vpop.permute.xlu0 %576
      %578 = vrot.lane.b32.xlu0 %v501, 4
      %v579 = vpop.permute.xlu0 %578
      %580 = vrot.lane.b32.xlu0 %v504, 4
      %v581 = vpop.permute.xlu0 %580
      %582 = vrot.lane.b32.xlu0 %v506, 4
      %v583 = vpop.permute.xlu0 %582
      %584 = vrot.lane.b32.xlu0 %v509, 4
      %v585 = vpop.permute.xlu0 %584
      %586 = vrot.lane.b32.xlu0 %v511, 4
      %v587 = vpop.permute.xlu0 %586
      %588 = vrot.lane.b32.xlu0 %v514, 4
      %v589 = vpop.permute.xlu0 %588
      %590 = vrot.lane.b32.xlu0 %v516, 4
      %v591 = vpop.permute.xlu0 %590
      %592 = vrot.lane.b32.xlu0 %v519, 4
      %v593 = vpop.permute.xlu0 %592
      %594 = vrot.lane.b32.xlu0 %v521, 4
      %v595 = vpop.permute.xlu0 %594
      %596 = vrot.lane.b32.xlu0 %v524, 4
      %v597 = vpop.permute.xlu0 %596
      %598 = vrot.lane.b32.xlu0 %v526, 4
      %v599 = vpop.permute.xlu0 %598
      %600 = vrot.lane.b32.xlu0 %v529, 4
      %v601 = vpop.permute.xlu0 %600
      %602 = vrot.lane.b32.xlu0 %v531, 4
      %v603 = vpop.permute.xlu0 %602
      %604 = vrot.lane.b32.xlu0 %v534, 4
      %v605 = vpop.permute.xlu0 %604
      %606 = vrot.lane.b32.xlu0 %v536, 4
      %v607 = vpop.permute.xlu0 %606
      %608 = vrot.lane.b32.xlu0 %v539, 4
      %v609 = vpop.permute.xlu0 %608
      %610 = vrot.lane.b32.xlu0 %v541, 4
      %v611 = vpop.permute.xlu0 %610
      %612 = vrot.lane.b32.xlu0 %v544, 4
      %v613 = vpop.permute.xlu0 %612
      %614 = vrot.lane.b32.xlu0 %v546, 4
      %v615 = vpop.permute.xlu0 %614
      %616 = vrot.lane.b32.xlu0 %v549, 4
      %v617 = vpop.permute.xlu0 %616
      %618 = vrot.lane.b32.xlu0 %v551, 4
      %v619 = vpop.permute.xlu0 %618
      %620 = vrot.lane.b32.xlu0 %v554, 4
      %v621 = vpop.permute.xlu0 %620
      %622 = vrot.lane.b32.xlu0 %v556, 4
      %v623 = vpop.permute.xlu0 %622
      %624 = vrot.lane.b32.xlu0 %v559, 4
      %v625 = vpop.permute.xlu0 %624
      %626 = vrot.lane.b32.xlu0 %v561, 4
      %v627 = vpop.permute.xlu0 %626
      %628 = vrot.lane.b32.xlu0 %v564, 4
      %v629 = vpop.permute.xlu0 %628
      %630 = vrot.lane.b32.xlu0 %v566, 4
      %v631 = vpop.permute.xlu0 %630
      %632 = vrot.lane.b32.xlu0 %v569, 4
      %v633 = vpop.permute.xlu0 %632
      %634 = vrot.lane.b32.xlu0 %v571, 4
      %v635 = vpop.permute.xlu0 %634
      %vm668 = vcmask 1045504
      %v669 = vrot.slane %v389, 2
      %v670 = vrot.slane %v390, 2
      %v671 = vsel %vm668, %v669, %v670
      %v672 = vrot.slane %v391, 2
      %v673 = vsel %vm668, %v670, %v672
      %v674 = vrot.slane %v392, 2
      %v675 = vrot.slane %v393, 2
      %v676 = vsel %vm668, %v674, %v675
      %v677 = vrot.slane %v394, 2
      %v678 = vsel %vm668, %v675, %v677
      %v679 = vrot.slane %v395, 2
      %v680 = vrot.slane %v396, 2
      %v681 = vsel %vm668, %v679, %v680
      %v682 = vrot.slane %v397, 2
      %v683 = vsel %vm668, %v680, %v682
      %v684 = vrot.slane %v398, 2
      %v685 = vrot.slane %v399, 2
      %v686 = vsel %vm668, %v684, %v685
      %v687 = vrot.slane %v400, 2
      %v688 = vsel %vm668, %v685, %v687
      %v689 = vrot.slane %v401, 2
      %v690 = vrot.slane %v402, 2
      %v691 = vsel %vm668, %v689, %v690
      %v692 = vrot.slane %v403, 2
      %v693 = vsel %vm668, %v690, %v692
      %v694 = vrot.slane %v404, 2
      %v695 = vrot.slane %v405, 2
      %v696 = vsel %vm668, %v694, %v695
      %v697 = vrot.slane %v406, 2
      %v698 = vsel %vm668, %v695, %v697
      %v699 = vrot.slane %v407, 2
      %v700 = vrot.slane %v408, 2
      %v701 = vsel %vm668, %v699, %v700
      %v702 = vrot.slane %v409, 2
      %v703 = vsel %vm668, %v700, %v702
      %v704 = vrot.slane %v410, 2
      %v705 = vrot.slane %v411, 2
      %v706 = vsel %vm668, %v704, %v705
      %v707 = vrot.slane %v412, 2
      %v708 = vsel %vm668, %v705, %v707
      %v709 = vrot.slane %v413, 2
      %v710 = vrot.slane %v414, 2
      %v711 = vsel %vm668, %v709, %v710
      %v712 = vrot.slane %v415, 2
      %v713 = vsel %vm668, %v710, %v712
      %v714 = vrot.slane %v416, 2
      %v715 = vrot.slane %v417, 2
      %v716 = vsel %vm668, %v714, %v715
      %v717 = vrot.slane %v418, 2
      %v718 = vsel %vm668, %v715, %v717
      %v719 = vrot.slane %v419, 2
      %v720 = vrot.slane %v420, 2
      %v721 = vsel %vm668, %v719, %v720
      %v722 = vrot.slane %v421, 2
      %v723 = vsel %vm668, %v720, %v722
      %v724 = vrot.slane %v422, 2
      %v725 = vrot.slane %v423, 2
      %v726 = vsel %vm668, %v724, %v725
      %v727 = vrot.slane %v424, 2
      %v728 = vsel %vm668, %v725, %v727
      %v729 = vrot.slane %v425, 2
      %v730 = vrot.slane %v426, 2
      %v731 = vsel %vm668, %v729, %v730
      %v732 = vrot.slane %v427, 2
      %v733 = vsel %vm668, %v730, %v732
      %v734 = vrot.slane %v428, 2
      %v735 = vrot.slane %v429, 2
      %v736 = vsel %vm668, %v734, %v735
      %v737 = vrot.slane %v430, 2
      %v738 = vsel %vm668, %v735, %v737
      %v739 = vrot.slane %v431, 2
      %v740 = vrot.slane %v432, 2
      %v741 = vsel %vm668, %v739, %v740
      %v742 = vrot.slane %v433, 2
      %v743 = vsel %vm668, %v740, %v742
      %v744 = vrot.slane %v434, 2
      %v745 = vrot.slane %v435, 2
      %v746 = vsel %vm668, %v744, %v745
      %v747 = vrot.slane %v436, 2
      %v748 = vsel %vm668, %v745, %v747
      %749 = vrot.lane.b32.xlu0 %v671, 8
      %v750 = vpop.permute.xlu0 %749
      %751 = vrot.lane.b32.xlu0 %v673, 8
      %v752 = vpop.permute.xlu0 %751
      %753 = vrot.lane.b32.xlu0 %v676, 8
      %v754 = vpop.permute.xlu0 %753
      %755 = vrot.lane.b32.xlu0 %v678, 8
      %v756 = vpop.permute.xlu0 %755
      %757 = vrot.lane.b32.xlu0 %v681, 8
      %v758 = vpop.permute.xlu0 %757
      %759 = vrot.lane.b32.xlu0 %v683, 8
      %v760 = vpop.permute.xlu0 %759
      %761 = vrot.lane.b32.xlu0 %v686, 8
      %v762 = vpop.permute.xlu0 %761
      %763 = vrot.lane.b32.xlu0 %v688, 8
      %v764 = vpop.permute.xlu0 %763
      %765 = vrot.lane.b32.xlu0 %v691, 8
      %v766 = vpop.permute.xlu0 %765
      %767 = vrot.lane.b32.xlu0 %v693, 8
      %v768 = vpop.permute.xlu0 %767
      %769 = vrot.lane.b32.xlu0 %v696, 8
      %v770 = vpop.permute.xlu0 %769
      %771 = vrot.lane.b32.xlu0 %v698, 8
      %v772 = vpop.permute.xlu0 %771
      %773 = vrot.lane.b32.xlu0 %v701, 8
      %v774 = vpop.permute.xlu0 %773
      %775 = vrot.lane.b32.xlu0 %v703, 8
      %v776 = vpop.permute.xlu0 %775
      %777 = vrot.lane.b32.xlu0 %v706, 8
      %v778 = vpop.permute.xlu0 %777
      %779 = vrot.lane.b32.xlu0 %v708, 8
      %v780 = vpop.permute.xlu0 %779
      %781 = vrot.lane.b32.xlu0 %v711, 8
      %v782 = vpop.permute.xlu0 %781
      %783 = vrot.lane.b32.xlu0 %v713, 8
      %v784 = vpop.permute.xlu0 %783
      %785 = vrot.lane.b32.xlu0 %v716, 8
      %v786 = vpop.permute.xlu0 %785
      %787 = vrot.lane.b32.xlu0 %v718, 8
      %v788 = vpop.permute.xlu0 %787
      %789 = vrot.lane.b32.xlu0 %v721, 8
      %v790 = vpop.permute.xlu0 %789
      %791 = vrot.lane.b32.xlu0 %v723, 8
      %v792 = vpop.permute.xlu0 %791
      %793 = vrot.lane.b32.xlu0 %v726, 8
      %v794 = vpop.permute.xlu0 %793
      %795 = vrot.lane.b32.xlu0 %v728, 8
      %v796 = vpop.permute.xlu0 %795
      %797 = vrot.lane.b32.xlu0 %v731, 8
      %v798 = vpop.permute.xlu0 %797
      %799 = vrot.lane.b32.xlu0 %v733, 8
      %v800 = vpop.permute.xlu0 %799
      %801 = vrot.lane.b32.xlu0 %v736, 8
      %v802 = vpop.permute.xlu0 %801
      %803 = vrot.lane.b32.xlu0 %v738, 8
      %v804 = vpop.permute.xlu0 %803
      %805 = vrot.lane.b32.xlu0 %v741, 8
      %v806 = vpop.permute.xlu0 %805
      %807 = vrot.lane.b32.xlu0 %v743, 8
      %v808 = vpop.permute.xlu0 %807
      %809 = vrot.lane.b32.xlu0 %v746, 8
      %v810 = vpop.permute.xlu0 %809
      %811 = vrot.lane.b32.xlu0 %v748, 8
      %v812 = vpop.permute.xlu0 %811
      %847 = vrot.lane.b32.xlu0 %v392, 12
      %v848 = vpop.permute.xlu0 %847
      %849 = vrot.lane.b32.xlu0 %v393, 12
      %v850 = vpop.permute.xlu0 %849
      %851 = vrot.lane.b32.xlu0 %v395, 12
      %v852 = vpop.permute.xlu0 %851
      %853 = vrot.lane.b32.xlu0 %v396, 12
      %v854 = vpop.permute.xlu0 %853
      %855 = vrot.lane.b32.xlu0 %v398, 12
      %v856 = vpop.permute.xlu0 %855
      %857 = vrot.lane.b32.xlu0 %v399, 12
      %v858 = vpop.permute.xlu0 %857
      %859 = vrot.lane.b32.xlu0 %v401, 12
      %v860 = vpop.permute.xlu0 %859
      %861 = vrot.lane.b32.xlu0 %v402, 12
      %v862 = vpop.permute.xlu0 %861
      %863 = vrot.lane.b32.xlu0 %v404, 12
      %v864 = vpop.permute.xlu0 %863
      %865 = vrot.lane.b32.xlu0 %v405, 12
      %v866 = vpop.permute.xlu0 %865
      %867 = vrot.lane.b32.xlu0 %v407, 12
      %v868 = vpop.permute.xlu0 %867
      %869 = vrot.lane.b32.xlu0 %v408, 12
      %v870 = vpop.permute.xlu0 %869
      %871 = vrot.lane.b32.xlu0 %v410, 12
      %v872 = vpop.permute.xlu0 %871
      %873 = vrot.lane.b32.xlu0 %v411, 12
      %v874 = vpop.permute.xlu0 %873
      %875 = vrot.lane.b32.xlu0 %v413, 12
      %v876 = vpop.permute.xlu0 %875
      %877 = vrot.lane.b32.xlu0 %v414, 12
      %v878 = vpop.permute.xlu0 %877
      %879 = vrot.lane.b32.xlu0 %v416, 12
      %v880 = vpop.permute.xlu0 %879
      %881 = vrot.lane.b32.xlu0 %v417, 12
      %v882 = vpop.permute.xlu0 %881
      %883 = vrot.lane.b32.xlu0 %v419, 12
      %v884 = vpop.permute.xlu0 %883
      %885 = vrot.lane.b32.xlu0 %v420, 12
      %v886 = vpop.permute.xlu0 %885
      %887 = vrot.lane.b32.xlu0 %v422, 12
      %v888 = vpop.permute.xlu0 %887
      %889 = vrot.lane.b32.xlu0 %v423, 12
      %v890 = vpop.permute.xlu0 %889
      %891 = vrot.lane.b32.xlu0 %v425, 12
      %v892 = vpop.permute.xlu0 %891
      %893 = vrot.lane.b32.xlu0 %v426, 12
      %v894 = vpop.permute.xlu0 %893
      %895 = vrot.lane.b32.xlu0 %v428, 12
      %v896 = vpop.permute.xlu0 %895
      %897 = vrot.lane.b32.xlu0 %v429, 12
      %v898 = vpop.permute.xlu0 %897
      %899 = vrot.lane.b32.xlu0 %v431, 12
      %v900 = vpop.permute.xlu0 %899
      %901 = vrot.lane.b32.xlu0 %v432, 12
      %v902 = vpop.permute.xlu0 %901
      %903 = vrot.lane.b32.xlu0 %v434, 12
      %v904 = vpop.permute.xlu0 %903
      %905 = vrot.lane.b32.xlu0 %v435, 12
      %v906 = vpop.permute.xlu0 %905
      %907 = vrot.lane.b32.xlu0 %v437, 12
      %v908 = vpop.permute.xlu0 %907
      %909 = vrot.lane.b32.xlu0 %v438, 12
      %v910 = vpop.permute.xlu0 %909
      %v944 = vrot.slane %v437, 1
      %v945 = vrot.slane %v438, 1
      %v946 = vsel %vm491, %v944, %v945
      %v947 = vrot.slane %v439, 1
      %v948 = vsel %vm491, %v945, %v947
      %949 = vrot.lane.b32.xlu0 %v499, 16
      %v950 = vpop.permute.xlu0 %949
      %951 = vrot.lane.b32.xlu0 %v501, 16
      %v952 = vpop.permute.xlu0 %951
      %953 = vrot.lane.b32.xlu0 %v504, 16
      %v954 = vpop.permute.xlu0 %953
      %955 = vrot.lane.b32.xlu0 %v506, 16
      %v956 = vpop.permute.xlu0 %955
      %957 = vrot.lane.b32.xlu0 %v509, 16
      %v958 = vpop.permute.xlu0 %957
      %959 = vrot.lane.b32.xlu0 %v511, 16
      %v960 = vpop.permute.xlu0 %959
      %961 = vrot.lane.b32.xlu0 %v514, 16
      %v962 = vpop.permute.xlu0 %961
      %963 = vrot.lane.b32.xlu0 %v516, 16
      %v964 = vpop.permute.xlu0 %963
      %965 = vrot.lane.b32.xlu0 %v519, 16
      %v966 = vpop.permute.xlu0 %965
      %967 = vrot.lane.b32.xlu0 %v521, 16
      %v968 = vpop.permute.xlu0 %967
      %969 = vrot.lane.b32.xlu0 %v524, 16
      %v970 = vpop.permute.xlu0 %969
      %971 = vrot.lane.b32.xlu0 %v526, 16
      %v972 = vpop.permute.xlu0 %971
      %973 = vrot.lane.b32.xlu0 %v529, 16
      %v974 = vpop.permute.xlu0 %973
      %975 = vrot.lane.b32.xlu0 %v531, 16
      %v976 = vpop.permute.xlu0 %975
      %977 = vrot.lane.b32.xlu0 %v534, 16
      %v978 = vpop.permute.xlu0 %977
      %979 = vrot.lane.b32.xlu0 %v536, 16
      %v980 = vpop.permute.xlu0 %979
      %981 = vrot.lane.b32.xlu0 %v539, 16
      %v982 = vpop.permute.xlu0 %981
      %983 = vrot.lane.b32.xlu0 %v541, 16
      %v984 = vpop.permute.xlu0 %983
      %985 = vrot.lane.b32.xlu0 %v544, 16
      %v986 = vpop.permute.xlu0 %985
      %987 = vrot.lane.b32.xlu0 %v546, 16
      %v988 = vpop.permute.xlu0 %987
      %989 = vrot.lane.b32.xlu0 %v549, 16
      %v990 = vpop.permute.xlu0 %989
      %991 = vrot.lane.b32.xlu0 %v551, 16
      %v992 = vpop.permute.xlu0 %991
      %993 = vrot.lane.b32.xlu0 %v554, 16
      %v994 = vpop.permute.xlu0 %993
      %995 = vrot.lane.b32.xlu0 %v556, 16
      %v996 = vpop.permute.xlu0 %995
      %997 = vrot.lane.b32.xlu0 %v559, 16
      %v998 = vpop.permute.xlu0 %997
      %999 = vrot.lane.b32.xlu0 %v561, 16
      %v1000 = vpop.permute.xlu0 %999
      %1001 = vrot.lane.b32.xlu0 %v564, 16
      %v1002 = vpop.permute.xlu0 %1001
      %1003 = vrot.lane.b32.xlu0 %v566, 16
      %v1004 = vpop.permute.xlu0 %1003
      %1005 = vrot.lane.b32.xlu0 %v569, 16
      %v1006 = vpop.permute.xlu0 %1005
      %1007 = vrot.lane.b32.xlu0 %v571, 16
      %v1008 = vpop.permute.xlu0 %1007
      %1009 = vrot.lane.b32.xlu0 %v946, 16
      %v1010 = vpop.permute.xlu0 %1009
      %1011 = vrot.lane.b32.xlu0 %v948, 16
      %v1012 = vpop.permute.xlu0 %1011
      %v1045 = vrot.slane %v437, 2
      %v1046 = vrot.slane %v438, 2
      %v1047 = vsel %vm668, %v1045, %v1046
      %v1048 = vrot.slane %v439, 2
      %v1049 = vsel %vm668, %v1046, %v1048
      %1050 = vrot.lane.b32.xlu0 %v676, 20
      %v1051 = vpop.permute.xlu0 %1050
      %1052 = vrot.lane.b32.xlu0 %v678, 20
      %v1053 = vpop.permute.xlu0 %1052
      %1054 = vrot.lane.b32.xlu0 %v681, 20
      %v1055 = vpop.permute.xlu0 %1054
      %1056 = vrot.lane.b32.xlu0 %v683, 20
      %v1057 = vpop.permute.xlu0 %1056
      %1058 = vrot.lane.b32.xlu0 %v686, 20
      %v1059 = vpop.permute.xlu0 %1058
      %1060 = vrot.lane.b32.xlu0 %v688, 20
      %v1061 = vpop.permute.xlu0 %1060
      %1062 = vrot.lane.b32.xlu0 %v691, 20
      %v1063 = vpop.permute.xlu0 %1062
      %1064 = vrot.lane.b32.xlu0 %v693, 20
      %v1065 = vpop.permute.xlu0 %1064
      %1066 = vrot.lane.b32.xlu0 %v696, 20
      %v1067 = vpop.permute.xlu0 %1066
      %1068 = vrot.lane.b32.xlu0 %v698, 20
      %v1069 = vpop.permute.xlu0 %1068
      %1070 = vrot.lane.b32.xlu0 %v701, 20
      %v1071 = vpop.permute.xlu0 %1070
      %1072 = vrot.lane.b32.xlu0 %v703, 20
      %v1073 = vpop.permute.xlu0 %1072
      %1074 = vrot.lane.b32.xlu0 %v706, 20
      %v1075 = vpop.permute.xlu0 %1074
      %1076 = vrot.lane.b32.xlu0 %v708, 20
      %v1077 = vpop.permute.xlu0 %1076
      %1078 = vrot.lane.b32.xlu0 %v711, 20
      %v1079 = vpop.permute.xlu0 %1078
      %1080 = vrot.lane.b32.xlu0 %v713, 20
      %v1081 = vpop.permute.xlu0 %1080
      %1082 = vrot.lane.b32.xlu0 %v716, 20
      %v1083 = vpop.permute.xlu0 %1082
      %1084 = vrot.lane.b32.xlu0 %v718, 20
      %v1085 = vpop.permute.xlu0 %1084
      %1086 = vrot.lane.b32.xlu0 %v721, 20
      %v1087 = vpop.permute.xlu0 %1086
      %1088 = vrot.lane.b32.xlu0 %v723, 20
      %v1089 = vpop.permute.xlu0 %1088
      %1090 = vrot.lane.b32.xlu0 %v726, 20
      %v1091 = vpop.permute.xlu0 %1090
      %1092 = vrot.lane.b32.xlu0 %v728, 20
      %v1093 = vpop.permute.xlu0 %1092
      %1094 = vrot.lane.b32.xlu0 %v731, 20
      %v1095 = vpop.permute.xlu0 %1094
      %1096 = vrot.lane.b32.xlu0 %v733, 20
      %v1097 = vpop.permute.xlu0 %1096
      %1098 = vrot.lane.b32.xlu0 %v736, 20
      %v1099 = vpop.permute.xlu0 %1098
      %1100 = vrot.lane.b32.xlu0 %v738, 20
      %v1101 = vpop.permute.xlu0 %1100
      %1102 = vrot.lane.b32.xlu0 %v741, 20
      %v1103 = vpop.permute.xlu0 %1102
      %1104 = vrot.lane.b32.xlu0 %v743, 20
      %v1105 = vpop.permute.xlu0 %1104
      %1106 = vrot.lane.b32.xlu0 %v746, 20
      %v1107 = vpop.permute.xlu0 %1106
      %1108 = vrot.lane.b32.xlu0 %v748, 20
      %v1109 = vpop.permute.xlu0 %1108
      %1110 = vrot.lane.b32.xlu0 %v1047, 20
      %v1111 = vpop.permute.xlu0 %1110
      %1112 = vrot.lane.b32.xlu0 %v1049, 20
      %v1113 = vpop.permute.xlu0 %1112
      %1148 = vrot.lane.b32.xlu0 %v395, 24
      %v1149 = vpop.permute.xlu0 %1148
      %1150 = vrot.lane.b32.xlu0 %v396, 24
      %v1151 = vpop.permute.xlu0 %1150
      %1152 = vrot.lane.b32.xlu0 %v398, 24
      %v1153 = vpop.permute.xlu0 %1152
      %1154 = vrot.lane.b32.xlu0 %v399, 24
      %v1155 = vpop.permute.xlu0 %1154
      %1156 = vrot.lane.b32.xlu0 %v401, 24
      %v1157 = vpop.permute.xlu0 %1156
      %1158 = vrot.lane.b32.xlu0 %v402, 24
      %v1159 = vpop.permute.xlu0 %1158
      %1160 = vrot.lane.b32.xlu0 %v404, 24
      %v1161 = vpop.permute.xlu0 %1160
      %1162 = vrot.lane.b32.xlu0 %v405, 24
      %v1163 = vpop.permute.xlu0 %1162
      %1164 = vrot.lane.b32.xlu0 %v407, 24
      %v1165 = vpop.permute.xlu0 %1164
      %1166 = vrot.lane.b32.xlu0 %v408, 24
      %v1167 = vpop.permute.xlu0 %1166
      %1168 = vrot.lane.b32.xlu0 %v410, 24
      %v1169 = vpop.permute.xlu0 %1168
      %1170 = vrot.lane.b32.xlu0 %v411, 24
      %v1171 = vpop.permute.xlu0 %1170
      %1172 = vrot.lane.b32.xlu0 %v413, 24
      %v1173 = vpop.permute.xlu0 %1172
      %1174 = vrot.lane.b32.xlu0 %v414, 24
      %v1175 = vpop.permute.xlu0 %1174
      %1176 = vrot.lane.b32.xlu0 %v416, 24
      %v1177 = vpop.permute.xlu0 %1176
      %1178 = vrot.lane.b32.xlu0 %v417, 24
      %v1179 = vpop.permute.xlu0 %1178
      %1180 = vrot.lane.b32.xlu0 %v419, 24
      %v1181 = vpop.permute.xlu0 %1180
      %1182 = vrot.lane.b32.xlu0 %v420, 24
      %v1183 = vpop.permute.xlu0 %1182
      %1184 = vrot.lane.b32.xlu0 %v422, 24
      %v1185 = vpop.permute.xlu0 %1184
      %1186 = vrot.lane.b32.xlu0 %v423, 24
      %v1187 = vpop.permute.xlu0 %1186
      %1188 = vrot.lane.b32.xlu0 %v425, 24
      %v1189 = vpop.permute.xlu0 %1188
      %1190 = vrot.lane.b32.xlu0 %v426, 24
      %v1191 = vpop.permute.xlu0 %1190
      %1192 = vrot.lane.b32.xlu0 %v428, 24
      %v1193 = vpop.permute.xlu0 %1192
      %1194 = vrot.lane.b32.xlu0 %v429, 24
      %v1195 = vpop.permute.xlu0 %1194
      %1196 = vrot.lane.b32.xlu0 %v431, 24
      %v1197 = vpop.permute.xlu0 %1196
      %1198 = vrot.lane.b32.xlu0 %v432, 24
      %v1199 = vpop.permute.xlu0 %1198
      %1200 = vrot.lane.b32.xlu0 %v434, 24
      %v1201 = vpop.permute.xlu0 %1200
      %1202 = vrot.lane.b32.xlu0 %v435, 24
      %v1203 = vpop.permute.xlu0 %1202
      %1204 = vrot.lane.b32.xlu0 %v437, 24
      %v1205 = vpop.permute.xlu0 %1204
      %1206 = vrot.lane.b32.xlu0 %v438, 24
      %v1207 = vpop.permute.xlu0 %1206
      %1208 = vrot.lane.b32.xlu0 %v440, 24
      %v1209 = vpop.permute.xlu0 %1208
      %1210 = vrot.lane.b32.xlu0 %v441, 24
      %v1211 = vpop.permute.xlu0 %1210
      %v1245 = vrot.slane %v440, 1
      %v1246 = vrot.slane %v441, 1
      %v1247 = vsel %vm491, %v1245, %v1246
      %v1248 = vrot.slane %v442, 1
      %v1249 = vsel %vm491, %v1246, %v1248
      %1250 = vrot.lane.b32.xlu0 %v504, 28
      %v1251 = vpop.permute.xlu0 %1250
      %1252 = vrot.lane.b32.xlu0 %v506, 28
      %v1253 = vpop.permute.xlu0 %1252
      %1254 = vrot.lane.b32.xlu0 %v509, 28
      %v1255 = vpop.permute.xlu0 %1254
      %1256 = vrot.lane.b32.xlu0 %v511, 28
      %v1257 = vpop.permute.xlu0 %1256
      %1258 = vrot.lane.b32.xlu0 %v514, 28
      %v1259 = vpop.permute.xlu0 %1258
      %1260 = vrot.lane.b32.xlu0 %v516, 28
      %v1261 = vpop.permute.xlu0 %1260
      %1262 = vrot.lane.b32.xlu0 %v519, 28
      %v1263 = vpop.permute.xlu0 %1262
      %1264 = vrot.lane.b32.xlu0 %v521, 28
      %v1265 = vpop.permute.xlu0 %1264
      %1266 = vrot.lane.b32.xlu0 %v524, 28
      %v1267 = vpop.permute.xlu0 %1266
      %1268 = vrot.lane.b32.xlu0 %v526, 28
      %v1269 = vpop.permute.xlu0 %1268
      %1270 = vrot.lane.b32.xlu0 %v529, 28
      %v1271 = vpop.permute.xlu0 %1270
      %1272 = vrot.lane.b32.xlu0 %v531, 28
      %v1273 = vpop.permute.xlu0 %1272
      %1274 = vrot.lane.b32.xlu0 %v534, 28
      %v1275 = vpop.permute.xlu0 %1274
      %1276 = vrot.lane.b32.xlu0 %v536, 28
      %v1277 = vpop.permute.xlu0 %1276
      %1278 = vrot.lane.b32.xlu0 %v539, 28
      %v1279 = vpop.permute.xlu0 %1278
      %1280 = vrot.lane.b32.xlu0 %v541, 28
      %v1281 = vpop.permute.xlu0 %1280
      %1282 = vrot.lane.b32.xlu0 %v544, 28
      %v1283 = vpop.permute.xlu0 %1282
      %1284 = vrot.lane.b32.xlu0 %v546, 28
      %v1285 = vpop.permute.xlu0 %1284
      %1286 = vrot.lane.b32.xlu0 %v549, 28
      %v1287 = vpop.permute.xlu0 %1286
      %1288 = vrot.lane.b32.xlu0 %v551, 28
      %v1289 = vpop.permute.xlu0 %1288
      %1290 = vrot.lane.b32.xlu0 %v554, 28
      %v1291 = vpop.permute.xlu0 %1290
      %1292 = vrot.lane.b32.xlu0 %v556, 28
      %v1293 = vpop.permute.xlu0 %1292
      %1294 = vrot.lane.b32.xlu0 %v559, 28
      %v1295 = vpop.permute.xlu0 %1294
      %1296 = vrot.lane.b32.xlu0 %v561, 28
      %v1297 = vpop.permute.xlu0 %1296
      %1298 = vrot.lane.b32.xlu0 %v564, 28
      %v1299 = vpop.permute.xlu0 %1298
      %1300 = vrot.lane.b32.xlu0 %v566, 28
      %v1301 = vpop.permute.xlu0 %1300
      %1302 = vrot.lane.b32.xlu0 %v569, 28
      %v1303 = vpop.permute.xlu0 %1302
      %1304 = vrot.lane.b32.xlu0 %v571, 28
      %v1305 = vpop.permute.xlu0 %1304
      %1306 = vrot.lane.b32.xlu0 %v946, 28
      %v1307 = vpop.permute.xlu0 %1306
      %1308 = vrot.lane.b32.xlu0 %v948, 28
      %v1309 = vpop.permute.xlu0 %1308
      %1310 = vrot.lane.b32.xlu0 %v1247, 28
      %v1311 = vpop.permute.xlu0 %1310
      %1312 = vrot.lane.b32.xlu0 %v1249, 28
      %v1313 = vpop.permute.xlu0 %1312
      %v1346 = vrot.slane %v440, 2
      %v1347 = vrot.slane %v441, 2
      %v1348 = vsel %vm668, %v1346, %v1347
      %v1349 = vrot.slane %v442, 2
      %v1350 = vsel %vm668, %v1347, %v1349
      %1351 = vrot.lane.b32.xlu0 %v681, 32
      %v1352 = vpop.permute.xlu0 %1351
      %1353 = vrot.lane.b32.xlu0 %v683, 32
      %v1354 = vpop.permute.xlu0 %1353
      %1355 = vrot.lane.b32.xlu0 %v686, 32
      %v1356 = vpop.permute.xlu0 %1355
      %1357 = vrot.lane.b32.xlu0 %v688, 32
      %v1358 = vpop.permute.xlu0 %1357
      %1359 = vrot.lane.b32.xlu0 %v691, 32
      %v1360 = vpop.permute.xlu0 %1359
      %1361 = vrot.lane.b32.xlu0 %v693, 32
      %v1362 = vpop.permute.xlu0 %1361
      %1363 = vrot.lane.b32.xlu0 %v696, 32
      %v1364 = vpop.permute.xlu0 %1363
      %1365 = vrot.lane.b32.xlu0 %v698, 32
      %v1366 = vpop.permute.xlu0 %1365
      %1367 = vrot.lane.b32.xlu0 %v701, 32
      %v1368 = vpop.permute.xlu0 %1367
      %1369 = vrot.lane.b32.xlu0 %v703, 32
      %v1370 = vpop.permute.xlu0 %1369
      %1371 = vrot.lane.b32.xlu0 %v706, 32
      %v1372 = vpop.permute.xlu0 %1371
      %1373 = vrot.lane.b32.xlu0 %v708, 32
      %v1374 = vpop.permute.xlu0 %1373
      %1375 = vrot.lane.b32.xlu0 %v711, 32
      %v1376 = vpop.permute.xlu0 %1375
      %1377 = vrot.lane.b32.xlu0 %v713, 32
      %v1378 = vpop.permute.xlu0 %1377
      %1379 = vrot.lane.b32.xlu0 %v716, 32
      %v1380 = vpop.permute.xlu0 %1379
      %1381 = vrot.lane.b32.xlu0 %v718, 32
      %v1382 = vpop.permute.xlu0 %1381
      %1383 = vrot.lane.b32.xlu0 %v721, 32
      %v1384 = vpop.permute.xlu0 %1383
      %1385 = vrot.lane.b32.xlu0 %v723, 32
      %v1386 = vpop.permute.xlu0 %1385
      %1387 = vrot.lane.b32.xlu0 %v726, 32
      %v1388 = vpop.permute.xlu0 %1387
      %1389 = vrot.lane.b32.xlu0 %v728, 32
      %v1390 = vpop.permute.xlu0 %1389
      %1391 = vrot.lane.b32.xlu0 %v731, 32
      %v1392 = vpop.permute.xlu0 %1391
      %1393 = vrot.lane.b32.xlu0 %v733, 32
      %v1394 = vpop.permute.xlu0 %1393
      %1395 = vrot.lane.b32.xlu0 %v736, 32
      %v1396 = vpop.permute.xlu0 %1395
      %1397 = vrot.lane.b32.xlu0 %v738, 32
      %v1398 = vpop.permute.xlu0 %1397
      %1399 = vrot.lane.b32.xlu0 %v741, 32
      %v1400 = vpop.permute.xlu0 %1399
      %1401 = vrot.lane.b32.xlu0 %v743, 32
      %v1402 = vpop.permute.xlu0 %1401
      %1403 = vrot.lane.b32.xlu0 %v746, 32
      %v1404 = vpop.permute.xlu0 %1403
      %1405 = vrot.lane.b32.xlu0 %v748, 32
      %v1406 = vpop.permute.xlu0 %1405
      %1407 = vrot.lane.b32.xlu0 %v1047, 32
      %v1408 = vpop.permute.xlu0 %1407
      %1409 = vrot.lane.b32.xlu0 %v1049, 32
      %v1410 = vpop.permute.xlu0 %1409
      %1411 = vrot.lane.b32.xlu0 %v1348, 32
      %v1412 = vpop.permute.xlu0 %1411
      %1413 = vrot.lane.b32.xlu0 %v1350, 32
      %v1414 = vpop.permute.xlu0 %1413
      %vm1447 = vcmask 31744
      %v1448 = vsel %vm1447, %v389, %v573
      %v1449 = vsel %vm1447, %v390, %v575
      %v1450 = vsel %vm1447, %v392, %v577
      %v1451 = vsel %vm1447, %v393, %v579
      %v1452 = vsel %vm1447, %v395, %v581
      %v1453 = vsel %vm1447, %v396, %v583
      %v1454 = vsel %vm1447, %v398, %v585
      %v1455 = vsel %vm1447, %v399, %v587
      %v1456 = vsel %vm1447, %v401, %v589
      %v1457 = vsel %vm1447, %v402, %v591
      %v1458 = vsel %vm1447, %v404, %v593
      %v1459 = vsel %vm1447, %v405, %v595
      %v1460 = vsel %vm1447, %v407, %v597
      %v1461 = vsel %vm1447, %v408, %v599
      %v1462 = vsel %vm1447, %v410, %v601
      %v1463 = vsel %vm1447, %v411, %v603
      %v1464 = vsel %vm1447, %v413, %v605
      %v1465 = vsel %vm1447, %v414, %v607
      %v1466 = vsel %vm1447, %v416, %v609
      %v1467 = vsel %vm1447, %v417, %v611
      %v1468 = vsel %vm1447, %v419, %v613
      %v1469 = vsel %vm1447, %v420, %v615
      %v1470 = vsel %vm1447, %v422, %v617
      %v1471 = vsel %vm1447, %v423, %v619
      %v1472 = vsel %vm1447, %v425, %v621
      %v1473 = vsel %vm1447, %v426, %v623
      %v1474 = vsel %vm1447, %v428, %v625
      %v1475 = vsel %vm1447, %v429, %v627
      %v1476 = vsel %vm1447, %v431, %v629
      %v1477 = vsel %vm1447, %v432, %v631
      %v1478 = vsel %vm1447, %v434, %v633
      %v1479 = vsel %vm1447, %v435, %v635
      %v1480 = vsel %vm333, %v1448, %v750
      %v1481 = vsel %vm333, %v1449, %v752
      %v1482 = vsel %vm333, %v1450, %v754
      %v1483 = vsel %vm333, %v1451, %v756
      %v1484 = vsel %vm333, %v1452, %v758
      %v1485 = vsel %vm333, %v1453, %v760
      %v1486 = vsel %vm333, %v1454, %v762
      %v1487 = vsel %vm333, %v1455, %v764
      %v1488 = vsel %vm333, %v1456, %v766
      %v1489 = vsel %vm333, %v1457, %v768
      %v1490 = vsel %vm333, %v1458, %v770
      %v1491 = vsel %vm333, %v1459, %v772
      %v1492 = vsel %vm333, %v1460, %v774
      %v1493 = vsel %vm333, %v1461, %v776
      %v1494 = vsel %vm333, %v1462, %v778
      %v1495 = vsel %vm333, %v1463, %v780
      %v1496 = vsel %vm333, %v1464, %v782
      %v1497 = vsel %vm333, %v1465, %v784
      %v1498 = vsel %vm333, %v1466, %v786
      %v1499 = vsel %vm333, %v1467, %v788
      %v1500 = vsel %vm333, %v1468, %v790
      %v1501 = vsel %vm333, %v1469, %v792
      %v1502 = vsel %vm333, %v1470, %v794
      %v1503 = vsel %vm333, %v1471, %v796
      %v1504 = vsel %vm333, %v1472, %v798
      %v1505 = vsel %vm333, %v1473, %v800
      %v1506 = vsel %vm333, %v1474, %v802
      %v1507 = vsel %vm333, %v1475, %v804
      %v1508 = vsel %vm333, %v1476, %v806
      %v1509 = vsel %vm333, %v1477, %v808
      %v1510 = vsel %vm333, %v1478, %v810
      %v1511 = vsel %vm333, %v1479, %v812
      %vm1512 = vcmask 97280
      %v1513 = vsel %vm1512, %v1480, %v848
      %v1514 = vsel %vm1512, %v1481, %v850
      %v1515 = vsel %vm1512, %v1482, %v852
      %v1516 = vsel %vm1512, %v1483, %v854
      %v1517 = vsel %vm1512, %v1484, %v856
      %v1518 = vsel %vm1512, %v1485, %v858
      %v1519 = vsel %vm1512, %v1486, %v860
      %v1520 = vsel %vm1512, %v1487, %v862
      %v1521 = vsel %vm1512, %v1488, %v864
      %v1522 = vsel %vm1512, %v1489, %v866
      %v1523 = vsel %vm1512, %v1490, %v868
      %v1524 = vsel %vm1512, %v1491, %v870
      %v1525 = vsel %vm1512, %v1492, %v872
      %v1526 = vsel %vm1512, %v1493, %v874
      %v1527 = vsel %vm1512, %v1494, %v876
      %v1528 = vsel %vm1512, %v1495, %v878
      %v1529 = vsel %vm1512, %v1496, %v880
      %v1530 = vsel %vm1512, %v1497, %v882
      %v1531 = vsel %vm1512, %v1498, %v884
      %v1532 = vsel %vm1512, %v1499, %v886
      %v1533 = vsel %vm1512, %v1500, %v888
      %v1534 = vsel %vm1512, %v1501, %v890
      %v1535 = vsel %vm1512, %v1502, %v892
      %v1536 = vsel %vm1512, %v1503, %v894
      %v1537 = vsel %vm1512, %v1504, %v896
      %v1538 = vsel %vm1512, %v1505, %v898
      %v1539 = vsel %vm1512, %v1506, %v900
      %v1540 = vsel %vm1512, %v1507, %v902
      %v1541 = vsel %vm1512, %v1508, %v904
      %v1542 = vsel %vm1512, %v1509, %v906
      %v1543 = vsel %vm1512, %v1510, %v908
      %v1544 = vsel %vm1512, %v1511, %v910
      %vm1545 = vcmask 130048
      %v1546 = vsel %vm1545, %v1513, %v950
      %v1547 = vsel %vm1545, %v1514, %v952
      %v1548 = vsel %vm1545, %v1515, %v954
      %v1549 = vsel %vm1545, %v1516, %v956
      %v1550 = vsel %vm1545, %v1517, %v958
      %v1551 = vsel %vm1545, %v1518, %v960
      %v1552 = vsel %vm1545, %v1519, %v962
      %v1553 = vsel %vm1545, %v1520, %v964
      %v1554 = vsel %vm1545, %v1521, %v966
      %v1555 = vsel %vm1545, %v1522, %v968
      %v1556 = vsel %vm1545, %v1523, %v970
      %v1557 = vsel %vm1545, %v1524, %v972
      %v1558 = vsel %vm1545, %v1525, %v974
      %v1559 = vsel %vm1545, %v1526, %v976
      %v1560 = vsel %vm1545, %v1527, %v978
      %v1561 = vsel %vm1545, %v1528, %v980
      %v1562 = vsel %vm1545, %v1529, %v982
      %v1563 = vsel %vm1545, %v1530, %v984
      %v1564 = vsel %vm1545, %v1531, %v986
      %v1565 = vsel %vm1545, %v1532, %v988
      %v1566 = vsel %vm1545, %v1533, %v990
      %v1567 = vsel %vm1545, %v1534, %v992
      %v1568 = vsel %vm1545, %v1535, %v994
      %v1569 = vsel %vm1545, %v1536, %v996
      %v1570 = vsel %vm1545, %v1537, %v998
      %v1571 = vsel %vm1545, %v1538, %v1000
      %v1572 = vsel %vm1545, %v1539, %v1002
      %v1573 = vsel %vm1545, %v1540, %v1004
      %v1574 = vsel %vm1545, %v1541, %v1006
      %v1575 = vsel %vm1545, %v1542, %v1008
      %v1576 = vsel %vm1545, %v1543, %v1010
      %v1577 = vsel %vm1545, %v1544, %v1012
      %vm1578 = vcmask 162816
      %v1579 = vsel %vm1578, %v1546, %v1051
      %v1580 = vsel %vm1578, %v1547, %v1053
      %v1581 = vsel %vm1578, %v1548, %v1055
      %v1582 = vsel %vm1578, %v1549, %v1057
      %v1583 = vsel %vm1578, %v1550, %v1059
      %v1584 = vsel %vm1578, %v1551, %v1061
      %v1585 = vsel %vm1578, %v1552, %v1063
      %v1586 = vsel %vm1578, %v1553, %v1065
      %v1587 = vsel %vm1578, %v1554, %v1067
      %v1588 = vsel %vm1578, %v1555, %v1069
      %v1589 = vsel %vm1578, %v1556, %v1071
      %v1590 = vsel %vm1578, %v1557, %v1073
      %v1591 = vsel %vm1578, %v1558, %v1075
      %v1592 = vsel %vm1578, %v1559, %v1077
      %v1593 = vsel %vm1578, %v1560, %v1079
      %v1594 = vsel %vm1578, %v1561, %v1081
      %v1595 = vsel %vm1578, %v1562, %v1083
      %v1596 = vsel %vm1578, %v1563, %v1085
      %v1597 = vsel %vm1578, %v1564, %v1087
      %v1598 = vsel %vm1578, %v1565, %v1089
      %v1599 = vsel %vm1578, %v1566, %v1091
      %v1600 = vsel %vm1578, %v1567, %v1093
      %v1601 = vsel %vm1578, %v1568, %v1095
      %v1602 = vsel %vm1578, %v1569, %v1097
      %v1603 = vsel %vm1578, %v1570, %v1099
      %v1604 = vsel %vm1578, %v1571, %v1101
      %v1605 = vsel %vm1578, %v1572, %v1103
      %v1606 = vsel %vm1578, %v1573, %v1105
      %v1607 = vsel %vm1578, %v1574, %v1107
      %v1608 = vsel %vm1578, %v1575, %v1109
      %v1609 = vsel %vm1578, %v1576, %v1111
      %v1610 = vsel %vm1578, %v1577, %v1113
      %vm1611 = vcmask 195584
      %v1612 = vsel %vm1611, %v1579, %v1149
      %v1613 = vsel %vm1611, %v1580, %v1151
      %v1614 = vsel %vm1611, %v1581, %v1153
      %v1615 = vsel %vm1611, %v1582, %v1155
      %v1616 = vsel %vm1611, %v1583, %v1157
      %v1617 = vsel %vm1611, %v1584, %v1159
      %v1618 = vsel %vm1611, %v1585, %v1161
      %v1619 = vsel %vm1611, %v1586, %v1163
      %v1620 = vsel %vm1611, %v1587, %v1165
      %v1621 = vsel %vm1611, %v1588, %v1167
      %v1622 = vsel %vm1611, %v1589, %v1169
      %v1623 = vsel %vm1611, %v1590, %v1171
      %v1624 = vsel %vm1611, %v1591, %v1173
      %v1625 = vsel %vm1611, %v1592, %v1175
      %v1626 = vsel %vm1611, %v1593, %v1177
      %v1627 = vsel %vm1611, %v1594, %v1179
      %v1628 = vsel %vm1611, %v1595, %v1181
      %v1629 = vsel %vm1611, %v1596, %v1183
      %v1630 = vsel %vm1611, %v1597, %v1185
      %v1631 = vsel %vm1611, %v1598, %v1187
      %v1632 = vsel %vm1611, %v1599, %v1189
      %v1633 = vsel %vm1611, %v1600, %v1191
      %v1634 = vsel %vm1611, %v1601, %v1193
      %v1635 = vsel %vm1611, %v1602, %v1195
      %v1636 = vsel %vm1611, %v1603, %v1197
      %v1637 = vsel %vm1611, %v1604, %v1199
      %v1638 = vsel %vm1611, %v1605, %v1201
      %v1639 = vsel %vm1611, %v1606, %v1203
      %v1640 = vsel %vm1611, %v1607, %v1205
      %v1641 = vsel %vm1611, %v1608, %v1207
      %v1642 = vsel %vm1611, %v1609, %v1209
      %v1643 = vsel %vm1611, %v1610, %v1211
      %vm1644 = vcmask 228352
      %v1645 = vsel %vm1644, %v1612, %v1251
      %v1646 = vsel %vm1644, %v1613, %v1253
      %v1647 = vsel %vm1644, %v1614, %v1255
      %v1648 = vsel %vm1644, %v1615, %v1257
      %v1649 = vsel %vm1644, %v1616, %v1259
      %v1650 = vsel %vm1644, %v1617, %v1261
      %v1651 = vsel %vm1644, %v1618, %v1263
      %v1652 = vsel %vm1644, %v1619, %v1265
      %v1653 = vsel %vm1644, %v1620, %v1267
      %v1654 = vsel %vm1644, %v1621, %v1269
      %v1655 = vsel %vm1644, %v1622, %v1271
      %v1656 = vsel %vm1644, %v1623, %v1273
      %v1657 = vsel %vm1644, %v1624, %v1275
      %v1658 = vsel %vm1644, %v1625, %v1277
      %v1659 = vsel %vm1644, %v1626, %v1279
      %v1660 = vsel %vm1644, %v1627, %v1281
      %v1661 = vsel %vm1644, %v1628, %v1283
      %v1662 = vsel %vm1644, %v1629, %v1285
      %v1663 = vsel %vm1644, %v1630, %v1287
      %v1664 = vsel %vm1644, %v1631, %v1289
      %v1665 = vsel %vm1644, %v1632, %v1291
      %v1666 = vsel %vm1644, %v1633, %v1293
      %v1667 = vsel %vm1644, %v1634, %v1295
      %v1668 = vsel %vm1644, %v1635, %v1297
      %v1669 = vsel %vm1644, %v1636, %v1299
      %v1670 = vsel %vm1644, %v1637, %v1301
      %v1671 = vsel %vm1644, %v1638, %v1303
      %v1672 = vsel %vm1644, %v1639, %v1305
      %v1673 = vsel %vm1644, %v1640, %v1307
      %v1674 = vsel %vm1644, %v1641, %v1309
      %v1675 = vsel %vm1644, %v1642, %v1311
      %v1676 = vsel %vm1644, %v1643, %v1313
      %vm1677 = vcmask 261120
      %v1678 = vsel %vm1677, %v1645, %v1352
      %v1679 = vsel %vm1677, %v1646, %v1354
      %v1680 = vsel %vm1677, %v1647, %v1356
      %v1681 = vsel %vm1677, %v1648, %v1358
      %v1682 = vsel %vm1677, %v1649, %v1360
      %v1683 = vsel %vm1677, %v1650, %v1362
      %v1684 = vsel %vm1677, %v1651, %v1364
      %v1685 = vsel %vm1677, %v1652, %v1366
      %v1686 = vsel %vm1677, %v1653, %v1368
      %v1687 = vsel %vm1677, %v1654, %v1370
      %v1688 = vsel %vm1677, %v1655, %v1372
      %v1689 = vsel %vm1677, %v1656, %v1374
      %v1690 = vsel %vm1677, %v1657, %v1376
      %v1691 = vsel %vm1677, %v1658, %v1378
      %v1692 = vsel %vm1677, %v1659, %v1380
      %v1693 = vsel %vm1677, %v1660, %v1382
      %v1694 = vsel %vm1677, %v1661, %v1384
      %v1695 = vsel %vm1677, %v1662, %v1386
      %v1696 = vsel %vm1677, %v1663, %v1388
      %v1697 = vsel %vm1677, %v1664, %v1390
      %v1698 = vsel %vm1677, %v1665, %v1392
      %v1699 = vsel %vm1677, %v1666, %v1394
      %v1700 = vsel %vm1677, %v1667, %v1396
      %v1701 = vsel %vm1677, %v1668, %v1398
      %v1702 = vsel %vm1677, %v1669, %v1400
      %v1703 = vsel %vm1677, %v1670, %v1402
      %v1704 = vsel %vm1677, %v1671, %v1404
      %v1705 = vsel %vm1677, %v1672, %v1406
      %v1706 = vsel %vm1677, %v1673, %v1408
      %v1707 = vsel %vm1677, %v1674, %v1410
      %v1708 = vsel %vm1677, %v1675, %v1412
      %v1709 = vsel %vm1677, %v1676, %v1414
      %v1710 = vld [vmem:[%s1] sm:$0xff]
      %v1711 = vld [vmem:[%s1 + $0x8] sm:$0xff]
      %v1712 = vld [vmem:[%s1 + $0x10] sm:$0xff]
      %v1713 = vld [vmem:[%s1 + $0x18] sm:$0xff]
      %v1714 = vld [vmem:[%s1 + $0x20] sm:$0xf]
      %v1715 = vld [vmem:[%s2] sm:$0x1]
      %v1717 = vlaneseq
      %v1718 = vshrl.u32 %v1717, 7
      %v1719 = vsub.s32 0, %v1718
      %v1720 = vrot.slane %v1715, %v1719
      %vm1722 = vcmask 293888
      %v1724 = vsel %vm1722, %v1678, 0
      %v1727 = vsel %vm1722, %v1679, 0
      %v1730 = vsel %vm1722, %v1680, 0
      %v1733 = vsel %vm1722, %v1681, 0
      %v1736 = vsel %vm1722, %v1682, 0
      %v1739 = vsel %vm1722, %v1683, 0
      %v1742 = vsel %vm1722, %v1684, 0
      %v1745 = vsel %vm1722, %v1685, 0
      %v1748 = vsel %vm1722, %v1686, 0
      %v1751 = vsel %vm1722, %v1687, 0
      %v1754 = vsel %vm1722, %v1688, 0
      %v1757 = vsel %vm1722, %v1689, 0
      %v1760 = vsel %vm1722, %v1690, 0
      %v1763 = vsel %vm1722, %v1691, 0
      %v1766 = vsel %vm1722, %v1692, 0
      %v1769 = vsel %vm1722, %v1693, 0
      %v1772 = vsel %vm1722, %v1694, 0
      %v1775 = vsel %vm1722, %v1695, 0
      %v1778 = vsel %vm1722, %v1696, 0
      %v1781 = vsel %vm1722, %v1697, 0
      %v1784 = vsel %vm1722, %v1698, 0
      %v1787 = vsel %vm1722, %v1699, 0
      %v1790 = vsel %vm1722, %v1700, 0
      %v1793 = vsel %vm1722, %v1701, 0
      %v1796 = vsel %vm1722, %v1702, 0
      %v1799 = vsel %vm1722, %v1703, 0
      %v1802 = vsel %vm1722, %v1704, 0
      %v1805 = vsel %vm1722, %v1705, 0
      %v1808 = vsel %vm1722, %v1706, 0
      %v1811 = vsel %vm1722, %v1707, 0
      %v1814 = vsel %vm1722, %v1708, 0
      %v1817 = vsel %vm1722, %v1709, 0
      %vm1819 = vcmask 1043456
      %v1821 = vsel %vm1819, %v1714, 0
      %1823 = vmatprep.subr.mxu0 0.0
      %1824 = vmatpush1.msra.mxu0 %v1710
      %1825 = vmatprep.subr.mxu0 0.0
      %1826 = vmatpush1.msra.mxu0 %v1711
      %1827 = vmatprep.subr.mxu0 0.0
      %1828 = vmatpush1.msra.mxu0 %v1712
      %1829 = vmatprep.subr.mxu0 0.0
      %1830 = vmatpush1.msra.mxu0 %v1713
      %1831 = vmatprep.subr.mxu0 0.0
      %1832 = vmatpush1.msra.mxu0 %v1821
      %1833 = vmatprep.subr.mxu0 0.0
      %1834 = vmatpush1.msra.mxu0 0.0
      %1835 = vmatprep.subr.mxu0 0.0
      %1836 = vmatpush1.msra.mxu0 0.0
      %1837 = vmatprep.subr.mxu0 0.0
      %1838 = vmatpush1.msra.mxu0 0.0
      %1839 = vmatprep.subr.mxu0 0.0
      %1840 = vmatpush1.msra.mxu0 0.0
      %1841 = vmatprep.subr.mxu0 0.0
      %1842 = vmatpush1.msra.mxu0 0.0
      %1843 = vmatprep.subr.mxu0 0.0
      %1844 = vmatpush1.msra.mxu0 0.0
      %1845 = vmatprep.subr.mxu0 0.0
      %1846 = vmatpush1.msra.mxu0 0.0
      %1847 = vmatprep.subr.mxu0 0.0
      %1848 = vmatpush1.msra.mxu0 0.0
      %1849 = vmatprep.subr.mxu0 0.0
      %1850 = vmatpush1.msra.mxu0 0.0
      %1851 = vmatprep.subr.mxu0 0.0
      %1852 = vmatpush1.msra.mxu0 0.0
      %1853 = vmatprep.subr.mxu0 0.0
      %1854 = vmatpush1.msra.mxu0 0.0
      %1855 = vmatprep.subr.mxu0 0.0
      %1856 = vmatpush1.msra.mxu0 0.0
      %1857 = vmatprep.subr.mxu0 0.0
      %1858 = vmatpush1.msra.mxu0 0.0
      %1859 = vmatprep.subr.mxu0 0.0
      %1860 = vmatpush1.msra.mxu0 0.0
      %1861 = vmatprep.subr.mxu0 0.0
      %1862 = vmatpush1.msra.mxu0 0.0
      %1863 = vmatprep.subr.mxu0 0.0
      %1864 = vmatpush1.msra.mxu0 0.0
      %1865 = vmatprep.subr.mxu0 0.0
      %1866 = vmatpush1.msra.mxu0 0.0
      %1867 = vmatprep.subr.mxu0 0.0
      %1868 = vmatpush1.msra.mxu0 0.0
      %1869 = vmatprep.subr.mxu0 0.0
      %1870 = vmatpush1.msra.mxu0 0.0
      %1871 = vmatprep.subr.mxu0 0.0
      %1872 = vmatpush1.msra.mxu0 0.0
      %1873 = vmatprep.subr.mxu0 0.0
      %1874 = vmatpush1.msra.mxu0 0.0
      %1875 = vmatprep.subr.mxu0 0.0
      %1876 = vmatpush1.msra.mxu0 0.0
      %1877 = vmatprep.subr.mxu0 0.0
      %1878 = vmatpush1.msra.mxu0 0.0
      %1879 = vmatprep.subr.mxu0 0.0
      %1880 = vmatpush1.msra.mxu0 0.0
      %1881 = vmatprep.subr.mxu0 0.0
      %1882 = vmatpush1.msra.mxu0 0.0
      %1883 = vmatprep.subr.mxu0 0.0
      %1884 = vmatpush1.msra.mxu0 0.0
      %1885 = vmatprep.subr.mxu0 0.0
      %1886 = vmatpush1.msra.mxu0 0.0
      %1887 = vmatprep.mubr.f32.mxu0 0.0
      %1888 = vmatmul.mubr.f32.gmra.mrb[0].mxu0 %v1724
      %v1889 = vpop.f32.mrb[0].mxu0
      %v1890 = vadd.f32 %v1720, %v1889
      %v1891 = vpop.f32.mrb[0].mxu0
      %1892 = vmatprep.mubr.f32.mxu0 0.0
      %1893 = vmatmul.mubr.f32.gmra.mrb[0].mxu0 %v1727
      %v1894 = vpop.f32.mrb[0].mxu0
      %v1895 = vadd.f32 %v1720, %v1894
      %v1896 = vpop.f32.mrb[0].mxu0
      %1897 = vmatprep.mubr.f32.mxu0 0.0
      %1898 = vmatmul.mubr.f32.gmra.mrb[0].mxu0 %v1730
      %v1899 = vpop.f32.mrb[0].mxu0
      %v1900 = vadd.f32 %v1720, %v1899
      %v1901 = vpop.f32.mrb[0].mxu0
      %1902 = vmatprep.mubr.f32.mxu0 0.0
      %1903 = vmatmul.mubr.f32.gmra.mrb[0].mxu0 %v1733
      %v1904 = vpop.f32.mrb[0].mxu0
      %v1905 = vadd.f32 %v1720, %v1904
      %v1906 = vpop.f32.mrb[0].mxu0
      %1907 = vmatprep.mubr.f32.mxu0 0.0
      %1908 = vmatmul.mubr.f32.gmra.mrb[0].mxu0 %v1736
      %v1909 = vpop.f32.mrb[0].mxu0
      %v1910 = vadd.f32 %v1720, %v1909
      %v1911 = vpop.f32.mrb[0].mxu0
      %1912 = vmatprep.mubr.f32.mxu0 0.0
      %1913 = vmatmul.mubr.f32.gmra.mrb[0].mxu0 %v1739
      %v1914 = vpop.f32.mrb[0].mxu0
      %v1915 = vadd.f32 %v1720, %v1914
      %v1916 = vpop.f32.mrb[0].mxu0
      %1917 = vmatprep.mubr.f32.mxu0 0.0
      %1918 = vmatmul.mubr.f32.gmra.mrb[0].mxu0 %v1742
      %v1919 = vpop.f32.mrb[0].mxu0
      %v1920 = vadd.f32 %v1720, %v1919
      %v1921 = vpop.f32.mrb[0].mxu0
      %1922 = vmatprep.mubr.f32.mxu0 0.0
      %1923 = vmatmul.mubr.f32.gmra.mrb[0].mxu0 %v1745
      %v1924 = vpop.f32.mrb[0].mxu0
      %v1925 = vadd.f32 %v1720, %v1924
      %v1926 = vpop.f32.mrb[0].mxu0
      %1927 = vmatprep.mubr.f32.mxu0 0.0
      %1928 = vmatmul.mubr.f32.gmra.mrb[0].mxu0 %v1748
      %v1929 = vpop.f32.mrb[0].mxu0
      %v1930 = vadd.f32 %v1720, %v1929
      %v1931 = vpop.f32.mrb[0].mxu0
      %1932 = vmatprep.mubr.f32.mxu0 0.0
      %1933 = vmatmul.mubr.f32.gmra.mrb[0].mxu0 %v1751
      %v1934 = vpop.f32.mrb[0].mxu0
      %v1935 = vadd.f32 %v1720, %v1934
      %v1936 = vpop.f32.mrb[0].mxu0
      %1937 = vmatprep.mubr.f32.mxu0 0.0
      %1938 = vmatmul.mubr.f32.gmra.mrb[0].mxu0 %v1754
      %v1939 = vpop.f32.mrb[0].mxu0
      %v1940 = vadd.f32 %v1720, %v1939
      %v1941 = vpop.f32.mrb[0].mxu0
      %1942 = vmatprep.mubr.f32.mxu0 0.0
      %1943 = vmatmul.mubr.f32.gmra.mrb[0].mxu0 %v1757
      %v1944 = vpop.f32.mrb[0].mxu0
      %v1945 = vadd.f32 %v1720, %v1944
      %v1946 = vpop.f32.mrb[0].mxu0
      %1947 = vmatprep.mubr.f32.mxu0 0.0
      %1948 = vmatmul.mubr.f32.gmra.mrb[0].mxu0 %v1760
      %v1949 = vpop.f32.mrb[0].mxu0
      %v1950 = vadd.f32 %v1720, %v1949
      %v1951 = vpop.f32.mrb[0].mxu0
      %1952 = vmatprep.mubr.f32.mxu0 0.0
      %1953 = vmatmul.mubr.f32.gmra.mrb[0].mxu0 %v1763
      %v1954 = vpop.f32.mrb[0].mxu0
      %v1955 = vadd.f32 %v1720, %v1954
      %v1956 = vpop.f32.mrb[0].mxu0
      %1957 = vmatprep.mubr.f32.mxu0 0.0
      %1958 = vmatmul.mubr.f32.gmra.mrb[0].mxu0 %v1766
      %v1959 = vpop.f32.mrb[0].mxu0
      %v1960 = vadd.f32 %v1720, %v1959
      %v1961 = vpop.f32.mrb[0].mxu0
      %1962 = vmatprep.mubr.f32.mxu0 0.0
      %1963 = vmatmul.mubr.f32.gmra.mrb[0].mxu0 %v1769
      %v1964 = vpop.f32.mrb[0].mxu0
      %v1965 = vadd.f32 %v1720, %v1964
      %v1966 = vpop.f32.mrb[0].mxu0
      %1967 = vmatprep.mubr.f32.mxu0 0.0
      %1968 = vmatmul.mubr.f32.gmra.mrb[0].mxu0 %v1772
      %v1969 = vpop.f32.mrb[0].mxu0
      %v1970 = vadd.f32 %v1720, %v1969
      %v1971 = vpop.f32.mrb[0].mxu0
      %1972 = vmatprep.mubr.f32.mxu0 0.0
      %1973 = vmatmul.mubr.f32.gmra.mrb[0].mxu0 %v1775
      %v1974 = vpop.f32.mrb[0].mxu0
      %v1975 = vadd.f32 %v1720, %v1974
      %v1976 = vpop.f32.mrb[0].mxu0
      %1977 = vmatprep.mubr.f32.mxu0 0.0
      %1978 = vmatmul.mubr.f32.gmra.mrb[0].mxu0 %v1778
      %v1979 = vpop.f32.mrb[0].mxu0
      %v1980 = vadd.f32 %v1720, %v1979
      %v1981 = vpop.f32.mrb[0].mxu0
      %1982 = vmatprep.mubr.f32.mxu0 0.0
      %1983 = vmatmul.mubr.f32.gmra.mrb[0].mxu0 %v1781
      %v1984 = vpop.f32.mrb[0].mxu0
      %v1985 = vadd.f32 %v1720, %v1984
      %v1986 = vpop.f32.mrb[0].mxu0
      %1987 = vmatprep.mubr.f32.mxu0 0.0
      %1988 = vmatmul.mubr.f32.gmra.mrb[0].mxu0 %v1784
      %v1989 = vpop.f32.mrb[0].mxu0
      %v1990 = vadd.f32 %v1720, %v1989
      %v1991 = vpop.f32.mrb[0].mxu0
      %1992 = vmatprep.mubr.f32.mxu0 0.0
      %1993 = vmatmul.mubr.f32.gmra.mrb[0].mxu0 %v1787
      %v1994 = vpop.f32.mrb[0].mxu0
      %v1995 = vadd.f32 %v1720, %v1994
      %v1996 = vpop.f32.mrb[0].mxu0
      %1997 = vmatprep.mubr.f32.mxu0 0.0
      %1998 = vmatmul.mubr.f32.gmra.mrb[0].mxu0 %v1790
      %v1999 = vpop.f32.mrb[0].mxu0
      %v2000 = vadd.f32 %v1720, %v1999
      %v2001 = vpop.f32.mrb[0].mxu0
      %2002 = vmatprep.mubr.f32.mxu0 0.0
      %2003 = vmatmul.mubr.f32.gmra.mrb[0].mxu0 %v1793
      %v2004 = vpop.f32.mrb[0].mxu0
      %v2005 = vadd.f32 %v1720, %v2004
      %v2006 = vpop.f32.mrb[0].mxu0
      %2007 = vmatprep.mubr.f32.mxu0 0.0
      %2008 = vmatmul.mubr.f32.gmra.mrb[0].mxu0 %v1796
      %v2009 = vpop.f32.mrb[0].mxu0
      %v2010 = vadd.f32 %v1720, %v2009
      %v2011 = vpop.f32.mrb[0].mxu0
      %2012 = vmatprep.mubr.f32.mxu0 0.0
      %2013 = vmatmul.mubr.f32.gmra.mrb[0].mxu0 %v1799
      %v2014 = vpop.f32.mrb[0].mxu0
      %v2015 = vadd.f32 %v1720, %v2014
      %v2016 = vpop.f32.mrb[0].mxu0
      %2017 = vmatprep.mubr.f32.mxu0 0.0
      %2018 = vmatmul.mubr.f32.gmra.mrb[0].mxu0 %v1802
      %v2019 = vpop.f32.mrb[0].mxu0
      %v2020 = vadd.f32 %v1720, %v2019
      %v2021 = vpop.f32.mrb[0].mxu0
      %2022 = vmatprep.mubr.f32.mxu0 0.0
      %2023 = vmatmul.mubr.f32.gmra.mrb[0].mxu0 %v1805
      %v2024 = vpop.f32.mrb[0].mxu0
      %v2025 = vadd.f32 %v1720, %v2024
      %v2026 = vpop.f32.mrb[0].mxu0
      %2027 = vmatprep.mubr.f32.mxu0 0.0
      %2028 = vmatmul.mubr.f32.gmra.mrb[0].mxu0 %v1808
      %v2029 = vpop.f32.mrb[0].mxu0
      %v2030 = vadd.f32 %v1720, %v2029
      %v2031 = vpop.f32.mrb[0].mxu0
      %2032 = vmatprep.mubr.f32.mxu0 0.0
      %2033 = vmatmul.mubr.f32.gmra.mrb[0].mxu0 %v1811
      %v2034 = vpop.f32.mrb[0].mxu0
      %v2035 = vadd.f32 %v1720, %v2034
      %v2036 = vpop.f32.mrb[0].mxu0
      %2037 = vmatprep.mubr.f32.mxu0 0.0
      %2038 = vmatmul.mubr.f32.gmra.mrb[0].mxu0 %v1814
      %v2039 = vpop.f32.mrb[0].mxu0
      %v2040 = vadd.f32 %v1720, %v2039
      %v2041 = vpop.f32.mrb[0].mxu0
      %2042 = vmatprep.mubr.f32.mxu0 0.0
      %2043 = vmatmul.mubr.f32.gmra.mrb[0].mxu0 %v1817
      %v2044 = vpop.f32.mrb[0].mxu0
      %v2045 = vadd.f32 %v1720, %v2044
      %v2046 = vpop.f32.mrb[0].mxu0
      %2047 = vdwg.mxu0
      %v2048 = vsel %vm333, %v1890, 0.0
      %v2049 = vsel %vm333, %v1895, 0.0
      %v2050 = vadd.f32 %v2048, %v2049
      %v2051 = vsel %vm333, %v1900, 0.0
      %v2052 = vadd.f32 %v2050, %v2051
      %v2053 = vsel %vm333, %v1905, 0.0
      %v2054 = vadd.f32 %v2052, %v2053
      %v2055 = vsel %vm333, %v1910, 0.0
      %v2056 = vadd.f32 %v2054, %v2055
      %v2057 = vsel %vm333, %v1915, 0.0
      %v2058 = vadd.f32 %v2056, %v2057
      %v2059 = vsel %vm333, %v1920, 0.0
      %v2060 = vadd.f32 %v2058, %v2059
      %v2061 = vsel %vm333, %v1925, 0.0
      %v2062 = vadd.f32 %v2060, %v2061
      %v2063 = vsel %vm333, %v1930, 0.0
      %v2064 = vadd.f32 %v2062, %v2063
      %v2065 = vsel %vm333, %v1935, 0.0
      %v2066 = vadd.f32 %v2064, %v2065
      %v2067 = vsel %vm333, %v1940, 0.0
      %v2068 = vadd.f32 %v2066, %v2067
      %v2069 = vsel %vm333, %v1945, 0.0
      %v2070 = vadd.f32 %v2068, %v2069
      %v2071 = vsel %vm333, %v1950, 0.0
      %v2072 = vadd.f32 %v2070, %v2071
      %v2073 = vsel %vm333, %v1955, 0.0
      %v2074 = vadd.f32 %v2072, %v2073
      %v2075 = vsel %vm333, %v1960, 0.0
      %v2076 = vadd.f32 %v2074, %v2075
      %v2077 = vsel %vm333, %v1965, 0.0
      %v2078 = vadd.f32 %v2076, %v2077
      %v2079 = vsel %vm333, %v1970, 0.0
      %v2080 = vadd.f32 %v2078, %v2079
      %v2081 = vsel %vm333, %v1975, 0.0
      %v2082 = vadd.f32 %v2080, %v2081
      %v2083 = vsel %vm333, %v1980, 0.0
      %v2084 = vadd.f32 %v2082, %v2083
      %v2085 = vsel %vm333, %v1985, 0.0
      %v2086 = vadd.f32 %v2084, %v2085
      %v2087 = vsel %vm333, %v1990, 0.0
      %v2088 = vadd.f32 %v2086, %v2087
      %v2089 = vsel %vm333, %v1995, 0.0
      %v2090 = vadd.f32 %v2088, %v2089
      %v2091 = vsel %vm333, %v2000, 0.0
      %v2092 = vadd.f32 %v2090, %v2091
      %v2093 = vsel %vm333, %v2005, 0.0
      %v2094 = vadd.f32 %v2092, %v2093
      %v2095 = vsel %vm333, %v2010, 0.0
      %v2096 = vadd.f32 %v2094, %v2095
      %v2097 = vsel %vm333, %v2015, 0.0
      %v2098 = vadd.f32 %v2096, %v2097
      %v2099 = vsel %vm333, %v2020, 0.0
      %v2100 = vadd.f32 %v2098, %v2099
      %v2101 = vsel %vm333, %v2025, 0.0
      %v2102 = vadd.f32 %v2100, %v2101
      %v2103 = vsel %vm333, %v2030, 0.0
      %v2104 = vadd.f32 %v2102, %v2103
      %v2105 = vsel %vm333, %v2035, 0.0
      %v2106 = vadd.f32 %v2104, %v2105
      %v2107 = vsel %vm333, %v2040, 0.0
      %v2108 = vadd.f32 %v2106, %v2107
      %v2109 = vsel %vm333, %v2045, 0.0
      %v2110 = vadd.f32 %v2108, %v2109
      %v2111 = vrot.slane %v2110, 4
      %v2112 = vadd.f32 %v2110, %v2111
      %v2113 = vrot.slane %v2112, 2
      %v2114 = vadd.f32 %v2112, %v2113
      %v2115 = vrot.slane %v2114, 1
      %v2116 = vadd.f32 %v2114, %v2115
      %v2117 = vmul.f32 %v1890, %v1890
      %v2118 = vmul.f32 %v1895, %v1895
      %v2119 = vmul.f32 %v1900, %v1900
      %v2120 = vmul.f32 %v1905, %v1905
      %v2121 = vmul.f32 %v1910, %v1910
      %v2122 = vmul.f32 %v1915, %v1915
      %v2123 = vmul.f32 %v1920, %v1920
      %v2124 = vmul.f32 %v1925, %v1925
      %v2125 = vmul.f32 %v1930, %v1930
      %v2126 = vmul.f32 %v1935, %v1935
      %v2127 = vmul.f32 %v1940, %v1940
      %v2128 = vmul.f32 %v1945, %v1945
      %v2129 = vmul.f32 %v1950, %v1950
      %v2130 = vmul.f32 %v1955, %v1955
      %v2131 = vmul.f32 %v1960, %v1960
      %v2132 = vmul.f32 %v1965, %v1965
      %v2133 = vmul.f32 %v1970, %v1970
      %v2134 = vmul.f32 %v1975, %v1975
      %v2135 = vmul.f32 %v1980, %v1980
      %v2136 = vmul.f32 %v1985, %v1985
      %v2137 = vmul.f32 %v1990, %v1990
      %v2138 = vmul.f32 %v1995, %v1995
      %v2139 = vmul.f32 %v2000, %v2000
      %v2140 = vmul.f32 %v2005, %v2005
      %v2141 = vmul.f32 %v2010, %v2010
      %v2142 = vmul.f32 %v2015, %v2015
      %v2143 = vmul.f32 %v2020, %v2020
      %v2144 = vmul.f32 %v2025, %v2025
      %v2145 = vmul.f32 %v2030, %v2030
      %v2146 = vmul.f32 %v2035, %v2035
      %v2147 = vmul.f32 %v2040, %v2040
      %v2148 = vmul.f32 %v2045, %v2045
      %v2149 = vsel %vm333, %v2117, 0.0
      %v2150 = vsel %vm333, %v2118, 0.0
      %v2151 = vadd.f32 %v2149, %v2150
      %v2152 = vsel %vm333, %v2119, 0.0
      %v2153 = vadd.f32 %v2151, %v2152
      %v2154 = vsel %vm333, %v2120, 0.0
      %v2155 = vadd.f32 %v2153, %v2154
      %v2156 = vsel %vm333, %v2121, 0.0
      %v2157 = vadd.f32 %v2155, %v2156
      %v2158 = vsel %vm333, %v2122, 0.0
      %v2159 = vadd.f32 %v2157, %v2158
      %v2160 = vsel %vm333, %v2123, 0.0
      %v2161 = vadd.f32 %v2159, %v2160
      %v2162 = vsel %vm333, %v2124, 0.0
      %v2163 = vadd.f32 %v2161, %v2162
      %v2164 = vsel %vm333, %v2125, 0.0
      %v2165 = vadd.f32 %v2163, %v2164
      %v2166 = vsel %vm333, %v2126, 0.0
      %v2167 = vadd.f32 %v2165, %v2166
      %v2168 = vsel %vm333, %v2127, 0.0
      %v2169 = vadd.f32 %v2167, %v2168
      %v2170 = vsel %vm333, %v2128, 0.0
      %v2171 = vadd.f32 %v2169, %v2170
      %v2172 = vsel %vm333, %v2129, 0.0
      %v2173 = vadd.f32 %v2171, %v2172
      %v2174 = vsel %vm333, %v2130, 0.0
      %v2175 = vadd.f32 %v2173, %v2174
      %v2176 = vsel %vm333, %v2131, 0.0
      %v2177 = vadd.f32 %v2175, %v2176
      %v2178 = vsel %vm333, %v2132, 0.0
      %v2179 = vadd.f32 %v2177, %v2178
      %v2180 = vsel %vm333, %v2133, 0.0
      %v2181 = vadd.f32 %v2179, %v2180
      %v2182 = vsel %vm333, %v2134, 0.0
      %v2183 = vadd.f32 %v2181, %v2182
      %v2184 = vsel %vm333, %v2135, 0.0
      %v2185 = vadd.f32 %v2183, %v2184
      %v2186 = vsel %vm333, %v2136, 0.0
      %v2187 = vadd.f32 %v2185, %v2186
      %v2188 = vsel %vm333, %v2137, 0.0
      %v2189 = vadd.f32 %v2187, %v2188
      %v2190 = vsel %vm333, %v2138, 0.0
      %v2191 = vadd.f32 %v2189, %v2190
      %v2192 = vsel %vm333, %v2139, 0.0
      %v2193 = vadd.f32 %v2191, %v2192
      %v2194 = vsel %vm333, %v2140, 0.0
      %v2195 = vadd.f32 %v2193, %v2194
      %v2196 = vsel %vm333, %v2141, 0.0
      %v2197 = vadd.f32 %v2195, %v2196
      %v2198 = vsel %vm333, %v2142, 0.0
      %v2199 = vadd.f32 %v2197, %v2198
      %v2200 = vsel %vm333, %v2143, 0.0
      %v2201 = vadd.f32 %v2199, %v2200
      %v2202 = vsel %vm333, %v2144, 0.0
      %v2203 = vadd.f32 %v2201, %v2202
      %v2204 = vsel %vm333, %v2145, 0.0
      %v2205 = vadd.f32 %v2203, %v2204
      %v2206 = vsel %vm333, %v2146, 0.0
      %v2207 = vadd.f32 %v2205, %v2206
      %v2208 = vsel %vm333, %v2147, 0.0
      %v2209 = vadd.f32 %v2207, %v2208
      %v2210 = vsel %vm333, %v2148, 0.0
      %v2211 = vadd.f32 %v2209, %v2210
      %v2212 = vrot.slane %v2211, 4
      %v2213 = vadd.f32 %v2211, %v2212
      %v2214 = vrot.slane %v2213, 2
      %v2215 = vadd.f32 %v2213, %v2214
      %v2216 = vrot.slane %v2215, 1
      %v2217 = vadd.f32 %v2215, %v2216
      %v2218 = vmul.f32 %v2116, 0.00390625
      %v2219 = vmul.f32 %v2217, 0.00390625
      %v2220 = vmul.f32 %v2218, %v2218
      %v2221 = vsub.f32 %v2219, %v2220
      %v2222 = vsub.f32 %v1890, %v2218
      %v2223 = vsub.f32 %v1895, %v2218
      %v2224 = vsub.f32 %v1900, %v2218
      %v2225 = vsub.f32 %v1905, %v2218
      %v2226 = vsub.f32 %v1910, %v2218
      %v2227 = vsub.f32 %v1915, %v2218
      %v2228 = vsub.f32 %v1920, %v2218
      %v2229 = vsub.f32 %v1925, %v2218
      %v2230 = vsub.f32 %v1930, %v2218
      %v2231 = vsub.f32 %v1935, %v2218
      %v2232 = vsub.f32 %v1940, %v2218
      %v2233 = vsub.f32 %v1945, %v2218
      %v2234 = vsub.f32 %v1950, %v2218
      %v2235 = vsub.f32 %v1955, %v2218
      %v2236 = vsub.f32 %v1960, %v2218
      %v2237 = vsub.f32 %v1965, %v2218
      %v2238 = vsub.f32 %v1970, %v2218
      %v2239 = vsub.f32 %v1975, %v2218
      %v2240 = vsub.f32 %v1980, %v2218
      %v2241 = vsub.f32 %v1985, %v2218
      %v2242 = vsub.f32 %v1990, %v2218
      %v2243 = vsub.f32 %v1995, %v2218
      %v2244 = vsub.f32 %v2000, %v2218
      %v2245 = vsub.f32 %v2005, %v2218
      %v2246 = vsub.f32 %v2010, %v2218
      %v2247 = vsub.f32 %v2015, %v2218
      %v2248 = vsub.f32 %v2020, %v2218
      %v2249 = vsub.f32 %v2025, %v2218
      %v2250 = vsub.f32 %v2030, %v2218
      %v2251 = vsub.f32 %v2035, %v2218
      %v2252 = vsub.f32 %v2040, %v2218
      %v2253 = vsub.f32 %v2045, %v2218
      %v2254 = vadd.f32 %v2221, 1e-05
      %v2255 = vrsqrt.pop %v2254
      %v2256 = vmul.f32 %v2222, %v2255
      %v2257 = vmul.f32 %v2223, %v2255
      %v2258 = vmul.f32 %v2224, %v2255
      %v2259 = vmul.f32 %v2225, %v2255
      %v2260 = vmul.f32 %v2226, %v2255
      %v2261 = vmul.f32 %v2227, %v2255
      %v2262 = vmul.f32 %v2228, %v2255
      %v2263 = vmul.f32 %v2229, %v2255
      %v2264 = vmul.f32 %v2230, %v2255
      %v2265 = vmul.f32 %v2231, %v2255
      %v2266 = vmul.f32 %v2232, %v2255
      %v2267 = vmul.f32 %v2233, %v2255
      %v2268 = vmul.f32 %v2234, %v2255
      %v2269 = vmul.f32 %v2235, %v2255
      %v2270 = vmul.f32 %v2236, %v2255
      %v2271 = vmul.f32 %v2237, %v2255
      %v2272 = vmul.f32 %v2238, %v2255
      %v2273 = vmul.f32 %v2239, %v2255
      %v2274 = vmul.f32 %v2240, %v2255
      %v2275 = vmul.f32 %v2241, %v2255
      %v2276 = vmul.f32 %v2242, %v2255
      %v2277 = vmul.f32 %v2243, %v2255
      %v2278 = vmul.f32 %v2244, %v2255
      %v2279 = vmul.f32 %v2245, %v2255
      %v2280 = vmul.f32 %v2246, %v2255
      %v2281 = vmul.f32 %v2247, %v2255
      %v2282 = vmul.f32 %v2248, %v2255
      %v2283 = vmul.f32 %v2249, %v2255
      %v2284 = vmul.f32 %v2250, %v2255
      %v2285 = vmul.f32 %v2251, %v2255
      %v2286 = vmul.f32 %v2252, %v2255
      %v2287 = vmul.f32 %v2253, %v2255
      %s2288 = scalar_lea.vmem [#allocation2], 24
      %2289 = vst.msk [vmem:[%s2288 + $0x1] sm:$0xff] %vm333, %v2256
      %2290 = vst.msk [vmem:[%s2288 + $0x9] sm:$0xff] %vm333, %v2257
      %2291 = vst.msk [vmem:[%s2288 + $0x19] sm:$0xff] %vm333, %v2258
      %2292 = vst.msk [vmem:[%s2288 + $0x21] sm:$0xff] %vm333, %v2259
      %2293 = vst.msk [vmem:[%s2288 + $0x31] sm:$0xff] %vm333, %v2260
      %2294 = vst.msk [vmem:[%s2288 + $0x39] sm:$0xff] %vm333, %v2261
      %2295 = vst.msk [vmem:[%s2288 + $0x49] sm:$0xff] %vm333, %v2262
      %2296 = vst.msk [vmem:[%s2288 + $0x51] sm:$0xff] %vm333, %v2263
      %2297 = vst.msk [vmem:[%s2288 + $0x61] sm:$0xff] %vm333, %v2264
      %2298 = vst.msk [vmem:[%s2288 + $0x69] sm:$0xff] %vm333, %v2265
      %2299 = vst.msk [vmem:[%s2288 + $0x79] sm:$0xff] %vm333, %v2266
      %2300 = vst.msk [vmem:[%s2288 + $0x81] sm:$0xff] %vm333, %v2267
      %2301 = vst.msk [vmem:[%s2288 + $0x91] sm:$0xff] %vm333, %v2268
      %2302 = vst.msk [vmem:[%s2288 + $0x99] sm:$0xff] %vm333, %v2269
      %2303 = vst.msk [vmem:[%s2288 + $0xa9] sm:$0xff] %vm333, %v2270
      %2304 = vst.msk [vmem:[%s2288 + $0xb1] sm:$0xff] %vm333, %v2271
      %2305 = vst.msk [vmem:[%s2288 + $0xc1] sm:$0xff] %vm333, %v2272
      %2306 = vst.msk [vmem:[%s2288 + $0xc9] sm:$0xff] %vm333, %v2273
      %2307 = vst.msk [vmem:[%s2288 + $0xd9] sm:$0xff] %vm333, %v2274
      %2308 = vst.msk [vmem:[%s2288 + $0xe1] sm:$0xff] %vm333, %v2275
      %2309 = vst.msk [vmem:[%s2288 + $0xf1] sm:$0xff] %vm333, %v2276
      %2310 = vst.msk [vmem:[%s2288 + $0xf9] sm:$0xff] %vm333, %v2277
      %2311 = vst.msk [vmem:[%s2288 + $0x109] sm:$0xff] %vm333, %v2278
      %2312 = vst.msk [vmem:[%s2288 + $0x111] sm:$0xff] %vm333, %v2279
      %2313 = vst.msk [vmem:[%s2288 + $0x121] sm:$0xff] %vm333, %v2280
      %2314 = vst.msk [vmem:[%s2288 + $0x129] sm:$0xff] %vm333, %v2281
      %2315 = vst.msk [vmem:[%s2288 + $0x139] sm:$0xff] %vm333, %v2282
      %2316 = vst.msk [vmem:[%s2288 + $0x141] sm:$0xff] %vm333, %v2283
      %2317 = vst.msk [vmem:[%s2288 + $0x151] sm:$0xff] %vm333, %v2284
      %2318 = vst.msk [vmem:[%s2288 + $0x159] sm:$0xff] %vm333, %v2285
      %2319 = vst.msk [vmem:[%s2288 + $0x169] sm:$0xff] %vm333, %v2286
      %2320 = vst.msk [vmem:[%s2288 + $0x171] sm:$0xff] %vm333, %v2287
      %v2321 = vld [vmem:[#allocation2] sm:$0xff]
      %v2322 = vld [vmem:[#allocation2 + $0x8] sm:$0xff]
      %v2323 = vld [vmem:[#allocation2 + $0x10] sm:$0x3]
      %v2324 = vld [vmem:[#allocation2 + $0x18] sm:$0xff]
      %v2325 = vld [vmem:[#allocation2 + $0x20] sm:$0xff]
      %v2326 = vld [vmem:[#allocation2 + $0x28] sm:$0x3]
      %v2327 = vld [vmem:[#allocation2 + $0x30] sm:$0xff]
      %v2328 = vld [vmem:[#allocation2 + $0x38] sm:$0xff]
      %v2329 = vld [vmem:[#allocation2 + $0x40] sm:$0x3]
      %v2330 = vld [vmem:[#allocation2 + $0x48] sm:$0xff]
      %v2331 = vld [vmem:[#allocation2 + $0x50] sm:$0xff]
      %v2332 = vld [vmem:[#allocation2 + $0x58] sm:$0x3]
      %v2333 = vld [vmem:[#allocation2 + $0x60] sm:$0xff]
      %v2334 = vld [vmem:[#allocation2 + $0x68] sm:$0xff]
      %v2335 = vld [vmem:[#allocation2 + $0x70] sm:$0x3]
      %v2336 = vld [vmem:[#allocation2 + $0x78] sm:$0xff]
      %v2337 = vld [vmem:[#allocation2 + $0x80] sm:$0xff]
      %v2338 = vld [vmem:[#allocation2 + $0x88] sm:$0x3]
      %v2339 = vld [vmem:[#allocation2 + $0x90] sm:$0xff]
      %v2340 = vld [vmem:[#allocation2 + $0x98] sm:$0xff]
      %v2341 = vld [vmem:[#allocation2 + $0xa0] sm:$0x3]
      %v2342 = vld [vmem:[#allocation2 + $0xa8] sm:$0xff]
      %v2343 = vld [vmem:[#allocation2 + $0xb0] sm:$0xff]
      %v2344 = vld [vmem:[#allocation2 + $0xb8] sm:$0x3]
      %v2345 = vld [vmem:[#allocation2 + $0xc0] sm:$0xff]
      %v2346 = vld [vmem:[#allocation2 + $0xc8] sm:$0xff]
      %v2347 = vld [vmem:[#allocation2 + $0xd0] sm:$0x3]
      %v2348 = vld [vmem:[#allocation2 + $0xd8] sm:$0xff]
      %v2349 = vld [vmem:[#allocation2 + $0xe0] sm:$0xff]
      %v2350 = vld [vmem:[#allocation2 + $0xe8] sm:$0x3]
      %v2351 = vld [vmem:[#allocation2 + $0xf0] sm:$0xff]
      %v2352 = vld [vmem:[#allocation2 + $0xf8] sm:$0xff]
      %v2353 = vld [vmem:[#allocation2 + $0x100] sm:$0x3]
      %v2354 = vld [vmem:[#allocation2 + $0x108] sm:$0xff]
      %v2355 = vld [vmem:[#allocation2 + $0x110] sm:$0xff]
      %v2356 = vld [vmem:[#allocation2 + $0x118] sm:$0x3]
      %v2357 = vld [vmem:[#allocation2 + $0x120] sm:$0xff]
      %v2358 = vld [vmem:[#allocation2 + $0x128] sm:$0xff]
      %v2359 = vld [vmem:[#allocation2 + $0x130] sm:$0x3]
      %v2360 = vld [vmem:[#allocation2 + $0x138] sm:$0xff]
      %v2361 = vld [vmem:[#allocation2 + $0x140] sm:$0xff]
      %v2362 = vld [vmem:[#allocation2 + $0x148] sm:$0x3]
      %v2363 = vld [vmem:[#allocation2 + $0x150] sm:$0xff]
      %v2364 = vld [vmem:[#allocation2 + $0x158] sm:$0xff]
      %v2365 = vld [vmem:[#allocation2 + $0x160] sm:$0x3]
      %v2366 = vld [vmem:[#allocation2 + $0x168] sm:$0xff]
      %v2367 = vld [vmem:[#allocation2 + $0x170] sm:$0xff]
      %v2368 = vld [vmem:[#allocation2 + $0x178] sm:$0x3]
      %v2369 = vld [vmem:[#allocation2 + $0x180] sm:$0xff]
      %v2370 = vld [vmem:[#allocation2 + $0x188] sm:$0xff]
      %v2371 = vld [vmem:[#allocation2 + $0x190] sm:$0x3]
      %v2372 = vld [vmem:[#allocation2 + $0x198] sm:$0xff]
      %v2373 = vld [vmem:[#allocation2 + $0x1a0] sm:$0xff]
      %v2374 = vld [vmem:[#allocation2 + $0x1a8] sm:$0x3]
      %v2423 = vrot.slane %v2321, 1
      %v2424 = vrot.slane %v2322, 1
      %v2425 = vsel %vm491, %v2423, %v2424
      %v2426 = vrot.slane %v2323, 1
      %v2427 = vsel %vm491, %v2424, %v2426
      %v2428 = vrot.slane %v2324, 1
      %v2429 = vrot.slane %v2325, 1
      %v2430 = vsel %vm491, %v2428, %v2429
      %v2431 = vrot.slane %v2326, 1
      %v2432 = vsel %vm491, %v2429, %v2431
      %v2433 = vrot.slane %v2327, 1
      %v2434 = vrot.slane %v2328, 1
      %v2435 = vsel %vm491, %v2433, %v2434
      %v2436 = vrot.slane %v2329, 1
      %v2437 = vsel %vm491, %v2434, %v2436
      %v2438 = vrot.slane %v2330, 1
      %v2439 = vrot.slane %v2331, 1
      %v2440 = vsel %vm491, %v2438, %v2439
      %v2441 = vrot.slane %v2332, 1
      %v2442 = vsel %vm491, %v2439, %v2441
      %v2443 = vrot.slane %v2333, 1
      %v2444 = vrot.slane %v2334, 1
      %v2445 = vsel %vm491, %v2443, %v2444
      %v2446 = vrot.slane %v2335, 1
      %v2447 = vsel %vm491, %v2444, %v2446
      %v2448 = vrot.slane %v2336, 1
      %v2449 = vrot.slane %v2337, 1
      %v2450 = vsel %vm491, %v2448, %v2449
      %v2451 = vrot.slane %v2338, 1
      %v2452 = vsel %vm491, %v2449, %v2451
      %v2453 = vrot.slane %v2339, 1
      %v2454 = vrot.slane %v2340, 1
      %v2455 = vsel %vm491, %v2453, %v2454
      %v2456 = vrot.slane %v2341, 1
      %v2457 = vsel %vm491, %v2454, %v2456
      %v2458 = vrot.slane %v2342, 1
      %v2459 = vrot.slane %v2343, 1
      %v2460 = vsel %vm491, %v2458, %v2459
      %v2461 = vrot.slane %v2344, 1
      %v2462 = vsel %vm491, %v2459, %v2461
      %v2463 = vrot.slane %v2345, 1
      %v2464 = vrot.slane %v2346, 1
      %v2465 = vsel %vm491, %v2463, %v2464
      %v2466 = vrot.slane %v2347, 1
      %v2467 = vsel %vm491, %v2464, %v2466
      %v2468 = vrot.slane %v2348, 1
      %v2469 = vrot.slane %v2349, 1
      %v2470 = vsel %vm491, %v2468, %v2469
      %v2471 = vrot.slane %v2350, 1
      %v2472 = vsel %vm491, %v2469, %v2471
      %v2473 = vrot.slane %v2351, 1
      %v2474 = vrot.slane %v2352, 1
      %v2475 = vsel %vm491, %v2473, %v2474
      %v2476 = vrot.slane %v2353, 1
      %v2477 = vsel %vm491, %v2474, %v2476
      %v2478 = vrot.slane %v2354, 1
      %v2479 = vrot.slane %v2355, 1
      %v2480 = vsel %vm491, %v2478, %v2479
      %v2481 = vrot.slane %v2356, 1
      %v2482 = vsel %vm491, %v2479, %v2481
      %v2483 = vrot.slane %v2357, 1
      %v2484 = vrot.slane %v2358, 1
      %v2485 = vsel %vm491, %v2483, %v2484
      %v2486 = vrot.slane %v2359, 1
      %v2487 = vsel %vm491, %v2484, %v2486
      %v2488 = vrot.slane %v2360, 1
      %v2489 = vrot.slane %v2361, 1
      %v2490 = vsel %vm491, %v2488, %v2489
      %v2491 = vrot.slane %v2362, 1
      %v2492 = vsel %vm491, %v2489, %v2491
      %v2493 = vrot.slane %v2363, 1
      %v2494 = vrot.slane %v2364, 1
      %v2495 = vsel %vm491, %v2493, %v2494
      %v2496 = vrot.slane %v2365, 1
      %v2497 = vsel %vm491, %v2494, %v2496
      %v2498 = vrot.slane %v2366, 1
      %v2499 = vrot.slane %v2367, 1
      %v2500 = vsel %vm491, %v2498, %v2499
      %v2501 = vrot.slane %v2368, 1
      %v2502 = vsel %vm491, %v2499, %v2501
      %2503 = vrot.lane.b32.xlu0 %v2425, 8
      %v2504 = vpop.permute.xlu0 %2503
      %2505 = vrot.lane.b32.xlu0 %v2427, 8
      %v2506 = vpop.permute.xlu0 %2505
      %2507 = vrot.lane.b32.xlu0 %v2430, 8
      %v2508 = vpop.permute.xlu0 %2507
      %2509 = vrot.lane.b32.xlu0 %v2432, 8
      %v2510 = vpop.permute.xlu0 %2509
      %2511 = vrot.lane.b32.xlu0 %v2435, 8
      %v2512 = vpop.permute.xlu0 %2511
      %2513 = vrot.lane.b32.xlu0 %v2437, 8
      %v2514 = vpop.permute.xlu0 %2513
      %2515 = vrot.lane.b32.xlu0 %v2440, 8
      %v2516 = vpop.permute.xlu0 %2515
      %2517 = vrot.lane.b32.xlu0 %v2442, 8
      %v2518 = vpop.permute.xlu0 %2517
      %2519 = vrot.lane.b32.xlu0 %v2445, 8
      %v2520 = vpop.permute.xlu0 %2519
      %2521 = vrot.lane.b32.xlu0 %v2447, 8
      %v2522 = vpop.permute.xlu0 %2521
      %2523 = vrot.lane.b32.xlu0 %v2450, 8
      %v2524 = vpop.permute.xlu0 %2523
      %2525 = vrot.lane.b32.xlu0 %v2452, 8
      %v2526 = vpop.permute.xlu0 %2525
      %2527 = vrot.lane.b32.xlu0 %v2455, 8
      %v2528 = vpop.permute.xlu0 %2527
      %2529 = vrot.lane.b32.xlu0 %v2457, 8
      %v2530 = vpop.permute.xlu0 %2529
      %2531 = vrot.lane.b32.xlu0 %v2460, 8
      %v2532 = vpop.permute.xlu0 %2531
      %2533 = vrot.lane.b32.xlu0 %v2462, 8
      %v2534 = vpop.permute.xlu0 %2533
      %2535 = vrot.lane.b32.xlu0 %v2465, 8
      %v2536 = vpop.permute.xlu0 %2535
      %2537 = vrot.lane.b32.xlu0 %v2467, 8
      %v2538 = vpop.permute.xlu0 %2537
      %2539 = vrot.lane.b32.xlu0 %v2470, 8
      %v2540 = vpop.permute.xlu0 %2539
      %2541 = vrot.lane.b32.xlu0 %v2472, 8
      %v2542 = vpop.permute.xlu0 %2541
      %2543 = vrot.lane.b32.xlu0 %v2475, 8
      %v2544 = vpop.permute.xlu0 %2543
      %2545 = vrot.lane.b32.xlu0 %v2477, 8
      %v2546 = vpop.permute.xlu0 %2545
      %2547 = vrot.lane.b32.xlu0 %v2480, 8
      %v2548 = vpop.permute.xlu0 %2547
      %2549 = vrot.lane.b32.xlu0 %v2482, 8
      %v2550 = vpop.permute.xlu0 %2549
      %2551 = vrot.lane.b32.xlu0 %v2485, 8
      %v2552 = vpop.permute.xlu0 %2551
      %2553 = vrot.lane.b32.xlu0 %v2487, 8
      %v2554 = vpop.permute.xlu0 %2553
      %2555 = vrot.lane.b32.xlu0 %v2490, 8
      %v2556 = vpop.permute.xlu0 %2555
      %2557 = vrot.lane.b32.xlu0 %v2492, 8
      %v2558 = vpop.permute.xlu0 %2557
      %2559 = vrot.lane.b32.xlu0 %v2495, 8
      %v2560 = vpop.permute.xlu0 %2559
      %2561 = vrot.lane.b32.xlu0 %v2497, 8
      %v2562 = vpop.permute.xlu0 %2561
      %2563 = vrot.lane.b32.xlu0 %v2500, 8
      %v2564 = vpop.permute.xlu0 %2563
      %2565 = vrot.lane.b32.xlu0 %v2502, 8
      %v2566 = vpop.permute.xlu0 %2565
      %v2599 = vrot.slane %v2321, 2
      %v2600 = vrot.slane %v2322, 2
      %v2601 = vsel %vm668, %v2599, %v2600
      %v2602 = vrot.slane %v2323, 2
      %v2603 = vsel %vm668, %v2600, %v2602
      %v2604 = vrot.slane %v2324, 2
      %v2605 = vrot.slane %v2325, 2
      %v2606 = vsel %vm668, %v2604, %v2605
      %v2607 = vrot.slane %v2326, 2
      %v2608 = vsel %vm668, %v2605, %v2607
      %v2609 = vrot.slane %v2327, 2
      %v2610 = vrot.slane %v2328, 2
      %v2611 = vsel %vm668, %v2609, %v2610
      %v2612 = vrot.slane %v2329, 2
      %v2613 = vsel %vm668, %v2610, %v2612
      %v2614 = vrot.slane %v2330, 2
      %v2615 = vrot.slane %v2331, 2
      %v2616 = vsel %vm668, %v2614, %v2615
      %v2617 = vrot.slane %v2332, 2
      %v2618 = vsel %vm668, %v2615, %v2617
      %v2619 = vrot.slane %v2333, 2
      %v2620 = vrot.slane %v2334, 2
      %v2621 = vsel %vm668, %v2619, %v2620
      %v2622 = vrot.slane %v2335, 2
      %v2623 = vsel %vm668, %v2620, %v2622
      %v2624 = vrot.slane %v2336, 2
      %v2625 = vrot.slane %v2337, 2
      %v2626 = vsel %vm668, %v2624, %v2625
      %v2627 = vrot.slane %v2338, 2
      %v2628 = vsel %vm668, %v2625, %v2627
      %v2629 = vrot.slane %v2339, 2
      %v2630 = vrot.slane %v2340, 2
      %v2631 = vsel %vm668, %v2629, %v2630
      %v2632 = vrot.slane %v2341, 2
      %v2633 = vsel %vm668, %v2630, %v2632
      %v2634 = vrot.slane %v2342, 2
      %v2635 = vrot.slane %v2343, 2
      %v2636 = vsel %vm668, %v2634, %v2635
      %v2637 = vrot.slane %v2344, 2
      %v2638 = vsel %vm668, %v2635, %v2637
      %v2639 = vrot.slane %v2345, 2
      %v2640 = vrot.slane %v2346, 2
      %v2641 = vsel %vm668, %v2639, %v2640
      %v2642 = vrot.slane %v2347, 2
      %v2643 = vsel %vm668, %v2640, %v2642
      %v2644 = vrot.slane %v2348, 2
      %v2645 = vrot.slane %v2349, 2
      %v2646 = vsel %vm668, %v2644, %v2645
      %v2647 = vrot.slane %v2350, 2
      %v2648 = vsel %vm668, %v2645, %v2647
      %v2649 = vrot.slane %v2351, 2
      %v2650 = vrot.slane %v2352, 2
      %v2651 = vsel %vm668, %v2649, %v2650
      %v2652 = vrot.slane %v2353, 2
      %v2653 = vsel %vm668, %v2650, %v2652
      %v2654 = vrot.slane %v2354, 2
      %v2655 = vrot.slane %v2355, 2
      %v2656 = vsel %vm668, %v2654, %v2655
      %v2657 = vrot.slane %v2356, 2
      %v2658 = vsel %vm668, %v2655, %v2657
      %v2659 = vrot.slane %v2357, 2
      %v2660 = vrot.slane %v2358, 2
      %v2661 = vsel %vm668, %v2659, %v2660
      %v2662 = vrot.slane %v2359, 2
      %v2663 = vsel %vm668, %v2660, %v2662
      %v2664 = vrot.slane %v2360, 2
      %v2665 = vrot.slane %v2361, 2
      %v2666 = vsel %vm668, %v2664, %v2665
      %v2667 = vrot.slane %v2362, 2
      %v2668 = vsel %vm668, %v2665, %v2667
      %v2669 = vrot.slane %v2363, 2
      %v2670 = vrot.slane %v2364, 2
      %v2671 = vsel %vm668, %v2669, %v2670
      %v2672 = vrot.slane %v2365, 2
      %v2673 = vsel %vm668, %v2670, %v2672
      %v2674 = vrot.slane %v2366, 2
      %v2675 = vrot.slane %v2367, 2
      %v2676 = vsel %vm668, %v2674, %v2675
      %v2677 = vrot.slane %v2368, 2
      %v2678 = vsel %vm668, %v2675, %v2677
      %2679 = vrot.lane.b32.xlu0 %v2601, 16
      %v2680 = vpop.permute.xlu0 %2679
      %2681 = vrot.lane.b32.xlu0 %v2603, 16
      %v2682 = vpop.permute.xlu0 %2681
      %2683 = vrot.lane.b32.xlu0 %v2606, 16
      %v2684 = vpop.permute.xlu0 %2683
      %2685 = vrot.lane.b32.xlu0 %v2608, 16
      %v2686 = vpop.permute.xlu0 %2685
      %2687 = vrot.lane.b32.xlu0 %v2611, 16
      %v2688 = vpop.permute.xlu0 %2687
      %2689 = vrot.lane.b32.xlu0 %v2613, 16
      %v2690 = vpop.permute.xlu0 %2689
      %2691 = vrot.lane.b32.xlu0 %v2616, 16
      %v2692 = vpop.permute.xlu0 %2691
      %2693 = vrot.lane.b32.xlu0 %v2618, 16
      %v2694 = vpop.permute.xlu0 %2693
      %2695 = vrot.lane.b32.xlu0 %v2621, 16
      %v2696 = vpop.permute.xlu0 %2695
      %2697 = vrot.lane.b32.xlu0 %v2623, 16
      %v2698 = vpop.permute.xlu0 %2697
      %2699 = vrot.lane.b32.xlu0 %v2626, 16
      %v2700 = vpop.permute.xlu0 %2699
      %2701 = vrot.lane.b32.xlu0 %v2628, 16
      %v2702 = vpop.permute.xlu0 %2701
      %2703 = vrot.lane.b32.xlu0 %v2631, 16
      %v2704 = vpop.permute.xlu0 %2703
      %2705 = vrot.lane.b32.xlu0 %v2633, 16
      %v2706 = vpop.permute.xlu0 %2705
      %2707 = vrot.lane.b32.xlu0 %v2636, 16
      %v2708 = vpop.permute.xlu0 %2707
      %2709 = vrot.lane.b32.xlu0 %v2638, 16
      %v2710 = vpop.permute.xlu0 %2709
      %2711 = vrot.lane.b32.xlu0 %v2641, 16
      %v2712 = vpop.permute.xlu0 %2711
      %2713 = vrot.lane.b32.xlu0 %v2643, 16
      %v2714 = vpop.permute.xlu0 %2713
      %2715 = vrot.lane.b32.xlu0 %v2646, 16
      %v2716 = vpop.permute.xlu0 %2715
      %2717 = vrot.lane.b32.xlu0 %v2648, 16
      %v2718 = vpop.permute.xlu0 %2717
      %2719 = vrot.lane.b32.xlu0 %v2651, 16
      %v2720 = vpop.permute.xlu0 %2719
      %2721 = vrot.lane.b32.xlu0 %v2653, 16
      %v2722 = vpop.permute.xlu0 %2721
      %2723 = vrot.lane.b32.xlu0 %v2656, 16
      %v2724 = vpop.permute.xlu0 %2723
      %2725 = vrot.lane.b32.xlu0 %v2658, 16
      %v2726 = vpop.permute.xlu0 %2725
      %2727 = vrot.lane.b32.xlu0 %v2661, 16
      %v2728 = vpop.permute.xlu0 %2727
      %2729 = vrot.lane.b32.xlu0 %v2663, 16
      %v2730 = vpop.permute.xlu0 %2729
      %2731 = vrot.lane.b32.xlu0 %v2666, 16
      %v2732 = vpop.permute.xlu0 %2731
      %2733 = vrot.lane.b32.xlu0 %v2668, 16
      %v2734 = vpop.permute.xlu0 %2733
      %2735 = vrot.lane.b32.xlu0 %v2671, 16
      %v2736 = vpop.permute.xlu0 %2735
      %2737 = vrot.lane.b32.xlu0 %v2673, 16
      %v2738 = vpop.permute.xlu0 %2737
      %2739 = vrot.lane.b32.xlu0 %v2676, 16
      %v2740 = vpop.permute.xlu0 %2739
      %2741 = vrot.lane.b32.xlu0 %v2678, 16
      %v2742 = vpop.permute.xlu0 %2741
      %2777 = vrot.lane.b32.xlu0 %v2324, 24
      %v2778 = vpop.permute.xlu0 %2777
      %2779 = vrot.lane.b32.xlu0 %v2325, 24
      %v2780 = vpop.permute.xlu0 %2779
      %2781 = vrot.lane.b32.xlu0 %v2327, 24
      %v2782 = vpop.permute.xlu0 %2781
      %2783 = vrot.lane.b32.xlu0 %v2328, 24
      %v2784 = vpop.permute.xlu0 %2783
      %2785 = vrot.lane.b32.xlu0 %v2330, 24
      %v2786 = vpop.permute.xlu0 %2785
      %2787 = vrot.lane.b32.xlu0 %v2331, 24
      %v2788 = vpop.permute.xlu0 %2787
      %2789 = vrot.lane.b32.xlu0 %v2333, 24
      %v2790 = vpop.permute.xlu0 %2789
      %2791 = vrot.lane.b32.xlu0 %v2334, 24
      %v2792 = vpop.permute.xlu0 %2791
      %2793 = vrot.lane.b32.xlu0 %v2336, 24
      %v2794 = vpop.permute.xlu0 %2793
      %2795 = vrot.lane.b32.xlu0 %v2337, 24
      %v2796 = vpop.permute.xlu0 %2795
      %2797 = vrot.lane.b32.xlu0 %v2339, 24
      %v2798 = vpop.permute.xlu0 %2797
      %2799 = vrot.lane.b32.xlu0 %v2340, 24
      %v2800 = vpop.permute.xlu0 %2799
      %2801 = vrot.lane.b32.xlu0 %v2342, 24
      %v2802 = vpop.permute.xlu0 %2801
      %2803 = vrot.lane.b32.xlu0 %v2343, 24
      %v2804 = vpop.permute.xlu0 %2803
      %2805 = vrot.lane.b32.xlu0 %v2345, 24
      %v2806 = vpop.permute.xlu0 %2805
      %2807 = vrot.lane.b32.xlu0 %v2346, 24
      %v2808 = vpop.permute.xlu0 %2807
      %2809 = vrot.lane.b32.xlu0 %v2348, 24
      %v2810 = vpop.permute.xlu0 %2809
      %2811 = vrot.lane.b32.xlu0 %v2349, 24
      %v2812 = vpop.permute.xlu0 %2811
      %2813 = vrot.lane.b32.xlu0 %v2351, 24
      %v2814 = vpop.permute.xlu0 %2813
      %2815 = vrot.lane.b32.xlu0 %v2352, 24
      %v2816 = vpop.permute.xlu0 %2815
      %2817 = vrot.lane.b32.xlu0 %v2354, 24
      %v2818 = vpop.permute.xlu0 %2817
      %2819 = vrot.lane.b32.xlu0 %v2355, 24
      %v2820 = vpop.permute.xlu0 %2819
      %2821 = vrot.lane.b32.xlu0 %v2357, 24
      %v2822 = vpop.permute.xlu0 %2821
      %2823 = vrot.lane.b32.xlu0 %v2358, 24
      %v2824 = vpop.permute.xlu0 %2823
      %2825 = vrot.lane.b32.xlu0 %v2360, 24
      %v2826 = vpop.permute.xlu0 %2825
      %2827 = vrot.lane.b32.xlu0 %v2361, 24
      %v2828 = vpop.permute.xlu0 %2827
      %2829 = vrot.lane.b32.xlu0 %v2363, 24
      %v2830 = vpop.permute.xlu0 %2829
      %2831 = vrot.lane.b32.xlu0 %v2364, 24
      %v2832 = vpop.permute.xlu0 %2831
      %2833 = vrot.lane.b32.xlu0 %v2366, 24
      %v2834 = vpop.permute.xlu0 %2833
      %2835 = vrot.lane.b32.xlu0 %v2367, 24
      %v2836 = vpop.permute.xlu0 %2835
      %2837 = vrot.lane.b32.xlu0 %v2369, 24
      %v2838 = vpop.permute.xlu0 %2837
      %2839 = vrot.lane.b32.xlu0 %v2370, 24
      %v2840 = vpop.permute.xlu0 %2839
      %v2874 = vrot.slane %v2369, 1
      %v2875 = vrot.slane %v2370, 1
      %v2876 = vsel %vm491, %v2874, %v2875
      %v2877 = vrot.slane %v2371, 1
      %v2878 = vsel %vm491, %v2875, %v2877
      %2879 = vrot.lane.b32.xlu0 %v2430, 32
      %v2880 = vpop.permute.xlu0 %2879
      %2881 = vrot.lane.b32.xlu0 %v2432, 32
      %v2882 = vpop.permute.xlu0 %2881
      %2883 = vrot.lane.b32.xlu0 %v2435, 32
      %v2884 = vpop.permute.xlu0 %2883
      %2885 = vrot.lane.b32.xlu0 %v2437, 32
      %v2886 = vpop.permute.xlu0 %2885
      %2887 = vrot.lane.b32.xlu0 %v2440, 32
      %v2888 = vpop.permute.xlu0 %2887
      %2889 = vrot.lane.b32.xlu0 %v2442, 32
      %v2890 = vpop.permute.xlu0 %2889
      %2891 = vrot.lane.b32.xlu0 %v2445, 32
      %v2892 = vpop.permute.xlu0 %2891
      %2893 = vrot.lane.b32.xlu0 %v2447, 32
      %v2894 = vpop.permute.xlu0 %2893
      %2895 = vrot.lane.b32.xlu0 %v2450, 32
      %v2896 = vpop.permute.xlu0 %2895
      %2897 = vrot.lane.b32.xlu0 %v2452, 32
      %v2898 = vpop.permute.xlu0 %2897
      %2899 = vrot.lane.b32.xlu0 %v2455, 32
      %v2900 = vpop.permute.xlu0 %2899
      %2901 = vrot.lane.b32.xlu0 %v2457, 32
      %v2902 = vpop.permute.xlu0 %2901
      %2903 = vrot.lane.b32.xlu0 %v2460, 32
      %v2904 = vpop.permute.xlu0 %2903
      %2905 = vrot.lane.b32.xlu0 %v2462, 32
      %v2906 = vpop.permute.xlu0 %2905
      %2907 = vrot.lane.b32.xlu0 %v2465, 32
      %v2908 = vpop.permute.xlu0 %2907
      %2909 = vrot.lane.b32.xlu0 %v2467, 32
      %v2910 = vpop.permute.xlu0 %2909
      %2911 = vrot.lane.b32.xlu0 %v2470, 32
      %v2912 = vpop.permute.xlu0 %2911
      %2913 = vrot.lane.b32.xlu0 %v2472, 32
      %v2914 = vpop.permute.xlu0 %2913
      %2915 = vrot.lane.b32.xlu0 %v2475, 32
      %v2916 = vpop.permute.xlu0 %2915
      %2917 = vrot.lane.b32.xlu0 %v2477, 32
      %v2918 = vpop.permute.xlu0 %2917
      %2919 = vrot.lane.b32.xlu0 %v2480, 32
      %v2920 = vpop.permute.xlu0 %2919
      %2921 = vrot.lane.b32.xlu0 %v2482, 32
      %v2922 = vpop.permute.xlu0 %2921
      %2923 = vrot.lane.b32.xlu0 %v2485, 32
      %v2924 = vpop.permute.xlu0 %2923
      %2925 = vrot.lane.b32.xlu0 %v2487, 32
      %v2926 = vpop.permute.xlu0 %2925
      %2927 = vrot.lane.b32.xlu0 %v2490, 32
      %v2928 = vpop.permute.xlu0 %2927
      %2929 = vrot.lane.b32.xlu0 %v2492, 32
      %v2930 = vpop.permute.xlu0 %2929
      %2931 = vrot.lane.b32.xlu0 %v2495, 32
      %v2932 = vpop.permute.xlu0 %2931
      %2933 = vrot.lane.b32.xlu0 %v2497, 32
      %v2934 = vpop.permute.xlu0 %2933
      %2935 = vrot.lane.b32.xlu0 %v2500, 32
      %v2936 = vpop.permute.xlu0 %2935
      %2937 = vrot.lane.b32.xlu0 %v2502, 32
      %v2938 = vpop.permute.xlu0 %2937
      %2939 = vrot.lane.b32.xlu0 %v2876, 32
      %v2940 = vpop.permute.xlu0 %2939
      %2941 = vrot.lane.b32.xlu0 %v2878, 32
      %v2942 = vpop.permute.xlu0 %2941
      %v2975 = vrot.slane %v2369, 2
      %v2976 = vrot.slane %v2370, 2
      %v2977 = vsel %vm668, %v2975, %v2976
      %v2978 = vrot.slane %v2371, 2
      %v2979 = vsel %vm668, %v2976, %v2978
      %2980 = vrot.lane.b32.xlu0 %v2606, 40
      %v2981 = vpop.permute.xlu0 %2980
      %2982 = vrot.lane.b32.xlu0 %v2608, 40
      %v2983 = vpop.permute.xlu0 %2982
      %2984 = vrot.lane.b32.xlu0 %v2611, 40
      %v2985 = vpop.permute.xlu0 %2984
      %2986 = vrot.lane.b32.xlu0 %v2613, 40
      %v2987 = vpop.permute.xlu0 %2986
      %2988 = vrot.lane.b32.xlu0 %v2616, 40
      %v2989 = vpop.permute.xlu0 %2988
      %2990 = vrot.lane.b32.xlu0 %v2618, 40
      %v2991 = vpop.permute.xlu0 %2990
      %2992 = vrot.lane.b32.xlu0 %v2621, 40
      %v2993 = vpop.permute.xlu0 %2992
      %2994 = vrot.lane.b32.xlu0 %v2623, 40
      %v2995 = vpop.permute.xlu0 %2994
      %2996 = vrot.lane.b32.xlu0 %v2626, 40
      %v2997 = vpop.permute.xlu0 %2996
      %2998 = vrot.lane.b32.xlu0 %v2628, 40
      %v2999 = vpop.permute.xlu0 %2998
      %3000 = vrot.lane.b32.xlu0 %v2631, 40
      %v3001 = vpop.permute.xlu0 %3000
      %3002 = vrot.lane.b32.xlu0 %v2633, 40
      %v3003 = vpop.permute.xlu0 %3002
      %3004 = vrot.lane.b32.xlu0 %v2636, 40
      %v3005 = vpop.permute.xlu0 %3004
      %3006 = vrot.lane.b32.xlu0 %v2638, 40
      %v3007 = vpop.permute.xlu0 %3006
      %3008 = vrot.lane.b32.xlu0 %v2641, 40
      %v3009 = vpop.permute.xlu0 %3008
      %3010 = vrot.lane.b32.xlu0 %v2643, 40
      %v3011 = vpop.permute.xlu0 %3010
      %3012 = vrot.lane.b32.xlu0 %v2646, 40
      %v3013 = vpop.permute.xlu0 %3012
      %3014 = vrot.lane.b32.xlu0 %v2648, 40
      %v3015 = vpop.permute.xlu0 %3014
      %3016 = vrot.lane.b32.xlu0 %v2651, 40
      %v3017 = vpop.permute.xlu0 %3016
      %3018 = vrot.lane.b32.xlu0 %v2653, 40
      %v3019 = vpop.permute.xlu0 %3018
      %3020 = vrot.lane.b32.xlu0 %v2656, 40
      %v3021 = vpop.permute.xlu0 %3020
      %3022 = vrot.lane.b32.xlu0 %v2658, 40
      %v3023 = vpop.permute.xlu0 %3022
      %3024 = vrot.lane.b32.xlu0 %v2661, 40
      %v3025 = vpop.permute.xlu0 %3024
      %3026 = vrot.lane.b32.xlu0 %v2663, 40
      %v3027 = vpop.permute.xlu0 %3026
      %3028 = vrot.lane.b32.xlu0 %v2666, 40
      %v3029 = vpop.permute.xlu0 %3028
      %3030 = vrot.lane.b32.xlu0 %v2668, 40
      %v3031 = vpop.permute.xlu0 %3030
      %3032 = vrot.lane.b32.xlu0 %v2671, 40
      %v3033 = vpop.permute.xlu0 %3032
      %3034 = vrot.lane.b32.xlu0 %v2673, 40
      %v3035 = vpop.permute.xlu0 %3034
      %3036 = vrot.lane.b32.xlu0 %v2676, 40
      %v3037 = vpop.permute.xlu0 %3036
      %3038 = vrot.lane.b32.xlu0 %v2678, 40
      %v3039 = vpop.permute.xlu0 %3038
      %3040 = vrot.lane.b32.xlu0 %v2977, 40
      %v3041 = vpop.permute.xlu0 %3040
      %3042 = vrot.lane.b32.xlu0 %v2979, 40
      %v3043 = vpop.permute.xlu0 %3042
      %3078 = vrot.lane.b32.xlu0 %v2327, 48
      %v3079 = vpop.permute.xlu0 %3078
      %3080 = vrot.lane.b32.xlu0 %v2328, 48
      %v3081 = vpop.permute.xlu0 %3080
      %3082 = vrot.lane.b32.xlu0 %v2330, 48
      %v3083 = vpop.permute.xlu0 %3082
      %3084 = vrot.lane.b32.xlu0 %v2331, 48
      %v3085 = vpop.permute.xlu0 %3084
      %3086 = vrot.lane.b32.xlu0 %v2333, 48
      %v3087 = vpop.permute.xlu0 %3086
      %3088 = vrot.lane.b32.xlu0 %v2334, 48
      %v3089 = vpop.permute.xlu0 %3088
      %3090 = vrot.lane.b32.xlu0 %v2336, 48
      %v3091 = vpop.permute.xlu0 %3090
      %3092 = vrot.lane.b32.xlu0 %v2337, 48
      %v3093 = vpop.permute.xlu0 %3092
      %3094 = vrot.lane.b32.xlu0 %v2339, 48
      %v3095 = vpop.permute.xlu0 %3094
      %3096 = vrot.lane.b32.xlu0 %v2340, 48
      %v3097 = vpop.permute.xlu0 %3096
      %3098 = vrot.lane.b32.xlu0 %v2342, 48
      %v3099 = vpop.permute.xlu0 %3098
      %3100 = vrot.lane.b32.xlu0 %v2343, 48
      %v3101 = vpop.permute.xlu0 %3100
      %3102 = vrot.lane.b32.xlu0 %v2345, 48
      %v3103 = vpop.permute.xlu0 %3102
      %3104 = vrot.lane.b32.xlu0 %v2346, 48
      %v3105 = vpop.permute.xlu0 %3104
      %3106 = vrot.lane.b32.xlu0 %v2348, 48
      %v3107 = vpop.permute.xlu0 %3106
      %3108 = vrot.lane.b32.xlu0 %v2349, 48
      %v3109 = vpop.permute.xlu0 %3108
      %3110 = vrot.lane.b32.xlu0 %v2351, 48
      %v3111 = vpop.permute.xlu0 %3110
      %3112 = vrot.lane.b32.xlu0 %v2352, 48
      %v3113 = vpop.permute.xlu0 %3112
      %3114 = vrot.lane.b32.xlu0 %v2354, 48
      %v3115 = vpop.permute.xlu0 %3114
      %3116 = vrot.lane.b32.xlu0 %v2355, 48
      %v3117 = vpop.permute.xlu0 %3116
      %3118 = vrot.lane.b32.xlu0 %v2357, 48
      %v3119 = vpop.permute.xlu0 %3118
      %3120 = vrot.lane.b32.xlu0 %v2358, 48
      %v3121 = vpop.permute.xlu0 %3120
      %3122 = vrot.lane.b32.xlu0 %v2360, 48
      %v3123 = vpop.permute.xlu0 %3122
      %3124 = vrot.lane.b32.xlu0 %v2361, 48
      %v3125 = vpop.permute.xlu0 %3124
      %3126 = vrot.lane.b32.xlu0 %v2363, 48
      %v3127 = vpop.permute.xlu0 %3126
      %3128 = vrot.lane.b32.xlu0 %v2364, 48
      %v3129 = vpop.permute.xlu0 %3128
      %3130 = vrot.lane.b32.xlu0 %v2366, 48
      %v3131 = vpop.permute.xlu0 %3130
      %3132 = vrot.lane.b32.xlu0 %v2367, 48
      %v3133 = vpop.permute.xlu0 %3132
      %3134 = vrot.lane.b32.xlu0 %v2369, 48
      %v3135 = vpop.permute.xlu0 %3134
      %3136 = vrot.lane.b32.xlu0 %v2370, 48
      %v3137 = vpop.permute.xlu0 %3136
      %3138 = vrot.lane.b32.xlu0 %v2372, 48
      %v3139 = vpop.permute.xlu0 %3138
      %3140 = vrot.lane.b32.xlu0 %v2373, 48
      %v3141 = vpop.permute.xlu0 %3140
      %v3175 = vrot.slane %v2372, 1
      %v3176 = vrot.slane %v2373, 1
      %v3177 = vsel %vm491, %v3175, %v3176
      %v3178 = vrot.slane %v2374, 1
      %v3179 = vsel %vm491, %v3176, %v3178
      %3180 = vrot.lane.b32.xlu0 %v2435, 56
      %v3181 = vpop.permute.xlu0 %3180
      %3182 = vrot.lane.b32.xlu0 %v2437, 56
      %v3183 = vpop.permute.xlu0 %3182
      %3184 = vrot.lane.b32.xlu0 %v2440, 56
      %v3185 = vpop.permute.xlu0 %3184
      %3186 = vrot.lane.b32.xlu0 %v2442, 56
      %v3187 = vpop.permute.xlu0 %3186
      %3188 = vrot.lane.b32.xlu0 %v2445, 56
      %v3189 = vpop.permute.xlu0 %3188
      %3190 = vrot.lane.b32.xlu0 %v2447, 56
      %v3191 = vpop.permute.xlu0 %3190
      %3192 = vrot.lane.b32.xlu0 %v2450, 56
      %v3193 = vpop.permute.xlu0 %3192
      %3194 = vrot.lane.b32.xlu0 %v2452, 56
      %v3195 = vpop.permute.xlu0 %3194
      %3196 = vrot.lane.b32.xlu0 %v2455, 56
      %v3197 = vpop.permute.xlu0 %3196
      %3198 = vrot.lane.b32.xlu0 %v2457, 56
      %v3199 = vpop.permute.xlu0 %3198
      %3200 = vrot.lane.b32.xlu0 %v2460, 56
      %v3201 = vpop.permute.xlu0 %3200
      %3202 = vrot.lane.b32.xlu0 %v2462, 56
      %v3203 = vpop.permute.xlu0 %3202
      %3204 = vrot.lane.b32.xlu0 %v2465, 56
      %v3205 = vpop.permute.xlu0 %3204
      %3206 = vrot.lane.b32.xlu0 %v2467, 56
      %v3207 = vpop.permute.xlu0 %3206
      %3208 = vrot.lane.b32.xlu0 %v2470, 56
      %v3209 = vpop.permute.xlu0 %3208
      %3210 = vrot.lane.b32.xlu0 %v2472, 56
      %v3211 = vpop.permute.xlu0 %3210
      %3212 = vrot.lane.b32.xlu0 %v2475, 56
      %v3213 = vpop.permute.xlu0 %3212
      %3214 = vrot.lane.b32.xlu0 %v2477, 56
      %v3215 = vpop.permute.xlu0 %3214
      %3216 = vrot.lane.b32.xlu0 %v2480, 56
      %v3217 = vpop.permute.xlu0 %3216
      %3218 = vrot.lane.b32.xlu0 %v2482, 56
      %v3219 = vpop.permute.xlu0 %3218
      %3220 = vrot.lane.b32.xlu0 %v2485, 56
      %v3221 = vpop.permute.xlu0 %3220
      %3222 = vrot.lane.b32.xlu0 %v2487, 56
      %v3223 = vpop.permute.xlu0 %3222
      %3224 = vrot.lane.b32.xlu0 %v2490, 56
      %v3225 = vpop.permute.xlu0 %3224
      %3226 = vrot.lane.b32.xlu0 %v2492, 56
      %v3227 = vpop.permute.xlu0 %3226
      %3228 = vrot.lane.b32.xlu0 %v2495, 56
      %v3229 = vpop.permute.xlu0 %3228
      %3230 = vrot.lane.b32.xlu0 %v2497, 56
      %v3231 = vpop.permute.xlu0 %3230
      %3232 = vrot.lane.b32.xlu0 %v2500, 56
      %v3233 = vpop.permute.xlu0 %3232
      %3234 = vrot.lane.b32.xlu0 %v2502, 56
      %v3235 = vpop.permute.xlu0 %3234
      %3236 = vrot.lane.b32.xlu0 %v2876, 56
      %v3237 = vpop.permute.xlu0 %3236
      %3238 = vrot.lane.b32.xlu0 %v2878, 56
      %v3239 = vpop.permute.xlu0 %3238
      %3240 = vrot.lane.b32.xlu0 %v3177, 56
      %v3241 = vpop.permute.xlu0 %3240
      %3242 = vrot.lane.b32.xlu0 %v3179, 56
      %v3243 = vpop.permute.xlu0 %3242
      %v3276 = vrot.slane %v2372, 2
      %v3277 = vrot.slane %v2373, 2
      %v3278 = vsel %vm668, %v3276, %v3277
      %v3279 = vrot.slane %v2374, 2
      %v3280 = vsel %vm668, %v3277, %v3279
      %3281 = vrot.lane.b32.xlu0 %v2611, 64
      %v3282 = vpop.permute.xlu0 %3281
      %3283 = vrot.lane.b32.xlu0 %v2613, 64
      %v3284 = vpop.permute.xlu0 %3283
      %3285 = vrot.lane.b32.xlu0 %v2616, 64
      %v3286 = vpop.permute.xlu0 %3285
      %3287 = vrot.lane.b32.xlu0 %v2618, 64
      %v3288 = vpop.permute.xlu0 %3287
      %3289 = vrot.lane.b32.xlu0 %v2621, 64
      %v3290 = vpop.permute.xlu0 %3289
      %3291 = vrot.lane.b32.xlu0 %v2623, 64
      %v3292 = vpop.permute.xlu0 %3291
      %3293 = vrot.lane.b32.xlu0 %v2626, 64
      %v3294 = vpop.permute.xlu0 %3293
      %3295 = vrot.lane.b32.xlu0 %v2628, 64
      %v3296 = vpop.permute.xlu0 %3295
      %3297 = vrot.lane.b32.xlu0 %v2631, 64
      %v3298 = vpop.permute.xlu0 %3297
      %3299 = vrot.lane.b32.xlu0 %v2633, 64
      %v3300 = vpop.permute.xlu0 %3299
      %3301 = vrot.lane.b32.xlu0 %v2636, 64
      %v3302 = vpop.permute.xlu0 %3301
      %3303 = vrot.lane.b32.xlu0 %v2638, 64
      %v3304 = vpop.permute.xlu0 %3303
      %3305 = vrot.lane.b32.xlu0 %v2641, 64
      %v3306 = vpop.permute.xlu0 %3305
      %3307 = vrot.lane.b32.xlu0 %v2643, 64
      %v3308 = vpop.permute.xlu0 %3307
      %3309 = vrot.lane.b32.xlu0 %v2646, 64
      %v3310 = vpop.permute.xlu0 %3309
      %3311 = vrot.lane.b32.xlu0 %v2648, 64
      %v3312 = vpop.permute.xlu0 %3311
      %3313 = vrot.lane.b32.xlu0 %v2651, 64
      %v3314 = vpop.permute.xlu0 %3313
      %3315 = vrot.lane.b32.xlu0 %v2653, 64
      %v3316 = vpop.permute.xlu0 %3315
      %3317 = vrot.lane.b32.xlu0 %v2656, 64
      %v3318 = vpop.permute.xlu0 %3317
      %3319 = vrot.lane.b32.xlu0 %v2658, 64
      %v3320 = vpop.permute.xlu0 %3319
      %3321 = vrot.lane.b32.xlu0 %v2661, 64
      %v3322 = vpop.permute.xlu0 %3321
      %3323 = vrot.lane.b32.xlu0 %v2663, 64
      %v3324 = vpop.permute.xlu0 %3323
      %3325 = vrot.lane.b32.xlu0 %v2666, 64
      %v3326 = vpop.permute.xlu0 %3325
      %3327 = vrot.lane.b32.xlu0 %v2668, 64
      %v3328 = vpop.permute.xlu0 %3327
      %3329 = vrot.lane.b32.xlu0 %v2671, 64
      %v3330 = vpop.permute.xlu0 %3329
      %3331 = vrot.lane.b32.xlu0 %v2673, 64
      %v3332 = vpop.permute.xlu0 %3331
      %3333 = vrot.lane.b32.xlu0 %v2676, 64
      %v3334 = vpop.permute.xlu0 %3333
      %3335 = vrot.lane.b32.xlu0 %v2678, 64
      %v3336 = vpop.permute.xlu0 %3335
      %3337 = vrot.lane.b32.xlu0 %v2977, 64
      %v3338 = vpop.permute.xlu0 %3337
      %3339 = vrot.lane.b32.xlu0 %v2979, 64
      %v3340 = vpop.permute.xlu0 %3339
      %3341 = vrot.lane.b32.xlu0 %v3278, 64
      %v3342 = vpop.permute.xlu0 %3341
      %3343 = vrot.lane.b32.xlu0 %v3280, 64
      %v3344 = vpop.permute.xlu0 %3343
      %v3377 = vsel %vm333, %v2321, %v2504
      %v3378 = vsel %vm333, %v2322, %v2506
      %v3379 = vsel %vm333, %v2324, %v2508
      %v3380 = vsel %vm333, %v2325, %v2510
      %v3381 = vsel %vm333, %v2327, %v2512
      %v3382 = vsel %vm333, %v2328, %v2514
      %v3383 = vsel %vm333, %v2330, %v2516
      %v3384 = vsel %vm333, %v2331, %v2518
      %v3385 = vsel %vm333, %v2333, %v2520
      %v3386 = vsel %vm333, %v2334, %v2522
      %v3387 = vsel %vm333, %v2336, %v2524
      %v3388 = vsel %vm333, %v2337, %v2526
      %v3389 = vsel %vm333, %v2339, %v2528
      %v3390 = vsel %vm333, %v2340, %v2530
      %v3391 = vsel %vm333, %v2342, %v2532
      %v3392 = vsel %vm333, %v2343, %v2534
      %v3393 = vsel %vm333, %v2345, %v2536
      %v3394 = vsel %vm333, %v2346, %v2538
      %v3395 = vsel %vm333, %v2348, %v2540
      %v3396 = vsel %vm333, %v2349, %v2542
      %v3397 = vsel %vm333, %v2351, %v2544
      %v3398 = vsel %vm333, %v2352, %v2546
      %v3399 = vsel %vm333, %v2354, %v2548
      %v3400 = vsel %vm333, %v2355, %v2550
      %v3401 = vsel %vm333, %v2357, %v2552
      %v3402 = vsel %vm333, %v2358, %v2554
      %v3403 = vsel %vm333, %v2360, %v2556
      %v3404 = vsel %vm333, %v2361, %v2558
      %v3405 = vsel %vm333, %v2363, %v2560
      %v3406 = vsel %vm333, %v2364, %v2562
      %v3407 = vsel %vm333, %v2366, %v2564
      %v3408 = vsel %vm333, %v2367, %v2566
      %v3409 = vsel %vm1545, %v3377, %v2680
      %v3410 = vsel %vm1545, %v3378, %v2682
      %v3411 = vsel %vm1545, %v3379, %v2684
      %v3412 = vsel %vm1545, %v3380, %v2686
      %v3413 = vsel %vm1545, %v3381, %v2688
      %v3414 = vsel %vm1545, %v3382, %v2690
      %v3415 = vsel %vm1545, %v3383, %v2692
      %v3416 = vsel %vm1545, %v3384, %v2694
      %v3417 = vsel %vm1545, %v3385, %v2696
      %v3418 = vsel %vm1545, %v3386, %v2698
      %v3419 = vsel %vm1545, %v3387, %v2700
      %v3420 = vsel %vm1545, %v3388, %v2702
      %v3421 = vsel %vm1545, %v3389, %v2704
      %v3422 = vsel %vm1545, %v3390, %v2706
      %v3423 = vsel %vm1545, %v3391, %v2708
      %v3424 = vsel %vm1545, %v3392, %v2710
      %v3425 = vsel %vm1545, %v3393, %v2712
      %v3426 = vsel %vm1545, %v3394, %v2714
      %v3427 = vsel %vm1545, %v3395, %v2716
      %v3428 = vsel %vm1545, %v3396, %v2718
      %v3429 = vsel %vm1545, %v3397, %v2720
      %v3430 = vsel %vm1545, %v3398, %v2722
      %v3431 = vsel %vm1545, %v3399, %v2724
      %v3432 = vsel %vm1545, %v3400, %v2726
      %v3433 = vsel %vm1545, %v3401, %v2728
      %v3434 = vsel %vm1545, %v3402, %v2730
      %v3435 = vsel %vm1545, %v3403, %v2732
      %v3436 = vsel %vm1545, %v3404, %v2734
      %v3437 = vsel %vm1545, %v3405, %v2736
      %v3438 = vsel %vm1545, %v3406, %v2738
      %v3439 = vsel %vm1545, %v3407, %v2740
      %v3440 = vsel %vm1545, %v3408, %v2742
      %v3441 = vsel %vm1611, %v3409, %v2778
      %v3442 = vsel %vm1611, %v3410, %v2780
      %v3443 = vsel %vm1611, %v3411, %v2782
      %v3444 = vsel %vm1611, %v3412, %v2784
      %v3445 = vsel %vm1611, %v3413, %v2786
      %v3446 = vsel %vm1611, %v3414, %v2788
      %v3447 = vsel %vm1611, %v3415, %v2790
      %v3448 = vsel %vm1611, %v3416, %v2792
      %v3449 = vsel %vm1611, %v3417, %v2794
      %v3450 = vsel %vm1611, %v3418, %v2796
      %v3451 = vsel %vm1611, %v3419, %v2798
      %v3452 = vsel %vm1611, %v3420, %v2800
      %v3453 = vsel %vm1611, %v3421, %v2802
      %v3454 = vsel %vm1611, %v3422, %v2804
      %v3455 = vsel %vm1611, %v3423, %v2806
      %v3456 = vsel %vm1611, %v3424, %v2808
      %v3457 = vsel %vm1611, %v3425, %v2810
      %v3458 = vsel %vm1611, %v3426, %v2812
      %v3459 = vsel %vm1611, %v3427, %v2814
      %v3460 = vsel %vm1611, %v3428, %v2816
      %v3461 = vsel %vm1611, %v3429, %v2818
      %v3462 = vsel %vm1611, %v3430, %v2820
      %v3463 = vsel %vm1611, %v3431, %v2822
      %v3464 = vsel %vm1611, %v3432, %v2824
      %v3465 = vsel %vm1611, %v3433, %v2826
      %v3466 = vsel %vm1611, %v3434, %v2828
      %v3467 = vsel %vm1611, %v3435, %v2830
      %v3468 = vsel %vm1611, %v3436, %v2832
      %v3469 = vsel %vm1611, %v3437, %v2834
      %v3470 = vsel %vm1611, %v3438, %v2836
      %v3471 = vsel %vm1611, %v3439, %v2838
      %v3472 = vsel %vm1611, %v3440, %v2840
      %v3473 = vsel %vm1677, %v3441, %v2880
      %v3474 = vsel %vm1677, %v3442, %v2882
      %v3475 = vsel %vm1677, %v3443, %v2884
      %v3476 = vsel %vm1677, %v3444, %v2886
      %v3477 = vsel %vm1677, %v3445, %v2888
      %v3478 = vsel %vm1677, %v3446, %v2890
      %v3479 = vsel %vm1677, %v3447, %v2892
      %v3480 = vsel %vm1677, %v3448, %v2894
      %v3481 = vsel %vm1677, %v3449, %v2896
      %v3482 = vsel %vm1677, %v3450, %v2898
      %v3483 = vsel %vm1677, %v3451, %v2900
      %v3484 = vsel %vm1677, %v3452, %v2902
      %v3485 = vsel %vm1677, %v3453, %v2904
      %v3486 = vsel %vm1677, %v3454, %v2906
      %v3487 = vsel %vm1677, %v3455, %v2908
      %v3488 = vsel %vm1677, %v3456, %v2910
      %v3489 = vsel %vm1677, %v3457, %v2912
      %v3490 = vsel %vm1677, %v3458, %v2914
      %v3491 = vsel %vm1677, %v3459, %v2916
      %v3492 = vsel %vm1677, %v3460, %v2918
      %v3493 = vsel %vm1677, %v3461, %v2920
      %v3494 = vsel %vm1677, %v3462, %v2922
      %v3495 = vsel %vm1677, %v3463, %v2924
      %v3496 = vsel %vm1677, %v3464, %v2926
      %v3497 = vsel %vm1677, %v3465, %v2928
      %v3498 = vsel %vm1677, %v3466, %v2930
      %v3499 = vsel %vm1677, %v3467, %v2932
      %v3500 = vsel %vm1677, %v3468, %v2934
      %v3501 = vsel %vm1677, %v3469, %v2936
      %v3502 = vsel %vm1677, %v3470, %v2938
      %v3503 = vsel %vm1677, %v3471, %v2940
      %v3504 = vsel %vm1677, %v3472, %v2942
      %vm3505 = vcmask 326656
      %v3506 = vsel %vm3505, %v3473, %v2981
      %v3507 = vsel %vm3505, %v3474, %v2983
      %v3508 = vsel %vm3505, %v3475, %v2985
      %v3509 = vsel %vm3505, %v3476, %v2987
      %v3510 = vsel %vm3505, %v3477, %v2989
      %v3511 = vsel %vm3505, %v3478, %v2991
      %v3512 = vsel %vm3505, %v3479, %v2993
      %v3513 = vsel %vm3505, %v3480, %v2995
      %v3514 = vsel %vm3505, %v3481, %v2997
      %v3515 = vsel %vm3505, %v3482, %v2999
      %v3516 = vsel %vm3505, %v3483, %v3001
      %v3517 = vsel %vm3505, %v3484, %v3003
      %v3518 = vsel %vm3505, %v3485, %v3005
      %v3519 = vsel %vm3505, %v3486, %v3007
      %v3520 = vsel %vm3505, %v3487, %v3009
      %v3521 = vsel %vm3505, %v3488, %v3011
      %v3522 = vsel %vm3505, %v3489, %v3013
      %v3523 = vsel %vm3505, %v3490, %v3015
      %v3524 = vsel %vm3505, %v3491, %v3017
      %v3525 = vsel %vm3505, %v3492, %v3019
      %v3526 = vsel %vm3505, %v3493, %v3021
      %v3527 = vsel %vm3505, %v3494, %v3023
      %v3528 = vsel %vm3505, %v3495, %v3025
      %v3529 = vsel %vm3505, %v3496, %v3027
      %v3530 = vsel %vm3505, %v3497, %v3029
      %v3531 = vsel %vm3505, %v3498, %v3031
      %v3532 = vsel %vm3505, %v3499, %v3033
      %v3533 = vsel %vm3505, %v3500, %v3035
      %v3534 = vsel %vm3505, %v3501, %v3037
      %v3535 = vsel %vm3505, %v3502, %v3039
      %v3536 = vsel %vm3505, %v3503, %v3041
      %v3537 = vsel %vm3505, %v3504, %v3043
      %vm3538 = vcmask 392192
      %v3539 = vsel %vm3538, %v3506, %v3079
      %v3540 = vsel %vm3538, %v3507, %v3081
      %v3541 = vsel %vm3538, %v3508, %v3083
      %v3542 = vsel %vm3538, %v3509, %v3085
      %v3543 = vsel %vm3538, %v3510, %v3087
      %v3544 = vsel %vm3538, %v3511, %v3089
      %v3545 = vsel %vm3538, %v3512, %v3091
      %v3546 = vsel %vm3538, %v3513, %v3093
      %v3547 = vsel %vm3538, %v3514, %v3095
      %v3548 = vsel %vm3538, %v3515, %v3097
      %v3549 = vsel %vm3538, %v3516, %v3099
      %v3550 = vsel %vm3538, %v3517, %v3101
      %v3551 = vsel %vm3538, %v3518, %v3103
      %v3552 = vsel %vm3538, %v3519, %v3105
      %v3553 = vsel %vm3538, %v3520, %v3107
      %v3554 = vsel %vm3538, %v3521, %v3109
      %v3555 = vsel %vm3538, %v3522, %v3111
      %v3556 = vsel %vm3538, %v3523, %v3113
      %v3557 = vsel %vm3538, %v3524, %v3115
      %v3558 = vsel %vm3538, %v3525, %v3117
      %v3559 = vsel %vm3538, %v3526, %v3119
      %v3560 = vsel %vm3538, %v3527, %v3121
      %v3561 = vsel %vm3538, %v3528, %v3123
      %v3562 = vsel %vm3538, %v3529, %v3125
      %v3563 = vsel %vm3538, %v3530, %v3127
      %v3564 = vsel %vm3538, %v3531, %v3129
      %v3565 = vsel %vm3538, %v3532, %v3131
      %v3566 = vsel %vm3538, %v3533, %v3133
      %v3567 = vsel %vm3538, %v3534, %v3135
      %v3568 = vsel %vm3538, %v3535, %v3137
      %v3569 = vsel %vm3538, %v3536, %v3139
      %v3570 = vsel %vm3538, %v3537, %v3141
      %vm3571 = vcmask 457728
      %v3572 = vsel %vm3571, %v3539, %v3181
      %v3573 = vsel %vm3571, %v3540, %v3183
      %v3574 = vsel %vm3571, %v3541, %v3185
      %v3575 = vsel %vm3571, %v3542, %v3187
      %v3576 = vsel %vm3571, %v3543, %v3189
      %v3577 = vsel %vm3571, %v3544, %v3191
      %v3578 = vsel %vm3571, %v3545, %v3193
      %v3579 = vsel %vm3571, %v3546, %v3195
      %v3580 = vsel %vm3571, %v3547, %v3197
      %v3581 = vsel %vm3571, %v3548, %v3199
      %v3582 = vsel %vm3571, %v3549, %v3201
      %v3583 = vsel %vm3571, %v3550, %v3203
      %v3584 = vsel %vm3571, %v3551, %v3205
      %v3585 = vsel %vm3571, %v3552, %v3207
      %v3586 = vsel %vm3571, %v3553, %v3209
      %v3587 = vsel %vm3571, %v3554, %v3211
      %v3588 = vsel %vm3571, %v3555, %v3213
      %v3589 = vsel %vm3571, %v3556, %v3215
      %v3590 = vsel %vm3571, %v3557, %v3217
      %v3591 = vsel %vm3571, %v3558, %v3219
      %v3592 = vsel %vm3571, %v3559, %v3221
      %v3593 = vsel %vm3571, %v3560, %v3223
      %v3594 = vsel %vm3571, %v3561, %v3225
      %v3595 = vsel %vm3571, %v3562, %v3227
      %v3596 = vsel %vm3571, %v3563, %v3229
      %v3597 = vsel %vm3571, %v3564, %v3231
      %v3598 = vsel %vm3571, %v3565, %v3233
      %v3599 = vsel %vm3571, %v3566, %v3235
      %v3600 = vsel %vm3571, %v3567, %v3237
      %v3601 = vsel %vm3571, %v3568, %v3239
      %v3602 = vsel %vm3571, %v3569, %v3241
      %v3603 = vsel %vm3571, %v3570, %v3243
      %vm3604 = vcmask 523264
      %v3605 = vsel %vm3604, %v3572, %v3282
      %v3606 = vsel %vm3604, %v3573, %v3284
      %v3607 = vsel %vm3604, %v3574, %v3286
      %v3608 = vsel %vm3604, %v3575, %v3288
      %v3609 = vsel %vm3604, %v3576, %v3290
      %v3610 = vsel %vm3604, %v3577, %v3292
      %v3611 = vsel %vm3604, %v3578, %v3294
      %v3612 = vsel %vm3604, %v3579, %v3296
      %v3613 = vsel %vm3604, %v3580, %v3298
      %v3614 = vsel %vm3604, %v3581, %v3300
      %v3615 = vsel %vm3604, %v3582, %v3302
      %v3616 = vsel %vm3604, %v3583, %v3304
      %v3617 = vsel %vm3604, %v3584, %v3306
      %v3618 = vsel %vm3604, %v3585, %v3308
      %v3619 = vsel %vm3604, %v3586, %v3310
      %v3620 = vsel %vm3604, %v3587, %v3312
      %v3621 = vsel %vm3604, %v3588, %v3314
      %v3622 = vsel %vm3604, %v3589, %v3316
      %v3623 = vsel %vm3604, %v3590, %v3318
      %v3624 = vsel %vm3604, %v3591, %v3320
      %v3625 = vsel %vm3604, %v3592, %v3322
      %v3626 = vsel %vm3604, %v3593, %v3324
      %v3627 = vsel %vm3604, %v3594, %v3326
      %v3628 = vsel %vm3604, %v3595, %v3328
      %v3629 = vsel %vm3604, %v3596, %v3330
      %v3630 = vsel %vm3604, %v3597, %v3332
      %v3631 = vsel %vm3604, %v3598, %v3334
      %v3632 = vsel %vm3604, %v3599, %v3336
      %v3633 = vsel %vm3604, %v3600, %v3338
      %v3634 = vsel %vm3604, %v3601, %v3340
      %v3635 = vsel %vm3604, %v3602, %v3342
      %v3636 = vsel %vm3604, %v3603, %v3344
      %v3637 = vld [vmem:[%s3] sm:$0xff]
      %v3638 = vld [vmem:[%s3 + $0x8] sm:$0xff]
      %v3639 = vld [vmem:[%s3 + $0x10] sm:$0xff]
      %v3640 = vld [vmem:[%s3 + $0x18] sm:$0xff]
      %v3641 = vld [vmem:[%s3 + $0x20] sm:$0xff]
      %v3642 = vld [vmem:[%s3 + $0x28] sm:$0xff]
      %v3643 = vld [vmem:[%s3 + $0x30] sm:$0xff]
      %v3644 = vld [vmem:[%s3 + $0x38] sm:$0xff]
      %v3645 = vld [vmem:[%s3 + $0x40] sm:$0xff]
      %v3646 = vld [vmem:[%s4] sm:$0x1]
      %v3648 = vlaneseq
      %v3649 = vshrl.u32 %v3648, 7
      %v3650 = vsub.s32 0, %v3649
      %v3651 = vrot.slane %v3646, %v3650
      %vm3653 = vcmask 588800
      %v3655 = vsel %vm3653, %v3605, 0
      %v3658 = vsel %vm3653, %v3606, 0
      %v3661 = vsel %vm3653, %v3607, 0
      %v3664 = vsel %vm3653, %v3608, 0
      %v3667 = vsel %vm3653, %v3609, 0
      %v3670 = vsel %vm3653, %v3610, 0
      %v3673 = vsel %vm3653, %v3611, 0
      %v3676 = vsel %vm3653, %v3612, 0
      %v3679 = vsel %vm3653, %v3613, 0
      %v3682 = vsel %vm3653, %v3614, 0
      %v3685 = vsel %vm3653, %v3615, 0
      %v3688 = vsel %vm3653, %v3616, 0
      %v3691 = vsel %vm3653, %v3617, 0
      %v3694 = vsel %vm3653, %v3618, 0
      %v3697 = vsel %vm3653, %v3619, 0
      %v3700 = vsel %vm3653, %v3620, 0
      %v3703 = vsel %vm3653, %v3621, 0
      %v3706 = vsel %vm3653, %v3622, 0
      %v3709 = vsel %vm3653, %v3623, 0
      %v3712 = vsel %vm3653, %v3624, 0
      %v3715 = vsel %vm3653, %v3625, 0
      %v3718 = vsel %vm3653, %v3626, 0
      %v3721 = vsel %vm3653, %v3627, 0
      %v3724 = vsel %vm3653, %v3628, 0
      %v3727 = vsel %vm3653, %v3629, 0
      %v3730 = vsel %vm3653, %v3630, 0
      %v3733 = vsel %vm3653, %v3631, 0
      %v3736 = vsel %vm3653, %v3632, 0
      %v3739 = vsel %vm3653, %v3633, 0
      %v3742 = vsel %vm3653, %v3634, 0
      %v3745 = vsel %vm3653, %v3635, 0
      %v3748 = vsel %vm3653, %v3636, 0
      %3750 = vmatprep.subr.mxu0 0.0
      %3751 = vmatpush1.msra.mxu0 %v3637
      %3752 = vmatprep.subr.mxu0 0.0
      %3753 = vmatpush1.msra.mxu0 %v3638
      %3754 = vmatprep.subr.mxu0 0.0
      %3755 = vmatpush1.msra.mxu0 %v3639
      %3756 = vmatprep.subr.mxu0 0.0
      %3757 = vmatpush1.msra.mxu0 %v3640
      %3758 = vmatprep.subr.mxu0 0.0
      %3759 = vmatpush1.msra.mxu0 %v3641
      %3760 = vmatprep.subr.mxu0 0.0
      %3761 = vmatpush1.msra.mxu0 %v3642
      %3762 = vmatprep.subr.mxu0 0.0
      %3763 = vmatpush1.msra.mxu0 %v3643
      %3764 = vmatprep.subr.mxu0 0.0
      %3765 = vmatpush1.msra.mxu0 %v3644
      %3766 = vmatprep.subr.mxu0 0.0
      %3767 = vmatpush1.msra.mxu0 %v3645
      %3768 = vmatprep.subr.mxu0 0.0
      %3769 = vmatpush1.msra.mxu0 0.0
      %3770 = vmatprep.subr.mxu0 0.0
      %3771 = vmatpush1.msra.mxu0 0.0
      %3772 = vmatprep.subr.mxu0 0.0
      %3773 = vmatpush1.msra.mxu0 0.0
      %3774 = vmatprep.subr.mxu0 0.0
      %3775 = vmatpush1.msra.mxu0 0.0
      %3776 = vmatprep.subr.mxu0 0.0
      %3777 = vmatpush1.msra.mxu0 0.0
      %3778 = vmatprep.subr.mxu0 0.0
      %3779 = vmatpush1.msra.mxu0 0.0
      %3780 = vmatprep.subr.mxu0 0.0
      %3781 = vmatpush1.msra.mxu0 0.0
      %3782 = vmatprep.subr.mxu0 0.0
      %3783 = vmatpush1.msra.mxu0 0.0
      %3784 = vmatprep.subr.mxu0 0.0
      %3785 = vmatpush1.msra.mxu0 0.0
      %3786 = vmatprep.subr.mxu0 0.0
      %3787 = vmatpush1.msra.mxu0 0.0
      %3788 = vmatprep.subr.mxu0 0.0
      %3789 = vmatpush1.msra.mxu0 0.0
      %3790 = vmatprep.subr.mxu0 0.0
      %3791 = vmatpush1.msra.mxu0 0.0
      %3792 = vmatprep.subr.mxu0 0.0
      %3793 = vmatpush1.msra.mxu0 0.0
      %3794 = vmatprep.subr.mxu0 0.0
      %3795 = vmatpush1.msra.mxu0 0.0
      %3796 = vmatprep.subr.mxu0 0.0
      %3797 = vmatpush1.msra.mxu0 0.0
      %3798 = vmatprep.subr.mxu0 0.0
      %3799 = vmatpush1.msra.mxu0 0.0
      %3800 = vmatprep.subr.mxu0 0.0
      %3801 = vmatpush1.msra.mxu0 0.0
      %3802 = vmatprep.subr.mxu0 0.0
      %3803 = vmatpush1.msra.mxu0 0.0
      %3804 = vmatprep.subr.mxu0 0.0
      %3805 = vmatpush1.msra.mxu0 0.0
      %3806 = vmatprep.subr.mxu0 0.0
      %3807 = vmatpush1.msra.mxu0 0.0
      %3808 = vmatprep.subr.mxu0 0.0
      %3809 = vmatpush1.msra.mxu0 0.0
      %3810 = vmatprep.subr.mxu0 0.0
      %3811 = vmatpush1.msra.mxu0 0.0
      %3812 = vmatprep.subr.mxu0 0.0
      %3813 = vmatpush1.msra.mxu0 0.0
      %3814 = vmatprep.mubr.f32.mxu0 0.0
      %3815 = vmatmul.mubr.f32.gmra.mrb[0].mxu0 %v3655
      %v3816 = vpop.f32.mrb[0].mxu0
      %v3817 = vadd.f32 %v3651, %v3816
      %v3818 = vpop.f32.mrb[0].mxu0
      %3819 = vmatprep.mubr.f32.mxu0 0.0
      %3820 = vmatmul.mubr.f32.gmra.mrb[0].mxu0 %v3658
      %v3821 = vpop.f32.mrb[0].mxu0
      %v3822 = vadd.f32 %v3651, %v3821
      %v3823 = vpop.f32.mrb[0].mxu0
      %3824 = vmatprep.mubr.f32.mxu0 0.0
      %3825 = vmatmul.mubr.f32.gmra.mrb[0].mxu0 %v3661
      %v3826 = vpop.f32.mrb[0].mxu0
      %v3827 = vadd.f32 %v3651, %v3826
      %v3828 = vpop.f32.mrb[0].mxu0
      %3829 = vmatprep.mubr.f32.mxu0 0.0
      %3830 = vmatmul.mubr.f32.gmra.mrb[0].mxu0 %v3664
      %v3831 = vpop.f32.mrb[0].mxu0
      %v3832 = vadd.f32 %v3651, %v3831
      %v3833 = vpop.f32.mrb[0].mxu0
      %3834 = vmatprep.mubr.f32.mxu0 0.0
      %3835 = vmatmul.mubr.f32.gmra.mrb[0].mxu0 %v3667
      %v3836 = vpop.f32.mrb[0].mxu0
      %v3837 = vadd.f32 %v3651, %v3836
      %v3838 = vpop.f32.mrb[0].mxu0
      %3839 = vmatprep.mubr.f32.mxu0 0.0
      %3840 = vmatmul.mubr.f32.gmra.mrb[0].mxu0 %v3670
      %v3841 = vpop.f32.mrb[0].mxu0
      %v3842 = vadd.f32 %v3651, %v3841
      %v3843 = vpop.f32.mrb[0].mxu0
      %3844 = vmatprep.mubr.f32.mxu0 0.0
      %3845 = vmatmul.mubr.f32.gmra.mrb[0].mxu0 %v3673
      %v3846 = vpop.f32.mrb[0].mxu0
      %v3847 = vadd.f32 %v3651, %v3846
      %v3848 = vpop.f32.mrb[0].mxu0
      %3849 = vmatprep.mubr.f32.mxu0 0.0
      %3850 = vmatmul.mubr.f32.gmra.mrb[0].mxu0 %v3676
      %v3851 = vpop.f32.mrb[0].mxu0
      %v3852 = vadd.f32 %v3651, %v3851
      %v3853 = vpop.f32.mrb[0].mxu0
      %3854 = vmatprep.mubr.f32.mxu0 0.0
      %3855 = vmatmul.mubr.f32.gmra.mrb[0].mxu0 %v3679
      %v3856 = vpop.f32.mrb[0].mxu0
      %v3857 = vadd.f32 %v3651, %v3856
      %v3858 = vpop.f32.mrb[0].mxu0
      %3859 = vmatprep.mubr.f32.mxu0 0.0
      %3860 = vmatmul.mubr.f32.gmra.mrb[0].mxu0 %v3682
      %v3861 = vpop.f32.mrb[0].mxu0
      %v3862 = vadd.f32 %v3651, %v3861
      %v3863 = vpop.f32.mrb[0].mxu0
      %3864 = vmatprep.mubr.f32.mxu0 0.0
      %3865 = vmatmul.mubr.f32.gmra.mrb[0].mxu0 %v3685
      %v3866 = vpop.f32.mrb[0].mxu0
      %v3867 = vadd.f32 %v3651, %v3866
      %v3868 = vpop.f32.mrb[0].mxu0
      %3869 = vmatprep.mubr.f32.mxu0 0.0
      %3870 = vmatmul.mubr.f32.gmra.mrb[0].mxu0 %v3688
      %v3871 = vpop.f32.mrb[0].mxu0
      %v3872 = vadd.f32 %v3651, %v3871
      %v3873 = vpop.f32.mrb[0].mxu0
      %3874 = vmatprep.mubr.f32.mxu0 0.0
      %3875 = vmatmul.mubr.f32.gmra.mrb[0].mxu0 %v3691
      %v3876 = vpop.f32.mrb[0].mxu0
      %v3877 = vadd.f32 %v3651, %v3876
      %v3878 = vpop.f32.mrb[0].mxu0
      %3879 = vmatprep.mubr.f32.mxu0 0.0
      %3880 = vmatmul.mubr.f32.gmra.mrb[0].mxu0 %v3694
      %v3881 = vpop.f32.mrb[0].mxu0
      %v3882 = vadd.f32 %v3651, %v3881
      %v3883 = vpop.f32.mrb[0].mxu0
      %3884 = vmatprep.mubr.f32.mxu0 0.0
      %3885 = vmatmul.mubr.f32.gmra.mrb[0].mxu0 %v3697
      %v3886 = vpop.f32.mrb[0].mxu0
      %v3887 = vadd.f32 %v3651, %v3886
      %v3888 = vpop.f32.mrb[0].mxu0
      %3889 = vmatprep.mubr.f32.mxu0 0.0
      %3890 = vmatmul.mubr.f32.gmra.mrb[0].mxu0 %v3700
      %v3891 = vpop.f32.mrb[0].mxu0
      %v3892 = vadd.f32 %v3651, %v3891
      %v3893 = vpop.f32.mrb[0].mxu0
      %3894 = vmatprep.mubr.f32.mxu0 0.0
      %3895 = vmatmul.mubr.f32.gmra.mrb[0].mxu0 %v3703
      %v3896 = vpop.f32.mrb[0].mxu0
      %v3897 = vadd.f32 %v3651, %v3896
      %v3898 = vpop.f32.mrb[0].mxu0
      %3899 = vmatprep.mubr.f32.mxu0 0.0
      %3900 = vmatmul.mubr.f32.gmra.mrb[0].mxu0 %v3706
      %v3901 = vpop.f32.mrb[0].mxu0
      %v3902 = vadd.f32 %v3651, %v3901
      %v3903 = vpop.f32.mrb[0].mxu0
      %3904 = vmatprep.mubr.f32.mxu0 0.0
      %3905 = vmatmul.mubr.f32.gmra.mrb[0].mxu0 %v3709
      %v3906 = vpop.f32.mrb[0].mxu0
      %v3907 = vadd.f32 %v3651, %v3906
      %v3908 = vpop.f32.mrb[0].mxu0
      %3909 = vmatprep.mubr.f32.mxu0 0.0
      %3910 = vmatmul.mubr.f32.gmra.mrb[0].mxu0 %v3712
      %v3911 = vpop.f32.mrb[0].mxu0
      %v3912 = vadd.f32 %v3651, %v3911
      %v3913 = vpop.f32.mrb[0].mxu0
      %3914 = vmatprep.mubr.f32.mxu0 0.0
      %3915 = vmatmul.mubr.f32.gmra.mrb[0].mxu0 %v3715
      %v3916 = vpop.f32.mrb[0].mxu0
      %v3917 = vadd.f32 %v3651, %v3916
      %v3918 = vpop.f32.mrb[0].mxu0
      %3919 = vmatprep.mubr.f32.mxu0 0.0
      %3920 = vmatmul.mubr.f32.gmra.mrb[0].mxu0 %v3718
      %v3921 = vpop.f32.mrb[0].mxu0
      %v3922 = vadd.f32 %v3651, %v3921
      %v3923 = vpop.f32.mrb[0].mxu0
      %3924 = vmatprep.mubr.f32.mxu0 0.0
      %3925 = vmatmul.mubr.f32.gmra.mrb[0].mxu0 %v3721
      %v3926 = vpop.f32.mrb[0].mxu0
      %v3927 = vadd.f32 %v3651, %v3926
      %v3928 = vpop.f32.mrb[0].mxu0
      %3929 = vmatprep.mubr.f32.mxu0 0.0
      %3930 = vmatmul.mubr.f32.gmra.mrb[0].mxu0 %v3724
      %v3931 = vpop.f32.mrb[0].mxu0
      %v3932 = vadd.f32 %v3651, %v3931
      %v3933 = vpop.f32.mrb[0].mxu0
      %3934 = vmatprep.mubr.f32.mxu0 0.0
      %3935 = vmatmul.mubr.f32.gmra.mrb[0].mxu0 %v3727
      %v3936 = vpop.f32.mrb[0].mxu0
      %v3937 = vadd.f32 %v3651, %v3936
      %v3938 = vpop.f32.mrb[0].mxu0
      %3939 = vmatprep.mubr.f32.mxu0 0.0
      %3940 = vmatmul.mubr.f32.gmra.mrb[0].mxu0 %v3730
      %v3941 = vpop.f32.mrb[0].mxu0
      %v3942 = vadd.f32 %v3651, %v3941
      %v3943 = vpop.f32.mrb[0].mxu0
      %3944 = vmatprep.mubr.f32.mxu0 0.0
      %3945 = vmatmul.mubr.f32.gmra.mrb[0].mxu0 %v3733
      %v3946 = vpop.f32.mrb[0].mxu0
      %v3947 = vadd.f32 %v3651, %v3946
      %v3948 = vpop.f32.mrb[0].mxu0
      %3949 = vmatprep.mubr.f32.mxu0 0.0
      %3950 = vmatmul.mubr.f32.gmra.mrb[0].mxu0 %v3736
      %v3951 = vpop.f32.mrb[0].mxu0
      %v3952 = vadd.f32 %v3651, %v3951
      %v3953 = vpop.f32.mrb[0].mxu0
      %3954 = vmatprep.mubr.f32.mxu0 0.0
      %3955 = vmatmul.mubr.f32.gmra.mrb[0].mxu0 %v3739
      %v3956 = vpop.f32.mrb[0].mxu0
      %v3957 = vadd.f32 %v3651, %v3956
      %v3958 = vpop.f32.mrb[0].mxu0
      %3959 = vmatprep.mubr.f32.mxu0 0.0
      %3960 = vmatmul.mubr.f32.gmra.mrb[0].mxu0 %v3742
      %v3961 = vpop.f32.mrb[0].mxu0
      %v3962 = vadd.f32 %v3651, %v3961
      %v3963 = vpop.f32.mrb[0].mxu0
      %3964 = vmatprep.mubr.f32.mxu0 0.0
      %3965 = vmatmul.mubr.f32.gmra.mrb[0].mxu0 %v3745
      %v3966 = vpop.f32.mrb[0].mxu0
      %v3967 = vadd.f32 %v3651, %v3966
      %v3968 = vpop.f32.mrb[0].mxu0
      %3969 = vmatprep.mubr.f32.mxu0 0.0
      %3970 = vmatmul.mubr.f32.gmra.mrb[0].mxu0 %v3748
      %v3971 = vpop.f32.mrb[0].mxu0
      %v3972 = vadd.f32 %v3651, %v3971
      %v3973 = vpop.f32.mrb[0].mxu0
      %3974 = vdwg.mxu0
      %v3975 = vsel %vm333, %v3817, 0.0
      %v3976 = vsel %vm333, %v3822, 0.0
      %v3977 = vadd.f32 %v3975, %v3976
      %v3978 = vsel %vm333, %v3827, 0.0
      %v3979 = vadd.f32 %v3977, %v3978
      %v3980 = vsel %vm333, %v3832, 0.0
      %v3981 = vadd.f32 %v3979, %v3980
      %v3982 = vsel %vm333, %v3837, 0.0
      %v3983 = vadd.f32 %v3981, %v3982
      %v3984 = vsel %vm333, %v3842, 0.0
      %v3985 = vadd.f32 %v3983, %v3984
      %v3986 = vsel %vm333, %v3847, 0.0
      %v3987 = vadd.f32 %v3985, %v3986
      %v3988 = vsel %vm333, %v3852, 0.0
      %v3989 = vadd.f32 %v3987, %v3988
      %v3990 = vsel %vm333, %v3857, 0.0
      %v3991 = vadd.f32 %v3989, %v3990
      %v3992 = vsel %vm333, %v3862, 0.0
      %v3993 = vadd.f32 %v3991, %v3992
      %v3994 = vsel %vm333, %v3867, 0.0
      %v3995 = vadd.f32 %v3993, %v3994
      %v3996 = vsel %vm333, %v3872, 0.0
      %v3997 = vadd.f32 %v3995, %v3996
      %v3998 = vsel %vm333, %v3877, 0.0
      %v3999 = vadd.f32 %v3997, %v3998
      %v4000 = vsel %vm333, %v3882, 0.0
      %v4001 = vadd.f32 %v3999, %v4000
      %v4002 = vsel %vm333, %v3887, 0.0
      %v4003 = vadd.f32 %v4001, %v4002
      %v4004 = vsel %vm333, %v3892, 0.0
      %v4005 = vadd.f32 %v4003, %v4004
      %v4006 = vsel %vm333, %v3897, 0.0
      %v4007 = vadd.f32 %v4005, %v4006
      %v4008 = vsel %vm333, %v3902, 0.0
      %v4009 = vadd.f32 %v4007, %v4008
      %v4010 = vsel %vm333, %v3907, 0.0
      %v4011 = vadd.f32 %v4009, %v4010
      %v4012 = vsel %vm333, %v3912, 0.0
      %v4013 = vadd.f32 %v4011, %v4012
      %v4014 = vsel %vm333, %v3917, 0.0
      %v4015 = vadd.f32 %v4013, %v4014
      %v4016 = vsel %vm333, %v3922, 0.0
      %v4017 = vadd.f32 %v4015, %v4016
      %v4018 = vsel %vm333, %v3927, 0.0
      %v4019 = vadd.f32 %v4017, %v4018
      %v4020 = vsel %vm333, %v3932, 0.0
      %v4021 = vadd.f32 %v4019, %v4020
      %v4022 = vsel %vm333, %v3937, 0.0
      %v4023 = vadd.f32 %v4021, %v4022
      %v4024 = vsel %vm333, %v3942, 0.0
      %v4025 = vadd.f32 %v4023, %v4024
      %v4026 = vsel %vm333, %v3947, 0.0
      %v4027 = vadd.f32 %v4025, %v4026
      %v4028 = vsel %vm333, %v3952, 0.0
      %v4029 = vadd.f32 %v4027, %v4028
      %v4030 = vsel %vm333, %v3957, 0.0
      %v4031 = vadd.f32 %v4029, %v4030
      %v4032 = vsel %vm333, %v3962, 0.0
      %v4033 = vadd.f32 %v4031, %v4032
      %v4034 = vsel %vm333, %v3967, 0.0
      %v4035 = vadd.f32 %v4033, %v4034
      %v4036 = vsel %vm333, %v3972, 0.0
      %v4037 = vadd.f32 %v4035, %v4036
      %v4038 = vrot.slane %v4037, 4
      %v4039 = vadd.f32 %v4037, %v4038
      %v4040 = vrot.slane %v4039, 2
      %v4041 = vadd.f32 %v4039, %v4040
      %v4042 = vrot.slane %v4041, 1
      %v4043 = vadd.f32 %v4041, %v4042
      %v4044 = vmul.f32 %v3817, %v3817
      %v4045 = vmul.f32 %v3822, %v3822
      %v4046 = vmul.f32 %v3827, %v3827
      %v4047 = vmul.f32 %v3832, %v3832
      %v4048 = vmul.f32 %v3837, %v3837
      %v4049 = vmul.f32 %v3842, %v3842
      %v4050 = vmul.f32 %v3847, %v3847
      %v4051 = vmul.f32 %v3852, %v3852
      %v4052 = vmul.f32 %v3857, %v3857
      %v4053 = vmul.f32 %v3862, %v3862
      %v4054 = vmul.f32 %v3867, %v3867
      %v4055 = vmul.f32 %v3872, %v3872
      %v4056 = vmul.f32 %v3877, %v3877
      %v4057 = vmul.f32 %v3882, %v3882
      %v4058 = vmul.f32 %v3887, %v3887
      %v4059 = vmul.f32 %v3892, %v3892
      %v4060 = vmul.f32 %v3897, %v3897
      %v4061 = vmul.f32 %v3902, %v3902
      %v4062 = vmul.f32 %v3907, %v3907
      %v4063 = vmul.f32 %v3912, %v3912
      %v4064 = vmul.f32 %v3917, %v3917
      %v4065 = vmul.f32 %v3922, %v3922
      %v4066 = vmul.f32 %v3927, %v3927
      %v4067 = vmul.f32 %v3932, %v3932
      %v4068 = vmul.f32 %v3937, %v3937
      %v4069 = vmul.f32 %v3942, %v3942
      %v4070 = vmul.f32 %v3947, %v3947
      %v4071 = vmul.f32 %v3952, %v3952
      %v4072 = vmul.f32 %v3957, %v3957
      %v4073 = vmul.f32 %v3962, %v3962
      %v4074 = vmul.f32 %v3967, %v3967
      %v4075 = vmul.f32 %v3972, %v3972
      %v4076 = vsel %vm333, %v4044, 0.0
      %v4077 = vsel %vm333, %v4045, 0.0
      %v4078 = vadd.f32 %v4076, %v4077
      %v4079 = vsel %vm333, %v4046, 0.0
      %v4080 = vadd.f32 %v4078, %v4079
      %v4081 = vsel %vm333, %v4047, 0.0
      %v4082 = vadd.f32 %v4080, %v4081
      %v4083 = vsel %vm333, %v4048, 0.0
      %v4084 = vadd.f32 %v4082, %v4083
      %v4085 = vsel %vm333, %v4049, 0.0
      %v4086 = vadd.f32 %v4084, %v4085
      %v4087 = vsel %vm333, %v4050, 0.0
      %v4088 = vadd.f32 %v4086, %v4087
      %v4089 = vsel %vm333, %v4051, 0.0
      %v4090 = vadd.f32 %v4088, %v4089
      %v4091 = vsel %vm333, %v4052, 0.0
      %v4092 = vadd.f32 %v4090, %v4091
      %v4093 = vsel %vm333, %v4053, 0.0
      %v4094 = vadd.f32 %v4092, %v4093
      %v4095 = vsel %vm333, %v4054, 0.0
      %v4096 = vadd.f32 %v4094, %v4095
      %v4097 = vsel %vm333, %v4055, 0.0
      %v4098 = vadd.f32 %v4096, %v4097
      %v4099 = vsel %vm333, %v4056, 0.0
      %v4100 = vadd.f32 %v4098, %v4099
      %v4101 = vsel %vm333, %v4057, 0.0
      %v4102 = vadd.f32 %v4100, %v4101
      %v4103 = vsel %vm333, %v4058, 0.0
      %v4104 = vadd.f32 %v4102, %v4103
      %v4105 = vsel %vm333, %v4059, 0.0
      %v4106 = vadd.f32 %v4104, %v4105
      %v4107 = vsel %vm333, %v4060, 0.0
      %v4108 = vadd.f32 %v4106, %v4107
      %v4109 = vsel %vm333, %v4061, 0.0
      %v4110 = vadd.f32 %v4108, %v4109
      %v4111 = vsel %vm333, %v4062, 0.0
      %v4112 = vadd.f32 %v4110, %v4111
      %v4113 = vsel %vm333, %v4063, 0.0
      %v4114 = vadd.f32 %v4112, %v4113
      %v4115 = vsel %vm333, %v4064, 0.0
      %v4116 = vadd.f32 %v4114, %v4115
      %v4117 = vsel %vm333, %v4065, 0.0
      %v4118 = vadd.f32 %v4116, %v4117
      %v4119 = vsel %vm333, %v4066, 0.0
      %v4120 = vadd.f32 %v4118, %v4119
      %v4121 = vsel %vm333, %v4067, 0.0
      %v4122 = vadd.f32 %v4120, %v4121
      %v4123 = vsel %vm333, %v4068, 0.0
      %v4124 = vadd.f32 %v4122, %v4123
      %v4125 = vsel %vm333, %v4069, 0.0
      %v4126 = vadd.f32 %v4124, %v4125
      %v4127 = vsel %vm333, %v4070, 0.0
      %v4128 = vadd.f32 %v4126, %v4127
      %v4129 = vsel %vm333, %v4071, 0.0
      %v4130 = vadd.f32 %v4128, %v4129
      %v4131 = vsel %vm333, %v4072, 0.0
      %v4132 = vadd.f32 %v4130, %v4131
      %v4133 = vsel %vm333, %v4073, 0.0
      %v4134 = vadd.f32 %v4132, %v4133
      %v4135 = vsel %vm333, %v4074, 0.0
      %v4136 = vadd.f32 %v4134, %v4135
      %v4137 = vsel %vm333, %v4075, 0.0
      %v4138 = vadd.f32 %v4136, %v4137
      %v4139 = vrot.slane %v4138, 4
      %v4140 = vadd.f32 %v4138, %v4139
      %v4141 = vrot.slane %v4140, 2
      %v4142 = vadd.f32 %v4140, %v4141
      %v4143 = vrot.slane %v4142, 1
      %v4144 = vadd.f32 %v4142, %v4143
      %v4145 = vmul.f32 %v4043, 0.00390625
      %v4146 = vmul.f32 %v4144, 0.00390625
      %v4147 = vmul.f32 %v4145, %v4145
      %v4148 = vsub.f32 %v4146, %v4147
      %v4149 = vsub.f32 %v3817, %v4145
      %v4150 = vsub.f32 %v3822, %v4145
      %v4151 = vsub.f32 %v3827, %v4145
      %v4152 = vsub.f32 %v3832, %v4145
      %v4153 = vsub.f32 %v3837, %v4145
      %v4154 = vsub.f32 %v3842, %v4145
      %v4155 = vsub.f32 %v3847, %v4145
      %v4156 = vsub.f32 %v3852, %v4145
      %v4157 = vsub.f32 %v3857, %v4145
      %v4158 = vsub.f32 %v3862, %v4145
      %v4159 = vsub.f32 %v3867, %v4145
      %v4160 = vsub.f32 %v3872, %v4145
      %v4161 = vsub.f32 %v3877, %v4145
      %v4162 = vsub.f32 %v3882, %v4145
      %v4163 = vsub.f32 %v3887, %v4145
      %v4164 = vsub.f32 %v3892, %v4145
      %v4165 = vsub.f32 %v3897, %v4145
      %v4166 = vsub.f32 %v3902, %v4145
      %v4167 = vsub.f32 %v3907, %v4145
      %v4168 = vsub.f32 %v3912, %v4145
      %v4169 = vsub.f32 %v3917, %v4145
      %v4170 = vsub.f32 %v3922, %v4145
      %v4171 = vsub.f32 %v3927, %v4145
      %v4172 = vsub.f32 %v3932, %v4145
      %v4173 = vsub.f32 %v3937, %v4145
      %v4174 = vsub.f32 %v3942, %v4145
      %v4175 = vsub.f32 %v3947, %v4145
      %v4176 = vsub.f32 %v3952, %v4145
      %v4177 = vsub.f32 %v3957, %v4145
      %v4178 = vsub.f32 %v3962, %v4145
      %v4179 = vsub.f32 %v3967, %v4145
      %v4180 = vsub.f32 %v3972, %v4145
      %v4181 = vadd.f32 %v4148, 1e-05
      %v4182 = vrsqrt.pop %v4181
      %v4183 = vmul.f32 %v4149, %v4182
      %v4184 = vmul.f32 %v4150, %v4182
      %v4185 = vmul.f32 %v4151, %v4182
      %v4186 = vmul.f32 %v4152, %v4182
      %v4187 = vmul.f32 %v4153, %v4182
      %v4188 = vmul.f32 %v4154, %v4182
      %v4189 = vmul.f32 %v4155, %v4182
      %v4190 = vmul.f32 %v4156, %v4182
      %v4191 = vmul.f32 %v4157, %v4182
      %v4192 = vmul.f32 %v4158, %v4182
      %v4193 = vmul.f32 %v4159, %v4182
      %v4194 = vmul.f32 %v4160, %v4182
      %v4195 = vmul.f32 %v4161, %v4182
      %v4196 = vmul.f32 %v4162, %v4182
      %v4197 = vmul.f32 %v4163, %v4182
      %v4198 = vmul.f32 %v4164, %v4182
      %v4199 = vmul.f32 %v4165, %v4182
      %v4200 = vmul.f32 %v4166, %v4182
      %v4201 = vmul.f32 %v4167, %v4182
      %v4202 = vmul.f32 %v4168, %v4182
      %v4203 = vmul.f32 %v4169, %v4182
      %v4204 = vmul.f32 %v4170, %v4182
      %v4205 = vmul.f32 %v4171, %v4182
      %v4206 = vmul.f32 %v4172, %v4182
      %v4207 = vmul.f32 %v4173, %v4182
      %v4208 = vmul.f32 %v4174, %v4182
      %v4209 = vmul.f32 %v4175, %v4182
      %v4210 = vmul.f32 %v4176, %v4182
      %v4211 = vmul.f32 %v4177, %v4182
      %v4212 = vmul.f32 %v4178, %v4182
      %v4213 = vmul.f32 %v4179, %v4182
      %v4214 = vmul.f32 %v4180, %v4182
      %4215 = vst.msk [vmem:[%s2288 + $0x1] sm:$0xff] %vm333, %v4183
      %4216 = vst.msk [vmem:[%s2288 + $0x9] sm:$0xff] %vm333, %v4184
      %4217 = vst.msk [vmem:[%s2288 + $0x19] sm:$0xff] %vm333, %v4185
      %4218 = vst.msk [vmem:[%s2288 + $0x21] sm:$0xff] %vm333, %v4186
      %4219 = vst.msk [vmem:[%s2288 + $0x31] sm:$0xff] %vm333, %v4187
      %4220 = vst.msk [vmem:[%s2288 + $0x39] sm:$0xff] %vm333, %v4188
      %4221 = vst.msk [vmem:[%s2288 + $0x49] sm:$0xff] %vm333, %v4189
      %4222 = vst.msk [vmem:[%s2288 + $0x51] sm:$0xff] %vm333, %v4190
      %4223 = vst.msk [vmem:[%s2288 + $0x61] sm:$0xff] %vm333, %v4191
      %4224 = vst.msk [vmem:[%s2288 + $0x69] sm:$0xff] %vm333, %v4192
      %4225 = vst.msk [vmem:[%s2288 + $0x79] sm:$0xff] %vm333, %v4193
      %4226 = vst.msk [vmem:[%s2288 + $0x81] sm:$0xff] %vm333, %v4194
      %4227 = vst.msk [vmem:[%s2288 + $0x91] sm:$0xff] %vm333, %v4195
      %4228 = vst.msk [vmem:[%s2288 + $0x99] sm:$0xff] %vm333, %v4196
      %4229 = vst.msk [vmem:[%s2288 + $0xa9] sm:$0xff] %vm333, %v4197
      %4230 = vst.msk [vmem:[%s2288 + $0xb1] sm:$0xff] %vm333, %v4198
      %4231 = vst.msk [vmem:[%s2288 + $0xc1] sm:$0xff] %vm333, %v4199
      %4232 = vst.msk [vmem:[%s2288 + $0xc9] sm:$0xff] %vm333, %v4200
      %4233 = vst.msk [vmem:[%s2288 + $0xd9] sm:$0xff] %vm333, %v4201
      %4234 = vst.msk [vmem:[%s2288 + $0xe1] sm:$0xff] %vm333, %v4202
      %4235 = vst.msk [vmem:[%s2288 + $0xf1] sm:$0xff] %vm333, %v4203
      %4236 = vst.msk [vmem:[%s2288 + $0xf9] sm:$0xff] %vm333, %v4204
      %4237 = vst.msk [vmem:[%s2288 + $0x109] sm:$0xff] %vm333, %v4205
      %4238 = vst.msk [vmem:[%s2288 + $0x111] sm:$0xff] %vm333, %v4206
      %4239 = vst.msk [vmem:[%s2288 + $0x121] sm:$0xff] %vm333, %v4207
      %4240 = vst.msk [vmem:[%s2288 + $0x129] sm:$0xff] %vm333, %v4208
      %4241 = vst.msk [vmem:[%s2288 + $0x139] sm:$0xff] %vm333, %v4209
      %4242 = vst.msk [vmem:[%s2288 + $0x141] sm:$0xff] %vm333, %v4210
      %4243 = vst.msk [vmem:[%s2288 + $0x151] sm:$0xff] %vm333, %v4211
      %4244 = vst.msk [vmem:[%s2288 + $0x159] sm:$0xff] %vm333, %v4212
      %4245 = vst.msk [vmem:[%s2288 + $0x169] sm:$0xff] %vm333, %v4213
      %4246 = vst.msk [vmem:[%s2288 + $0x171] sm:$0xff] %vm333, %v4214
      %v4247 = vld [vmem:[#allocation2] sm:$0xff]
      %v4248 = vld [vmem:[#allocation2 + $0x8] sm:$0xff]
      %v4249 = vld [vmem:[#allocation2 + $0x10] sm:$0x3]
      %v4250 = vld [vmem:[#allocation2 + $0x18] sm:$0xff]
      %v4251 = vld [vmem:[#allocation2 + $0x20] sm:$0xff]
      %v4252 = vld [vmem:[#allocation2 + $0x28] sm:$0x3]
      %v4253 = vld [vmem:[#allocation2 + $0x30] sm:$0xff]
      %v4254 = vld [vmem:[#allocation2 + $0x38] sm:$0xff]
      %v4255 = vld [vmem:[#allocation2 + $0x40] sm:$0x3]
      %v4256 = vld [vmem:[#allocation2 + $0x48] sm:$0xff]
      %v4257 = vld [vmem:[#allocation2 + $0x50] sm:$0xff]
      %v4258 = vld [vmem:[#allocation2 + $0x58] sm:$0x3]
      %v4259 = vld [vmem:[#allocation2 + $0x60] sm:$0xff]
      %v4260 = vld [vmem:[#allocation2 + $0x68] sm:$0xff]
      %v4261 = vld [vmem:[#allocation2 + $0x70] sm:$0x3]
      %v4262 = vld [vmem:[#allocation2 + $0x78] sm:$0xff]
      %v4263 = vld [vmem:[#allocation2 + $0x80] sm:$0xff]
      %v4264 = vld [vmem:[#allocation2 + $0x88] sm:$0x3]
      %v4265 = vld [vmem:[#allocation2 + $0x90] sm:$0xff]
      %v4266 = vld [vmem:[#allocation2 + $0x98] sm:$0xff]
      %v4267 = vld [vmem:[#allocation2 + $0xa0] sm:$0x3]
      %v4268 = vld [vmem:[#allocation2 + $0xa8] sm:$0xff]
      %v4269 = vld [vmem:[#allocation2 + $0xb0] sm:$0xff]
      %v4270 = vld [vmem:[#allocation2 + $0xb8] sm:$0x3]
      %v4271 = vld [vmem:[#allocation2 + $0xc0] sm:$0xff]
      %v4272 = vld [vmem:[#allocation2 + $0xc8] sm:$0xff]
      %v4273 = vld [vmem:[#allocation2 + $0xd0] sm:$0x3]
      %v4274 = vld [vmem:[#allocation2 + $0xd8] sm:$0xff]
      %v4275 = vld [vmem:[#allocation2 + $0xe0] sm:$0xff]
      %v4276 = vld [vmem:[#allocation2 + $0xe8] sm:$0x3]
      %v4277 = vld [vmem:[#allocation2 + $0xf0] sm:$0xff]
      %v4278 = vld [vmem:[#allocation2 + $0xf8] sm:$0xff]
      %v4279 = vld [vmem:[#allocation2 + $0x100] sm:$0x3]
      %v4280 = vld [vmem:[#allocation2 + $0x108] sm:$0xff]
      %v4281 = vld [vmem:[#allocation2 + $0x110] sm:$0xff]
      %v4282 = vld [vmem:[#allocation2 + $0x118] sm:$0x3]
      %v4283 = vld [vmem:[#allocation2 + $0x120] sm:$0xff]
      %v4284 = vld [vmem:[#allocation2 + $0x128] sm:$0xff]
      %v4285 = vld [vmem:[#allocation2 + $0x130] sm:$0x3]
      %v4286 = vld [vmem:[#allocation2 + $0x138] sm:$0xff]
      %v4287 = vld [vmem:[#allocation2 + $0x140] sm:$0xff]
      %v4288 = vld [vmem:[#allocation2 + $0x148] sm:$0x3]
      %v4289 = vld [vmem:[#allocation2 + $0x150] sm:$0xff]
      %v4290 = vld [vmem:[#allocation2 + $0x158] sm:$0xff]
      %v4291 = vld [vmem:[#allocation2 + $0x160] sm:$0x3]
      %v4292 = vld [vmem:[#allocation2 + $0x168] sm:$0xff]
      %v4293 = vld [vmem:[#allocation2 + $0x170] sm:$0xff]
      %v4294 = vld [vmem:[#allocation2 + $0x178] sm:$0x3]
      %v4295 = vld [vmem:[#allocation2 + $0x180] sm:$0xff]
      %v4296 = vld [vmem:[#allocation2 + $0x188] sm:$0xff]
      %v4297 = vld [vmem:[#allocation2 + $0x190] sm:$0x3]
      %v4298 = vld [vmem:[#allocation2 + $0x198] sm:$0xff]
      %v4299 = vld [vmem:[#allocation2 + $0x1a0] sm:$0xff]
      %v4300 = vld [vmem:[#allocation2 + $0x1a8] sm:$0x3]
      %v4349 = vrot.slane %v4247, 1
      %v4350 = vrot.slane %v4248, 1
      %v4351 = vsel %vm491, %v4349, %v4350
      %v4352 = vrot.slane %v4249, 1
      %v4353 = vsel %vm491, %v4350, %v4352
      %v4354 = vrot.slane %v4250, 1
      %v4355 = vrot.slane %v4251, 1
      %v4356 = vsel %vm491, %v4354, %v4355
      %v4357 = vrot.slane %v4252, 1
      %v4358 = vsel %vm491, %v4355, %v4357
      %v4359 = vrot.slane %v4253, 1
      %v4360 = vrot.slane %v4254, 1
      %v4361 = vsel %vm491, %v4359, %v4360
      %v4362 = vrot.slane %v4255, 1
      %v4363 = vsel %vm491, %v4360, %v4362
      %v4364 = vrot.slane %v4256, 1
      %v4365 = vrot.slane %v4257, 1
      %v4366 = vsel %vm491, %v4364, %v4365
      %v4367 = vrot.slane %v4258, 1
      %v4368 = vsel %vm491, %v4365, %v4367
      %v4369 = vrot.slane %v4259, 1
      %v4370 = vrot.slane %v4260, 1
      %v4371 = vsel %vm491, %v4369, %v4370
      %v4372 = vrot.slane %v4261, 1
      %v4373 = vsel %vm491, %v4370, %v4372
      %v4374 = vrot.slane %v4262, 1
      %v4375 = vrot.slane %v4263, 1
      %v4376 = vsel %vm491, %v4374, %v4375
      %v4377 = vrot.slane %v4264, 1
      %v4378 = vsel %vm491, %v4375, %v4377
      %v4379 = vrot.slane %v4265, 1
      %v4380 = vrot.slane %v4266, 1
      %v4381 = vsel %vm491, %v4379, %v4380
      %v4382 = vrot.slane %v4267, 1
      %v4383 = vsel %vm491, %v4380, %v4382
      %v4384 = vrot.slane %v4268, 1
      %v4385 = vrot.slane %v4269, 1
      %v4386 = vsel %vm491, %v4384, %v4385
      %v4387 = vrot.slane %v4270, 1
      %v4388 = vsel %vm491, %v4385, %v4387
      %v4389 = vrot.slane %v4271, 1
      %v4390 = vrot.slane %v4272, 1
      %v4391 = vsel %vm491, %v4389, %v4390
      %v4392 = vrot.slane %v4273, 1
      %v4393 = vsel %vm491, %v4390, %v4392
      %v4394 = vrot.slane %v4274, 1
      %v4395 = vrot.slane %v4275, 1
      %v4396 = vsel %vm491, %v4394, %v4395
      %v4397 = vrot.slane %v4276, 1
      %v4398 = vsel %vm491, %v4395, %v4397
      %v4399 = vrot.slane %v4277, 1
      %v4400 = vrot.slane %v4278, 1
      %v4401 = vsel %vm491, %v4399, %v4400
      %v4402 = vrot.slane %v4279, 1
      %v4403 = vsel %vm491, %v4400, %v4402
      %v4404 = vrot.slane %v4280, 1
      %v4405 = vrot.slane %v4281, 1
      %v4406 = vsel %vm491, %v4404, %v4405
      %v4407 = vrot.slane %v4282, 1
      %v4408 = vsel %vm491, %v4405, %v4407
      %v4409 = vrot.slane %v4283, 1
      %v4410 = vrot.slane %v4284, 1
      %v4411 = vsel %vm491, %v4409, %v4410
      %v4412 = vrot.slane %v4285, 1
      %v4413 = vsel %vm491, %v4410, %v4412
      %v4414 = vrot.slane %v4286, 1
      %v4415 = vrot.slane %v4287, 1
      %v4416 = vsel %vm491, %v4414, %v4415
      %v4417 = vrot.slane %v4288, 1
      %v4418 = vsel %vm491, %v4415, %v4417
      %v4419 = vrot.slane %v4289, 1
      %v4420 = vrot.slane %v4290, 1
      %v4421 = vsel %vm491, %v4419, %v4420
      %v4422 = vrot.slane %v4291, 1
      %v4423 = vsel %vm491, %v4420, %v4422
      %v4424 = vrot.slane %v4292, 1
      %v4425 = vrot.slane %v4293, 1
      %v4426 = vsel %vm491, %v4424, %v4425
      %v4427 = vrot.slane %v4294, 1
      %v4428 = vsel %vm491, %v4425, %v4427
      %4429 = vrot.lane.b32.xlu0 %v4351, 8
      %v4430 = vpop.permute.xlu0 %4429
      %4431 = vrot.lane.b32.xlu0 %v4353, 8
      %v4432 = vpop.permute.xlu0 %4431
      %4433 = vrot.lane.b32.xlu0 %v4356, 8
      %v4434 = vpop.permute.xlu0 %4433
      %4435 = vrot.lane.b32.xlu0 %v4358, 8
      %v4436 = vpop.permute.xlu0 %4435
      %4437 = vrot.lane.b32.xlu0 %v4361, 8
      %v4438 = vpop.permute.xlu0 %4437
      %4439 = vrot.lane.b32.xlu0 %v4363, 8
      %v4440 = vpop.permute.xlu0 %4439
      %4441 = vrot.lane.b32.xlu0 %v4366, 8
      %v4442 = vpop.permute.xlu0 %4441
      %4443 = vrot.lane.b32.xlu0 %v4368, 8
      %v4444 = vpop.permute.xlu0 %4443
      %4445 = vrot.lane.b32.xlu0 %v4371, 8
      %v4446 = vpop.permute.xlu0 %4445
      %4447 = vrot.lane.b32.xlu0 %v4373, 8
      %v4448 = vpop.permute.xlu0 %4447
      %4449 = vrot.lane.b32.xlu0 %v4376, 8
      %v4450 = vpop.permute.xlu0 %4449
      %4451 = vrot.lane.b32.xlu0 %v4378, 8
      %v4452 = vpop.permute.xlu0 %4451
      %4453 = vrot.lane.b32.xlu0 %v4381, 8
      %v4454 = vpop.permute.xlu0 %4453
      %4455 = vrot.lane.b32.xlu0 %v4383, 8
      %v4456 = vpop.permute.xlu0 %4455
      %4457 = vrot.lane.b32.xlu0 %v4386, 8
      %v4458 = vpop.permute.xlu0 %4457
      %4459 = vrot.lane.b32.xlu0 %v4388, 8
      %v4460 = vpop.permute.xlu0 %4459
      %4461 = vrot.lane.b32.xlu0 %v4391, 8
      %v4462 = vpop.permute.xlu0 %4461
      %4463 = vrot.lane.b32.xlu0 %v4393, 8
      %v4464 = vpop.permute.xlu0 %4463
      %4465 = vrot.lane.b32.xlu0 %v4396, 8
      %v4466 = vpop.permute.xlu0 %4465
      %4467 = vrot.lane.b32.xlu0 %v4398, 8
      %v4468 = vpop.permute.xlu0 %4467
      %4469 = vrot.lane.b32.xlu0 %v4401, 8
      %v4470 = vpop.permute.xlu0 %4469
      %4471 = vrot.lane.b32.xlu0 %v4403, 8
      %v4472 = vpop.permute.xlu0 %4471
      %4473 = vrot.lane.b32.xlu0 %v4406, 8
      %v4474 = vpop.permute.xlu0 %4473
      %4475 = vrot.lane.b32.xlu0 %v4408, 8
      %v4476 = vpop.permute.xlu0 %4475
      %4477 = vrot.lane.b32.xlu0 %v4411, 8
      %v4478 = vpop.permute.xlu0 %4477
      %4479 = vrot.lane.b32.xlu0 %v4413, 8
      %v4480 = vpop.permute.xlu0 %4479
      %4481 = vrot.lane.b32.xlu0 %v4416, 8
      %v4482 = vpop.permute.xlu0 %4481
      %4483 = vrot.lane.b32.xlu0 %v4418, 8
      %v4484 = vpop.permute.xlu0 %4483
      %4485 = vrot.lane.b32.xlu0 %v4421, 8
      %v4486 = vpop.permute.xlu0 %4485
      %4487 = vrot.lane.b32.xlu0 %v4423, 8
      %v4488 = vpop.permute.xlu0 %4487
      %4489 = vrot.lane.b32.xlu0 %v4426, 8
      %v4490 = vpop.permute.xlu0 %4489
      %4491 = vrot.lane.b32.xlu0 %v4428, 8
      %v4492 = vpop.permute.xlu0 %4491
      %v4525 = vrot.slane %v4247, 2
      %v4526 = vrot.slane %v4248, 2
      %v4527 = vsel %vm668, %v4525, %v4526
      %v4528 = vrot.slane %v4249, 2
      %v4529 = vsel %vm668, %v4526, %v4528
      %v4530 = vrot.slane %v4250, 2
      %v4531 = vrot.slane %v4251, 2
      %v4532 = vsel %vm668, %v4530, %v4531
      %v4533 = vrot.slane %v4252, 2
      %v4534 = vsel %vm668, %v4531, %v4533
      %v4535 = vrot.slane %v4253, 2
      %v4536 = vrot.slane %v4254, 2
      %v4537 = vsel %vm668, %v4535, %v4536
      %v4538 = vrot.slane %v4255, 2
      %v4539 = vsel %vm668, %v4536, %v4538
      %v4540 = vrot.slane %v4256, 2
      %v4541 = vrot.slane %v4257, 2
      %v4542 = vsel %vm668, %v4540, %v4541
      %v4543 = vrot.slane %v4258, 2
      %v4544 = vsel %vm668, %v4541, %v4543
      %v4545 = vrot.slane %v4259, 2
      %v4546 = vrot.slane %v4260, 2
      %v4547 = vsel %vm668, %v4545, %v4546
      %v4548 = vrot.slane %v4261, 2
      %v4549 = vsel %vm668, %v4546, %v4548
      %v4550 = vrot.slane %v4262, 2
      %v4551 = vrot.slane %v4263, 2
      %v4552 = vsel %vm668, %v4550, %v4551
      %v4553 = vrot.slane %v4264, 2
      %v4554 = vsel %vm668, %v4551, %v4553
      %v4555 = vrot.slane %v4265, 2
      %v4556 = vrot.slane %v4266, 2
      %v4557 = vsel %vm668, %v4555, %v4556
      %v4558 = vrot.slane %v4267, 2
      %v4559 = vsel %vm668, %v4556, %v4558
      %v4560 = vrot.slane %v4268, 2
      %v4561 = vrot.slane %v4269, 2
      %v4562 = vsel %vm668, %v4560, %v4561
      %v4563 = vrot.slane %v4270, 2
      %v4564 = vsel %vm668, %v4561, %v4563
      %v4565 = vrot.slane %v4271, 2
      %v4566 = vrot.slane %v4272, 2
      %v4567 = vsel %vm668, %v4565, %v4566
      %v4568 = vrot.slane %v4273, 2
      %v4569 = vsel %vm668, %v4566, %v4568
      %v4570 = vrot.slane %v4274, 2
      %v4571 = vrot.slane %v4275, 2
      %v4572 = vsel %vm668, %v4570, %v4571
      %v4573 = vrot.slane %v4276, 2
      %v4574 = vsel %vm668, %v4571, %v4573
      %v4575 = vrot.slane %v4277, 2
      %v4576 = vrot.slane %v4278, 2
      %v4577 = vsel %vm668, %v4575, %v4576
      %v4578 = vrot.slane %v4279, 2
      %v4579 = vsel %vm668, %v4576, %v4578
      %v4580 = vrot.slane %v4280, 2
      %v4581 = vrot.slane %v4281, 2
      %v4582 = vsel %vm668, %v4580, %v4581
      %v4583 = vrot.slane %v4282, 2
      %v4584 = vsel %vm668, %v4581, %v4583
      %v4585 = vrot.slane %v4283, 2
      %v4586 = vrot.slane %v4284, 2
      %v4587 = vsel %vm668, %v4585, %v4586
      %v4588 = vrot.slane %v4285, 2
      %v4589 = vsel %vm668, %v4586, %v4588
      %v4590 = vrot.slane %v4286, 2
      %v4591 = vrot.slane %v4287, 2
      %v4592 = vsel %vm668, %v4590, %v4591
      %v4593 = vrot.slane %v4288, 2
      %v4594 = vsel %vm668, %v4591, %v4593
      %v4595 = vrot.slane %v4289, 2
      %v4596 = vrot.slane %v4290, 2
      %v4597 = vsel %vm668, %v4595, %v4596
      %v4598 = vrot.slane %v4291, 2
      %v4599 = vsel %vm668, %v4596, %v4598
      %v4600 = vrot.slane %v4292, 2
      %v4601 = vrot.slane %v4293, 2
      %v4602 = vsel %vm668, %v4600, %v4601
      %v4603 = vrot.slane %v4294, 2
      %v4604 = vsel %vm668, %v4601, %v4603
      %4605 = vrot.lane.b32.xlu0 %v4527, 16
      %v4606 = vpop.permute.xlu0 %4605
      %4607 = vrot.lane.b32.xlu0 %v4529, 16
      %v4608 = vpop.permute.xlu0 %4607
      %4609 = vrot.lane.b32.xlu0 %v4532, 16
      %v4610 = vpop.permute.xlu0 %4609
      %4611 = vrot.lane.b32.xlu0 %v4534, 16
      %v4612 = vpop.permute.xlu0 %4611
      %4613 = vrot.lane.b32.xlu0 %v4537, 16
      %v4614 = vpop.permute.xlu0 %4613
      %4615 = vrot.lane.b32.xlu0 %v4539, 16
      %v4616 = vpop.permute.xlu0 %4615
      %4617 = vrot.lane.b32.xlu0 %v4542, 16
      %v4618 = vpop.permute.xlu0 %4617
      %4619 = vrot.lane.b32.xlu0 %v4544, 16
      %v4620 = vpop.permute.xlu0 %4619
      %4621 = vrot.lane.b32.xlu0 %v4547, 16
      %v4622 = vpop.permute.xlu0 %4621
      %4623 = vrot.lane.b32.xlu0 %v4549, 16
      %v4624 = vpop.permute.xlu0 %4623
      %4625 = vrot.lane.b32.xlu0 %v4552, 16
      %v4626 = vpop.permute.xlu0 %4625
      %4627 = vrot.lane.b32.xlu0 %v4554, 16
      %v4628 = vpop.permute.xlu0 %4627
      %4629 = vrot.lane.b32.xlu0 %v4557, 16
      %v4630 = vpop.permute.xlu0 %4629
      %4631 = vrot.lane.b32.xlu0 %v4559, 16
      %v4632 = vpop.permute.xlu0 %4631
      %4633 = vrot.lane.b32.xlu0 %v4562, 16
      %v4634 = vpop.permute.xlu0 %4633
      %4635 = vrot.lane.b32.xlu0 %v4564, 16
      %v4636 = vpop.permute.xlu0 %4635
      %4637 = vrot.lane.b32.xlu0 %v4567, 16
      %v4638 = vpop.permute.xlu0 %4637
      %4639 = vrot.lane.b32.xlu0 %v4569, 16
      %v4640 = vpop.permute.xlu0 %4639
      %4641 = vrot.lane.b32.xlu0 %v4572, 16
      %v4642 = vpop.permute.xlu0 %4641
      %4643 = vrot.lane.b32.xlu0 %v4574, 16
      %v4644 = vpop.permute.xlu0 %4643
      %4645 = vrot.lane.b32.xlu0 %v4577, 16
      %v4646 = vpop.permute.xlu0 %4645
      %4647 = vrot.lane.b32.xlu0 %v4579, 16
      %v4648 = vpop.permute.xlu0 %4647
      %4649 = vrot.lane.b32.xlu0 %v4582, 16
      %v4650 = vpop.permute.xlu0 %4649
      %4651 = vrot.lane.b32.xlu0 %v4584, 16
      %v4652 = vpop.permute.xlu0 %4651
      %4653 = vrot.lane.b32.xlu0 %v4587, 16
      %v4654 = vpop.permute.xlu0 %4653
      %4655 = vrot.lane.b32.xlu0 %v4589, 16
      %v4656 = vpop.permute.xlu0 %4655
      %4657 = vrot.lane.b32.xlu0 %v4592, 16
      %v4658 = vpop.permute.xlu0 %4657
      %4659 = vrot.lane.b32.xlu0 %v4594, 16
      %v4660 = vpop.permute.xlu0 %4659
      %4661 = vrot.lane.b32.xlu0 %v4597, 16
      %v4662 = vpop.permute.xlu0 %4661
      %4663 = vrot.lane.b32.xlu0 %v4599, 16
      %v4664 = vpop.permute.xlu0 %4663
      %4665 = vrot.lane.b32.xlu0 %v4602, 16
      %v4666 = vpop.permute.xlu0 %4665
      %4667 = vrot.lane.b32.xlu0 %v4604, 16
      %v4668 = vpop.permute.xlu0 %4667
      %4703 = vrot.lane.b32.xlu0 %v4250, 24
      %v4704 = vpop.permute.xlu0 %4703
      %4705 = vrot.lane.b32.xlu0 %v4251, 24
      %v4706 = vpop.permute.xlu0 %4705
      %4707 = vrot.lane.b32.xlu0 %v4253, 24
      %v4708 = vpop.permute.xlu0 %4707
      %4709 = vrot.lane.b32.xlu0 %v4254, 24
      %v4710 = vpop.permute.xlu0 %4709
      %4711 = vrot.lane.b32.xlu0 %v4256, 24
      %v4712 = vpop.permute.xlu0 %4711
      %4713 = vrot.lane.b32.xlu0 %v4257, 24
      %v4714 = vpop.permute.xlu0 %4713
      %4715 = vrot.lane.b32.xlu0 %v4259, 24
      %v4716 = vpop.permute.xlu0 %4715
      %4717 = vrot.lane.b32.xlu0 %v4260, 24
      %v4718 = vpop.permute.xlu0 %4717
      %4719 = vrot.lane.b32.xlu0 %v4262, 24
      %v4720 = vpop.permute.xlu0 %4719
      %4721 = vrot.lane.b32.xlu0 %v4263, 24
      %v4722 = vpop.permute.xlu0 %4721
      %4723 = vrot.lane.b32.xlu0 %v4265, 24
      %v4724 = vpop.permute.xlu0 %4723
      %4725 = vrot.lane.b32.xlu0 %v4266, 24
      %v4726 = vpop.permute.xlu0 %4725
      %4727 = vrot.lane.b32.xlu0 %v4268, 24
      %v4728 = vpop.permute.xlu0 %4727
      %4729 = vrot.lane.b32.xlu0 %v4269, 24
      %v4730 = vpop.permute.xlu0 %4729
      %4731 = vrot.lane.b32.xlu0 %v4271, 24
      %v4732 = vpop.permute.xlu0 %4731
      %4733 = vrot.lane.b32.xlu0 %v4272, 24
      %v4734 = vpop.permute.xlu0 %4733
      %4735 = vrot.lane.b32.xlu0 %v4274, 24
      %v4736 = vpop.permute.xlu0 %4735
      %4737 = vrot.lane.b32.xlu0 %v4275, 24
      %v4738 = vpop.permute.xlu0 %4737
      %4739 = vrot.lane.b32.xlu0 %v4277, 24
      %v4740 = vpop.permute.xlu0 %4739
      %4741 = vrot.lane.b32.xlu0 %v4278, 24
      %v4742 = vpop.permute.xlu0 %4741
      %4743 = vrot.lane.b32.xlu0 %v4280, 24
      %v4744 = vpop.permute.xlu0 %4743
      %4745 = vrot.lane.b32.xlu0 %v4281, 24
      %v4746 = vpop.permute.xlu0 %4745
      %4747 = vrot.lane.b32.xlu0 %v4283, 24
      %v4748 = vpop.permute.xlu0 %4747
      %4749 = vrot.lane.b32.xlu0 %v4284, 24
      %v4750 = vpop.permute.xlu0 %4749
      %4751 = vrot.lane.b32.xlu0 %v4286, 24
      %v4752 = vpop.permute.xlu0 %4751
      %4753 = vrot.lane.b32.xlu0 %v4287, 24
      %v4754 = vpop.permute.xlu0 %4753
      %4755 = vrot.lane.b32.xlu0 %v4289, 24
      %v4756 = vpop.permute.xlu0 %4755
      %4757 = vrot.lane.b32.xlu0 %v4290, 24
      %v4758 = vpop.permute.xlu0 %4757
      %4759 = vrot.lane.b32.xlu0 %v4292, 24
      %v4760 = vpop.permute.xlu0 %4759
      %4761 = vrot.lane.b32.xlu0 %v4293, 24
      %v4762 = vpop.permute.xlu0 %4761
      %4763 = vrot.lane.b32.xlu0 %v4295, 24
      %v4764 = vpop.permute.xlu0 %4763
      %4765 = vrot.lane.b32.xlu0 %v4296, 24
      %v4766 = vpop.permute.xlu0 %4765
      %v4800 = vrot.slane %v4295, 1
      %v4801 = vrot.slane %v4296, 1
      %v4802 = vsel %vm491, %v4800, %v4801
      %v4803 = vrot.slane %v4297, 1
      %v4804 = vsel %vm491, %v4801, %v4803
      %4805 = vrot.lane.b32.xlu0 %v4356, 32
      %v4806 = vpop.permute.xlu0 %4805
      %4807 = vrot.lane.b32.xlu0 %v4358, 32
      %v4808 = vpop.permute.xlu0 %4807
      %4809 = vrot.lane.b32.xlu0 %v4361, 32
      %v4810 = vpop.permute.xlu0 %4809
      %4811 = vrot.lane.b32.xlu0 %v4363, 32
      %v4812 = vpop.permute.xlu0 %4811
      %4813 = vrot.lane.b32.xlu0 %v4366, 32
      %v4814 = vpop.permute.xlu0 %4813
      %4815 = vrot.lane.b32.xlu0 %v4368, 32
      %v4816 = vpop.permute.xlu0 %4815
      %4817 = vrot.lane.b32.xlu0 %v4371, 32
      %v4818 = vpop.permute.xlu0 %4817
      %4819 = vrot.lane.b32.xlu0 %v4373, 32
      %v4820 = vpop.permute.xlu0 %4819
      %4821 = vrot.lane.b32.xlu0 %v4376, 32
      %v4822 = vpop.permute.xlu0 %4821
      %4823 = vrot.lane.b32.xlu0 %v4378, 32
      %v4824 = vpop.permute.xlu0 %4823
      %4825 = vrot.lane.b32.xlu0 %v4381, 32
      %v4826 = vpop.permute.xlu0 %4825
      %4827 = vrot.lane.b32.xlu0 %v4383, 32
      %v4828 = vpop.permute.xlu0 %4827
      %4829 = vrot.lane.b32.xlu0 %v4386, 32
      %v4830 = vpop.permute.xlu0 %4829
      %4831 = vrot.lane.b32.xlu0 %v4388, 32
      %v4832 = vpop.permute.xlu0 %4831
      %4833 = vrot.lane.b32.xlu0 %v4391, 32
      %v4834 = vpop.permute.xlu0 %4833
      %4835 = vrot.lane.b32.xlu0 %v4393, 32
      %v4836 = vpop.permute.xlu0 %4835
      %4837 = vrot.lane.b32.xlu0 %v4396, 32
      %v4838 = vpop.permute.xlu0 %4837
      %4839 = vrot.lane.b32.xlu0 %v4398, 32
      %v4840 = vpop.permute.xlu0 %4839
      %4841 = vrot.lane.b32.xlu0 %v4401, 32
      %v4842 = vpop.permute.xlu0 %4841
      %4843 = vrot.lane.b32.xlu0 %v4403, 32
      %v4844 = vpop.permute.xlu0 %4843
      %4845 = vrot.lane.b32.xlu0 %v4406, 32
      %v4846 = vpop.permute.xlu0 %4845
      %4847 = vrot.lane.b32.xlu0 %v4408, 32
      %v4848 = vpop.permute.xlu0 %4847
      %4849 = vrot.lane.b32.xlu0 %v4411, 32
      %v4850 = vpop.permute.xlu0 %4849
      %4851 = vrot.lane.b32.xlu0 %v4413, 32
      %v4852 = vpop.permute.xlu0 %4851
      %4853 = vrot.lane.b32.xlu0 %v4416, 32
      %v4854 = vpop.permute.xlu0 %4853
      %4855 = vrot.lane.b32.xlu0 %v4418, 32
      %v4856 = vpop.permute.xlu0 %4855
      %4857 = vrot.lane.b32.xlu0 %v4421, 32
      %v4858 = vpop.permute.xlu0 %4857
      %4859 = vrot.lane.b32.xlu0 %v4423, 32
      %v4860 = vpop.permute.xlu0 %4859
      %4861 = vrot.lane.b32.xlu0 %v4426, 32
      %v4862 = vpop.permute.xlu0 %4861
      %4863 = vrot.lane.b32.xlu0 %v4428, 32
      %v4864 = vpop.permute.xlu0 %4863
      %4865 = vrot.lane.b32.xlu0 %v4802, 32
      %v4866 = vpop.permute.xlu0 %4865
      %4867 = vrot.lane.b32.xlu0 %v4804, 32
      %v4868 = vpop.permute.xlu0 %4867
      %v4901 = vrot.slane %v4295, 2
      %v4902 = vrot.slane %v4296, 2
      %v4903 = vsel %vm668, %v4901, %v4902
      %v4904 = vrot.slane %v4297, 2
      %v4905 = vsel %vm668, %v4902, %v4904
      %4906 = vrot.lane.b32.xlu0 %v4532, 40
      %v4907 = vpop.permute.xlu0 %4906
      %4908 = vrot.lane.b32.xlu0 %v4534, 40
      %v4909 = vpop.permute.xlu0 %4908
      %4910 = vrot.lane.b32.xlu0 %v4537, 40
      %v4911 = vpop.permute.xlu0 %4910
      %4912 = vrot.lane.b32.xlu0 %v4539, 40
      %v4913 = vpop.permute.xlu0 %4912
      %4914 = vrot.lane.b32.xlu0 %v4542, 40
      %v4915 = vpop.permute.xlu0 %4914
      %4916 = vrot.lane.b32.xlu0 %v4544, 40
      %v4917 = vpop.permute.xlu0 %4916
      %4918 = vrot.lane.b32.xlu0 %v4547, 40
      %v4919 = vpop.permute.xlu0 %4918
      %4920 = vrot.lane.b32.xlu0 %v4549, 40
      %v4921 = vpop.permute.xlu0 %4920
      %4922 = vrot.lane.b32.xlu0 %v4552, 40
      %v4923 = vpop.permute.xlu0 %4922
      %4924 = vrot.lane.b32.xlu0 %v4554, 40
      %v4925 = vpop.permute.xlu0 %4924
      %4926 = vrot.lane.b32.xlu0 %v4557, 40
      %v4927 = vpop.permute.xlu0 %4926
      %4928 = vrot.lane.b32.xlu0 %v4559, 40
      %v4929 = vpop.permute.xlu0 %4928
      %4930 = vrot.lane.b32.xlu0 %v4562, 40
      %v4931 = vpop.permute.xlu0 %4930
      %4932 = vrot.lane.b32.xlu0 %v4564, 40
      %v4933 = vpop.permute.xlu0 %4932
      %4934 = vrot.lane.b32.xlu0 %v4567, 40
      %v4935 = vpop.permute.xlu0 %4934
      %4936 = vrot.lane.b32.xlu0 %v4569, 40
      %v4937 = vpop.permute.xlu0 %4936
      %4938 = vrot.lane.b32.xlu0 %v4572, 40
      %v4939 = vpop.permute.xlu0 %4938
      %4940 = vrot.lane.b32.xlu0 %v4574, 40
      %v4941 = vpop.permute.xlu0 %4940
      %4942 = vrot.lane.b32.xlu0 %v4577, 40
      %v4943 = vpop.permute.xlu0 %4942
      %4944 = vrot.lane.b32.xlu0 %v4579, 40
      %v4945 = vpop.permute.xlu0 %4944
      %4946 = vrot.lane.b32.xlu0 %v4582, 40
      %v4947 = vpop.permute.xlu0 %4946
      %4948 = vrot.lane.b32.xlu0 %v4584, 40
      %v4949 = vpop.permute.xlu0 %4948
      %4950 = vrot.lane.b32.xlu0 %v4587, 40
      %v4951 = vpop.permute.xlu0 %4950
      %4952 = vrot.lane.b32.xlu0 %v4589, 40
      %v4953 = vpop.permute.xlu0 %4952
      %4954 = vrot.lane.b32.xlu0 %v4592, 40
      %v4955 = vpop.permute.xlu0 %4954
      %4956 = vrot.lane.b32.xlu0 %v4594, 40
      %v4957 = vpop.permute.xlu0 %4956
      %4958 = vrot.lane.b32.xlu0 %v4597, 40
      %v4959 = vpop.permute.xlu0 %4958
      %4960 = vrot.lane.b32.xlu0 %v4599, 40
      %v4961 = vpop.permute.xlu0 %4960
      %4962 = vrot.lane.b32.xlu0 %v4602, 40
      %v4963 = vpop.permute.xlu0 %4962
      %4964 = vrot.lane.b32.xlu0 %v4604, 40
      %v4965 = vpop.permute.xlu0 %4964
      %4966 = vrot.lane.b32.xlu0 %v4903, 40
      %v4967 = vpop.permute.xlu0 %4966
      %4968 = vrot.lane.b32.xlu0 %v4905, 40
      %v4969 = vpop.permute.xlu0 %4968
      %5004 = vrot.lane.b32.xlu0 %v4253, 48
      %v5005 = vpop.permute.xlu0 %5004
      %5006 = vrot.lane.b32.xlu0 %v4254, 48
      %v5007 = vpop.permute.xlu0 %5006
      %5008 = vrot.lane.b32.xlu0 %v4256, 48
      %v5009 = vpop.permute.xlu0 %5008
      %5010 = vrot.lane.b32.xlu0 %v4257, 48
      %v5011 = vpop.permute.xlu0 %5010
      %5012 = vrot.lane.b32.xlu0 %v4259, 48
      %v5013 = vpop.permute.xlu0 %5012
      %5014 = vrot.lane.b32.xlu0 %v4260, 48
      %v5015 = vpop.permute.xlu0 %5014
      %5016 = vrot.lane.b32.xlu0 %v4262, 48
      %v5017 = vpop.permute.xlu0 %5016
      %5018 = vrot.lane.b32.xlu0 %v4263, 48
      %v5019 = vpop.permute.xlu0 %5018
      %5020 = vrot.lane.b32.xlu0 %v4265, 48
      %v5021 = vpop.permute.xlu0 %5020
      %5022 = vrot.lane.b32.xlu0 %v4266, 48
      %v5023 = vpop.permute.xlu0 %5022
      %5024 = vrot.lane.b32.xlu0 %v4268, 48
      %v5025 = vpop.permute.xlu0 %5024
      %5026 = vrot.lane.b32.xlu0 %v4269, 48
      %v5027 = vpop.permute.xlu0 %5026
      %5028 = vrot.lane.b32.xlu0 %v4271, 48
      %v5029 = vpop.permute.xlu0 %5028
      %5030 = vrot.lane.b32.xlu0 %v4272, 48
      %v5031 = vpop.permute.xlu0 %5030
      %5032 = vrot.lane.b32.xlu0 %v4274, 48
      %v5033 = vpop.permute.xlu0 %5032
      %5034 = vrot.lane.b32.xlu0 %v4275, 48
      %v5035 = vpop.permute.xlu0 %5034
      %5036 = vrot.lane.b32.xlu0 %v4277, 48
      %v5037 = vpop.permute.xlu0 %5036
      %5038 = vrot.lane.b32.xlu0 %v4278, 48
      %v5039 = vpop.permute.xlu0 %5038
      %5040 = vrot.lane.b32.xlu0 %v4280, 48
      %v5041 = vpop.permute.xlu0 %5040
      %5042 = vrot.lane.b32.xlu0 %v4281, 48
      %v5043 = vpop.permute.xlu0 %5042
      %5044 = vrot.lane.b32.xlu0 %v4283, 48
      %v5045 = vpop.permute.xlu0 %5044
      %5046 = vrot.lane.b32.xlu0 %v4284, 48
      %v5047 = vpop.permute.xlu0 %5046
      %5048 = vrot.lane.b32.xlu0 %v4286, 48
      %v5049 = vpop.permute.xlu0 %5048
      %5050 = vrot.lane.b32.xlu0 %v4287, 48
      %v5051 = vpop.permute.xlu0 %5050
      %5052 = vrot.lane.b32.xlu0 %v4289, 48
      %v5053 = vpop.permute.xlu0 %5052
      %5054 = vrot.lane.b32.xlu0 %v4290, 48
      %v5055 = vpop.permute.xlu0 %5054
      %5056 = vrot.lane.b32.xlu0 %v4292, 48
      %v5057 = vpop.permute.xlu0 %5056
      %5058 = vrot.lane.b32.xlu0 %v4293, 48
      %v5059 = vpop.permute.xlu0 %5058
      %5060 = vrot.lane.b32.xlu0 %v4295, 48
      %v5061 = vpop.permute.xlu0 %5060
      %5062 = vrot.lane.b32.xlu0 %v4296, 48
      %v5063 = vpop.permute.xlu0 %5062
      %5064 = vrot.lane.b32.xlu0 %v4298, 48
      %v5065 = vpop.permute.xlu0 %5064
      %5066 = vrot.lane.b32.xlu0 %v4299, 48
      %v5067 = vpop.permute.xlu0 %5066
      %v5101 = vrot.slane %v4298, 1
      %v5102 = vrot.slane %v4299, 1
      %v5103 = vsel %vm491, %v5101, %v5102
      %v5104 = vrot.slane %v4300, 1
      %v5105 = vsel %vm491, %v5102, %v5104
      %5106 = vrot.lane.b32.xlu0 %v4361, 56
      %v5107 = vpop.permute.xlu0 %5106
      %5108 = vrot.lane.b32.xlu0 %v4363, 56
      %v5109 = vpop.permute.xlu0 %5108
      %5110 = vrot.lane.b32.xlu0 %v4366, 56
      %v5111 = vpop.permute.xlu0 %5110
      %5112 = vrot.lane.b32.xlu0 %v4368, 56
      %v5113 = vpop.permute.xlu0 %5112
      %5114 = vrot.lane.b32.xlu0 %v4371, 56
      %v5115 = vpop.permute.xlu0 %5114
      %5116 = vrot.lane.b32.xlu0 %v4373, 56
      %v5117 = vpop.permute.xlu0 %5116
      %5118 = vrot.lane.b32.xlu0 %v4376, 56
      %v5119 = vpop.permute.xlu0 %5118
      %5120 = vrot.lane.b32.xlu0 %v4378, 56
      %v5121 = vpop.permute.xlu0 %5120
      %5122 = vrot.lane.b32.xlu0 %v4381, 56
      %v5123 = vpop.permute.xlu0 %5122
      %5124 = vrot.lane.b32.xlu0 %v4383, 56
      %v5125 = vpop.permute.xlu0 %5124
      %5126 = vrot.lane.b32.xlu0 %v4386, 56
      %v5127 = vpop.permute.xlu0 %5126
      %5128 = vrot.lane.b32.xlu0 %v4388, 56
      %v5129 = vpop.permute.xlu0 %5128
      %5130 = vrot.lane.b32.xlu0 %v4391, 56
      %v5131 = vpop.permute.xlu0 %5130
      %5132 = vrot.lane.b32.xlu0 %v4393, 56
      %v5133 = vpop.permute.xlu0 %5132
      %5134 = vrot.lane.b32.xlu0 %v4396, 56
      %v5135 = vpop.permute.xlu0 %5134
      %5136 = vrot.lane.b32.xlu0 %v4398, 56
      %v5137 = vpop.permute.xlu0 %5136
      %5138 = vrot.lane.b32.xlu0 %v4401, 56
      %v5139 = vpop.permute.xlu0 %5138
      %5140 = vrot.lane.b32.xlu0 %v4403, 56
      %v5141 = vpop.permute.xlu0 %5140
      %5142 = vrot.lane.b32.xlu0 %v4406, 56
      %v5143 = vpop.permute.xlu0 %5142
      %5144 = vrot.lane.b32.xlu0 %v4408, 56
      %v5145 = vpop.permute.xlu0 %5144
      %5146 = vrot.lane.b32.xlu0 %v4411, 56
      %v5147 = vpop.permute.xlu0 %5146
      %5148 = vrot.lane.b32.xlu0 %v4413, 56
      %v5149 = vpop.permute.xlu0 %5148
      %5150 = vrot.lane.b32.xlu0 %v4416, 56
      %v5151 = vpop.permute.xlu0 %5150
      %5152 = vrot.lane.b32.xlu0 %v4418, 56
      %v5153 = vpop.permute.xlu0 %5152
      %5154 = vrot.lane.b32.xlu0 %v4421, 56
      %v5155 = vpop.permute.xlu0 %5154
      %5156 = vrot.lane.b32.xlu0 %v4423, 56
      %v5157 = vpop.permute.xlu0 %5156
      %5158 = vrot.lane.b32.xlu0 %v4426, 56
      %v5159 = vpop.permute.xlu0 %5158
      %5160 = vrot.lane.b32.xlu0 %v4428, 56
      %v5161 = vpop.permute.xlu0 %5160
      %5162 = vrot.lane.b32.xlu0 %v4802, 56
      %v5163 = vpop.permute.xlu0 %5162
      %5164 = vrot.lane.b32.xlu0 %v4804, 56
      %v5165 = vpop.permute.xlu0 %5164
      %5166 = vrot.lane.b32.xlu0 %v5103, 56
      %v5167 = vpop.permute.xlu0 %5166
      %5168 = vrot.lane.b32.xlu0 %v5105, 56
      %v5169 = vpop.permute.xlu0 %5168
      %v5202 = vrot.slane %v4298, 2
      %v5203 = vrot.slane %v4299, 2
      %v5204 = vsel %vm668, %v5202, %v5203
      %v5205 = vrot.slane %v4300, 2
      %v5206 = vsel %vm668, %v5203, %v5205
      %5207 = vrot.lane.b32.xlu0 %v4537, 64
      %v5208 = vpop.permute.xlu0 %5207
      %5209 = vrot.lane.b32.xlu0 %v4539, 64
      %v5210 = vpop.permute.xlu0 %5209
      %5211 = vrot.lane.b32.xlu0 %v4542, 64
      %v5212 = vpop.permute.xlu0 %5211
      %5213 = vrot.lane.b32.xlu0 %v4544, 64
      %v5214 = vpop.permute.xlu0 %5213
      %5215 = vrot.lane.b32.xlu0 %v4547, 64
      %v5216 = vpop.permute.xlu0 %5215
      %5217 = vrot.lane.b32.xlu0 %v4549, 64
      %v5218 = vpop.permute.xlu0 %5217
      %5219 = vrot.lane.b32.xlu0 %v4552, 64
      %v5220 = vpop.permute.xlu0 %5219
      %5221 = vrot.lane.b32.xlu0 %v4554, 64
      %v5222 = vpop.permute.xlu0 %5221
      %5223 = vrot.lane.b32.xlu0 %v4557, 64
      %v5224 = vpop.permute.xlu0 %5223
      %5225 = vrot.lane.b32.xlu0 %v4559, 64
      %v5226 = vpop.permute.xlu0 %5225
      %5227 = vrot.lane.b32.xlu0 %v4562, 64
      %v5228 = vpop.permute.xlu0 %5227
      %5229 = vrot.lane.b32.xlu0 %v4564, 64
      %v5230 = vpop.permute.xlu0 %5229
      %5231 = vrot.lane.b32.xlu0 %v4567, 64
      %v5232 = vpop.permute.xlu0 %5231
      %5233 = vrot.lane.b32.xlu0 %v4569, 64
      %v5234 = vpop.permute.xlu0 %5233
      %5235 = vrot.lane.b32.xlu0 %v4572, 64
      %v5236 = vpop.permute.xlu0 %5235
      %5237 = vrot.lane.b32.xlu0 %v4574, 64
      %v5238 = vpop.permute.xlu0 %5237
      %5239 = vrot.lane.b32.xlu0 %v4577, 64
      %v5240 = vpop.permute.xlu0 %5239
      %5241 = vrot.lane.b32.xlu0 %v4579, 64
      %v5242 = vpop.permute.xlu0 %5241
      %5243 = vrot.lane.b32.xlu0 %v4582, 64
      %v5244 = vpop.permute.xlu0 %5243
      %5245 = vrot.lane.b32.xlu0 %v4584, 64
      %v5246 = vpop.permute.xlu0 %5245
      %5247 = vrot.lane.b32.xlu0 %v4587, 64
      %v5248 = vpop.permute.xlu0 %5247
      %5249 = vrot.lane.b32.xlu0 %v4589, 64
      %v5250 = vpop.permute.xlu0 %5249
      %5251 = vrot.lane.b32.xlu0 %v4592, 64
      %v5252 = vpop.permute.xlu0 %5251
      %5253 = vrot.lane.b32.xlu0 %v4594, 64
      %v5254 = vpop.permute.xlu0 %5253
      %5255 = vrot.lane.b32.xlu0 %v4597, 64
      %v5256 = vpop.permute.xlu0 %5255
      %5257 = vrot.lane.b32.xlu0 %v4599, 64
      %v5258 = vpop.permute.xlu0 %5257
      %5259 = vrot.lane.b32.xlu0 %v4602, 64
      %v5260 = vpop.permute.xlu0 %5259
      %5261 = vrot.lane.b32.xlu0 %v4604, 64
      %v5262 = vpop.permute.xlu0 %5261
      %5263 = vrot.lane.b32.xlu0 %v4903, 64
      %v5264 = vpop.permute.xlu0 %5263
      %5265 = vrot.lane.b32.xlu0 %v4905, 64
      %v5266 = vpop.permute.xlu0 %5265
      %5267 = vrot.lane.b32.xlu0 %v5204, 64
      %v5268 = vpop.permute.xlu0 %5267
      %5269 = vrot.lane.b32.xlu0 %v5206, 64
      %v5270 = vpop.permute.xlu0 %5269
      %v5303 = vsel %vm333, %v4247, %v4430
      %v5304 = vsel %vm333, %v4248, %v4432
      %v5305 = vsel %vm333, %v4250, %v4434
      %v5306 = vsel %vm333, %v4251, %v4436
      %v5307 = vsel %vm333, %v4253, %v4438
      %v5308 = vsel %vm333, %v4254, %v4440
      %v5309 = vsel %vm333, %v4256, %v4442
      %v5310 = vsel %vm333, %v4257, %v4444
      %v5311 = vsel %vm333, %v4259, %v4446
      %v5312 = vsel %vm333, %v4260, %v4448
      %v5313 = vsel %vm333, %v4262, %v4450
      %v5314 = vsel %vm333, %v4263, %v4452
      %v5315 = vsel %vm333, %v4265, %v4454
      %v5316 = vsel %vm333, %v4266, %v4456
      %v5317 = vsel %vm333, %v4268, %v4458
      %v5318 = vsel %vm333, %v4269, %v4460
      %v5319 = vsel %vm333, %v4271, %v4462
      %v5320 = vsel %vm333, %v4272, %v4464
      %v5321 = vsel %vm333, %v4274, %v4466
      %v5322 = vsel %vm333, %v4275, %v4468
      %v5323 = vsel %vm333, %v4277, %v4470
      %v5324 = vsel %vm333, %v4278, %v4472
      %v5325 = vsel %vm333, %v4280, %v4474
      %v5326 = vsel %vm333, %v4281, %v4476
      %v5327 = vsel %vm333, %v4283, %v4478
      %v5328 = vsel %vm333, %v4284, %v4480
      %v5329 = vsel %vm333, %v4286, %v4482
      %v5330 = vsel %vm333, %v4287, %v4484
      %v5331 = vsel %vm333, %v4289, %v4486
      %v5332 = vsel %vm333, %v4290, %v4488
      %v5333 = vsel %vm333, %v4292, %v4490
      %v5334 = vsel %vm333, %v4293, %v4492
      %v5335 = vsel %vm1545, %v5303, %v4606
      %v5336 = vsel %vm1545, %v5304, %v4608
      %v5337 = vsel %vm1545, %v5305, %v4610
      %v5338 = vsel %vm1545, %v5306, %v4612
      %v5339 = vsel %vm1545, %v5307, %v4614
      %v5340 = vsel %vm1545, %v5308, %v4616
      %v5341 = vsel %vm1545, %v5309, %v4618
      %v5342 = vsel %vm1545, %v5310, %v4620
      %v5343 = vsel %vm1545, %v5311, %v4622
      %v5344 = vsel %vm1545, %v5312, %v4624
      %v5345 = vsel %vm1545, %v5313, %v4626
      %v5346 = vsel %vm1545, %v5314, %v4628
      %v5347 = vsel %vm1545, %v5315, %v4630
      %v5348 = vsel %vm1545, %v5316, %v4632
      %v5349 = vsel %vm1545, %v5317, %v4634
      %v5350 = vsel %vm1545, %v5318, %v4636
      %v5351 = vsel %vm1545, %v5319, %v4638
      %v5352 = vsel %vm1545, %v5320, %v4640
      %v5353 = vsel %vm1545, %v5321, %v4642
      %v5354 = vsel %vm1545, %v5322, %v4644
      %v5355 = vsel %vm1545, %v5323, %v4646
      %v5356 = vsel %vm1545, %v5324, %v4648
      %v5357 = vsel %vm1545, %v5325, %v4650
      %v5358 = vsel %vm1545, %v5326, %v4652
      %v5359 = vsel %vm1545, %v5327, %v4654
      %v5360 = vsel %vm1545, %v5328, %v4656
      %v5361 = vsel %vm1545, %v5329, %v4658
      %v5362 = vsel %vm1545, %v5330, %v4660
      %v5363 = vsel %vm1545, %v5331, %v4662
      %v5364 = vsel %vm1545, %v5332, %v4664
      %v5365 = vsel %vm1545, %v5333, %v4666
      %v5366 = vsel %vm1545, %v5334, %v4668
      %v5367 = vsel %vm1611, %v5335, %v4704
      %v5368 = vsel %vm1611, %v5336, %v4706
      %v5369 = vsel %vm1611, %v5337, %v4708
      %v5370 = vsel %vm1611, %v5338, %v4710
      %v5371 = vsel %vm1611, %v5339, %v4712
      %v5372 = vsel %vm1611, %v5340, %v4714
      %v5373 = vsel %vm1611, %v5341, %v4716
      %v5374 = vsel %vm1611, %v5342, %v4718
      %v5375 = vsel %vm1611, %v5343, %v4720
      %v5376 = vsel %vm1611, %v5344, %v4722
      %v5377 = vsel %vm1611, %v5345, %v4724
      %v5378 = vsel %vm1611, %v5346, %v4726
      %v5379 = vsel %vm1611, %v5347, %v4728
      %v5380 = vsel %vm1611, %v5348, %v4730
      %v5381 = vsel %vm1611, %v5349, %v4732
      %v5382 = vsel %vm1611, %v5350, %v4734
      %v5383 = vsel %vm1611, %v5351, %v4736
      %v5384 = vsel %vm1611, %v5352, %v4738
      %v5385 = vsel %vm1611, %v5353, %v4740
      %v5386 = vsel %vm1611, %v5354, %v4742
      %v5387 = vsel %vm1611, %v5355, %v4744
      %v5388 = vsel %vm1611, %v5356, %v4746
      %v5389 = vsel %vm1611, %v5357, %v4748
      %v5390 = vsel %vm1611, %v5358, %v4750
      %v5391 = vsel %vm1611, %v5359, %v4752
      %v5392 = vsel %vm1611, %v5360, %v4754
      %v5393 = vsel %vm1611, %v5361, %v4756
      %v5394 = vsel %vm1611, %v5362, %v4758
      %v5395 = vsel %vm1611, %v5363, %v4760
      %v5396 = vsel %vm1611, %v5364, %v4762
      %v5397 = vsel %vm1611, %v5365, %v4764
      %v5398 = vsel %vm1611, %v5366, %v4766
      %v5399 = vsel %vm1677, %v5367, %v4806
      %v5400 = vsel %vm1677, %v5368, %v4808
      %v5401 = vsel %vm1677, %v5369, %v4810
      %v5402 = vsel %vm1677, %v5370, %v4812
      %v5403 = vsel %vm1677, %v5371, %v4814
      %v5404 = vsel %vm1677, %v5372, %v4816
      %v5405 = vsel %vm1677, %v5373, %v4818
      %v5406 = vsel %vm1677, %v5374, %v4820
      %v5407 = vsel %vm1677, %v5375, %v4822
      %v5408 = vsel %vm1677, %v5376, %v4824
      %v5409 = vsel %vm1677, %v5377, %v4826
      %v5410 = vsel %vm1677, %v5378, %v4828
      %v5411 = vsel %vm1677, %v5379, %v4830
      %v5412 = vsel %vm1677, %v5380, %v4832
      %v5413 = vsel %vm1677, %v5381, %v4834
      %v5414 = vsel %vm1677, %v5382, %v4836
      %v5415 = vsel %vm1677, %v5383, %v4838
      %v5416 = vsel %vm1677, %v5384, %v4840
      %v5417 = vsel %vm1677, %v5385, %v4842
      %v5418 = vsel %vm1677, %v5386, %v4844
      %v5419 = vsel %vm1677, %v5387, %v4846
      %v5420 = vsel %vm1677, %v5388, %v4848
      %v5421 = vsel %vm1677, %v5389, %v4850
      %v5422 = vsel %vm1677, %v5390, %v4852
      %v5423 = vsel %vm1677, %v5391, %v4854
      %v5424 = vsel %vm1677, %v5392, %v4856
      %v5425 = vsel %vm1677, %v5393, %v4858
      %v5426 = vsel %vm1677, %v5394, %v4860
      %v5427 = vsel %vm1677, %v5395, %v4862
      %v5428 = vsel %vm1677, %v5396, %v4864
      %v5429 = vsel %vm1677, %v5397, %v4866
      %v5430 = vsel %vm1677, %v5398, %v4868
      %v5431 = vsel %vm3505, %v5399, %v4907
      %v5432 = vsel %vm3505, %v5400, %v4909
      %v5433 = vsel %vm3505, %v5401, %v4911
      %v5434 = vsel %vm3505, %v5402, %v4913
      %v5435 = vsel %vm3505, %v5403, %v4915
      %v5436 = vsel %vm3505, %v5404, %v4917
      %v5437 = vsel %vm3505, %v5405, %v4919
      %v5438 = vsel %vm3505, %v5406, %v4921
      %v5439 = vsel %vm3505, %v5407, %v4923
      %v5440 = vsel %vm3505, %v5408, %v4925
      %v5441 = vsel %vm3505, %v5409, %v4927
      %v5442 = vsel %vm3505, %v5410, %v4929
      %v5443 = vsel %vm3505, %v5411, %v4931
      %v5444 = vsel %vm3505, %v5412, %v4933
      %v5445 = vsel %vm3505, %v5413, %v4935
      %v5446 = vsel %vm3505, %v5414, %v4937
      %v5447 = vsel %vm3505, %v5415, %v4939
      %v5448 = vsel %vm3505, %v5416, %v4941
      %v5449 = vsel %vm3505, %v5417, %v4943
      %v5450 = vsel %vm3505, %v5418, %v4945
      %v5451 = vsel %vm3505, %v5419, %v4947
      %v5452 = vsel %vm3505, %v5420, %v4949
      %v5453 = vsel %vm3505, %v5421, %v4951
      %v5454 = vsel %vm3505, %v5422, %v4953
      %v5455 = vsel %vm3505, %v5423, %v4955
      %v5456 = vsel %vm3505, %v5424, %v4957
      %v5457 = vsel %vm3505, %v5425, %v4959
      %v5458 = vsel %vm3505, %v5426, %v4961
      %v5459 = vsel %vm3505, %v5427, %v4963
      %v5460 = vsel %vm3505, %v5428, %v4965
      %v5461 = vsel %vm3505, %v5429, %v4967
      %v5462 = vsel %vm3505, %v5430, %v4969
      %v5463 = vsel %vm3538, %v5431, %v5005
      %v5464 = vsel %vm3538, %v5432, %v5007
      %v5465 = vsel %vm3538, %v5433, %v5009
      %v5466 = vsel %vm3538, %v5434, %v5011
      %v5467 = vsel %vm3538, %v5435, %v5013
      %v5468 = vsel %vm3538, %v5436, %v5015
      %v5469 = vsel %vm3538, %v5437, %v5017
      %v5470 = vsel %vm3538, %v5438, %v5019
      %v5471 = vsel %vm3538, %v5439, %v5021
      %v5472 = vsel %vm3538, %v5440, %v5023
      %v5473 = vsel %vm3538, %v5441, %v5025
      %v5474 = vsel %vm3538, %v5442, %v5027
      %v5475 = vsel %vm3538, %v5443, %v5029
      %v5476 = vsel %vm3538, %v5444, %v5031
      %v5477 = vsel %vm3538, %v5445, %v5033
      %v5478 = vsel %vm3538, %v5446, %v5035
      %v5479 = vsel %vm3538, %v5447, %v5037
      %v5480 = vsel %vm3538, %v5448, %v5039
      %v5481 = vsel %vm3538, %v5449, %v5041
      %v5482 = vsel %vm3538, %v5450, %v5043
      %v5483 = vsel %vm3538, %v5451, %v5045
      %v5484 = vsel %vm3538, %v5452, %v5047
      %v5485 = vsel %vm3538, %v5453, %v5049
      %v5486 = vsel %vm3538, %v5454, %v5051
      %v5487 = vsel %vm3538, %v5455, %v5053
      %v5488 = vsel %vm3538, %v5456, %v5055
      %v5489 = vsel %vm3538, %v5457, %v5057
      %v5490 = vsel %vm3538, %v5458, %v5059
      %v5491 = vsel %vm3538, %v5459, %v5061
      %v5492 = vsel %vm3538, %v5460, %v5063
      %v5493 = vsel %vm3538, %v5461, %v5065
      %v5494 = vsel %vm3538, %v5462, %v5067
      %v5495 = vsel %vm3571, %v5463, %v5107
      %v5496 = vsel %vm3571, %v5464, %v5109
      %v5497 = vsel %vm3571, %v5465, %v5111
      %v5498 = vsel %vm3571, %v5466, %v5113
      %v5499 = vsel %vm3571, %v5467, %v5115
      %v5500 = vsel %vm3571, %v5468, %v5117
      %v5501 = vsel %vm3571, %v5469, %v5119
      %v5502 = vsel %vm3571, %v5470, %v5121
      %v5503 = vsel %vm3571, %v5471, %v5123
      %v5504 = vsel %vm3571, %v5472, %v5125
      %v5505 = vsel %vm3571, %v5473, %v5127
      %v5506 = vsel %vm3571, %v5474, %v5129
      %v5507 = vsel %vm3571, %v5475, %v5131
      %v5508 = vsel %vm3571, %v5476, %v5133
      %v5509 = vsel %vm3571, %v5477, %v5135
      %v5510 = vsel %vm3571, %v5478, %v5137
      %v5511 = vsel %vm3571, %v5479, %v5139
      %v5512 = vsel %vm3571, %v5480, %v5141
      %v5513 = vsel %vm3571, %v5481, %v5143
      %v5514 = vsel %vm3571, %v5482, %v5145
      %v5515 = vsel %vm3571, %v5483, %v5147
      %v5516 = vsel %vm3571, %v5484, %v5149
      %v5517 = vsel %vm3571, %v5485, %v5151
      %v5518 = vsel %vm3571, %v5486, %v5153
      %v5519 = vsel %vm3571, %v5487, %v5155
      %v5520 = vsel %vm3571, %v5488, %v5157
      %v5521 = vsel %vm3571, %v5489, %v5159
      %v5522 = vsel %vm3571, %v5490, %v5161
      %v5523 = vsel %vm3571, %v5491, %v5163
      %v5524 = vsel %vm3571, %v5492, %v5165
      %v5525 = vsel %vm3571, %v5493, %v5167
      %v5526 = vsel %vm3571, %v5494, %v5169
      %v5527 = vsel %vm3604, %v5495, %v5208
      %v5528 = vsel %vm3604, %v5496, %v5210
      %v5529 = vsel %vm3604, %v5497, %v5212
      %v5530 = vsel %vm3604, %v5498, %v5214
      %v5531 = vsel %vm3604, %v5499, %v5216
      %v5532 = vsel %vm3604, %v5500, %v5218
      %v5533 = vsel %vm3604, %v5501, %v5220
      %v5534 = vsel %vm3604, %v5502, %v5222
      %v5535 = vsel %vm3604, %v5503, %v5224
      %v5536 = vsel %vm3604, %v5504, %v5226
      %v5537 = vsel %vm3604, %v5505, %v5228
      %v5538 = vsel %vm3604, %v5506, %v5230
      %v5539 = vsel %vm3604, %v5507, %v5232
      %v5540 = vsel %vm3604, %v5508, %v5234
      %v5541 = vsel %vm3604, %v5509, %v5236
      %v5542 = vsel %vm3604, %v5510, %v5238
      %v5543 = vsel %vm3604, %v5511, %v5240
      %v5544 = vsel %vm3604, %v5512, %v5242
      %v5545 = vsel %vm3604, %v5513, %v5244
      %v5546 = vsel %vm3604, %v5514, %v5246
      %v5547 = vsel %vm3604, %v5515, %v5248
      %v5548 = vsel %vm3604, %v5516, %v5250
      %v5549 = vsel %vm3604, %v5517, %v5252
      %v5550 = vsel %vm3604, %v5518, %v5254
      %v5551 = vsel %vm3604, %v5519, %v5256
      %v5552 = vsel %vm3604, %v5520, %v5258
      %v5553 = vsel %vm3604, %v5521, %v5260
      %v5554 = vsel %vm3604, %v5522, %v5262
      %v5555 = vsel %vm3604, %v5523, %v5264
      %v5556 = vsel %vm3604, %v5524, %v5266
      %v5557 = vsel %vm3604, %v5525, %v5268
      %v5558 = vsel %vm3604, %v5526, %v5270
      %v5559 = vld [vmem:[%s5] sm:$0xff]
      %v5560 = vld [vmem:[%s5 + $0x8] sm:$0xff]
      %v5561 = vld [vmem:[%s5 + $0x10] sm:$0xff]
      %v5562 = vld [vmem:[%s5 + $0x18] sm:$0xff]
      %v5563 = vld [vmem:[%s5 + $0x20] sm:$0xff]
      %v5564 = vld [vmem:[%s5 + $0x28] sm:$0xff]
      %v5565 = vld [vmem:[%s5 + $0x30] sm:$0xff]
      %v5566 = vld [vmem:[%s5 + $0x38] sm:$0xff]
      %v5567 = vld [vmem:[%s5 + $0x40] sm:$0xff]
      %v5568 = vld [vmem:[%s6] sm:$0x1]
      %v5570 = vlaneseq
      %v5571 = vshrl.u32 %v5570, 7
      %v5572 = vsub.s32 0, %v5571
      %v5573 = vrot.slane %v5568, %v5572
      %v5576 = vsel %vm3653, %v5527, 0
      %v5579 = vsel %vm3653, %v5528, 0
      %v5582 = vsel %vm3653, %v5529, 0
      %v5585 = vsel %vm3653, %v5530, 0
      %v5588 = vsel %vm3653, %v5531, 0
      %v5591 = vsel %vm3653, %v5532, 0
      %v5594 = vsel %vm3653, %v5533, 0
      %v5597 = vsel %vm3653, %v5534, 0
      %v5600 = vsel %vm3653, %v5535, 0
      %v5603 = vsel %vm3653, %v5536, 0
      %v5606 = vsel %vm3653, %v5537, 0
      %v5609 = vsel %vm3653, %v5538, 0
      %v5612 = vsel %vm3653, %v5539, 0
      %v5615 = vsel %vm3653, %v5540, 0
      %v5618 = vsel %vm3653, %v5541, 0
      %v5621 = vsel %vm3653, %v5542, 0
      %v5624 = vsel %vm3653, %v5543, 0
      %v5627 = vsel %vm3653, %v5544, 0
      %v5630 = vsel %vm3653, %v5545, 0
      %v5633 = vsel %vm3653, %v5546, 0
      %v5636 = vsel %vm3653, %v5547, 0
      %v5639 = vsel %vm3653, %v5548, 0
      %v5642 = vsel %vm3653, %v5549, 0
      %v5645 = vsel %vm3653, %v5550, 0
      %v5648 = vsel %vm3653, %v5551, 0
      %v5651 = vsel %vm3653, %v5552, 0
      %v5654 = vsel %vm3653, %v5553, 0
      %v5657 = vsel %vm3653, %v5554, 0
      %v5660 = vsel %vm3653, %v5555, 0
      %v5663 = vsel %vm3653, %v5556, 0
      %v5666 = vsel %vm3653, %v5557, 0
      %v5669 = vsel %vm3653, %v5558, 0
      %5671 = vmatprep.subr.mxu0 0.0
      %5672 = vmatpush1.msra.mxu0 %v5559
      %5673 = vmatprep.subr.mxu0 0.0
      %5674 = vmatpush1.msra.mxu0 %v5560
      %5675 = vmatprep.subr.mxu0 0.0
      %5676 = vmatpush1.msra.mxu0 %v5561
      %5677 = vmatprep.subr.mxu0 0.0
      %5678 = vmatpush1.msra.mxu0 %v5562
      %5679 = vmatprep.subr.mxu0 0.0
      %5680 = vmatpush1.msra.mxu0 %v5563
      %5681 = vmatprep.subr.mxu0 0.0
      %5682 = vmatpush1.msra.mxu0 %v5564
      %5683 = vmatprep.subr.mxu0 0.0
      %5684 = vmatpush1.msra.mxu0 %v5565
      %5685 = vmatprep.subr.mxu0 0.0
      %5686 = vmatpush1.msra.mxu0 %v5566
      %5687 = vmatprep.subr.mxu0 0.0
      %5688 = vmatpush1.msra.mxu0 %v5567
      %5689 = vmatprep.subr.mxu0 0.0
      %5690 = vmatpush1.msra.mxu0 0.0
      %5691 = vmatprep.subr.mxu0 0.0
      %5692 = vmatpush1.msra.mxu0 0.0
      %5693 = vmatprep.subr.mxu0 0.0
      %5694 = vmatpush1.msra.mxu0 0.0
      %5695 = vmatprep.subr.mxu0 0.0
      %5696 = vmatpush1.msra.mxu0 0.0
      %5697 = vmatprep.subr.mxu0 0.0
      %5698 = vmatpush1.msra.mxu0 0.0
      %5699 = vmatprep.subr.mxu0 0.0
      %5700 = vmatpush1.msra.mxu0 0.0
      %5701 = vmatprep.subr.mxu0 0.0
      %5702 = vmatpush1.msra.mxu0 0.0
      %5703 = vmatprep.subr.mxu0 0.0
      %5704 = vmatpush1.msra.mxu0 0.0
      %5705 = vmatprep.subr.mxu0 0.0
      %5706 = vmatpush1.msra.mxu0 0.0
      %5707 = vmatprep.subr.mxu0 0.0
      %5708 = vmatpush1.msra.mxu0 0.0
      %5709 = vmatprep.subr.mxu0 0.0
      %5710 = vmatpush1.msra.mxu0 0.0
      %5711 = vmatprep.subr.mxu0 0.0
      %5712 = vmatpush1.msra.mxu0 0.0
      %5713 = vmatprep.subr.mxu0 0.0
      %5714 = vmatpush1.msra.mxu0 0.0
      %5715 = vmatprep.subr.mxu0 0.0
      %5716 = vmatpush1.msra.mxu0 0.0
      %5717 = vmatprep.subr.mxu0 0.0
      %5718 = vmatpush1.msra.mxu0 0.0
      %5719 = vmatprep.subr.mxu0 0.0
      %5720 = vmatpush1.msra.mxu0 0.0
      %5721 = vmatprep.subr.mxu0 0.0
      %5722 = vmatpush1.msra.mxu0 0.0
      %5723 = vmatprep.subr.mxu0 0.0
      %5724 = vmatpush1.msra.mxu0 0.0
      %5725 = vmatprep.subr.mxu0 0.0
      %5726 = vmatpush1.msra.mxu0 0.0
      %5727 = vmatprep.subr.mxu0 0.0
      %5728 = vmatpush1.msra.mxu0 0.0
      %5729 = vmatprep.subr.mxu0 0.0
      %5730 = vmatpush1.msra.mxu0 0.0
      %5731 = vmatprep.subr.mxu0 0.0
      %5732 = vmatpush1.msra.mxu0 0.0
      %5733 = vmatprep.subr.mxu0 0.0
      %5734 = vmatpush1.msra.mxu0 0.0
      %5735 = vmatprep.mubr.f32.mxu0 0.0
      %5736 = vmatmul.mubr.f32.gmra.mrb[0].mxu0 %v5576
      %v5737 = vpop.f32.mrb[0].mxu0
      %v5738 = vadd.f32 %v5573, %v5737
      %v5739 = vpop.f32.mrb[0].mxu0
      %5740 = vmatprep.mubr.f32.mxu0 0.0
      %5741 = vmatmul.mubr.f32.gmra.mrb[0].mxu0 %v5579
      %v5742 = vpop.f32.mrb[0].mxu0
      %v5743 = vadd.f32 %v5573, %v5742
      %v5744 = vpop.f32.mrb[0].mxu0
      %5745 = vmatprep.mubr.f32.mxu0 0.0
      %5746 = vmatmul.mubr.f32.gmra.mrb[0].mxu0 %v5582
      %v5747 = vpop.f32.mrb[0].mxu0
      %v5748 = vadd.f32 %v5573, %v5747
      %v5749 = vpop.f32.mrb[0].mxu0
      %5750 = vmatprep.mubr.f32.mxu0 0.0
      %5751 = vmatmul.mubr.f32.gmra.mrb[0].mxu0 %v5585
      %v5752 = vpop.f32.mrb[0].mxu0
      %v5753 = vadd.f32 %v5573, %v5752
      %v5754 = vpop.f32.mrb[0].mxu0
      %5755 = vmatprep.mubr.f32.mxu0 0.0
      %5756 = vmatmul.mubr.f32.gmra.mrb[0].mxu0 %v5588
      %v5757 = vpop.f32.mrb[0].mxu0
      %v5758 = vadd.f32 %v5573, %v5757
      %v5759 = vpop.f32.mrb[0].mxu0
      %5760 = vmatprep.mubr.f32.mxu0 0.0
      %5761 = vmatmul.mubr.f32.gmra.mrb[0].mxu0 %v5591
      %v5762 = vpop.f32.mrb[0].mxu0
      %v5763 = vadd.f32 %v5573, %v5762
      %v5764 = vpop.f32.mrb[0].mxu0
      %5765 = vmatprep.mubr.f32.mxu0 0.0
      %5766 = vmatmul.mubr.f32.gmra.mrb[0].mxu0 %v5594
      %v5767 = vpop.f32.mrb[0].mxu0
      %v5768 = vadd.f32 %v5573, %v5767
      %v5769 = vpop.f32.mrb[0].mxu0
      %5770 = vmatprep.mubr.f32.mxu0 0.0
      %5771 = vmatmul.mubr.f32.gmra.mrb[0].mxu0 %v5597
      %v5772 = vpop.f32.mrb[0].mxu0
      %v5773 = vadd.f32 %v5573, %v5772
      %v5774 = vpop.f32.mrb[0].mxu0
      %5775 = vmatprep.mubr.f32.mxu0 0.0
      %5776 = vmatmul.mubr.f32.gmra.mrb[0].mxu0 %v5600
      %v5777 = vpop.f32.mrb[0].mxu0
      %v5778 = vadd.f32 %v5573, %v5777
      %v5779 = vpop.f32.mrb[0].mxu0
      %5780 = vmatprep.mubr.f32.mxu0 0.0
      %5781 = vmatmul.mubr.f32.gmra.mrb[0].mxu0 %v5603
      %v5782 = vpop.f32.mrb[0].mxu0
      %v5783 = vadd.f32 %v5573, %v5782
      %v5784 = vpop.f32.mrb[0].mxu0
      %5785 = vmatprep.mubr.f32.mxu0 0.0
      %5786 = vmatmul.mubr.f32.gmra.mrb[0].mxu0 %v5606
      %v5787 = vpop.f32.mrb[0].mxu0
      %v5788 = vadd.f32 %v5573, %v5787
      %v5789 = vpop.f32.mrb[0].mxu0
      %5790 = vmatprep.mubr.f32.mxu0 0.0
      %5791 = vmatmul.mubr.f32.gmra.mrb[0].mxu0 %v5609
      %v5792 = vpop.f32.mrb[0].mxu0
      %v5793 = vadd.f32 %v5573, %v5792
      %v5794 = vpop.f32.mrb[0].mxu0
      %5795 = vmatprep.mubr.f32.mxu0 0.0
      %5796 = vmatmul.mubr.f32.gmra.mrb[0].mxu0 %v5612
      %v5797 = vpop.f32.mrb[0].mxu0
      %v5798 = vadd.f32 %v5573, %v5797
      %v5799 = vpop.f32.mrb[0].mxu0
      %5800 = vmatprep.mubr.f32.mxu0 0.0
      %5801 = vmatmul.mubr.f32.gmra.mrb[0].mxu0 %v5615
      %v5802 = vpop.f32.mrb[0].mxu0
      %v5803 = vadd.f32 %v5573, %v5802
      %v5804 = vpop.f32.mrb[0].mxu0
      %5805 = vmatprep.mubr.f32.mxu0 0.0
      %5806 = vmatmul.mubr.f32.gmra.mrb[0].mxu0 %v5618
      %v5807 = vpop.f32.mrb[0].mxu0
      %v5808 = vadd.f32 %v5573, %v5807
      %v5809 = vpop.f32.mrb[0].mxu0
      %5810 = vmatprep.mubr.f32.mxu0 0.0
      %5811 = vmatmul.mubr.f32.gmra.mrb[0].mxu0 %v5621
      %v5812 = vpop.f32.mrb[0].mxu0
      %v5813 = vadd.f32 %v5573, %v5812
      %v5814 = vpop.f32.mrb[0].mxu0
      %5815 = vmatprep.mubr.f32.mxu0 0.0
      %5816 = vmatmul.mubr.f32.gmra.mrb[0].mxu0 %v5624
      %v5817 = vpop.f32.mrb[0].mxu0
      %v5818 = vadd.f32 %v5573, %v5817
      %v5819 = vpop.f32.mrb[0].mxu0
      %5820 = vmatprep.mubr.f32.mxu0 0.0
      %5821 = vmatmul.mubr.f32.gmra.mrb[0].mxu0 %v5627
      %v5822 = vpop.f32.mrb[0].mxu0
      %v5823 = vadd.f32 %v5573, %v5822
      %v5824 = vpop.f32.mrb[0].mxu0
      %5825 = vmatprep.mubr.f32.mxu0 0.0
      %5826 = vmatmul.mubr.f32.gmra.mrb[0].mxu0 %v5630
      %v5827 = vpop.f32.mrb[0].mxu0
      %v5828 = vadd.f32 %v5573, %v5827
      %v5829 = vpop.f32.mrb[0].mxu0
      %5830 = vmatprep.mubr.f32.mxu0 0.0
      %5831 = vmatmul.mubr.f32.gmra.mrb[0].mxu0 %v5633
      %v5832 = vpop.f32.mrb[0].mxu0
      %v5833 = vadd.f32 %v5573, %v5832
      %v5834 = vpop.f32.mrb[0].mxu0
      %5835 = vmatprep.mubr.f32.mxu0 0.0
      %5836 = vmatmul.mubr.f32.gmra.mrb[0].mxu0 %v5636
      %v5837 = vpop.f32.mrb[0].mxu0
      %v5838 = vadd.f32 %v5573, %v5837
      %v5839 = vpop.f32.mrb[0].mxu0
      %5840 = vmatprep.mubr.f32.mxu0 0.0
      %5841 = vmatmul.mubr.f32.gmra.mrb[0].mxu0 %v5639
      %v5842 = vpop.f32.mrb[0].mxu0
      %v5843 = vadd.f32 %v5573, %v5842
      %v5844 = vpop.f32.mrb[0].mxu0
      %5845 = vmatprep.mubr.f32.mxu0 0.0
      %5846 = vmatmul.mubr.f32.gmra.mrb[0].mxu0 %v5642
      %v5847 = vpop.f32.mrb[0].mxu0
      %v5848 = vadd.f32 %v5573, %v5847
      %v5849 = vpop.f32.mrb[0].mxu0
      %5850 = vmatprep.mubr.f32.mxu0 0.0
      %5851 = vmatmul.mubr.f32.gmra.mrb[0].mxu0 %v5645
      %v5852 = vpop.f32.mrb[0].mxu0
      %v5853 = vadd.f32 %v5573, %v5852
      %v5854 = vpop.f32.mrb[0].mxu0
      %5855 = vmatprep.mubr.f32.mxu0 0.0
      %5856 = vmatmul.mubr.f32.gmra.mrb[0].mxu0 %v5648
      %v5857 = vpop.f32.mrb[0].mxu0
      %v5858 = vadd.f32 %v5573, %v5857
      %v5859 = vpop.f32.mrb[0].mxu0
      %5860 = vmatprep.mubr.f32.mxu0 0.0
      %5861 = vmatmul.mubr.f32.gmra.mrb[0].mxu0 %v5651
      %v5862 = vpop.f32.mrb[0].mxu0
      %v5863 = vadd.f32 %v5573, %v5862
      %v5864 = vpop.f32.mrb[0].mxu0
      %5865 = vmatprep.mubr.f32.mxu0 0.0
      %5866 = vmatmul.mubr.f32.gmra.mrb[0].mxu0 %v5654
      %v5867 = vpop.f32.mrb[0].mxu0
      %v5868 = vadd.f32 %v5573, %v5867
      %v5869 = vpop.f32.mrb[0].mxu0
      %5870 = vmatprep.mubr.f32.mxu0 0.0
      %5871 = vmatmul.mubr.f32.gmra.mrb[0].mxu0 %v5657
      %v5872 = vpop.f32.mrb[0].mxu0
      %v5873 = vadd.f32 %v5573, %v5872
      %v5874 = vpop.f32.mrb[0].mxu0
      %5875 = vmatprep.mubr.f32.mxu0 0.0
      %5876 = vmatmul.mubr.f32.gmra.mrb[0].mxu0 %v5660
      %v5877 = vpop.f32.mrb[0].mxu0
      %v5878 = vadd.f32 %v5573, %v5877
      %v5879 = vpop.f32.mrb[0].mxu0
      %5880 = vmatprep.mubr.f32.mxu0 0.0
      %5881 = vmatmul.mubr.f32.gmra.mrb[0].mxu0 %v5663
      %v5882 = vpop.f32.mrb[0].mxu0
      %v5883 = vadd.f32 %v5573, %v5882
      %v5884 = vpop.f32.mrb[0].mxu0
      %5885 = vmatprep.mubr.f32.mxu0 0.0
      %5886 = vmatmul.mubr.f32.gmra.mrb[0].mxu0 %v5666
      %v5887 = vpop.f32.mrb[0].mxu0
      %v5888 = vadd.f32 %v5573, %v5887
      %v5889 = vpop.f32.mrb[0].mxu0
      %5890 = vmatprep.mubr.f32.mxu0 0.0
      %5891 = vmatmul.mubr.f32.gmra.mrb[0].mxu0 %v5669
      %v5892 = vpop.f32.mrb[0].mxu0
      %v5893 = vadd.f32 %v5573, %v5892
      %v5894 = vpop.f32.mrb[0].mxu0
      %5895 = vdwg.mxu0
      %v5896 = vsel %vm333, %v5738, 0.0
      %v5897 = vsel %vm333, %v5743, 0.0
      %v5898 = vadd.f32 %v5896, %v5897
      %v5899 = vsel %vm333, %v5748, 0.0
      %v5900 = vadd.f32 %v5898, %v5899
      %v5901 = vsel %vm333, %v5753, 0.0
      %v5902 = vadd.f32 %v5900, %v5901
      %v5903 = vsel %vm333, %v5758, 0.0
      %v5904 = vadd.f32 %v5902, %v5903
      %v5905 = vsel %vm333, %v5763, 0.0
      %v5906 = vadd.f32 %v5904, %v5905
      %v5907 = vsel %vm333, %v5768, 0.0
      %v5908 = vadd.f32 %v5906, %v5907
      %v5909 = vsel %vm333, %v5773, 0.0
      %v5910 = vadd.f32 %v5908, %v5909
      %v5911 = vsel %vm333, %v5778, 0.0
      %v5912 = vadd.f32 %v5910, %v5911
      %v5913 = vsel %vm333, %v5783, 0.0
      %v5914 = vadd.f32 %v5912, %v5913
      %v5915 = vsel %vm333, %v5788, 0.0
      %v5916 = vadd.f32 %v5914, %v5915
      %v5917 = vsel %vm333, %v5793, 0.0
      %v5918 = vadd.f32 %v5916, %v5917
      %v5919 = vsel %vm333, %v5798, 0.0
      %v5920 = vadd.f32 %v5918, %v5919
      %v5921 = vsel %vm333, %v5803, 0.0
      %v5922 = vadd.f32 %v5920, %v5921
      %v5923 = vsel %vm333, %v5808, 0.0
      %v5924 = vadd.f32 %v5922, %v5923
      %v5925 = vsel %vm333, %v5813, 0.0
      %v5926 = vadd.f32 %v5924, %v5925
      %v5927 = vsel %vm333, %v5818, 0.0
      %v5928 = vadd.f32 %v5926, %v5927
      %v5929 = vsel %vm333, %v5823, 0.0
      %v5930 = vadd.f32 %v5928, %v5929
      %v5931 = vsel %vm333, %v5828, 0.0
      %v5932 = vadd.f32 %v5930, %v5931
      %v5933 = vsel %vm333, %v5833, 0.0
      %v5934 = vadd.f32 %v5932, %v5933
      %v5935 = vsel %vm333, %v5838, 0.0
      %v5936 = vadd.f32 %v5934, %v5935
      %v5937 = vsel %vm333, %v5843, 0.0
      %v5938 = vadd.f32 %v5936, %v5937
      %v5939 = vsel %vm333, %v5848, 0.0
      %v5940 = vadd.f32 %v5938, %v5939
      %v5941 = vsel %vm333, %v5853, 0.0
      %v5942 = vadd.f32 %v5940, %v5941
      %v5943 = vsel %vm333, %v5858, 0.0
      %v5944 = vadd.f32 %v5942, %v5943
      %v5945 = vsel %vm333, %v5863, 0.0
      %v5946 = vadd.f32 %v5944, %v5945
      %v5947 = vsel %vm333, %v5868, 0.0
      %v5948 = vadd.f32 %v5946, %v5947
      %v5949 = vsel %vm333, %v5873, 0.0
      %v5950 = vadd.f32 %v5948, %v5949
      %v5951 = vsel %vm333, %v5878, 0.0
      %v5952 = vadd.f32 %v5950, %v5951
      %v5953 = vsel %vm333, %v5883, 0.0
      %v5954 = vadd.f32 %v5952, %v5953
      %v5955 = vsel %vm333, %v5888, 0.0
      %v5956 = vadd.f32 %v5954, %v5955
      %v5957 = vsel %vm333, %v5893, 0.0
      %v5958 = vadd.f32 %v5956, %v5957
      %v5959 = vrot.slane %v5958, 4
      %v5960 = vadd.f32 %v5958, %v5959
      %v5961 = vrot.slane %v5960, 2
      %v5962 = vadd.f32 %v5960, %v5961
      %v5963 = vrot.slane %v5962, 1
      %v5964 = vadd.f32 %v5962, %v5963
      %v5965 = vmul.f32 %v5738, %v5738
      %v5966 = vmul.f32 %v5743, %v5743
      %v5967 = vmul.f32 %v5748, %v5748
      %v5968 = vmul.f32 %v5753, %v5753
      %v5969 = vmul.f32 %v5758, %v5758
      %v5970 = vmul.f32 %v5763, %v5763
      %v5971 = vmul.f32 %v5768, %v5768
      %v5972 = vmul.f32 %v5773, %v5773
      %v5973 = vmul.f32 %v5778, %v5778
      %v5974 = vmul.f32 %v5783, %v5783
      %v5975 = vmul.f32 %v5788, %v5788
      %v5976 = vmul.f32 %v5793, %v5793
      %v5977 = vmul.f32 %v5798, %v5798
      %v5978 = vmul.f32 %v5803, %v5803
      %v5979 = vmul.f32 %v5808, %v5808
      %v5980 = vmul.f32 %v5813, %v5813
      %v5981 = vmul.f32 %v5818, %v5818
      %v5982 = vmul.f32 %v5823, %v5823
      %v5983 = vmul.f32 %v5828, %v5828
      %v5984 = vmul.f32 %v5833, %v5833
      %v5985 = vmul.f32 %v5838, %v5838
      %v5986 = vmul.f32 %v5843, %v5843
      %v5987 = vmul.f32 %v5848, %v5848
      %v5988 = vmul.f32 %v5853, %v5853
      %v5989 = vmul.f32 %v5858, %v5858
      %v5990 = vmul.f32 %v5863, %v5863
      %v5991 = vmul.f32 %v5868, %v5868
      %v5992 = vmul.f32 %v5873, %v5873
      %v5993 = vmul.f32 %v5878, %v5878
      %v5994 = vmul.f32 %v5883, %v5883
      %v5995 = vmul.f32 %v5888, %v5888
      %v5996 = vmul.f32 %v5893, %v5893
      %v5997 = vsel %vm333, %v5965, 0.0
      %v5998 = vsel %vm333, %v5966, 0.0
      %v5999 = vadd.f32 %v5997, %v5998
      %v6000 = vsel %vm333, %v5967, 0.0
      %v6001 = vadd.f32 %v5999, %v6000
      %v6002 = vsel %vm333, %v5968, 0.0
      %v6003 = vadd.f32 %v6001, %v6002
      %v6004 = vsel %vm333, %v5969, 0.0
      %v6005 = vadd.f32 %v6003, %v6004
      %v6006 = vsel %vm333, %v5970, 0.0
      %v6007 = vadd.f32 %v6005, %v6006
      %v6008 = vsel %vm333, %v5971, 0.0
      %v6009 = vadd.f32 %v6007, %v6008
      %v6010 = vsel %vm333, %v5972, 0.0
      %v6011 = vadd.f32 %v6009, %v6010
      %v6012 = vsel %vm333, %v5973, 0.0
      %v6013 = vadd.f32 %v6011, %v6012
      %v6014 = vsel %vm333, %v5974, 0.0
      %v6015 = vadd.f32 %v6013, %v6014
      %v6016 = vsel %vm333, %v5975, 0.0
      %v6017 = vadd.f32 %v6015, %v6016
      %v6018 = vsel %vm333, %v5976, 0.0
      %v6019 = vadd.f32 %v6017, %v6018
      %v6020 = vsel %vm333, %v5977, 0.0
      %v6021 = vadd.f32 %v6019, %v6020
      %v6022 = vsel %vm333, %v5978, 0.0
      %v6023 = vadd.f32 %v6021, %v6022
      %v6024 = vsel %vm333, %v5979, 0.0
      %v6025 = vadd.f32 %v6023, %v6024
      %v6026 = vsel %vm333, %v5980, 0.0
      %v6027 = vadd.f32 %v6025, %v6026
      %v6028 = vsel %vm333, %v5981, 0.0
      %v6029 = vadd.f32 %v6027, %v6028
      %v6030 = vsel %vm333, %v5982, 0.0
      %v6031 = vadd.f32 %v6029, %v6030
      %v6032 = vsel %vm333, %v5983, 0.0
      %v6033 = vadd.f32 %v6031, %v6032
      %v6034 = vsel %vm333, %v5984, 0.0
      %v6035 = vadd.f32 %v6033, %v6034
      %v6036 = vsel %vm333, %v5985, 0.0
      %v6037 = vadd.f32 %v6035, %v6036
      %v6038 = vsel %vm333, %v5986, 0.0
      %v6039 = vadd.f32 %v6037, %v6038
      %v6040 = vsel %vm333, %v5987, 0.0
      %v6041 = vadd.f32 %v6039, %v6040
      %v6042 = vsel %vm333, %v5988, 0.0
      %v6043 = vadd.f32 %v6041, %v6042
      %v6044 = vsel %vm333, %v5989, 0.0
      %v6045 = vadd.f32 %v6043, %v6044
      %v6046 = vsel %vm333, %v5990, 0.0
      %v6047 = vadd.f32 %v6045, %v6046
      %v6048 = vsel %vm333, %v5991, 0.0
      %v6049 = vadd.f32 %v6047, %v6048
      %v6050 = vsel %vm333, %v5992, 0.0
      %v6051 = vadd.f32 %v6049, %v6050
      %v6052 = vsel %vm333, %v5993, 0.0
      %v6053 = vadd.f32 %v6051, %v6052
      %v6054 = vsel %vm333, %v5994, 0.0
      %v6055 = vadd.f32 %v6053, %v6054
      %v6056 = vsel %vm333, %v5995, 0.0
      %v6057 = vadd.f32 %v6055, %v6056
      %v6058 = vsel %vm333, %v5996, 0.0
      %v6059 = vadd.f32 %v6057, %v6058
      %v6060 = vrot.slane %v6059, 4
      %v6061 = vadd.f32 %v6059, %v6060
      %v6062 = vrot.slane %v6061, 2
      %v6063 = vadd.f32 %v6061, %v6062
      %v6064 = vrot.slane %v6063, 1
      %v6065 = vadd.f32 %v6063, %v6064
      %v6066 = vmul.f32 %v5964, 0.00390625
      %v6067 = vmul.f32 %v6065, 0.00390625
      %v6068 = vmul.f32 %v6066, %v6066
      %v6069 = vsub.f32 %v6067, %v6068
      %v6070 = vsub.f32 %v5738, %v6066
      %v6071 = vsub.f32 %v5743, %v6066
      %v6072 = vsub.f32 %v5748, %v6066
      %v6073 = vsub.f32 %v5753, %v6066
      %v6074 = vsub.f32 %v5758, %v6066
      %v6075 = vsub.f32 %v5763, %v6066
      %v6076 = vsub.f32 %v5768, %v6066
      %v6077 = vsub.f32 %v5773, %v6066
      %v6078 = vsub.f32 %v5778, %v6066
      %v6079 = vsub.f32 %v5783, %v6066
      %v6080 = vsub.f32 %v5788, %v6066
      %v6081 = vsub.f32 %v5793, %v6066
      %v6082 = vsub.f32 %v5798, %v6066
      %v6083 = vsub.f32 %v5803, %v6066
      %v6084 = vsub.f32 %v5808, %v6066
      %v6085 = vsub.f32 %v5813, %v6066
      %v6086 = vsub.f32 %v5818, %v6066
      %v6087 = vsub.f32 %v5823, %v6066
      %v6088 = vsub.f32 %v5828, %v6066
      %v6089 = vsub.f32 %v5833, %v6066
      %v6090 = vsub.f32 %v5838, %v6066
      %v6091 = vsub.f32 %v5843, %v6066
      %v6092 = vsub.f32 %v5848, %v6066
      %v6093 = vsub.f32 %v5853, %v6066
      %v6094 = vsub.f32 %v5858, %v6066
      %v6095 = vsub.f32 %v5863, %v6066
      %v6096 = vsub.f32 %v5868, %v6066
      %v6097 = vsub.f32 %v5873, %v6066
      %v6098 = vsub.f32 %v5878, %v6066
      %v6099 = vsub.f32 %v5883, %v6066
      %v6100 = vsub.f32 %v5888, %v6066
      %v6101 = vsub.f32 %v5893, %v6066
      %v6102 = vadd.f32 %v6069, 1e-05
      %v6103 = vrsqrt.pop %v6102
      %v6104 = vmul.f32 %v6070, %v6103
      %v6105 = vmul.f32 %v6071, %v6103
      %v6106 = vmul.f32 %v6072, %v6103
      %v6107 = vmul.f32 %v6073, %v6103
      %v6108 = vmul.f32 %v6074, %v6103
      %v6109 = vmul.f32 %v6075, %v6103
      %v6110 = vmul.f32 %v6076, %v6103
      %v6111 = vmul.f32 %v6077, %v6103
      %v6112 = vmul.f32 %v6078, %v6103
      %v6113 = vmul.f32 %v6079, %v6103
      %v6114 = vmul.f32 %v6080, %v6103
      %v6115 = vmul.f32 %v6081, %v6103
      %v6116 = vmul.f32 %v6082, %v6103
      %v6117 = vmul.f32 %v6083, %v6103
      %v6118 = vmul.f32 %v6084, %v6103
      %v6119 = vmul.f32 %v6085, %v6103
      %v6120 = vmul.f32 %v6086, %v6103
      %v6121 = vmul.f32 %v6087, %v6103
      %v6122 = vmul.f32 %v6088, %v6103
      %v6123 = vmul.f32 %v6089, %v6103
      %v6124 = vmul.f32 %v6090, %v6103
      %v6125 = vmul.f32 %v6091, %v6103
      %v6126 = vmul.f32 %v6092, %v6103
      %v6127 = vmul.f32 %v6093, %v6103
      %v6128 = vmul.f32 %v6094, %v6103
      %v6129 = vmul.f32 %v6095, %v6103
      %v6130 = vmul.f32 %v6096, %v6103
      %v6131 = vmul.f32 %v6097, %v6103
      %v6132 = vmul.f32 %v6098, %v6103
      %v6133 = vmul.f32 %v6099, %v6103
      %v6134 = vmul.f32 %v6100, %v6103
      %v6135 = vmul.f32 %v6101, %v6103
      %6136 = vst.msk [vmem:[%s2288 + $0x1] sm:$0xff] %vm333, %v6104
      %6137 = vst.msk [vmem:[%s2288 + $0x9] sm:$0xff] %vm333, %v6105
      %6138 = vst.msk [vmem:[%s2288 + $0x19] sm:$0xff] %vm333, %v6106
      %6139 = vst.msk [vmem:[%s2288 + $0x21] sm:$0xff] %vm333, %v6107
      %6140 = vst.msk [vmem:[%s2288 + $0x31] sm:$0xff] %vm333, %v6108
      %6141 = vst.msk [vmem:[%s2288 + $0x39] sm:$0xff] %vm333, %v6109
      %6142 = vst.msk [vmem:[%s2288 + $0x49] sm:$0xff] %vm333, %v6110
      %6143 = vst.msk [vmem:[%s2288 + $0x51] sm:$0xff] %vm333, %v6111
      %6144 = vst.msk [vmem:[%s2288 + $0x61] sm:$0xff] %vm333, %v6112
      %6145 = vst.msk [vmem:[%s2288 + $0x69] sm:$0xff] %vm333, %v6113
      %6146 = vst.msk [vmem:[%s2288 + $0x79] sm:$0xff] %vm333, %v6114
      %6147 = vst.msk [vmem:[%s2288 + $0x81] sm:$0xff] %vm333, %v6115
      %6148 = vst.msk [vmem:[%s2288 + $0x91] sm:$0xff] %vm333, %v6116
      %6149 = vst.msk [vmem:[%s2288 + $0x99] sm:$0xff] %vm333, %v6117
      %6150 = vst.msk [vmem:[%s2288 + $0xa9] sm:$0xff] %vm333, %v6118
      %6151 = vst.msk [vmem:[%s2288 + $0xb1] sm:$0xff] %vm333, %v6119
      %6152 = vst.msk [vmem:[%s2288 + $0xc1] sm:$0xff] %vm333, %v6120
      %6153 = vst.msk [vmem:[%s2288 + $0xc9] sm:$0xff] %vm333, %v6121
      %6154 = vst.msk [vmem:[%s2288 + $0xd9] sm:$0xff] %vm333, %v6122
      %6155 = vst.msk [vmem:[%s2288 + $0xe1] sm:$0xff] %vm333, %v6123
      %6156 = vst.msk [vmem:[%s2288 + $0xf1] sm:$0xff] %vm333, %v6124
      %6157 = vst.msk [vmem:[%s2288 + $0xf9] sm:$0xff] %vm333, %v6125
      %6158 = vst.msk [vmem:[%s2288 + $0x109] sm:$0xff] %vm333, %v6126
      %6159 = vst.msk [vmem:[%s2288 + $0x111] sm:$0xff] %vm333, %v6127
      %6160 = vst.msk [vmem:[%s2288 + $0x121] sm:$0xff] %vm333, %v6128
      %6161 = vst.msk [vmem:[%s2288 + $0x129] sm:$0xff] %vm333, %v6129
      %6162 = vst.msk [vmem:[%s2288 + $0x139] sm:$0xff] %vm333, %v6130
      %6163 = vst.msk [vmem:[%s2288 + $0x141] sm:$0xff] %vm333, %v6131
      %6164 = vst.msk [vmem:[%s2288 + $0x151] sm:$0xff] %vm333, %v6132
      %6165 = vst.msk [vmem:[%s2288 + $0x159] sm:$0xff] %vm333, %v6133
      %6166 = vst.msk [vmem:[%s2288 + $0x169] sm:$0xff] %vm333, %v6134
      %6167 = vst.msk [vmem:[%s2288 + $0x171] sm:$0xff] %vm333, %v6135
      %v6168 = vld [vmem:[#allocation2] sm:$0xff]
      %v6169 = vld [vmem:[#allocation2 + $0x8] sm:$0xff]
      %v6170 = vld [vmem:[#allocation2 + $0x10] sm:$0x3]
      %v6171 = vld [vmem:[#allocation2 + $0x18] sm:$0xff]
      %v6172 = vld [vmem:[#allocation2 + $0x20] sm:$0xff]
      %v6173 = vld [vmem:[#allocation2 + $0x28] sm:$0x3]
      %v6174 = vld [vmem:[#allocation2 + $0x30] sm:$0xff]
      %v6175 = vld [vmem:[#allocation2 + $0x38] sm:$0xff]
      %v6176 = vld [vmem:[#allocation2 + $0x40] sm:$0x3]
      %v6177 = vld [vmem:[#allocation2 + $0x48] sm:$0xff]
      %v6178 = vld [vmem:[#allocation2 + $0x50] sm:$0xff]
      %v6179 = vld [vmem:[#allocation2 + $0x58] sm:$0x3]
      %v6180 = vld [vmem:[#allocation2 + $0x60] sm:$0xff]
      %v6181 = vld [vmem:[#allocation2 + $0x68] sm:$0xff]
      %v6182 = vld [vmem:[#allocation2 + $0x70] sm:$0x3]
      %v6183 = vld [vmem:[#allocation2 + $0x78] sm:$0xff]
      %v6184 = vld [vmem:[#allocation2 + $0x80] sm:$0xff]
      %v6185 = vld [vmem:[#allocation2 + $0x88] sm:$0x3]
      %v6186 = vld [vmem:[#allocation2 + $0x90] sm:$0xff]
      %v6187 = vld [vmem:[#allocation2 + $0x98] sm:$0xff]
      %v6188 = vld [vmem:[#allocation2 + $0xa0] sm:$0x3]
      %v6189 = vld [vmem:[#allocation2 + $0xa8] sm:$0xff]
      %v6190 = vld [vmem:[#allocation2 + $0xb0] sm:$0xff]
      %v6191 = vld [vmem:[#allocation2 + $0xb8] sm:$0x3]
      %v6192 = vld [vmem:[#allocation2 + $0xc0] sm:$0xff]
      %v6193 = vld [vmem:[#allocation2 + $0xc8] sm:$0xff]
      %v6194 = vld [vmem:[#allocation2 + $0xd0] sm:$0x3]
      %v6195 = vld [vmem:[#allocation2 + $0xd8] sm:$0xff]
      %v6196 = vld [vmem:[#allocation2 + $0xe0] sm:$0xff]
      %v6197 = vld [vmem:[#allocation2 + $0xe8] sm:$0x3]
      %v6198 = vld [vmem:[#allocation2 + $0xf0] sm:$0xff]
      %v6199 = vld [vmem:[#allocation2 + $0xf8] sm:$0xff]
      %v6200 = vld [vmem:[#allocation2 + $0x100] sm:$0x3]
      %v6201 = vld [vmem:[#allocation2 + $0x108] sm:$0xff]
      %v6202 = vld [vmem:[#allocation2 + $0x110] sm:$0xff]
      %v6203 = vld [vmem:[#allocation2 + $0x118] sm:$0x3]
      %v6204 = vld [vmem:[#allocation2 + $0x120] sm:$0xff]
      %v6205 = vld [vmem:[#allocation2 + $0x128] sm:$0xff]
      %v6206 = vld [vmem:[#allocation2 + $0x130] sm:$0x3]
      %v6207 = vld [vmem:[#allocation2 + $0x138] sm:$0xff]
      %v6208 = vld [vmem:[#allocation2 + $0x140] sm:$0xff]
      %v6209 = vld [vmem:[#allocation2 + $0x148] sm:$0x3]
      %v6210 = vld [vmem:[#allocation2 + $0x150] sm:$0xff]
      %v6211 = vld [vmem:[#allocation2 + $0x158] sm:$0xff]
      %v6212 = vld [vmem:[#allocation2 + $0x160] sm:$0x3]
      %v6213 = vld [vmem:[#allocation2 + $0x168] sm:$0xff]
      %v6214 = vld [vmem:[#allocation2 + $0x170] sm:$0xff]
      %v6215 = vld [vmem:[#allocation2 + $0x178] sm:$0x3]
      %v6216 = vld [vmem:[#allocation2 + $0x180] sm:$0xff]
      %v6217 = vld [vmem:[#allocation2 + $0x188] sm:$0xff]
      %v6218 = vld [vmem:[#allocation2 + $0x190] sm:$0x3]
      %v6219 = vld [vmem:[#allocation2 + $0x198] sm:$0xff]
      %v6220 = vld [vmem:[#allocation2 + $0x1a0] sm:$0xff]
      %v6221 = vld [vmem:[#allocation2 + $0x1a8] sm:$0x3]
      %v6270 = vrot.slane %v6168, 1
      %v6271 = vrot.slane %v6169, 1
      %v6272 = vsel %vm491, %v6270, %v6271
      %v6273 = vrot.slane %v6170, 1
      %v6274 = vsel %vm491, %v6271, %v6273
      %v6275 = vrot.slane %v6171, 1
      %v6276 = vrot.slane %v6172, 1
      %v6277 = vsel %vm491, %v6275, %v6276
      %v6278 = vrot.slane %v6173, 1
      %v6279 = vsel %vm491, %v6276, %v6278
      %v6280 = vrot.slane %v6174, 1
      %v6281 = vrot.slane %v6175, 1
      %v6282 = vsel %vm491, %v6280, %v6281
      %v6283 = vrot.slane %v6176, 1
      %v6284 = vsel %vm491, %v6281, %v6283
      %v6285 = vrot.slane %v6177, 1
      %v6286 = vrot.slane %v6178, 1
      %v6287 = vsel %vm491, %v6285, %v6286
      %v6288 = vrot.slane %v6179, 1
      %v6289 = vsel %vm491, %v6286, %v6288
      %v6290 = vrot.slane %v6180, 1
      %v6291 = vrot.slane %v6181, 1
      %v6292 = vsel %vm491, %v6290, %v6291
      %v6293 = vrot.slane %v6182, 1
      %v6294 = vsel %vm491, %v6291, %v6293
      %v6295 = vrot.slane %v6183, 1
      %v6296 = vrot.slane %v6184, 1
      %v6297 = vsel %vm491, %v6295, %v6296
      %v6298 = vrot.slane %v6185, 1
      %v6299 = vsel %vm491, %v6296, %v6298
      %v6300 = vrot.slane %v6186, 1
      %v6301 = vrot.slane %v6187, 1
      %v6302 = vsel %vm491, %v6300, %v6301
      %v6303 = vrot.slane %v6188, 1
      %v6304 = vsel %vm491, %v6301, %v6303
      %v6305 = vrot.slane %v6189, 1
      %v6306 = vrot.slane %v6190, 1
      %v6307 = vsel %vm491, %v6305, %v6306
      %v6308 = vrot.slane %v6191, 1
      %v6309 = vsel %vm491, %v6306, %v6308
      %v6310 = vrot.slane %v6192, 1
      %v6311 = vrot.slane %v6193, 1
      %v6312 = vsel %vm491, %v6310, %v6311
      %v6313 = vrot.slane %v6194, 1
      %v6314 = vsel %vm491, %v6311, %v6313
      %v6315 = vrot.slane %v6195, 1
      %v6316 = vrot.slane %v6196, 1
      %v6317 = vsel %vm491, %v6315, %v6316
      %v6318 = vrot.slane %v6197, 1
      %v6319 = vsel %vm491, %v6316, %v6318
      %v6320 = vrot.slane %v6198, 1
      %v6321 = vrot.slane %v6199, 1
      %v6322 = vsel %vm491, %v6320, %v6321
      %v6323 = vrot.slane %v6200, 1
      %v6324 = vsel %vm491, %v6321, %v6323
      %v6325 = vrot.slane %v6201, 1
      %v6326 = vrot.slane %v6202, 1
      %v6327 = vsel %vm491, %v6325, %v6326
      %v6328 = vrot.slane %v6203, 1
      %v6329 = vsel %vm491, %v6326, %v6328
      %v6330 = vrot.slane %v6204, 1
      %v6331 = vrot.slane %v6205, 1
      %v6332 = vsel %vm491, %v6330, %v6331
      %v6333 = vrot.slane %v6206, 1
      %v6334 = vsel %vm491, %v6331, %v6333
      %v6335 = vrot.slane %v6207, 1
      %v6336 = vrot.slane %v6208, 1
      %v6337 = vsel %vm491, %v6335, %v6336
      %v6338 = vrot.slane %v6209, 1
      %v6339 = vsel %vm491, %v6336, %v6338
      %v6340 = vrot.slane %v6210, 1
      %v6341 = vrot.slane %v6211, 1
      %v6342 = vsel %vm491, %v6340, %v6341
      %v6343 = vrot.slane %v6212, 1
      %v6344 = vsel %vm491, %v6341, %v6343
      %v6345 = vrot.slane %v6213, 1
      %v6346 = vrot.slane %v6214, 1
      %v6347 = vsel %vm491, %v6345, %v6346
      %v6348 = vrot.slane %v6215, 1
      %v6349 = vsel %vm491, %v6346, %v6348
      %6350 = vrot.lane.b32.xlu0 %v6272, 8
      %v6351 = vpop.permute.xlu0 %6350
      %6352 = vrot.lane.b32.xlu0 %v6274, 8
      %v6353 = vpop.permute.xlu0 %6352
      %6354 = vrot.lane.b32.xlu0 %v6277, 8
      %v6355 = vpop.permute.xlu0 %6354
      %6356 = vrot.lane.b32.xlu0 %v6279, 8
      %v6357 = vpop.permute.xlu0 %6356
      %6358 = vrot.lane.b32.xlu0 %v6282, 8
      %v6359 = vpop.permute.xlu0 %6358
      %6360 = vrot.lane.b32.xlu0 %v6284, 8
      %v6361 = vpop.permute.xlu0 %6360
      %6362 = vrot.lane.b32.xlu0 %v6287, 8
      %v6363 = vpop.permute.xlu0 %6362
      %6364 = vrot.lane.b32.xlu0 %v6289, 8
      %v6365 = vpop.permute.xlu0 %6364
      %6366 = vrot.lane.b32.xlu0 %v6292, 8
      %v6367 = vpop.permute.xlu0 %6366
      %6368 = vrot.lane.b32.xlu0 %v6294, 8
      %v6369 = vpop.permute.xlu0 %6368
      %6370 = vrot.lane.b32.xlu0 %v6297, 8
      %v6371 = vpop.permute.xlu0 %6370
      %6372 = vrot.lane.b32.xlu0 %v6299, 8
      %v6373 = vpop.permute.xlu0 %6372
      %6374 = vrot.lane.b32.xlu0 %v6302, 8
      %v6375 = vpop.permute.xlu0 %6374
      %6376 = vrot.lane.b32.xlu0 %v6304, 8
      %v6377 = vpop.permute.xlu0 %6376
      %6378 = vrot.lane.b32.xlu0 %v6307, 8
      %v6379 = vpop.permute.xlu0 %6378
      %6380 = vrot.lane.b32.xlu0 %v6309, 8
      %v6381 = vpop.permute.xlu0 %6380
      %6382 = vrot.lane.b32.xlu0 %v6312, 8
      %v6383 = vpop.permute.xlu0 %6382
      %6384 = vrot.lane.b32.xlu0 %v6314, 8
      %v6385 = vpop.permute.xlu0 %6384
      %6386 = vrot.lane.b32.xlu0 %v6317, 8
      %v6387 = vpop.permute.xlu0 %6386
      %6388 = vrot.lane.b32.xlu0 %v6319, 8
      %v6389 = vpop.permute.xlu0 %6388
      %6390 = vrot.lane.b32.xlu0 %v6322, 8
      %v6391 = vpop.permute.xlu0 %6390
      %6392 = vrot.lane.b32.xlu0 %v6324, 8
      %v6393 = vpop.permute.xlu0 %6392
      %6394 = vrot.lane.b32.xlu0 %v6327, 8
      %v6395 = vpop.permute.xlu0 %6394
      %6396 = vrot.lane.b32.xlu0 %v6329, 8
      %v6397 = vpop.permute.xlu0 %6396
      %6398 = vrot.lane.b32.xlu0 %v6332, 8
      %v6399 = vpop.permute.xlu0 %6398
      %6400 = vrot.lane.b32.xlu0 %v6334, 8
      %v6401 = vpop.permute.xlu0 %6400
      %6402 = vrot.lane.b32.xlu0 %v6337, 8
      %v6403 = vpop.permute.xlu0 %6402
      %6404 = vrot.lane.b32.xlu0 %v6339, 8
      %v6405 = vpop.permute.xlu0 %6404
      %6406 = vrot.lane.b32.xlu0 %v6342, 8
      %v6407 = vpop.permute.xlu0 %6406
      %6408 = vrot.lane.b32.xlu0 %v6344, 8
      %v6409 = vpop.permute.xlu0 %6408
      %6410 = vrot.lane.b32.xlu0 %v6347, 8
      %v6411 = vpop.permute.xlu0 %6410
      %6412 = vrot.lane.b32.xlu0 %v6349, 8
      %v6413 = vpop.permute.xlu0 %6412
      %v6446 = vrot.slane %v6168, 2
      %v6447 = vrot.slane %v6169, 2
      %v6448 = vsel %vm668, %v6446, %v6447
      %v6449 = vrot.slane %v6170, 2
      %v6450 = vsel %vm668, %v6447, %v6449
      %v6451 = vrot.slane %v6171, 2
      %v6452 = vrot.slane %v6172, 2
      %v6453 = vsel %vm668, %v6451, %v6452
      %v6454 = vrot.slane %v6173, 2
      %v6455 = vsel %vm668, %v6452, %v6454
      %v6456 = vrot.slane %v6174, 2
      %v6457 = vrot.slane %v6175, 2
      %v6458 = vsel %vm668, %v6456, %v6457
      %v6459 = vrot.slane %v6176, 2
      %v6460 = vsel %vm668, %v6457, %v6459
      %v6461 = vrot.slane %v6177, 2
      %v6462 = vrot.slane %v6178, 2
      %v6463 = vsel %vm668, %v6461, %v6462
      %v6464 = vrot.slane %v6179, 2
      %v6465 = vsel %vm668, %v6462, %v6464
      %v6466 = vrot.slane %v6180, 2
      %v6467 = vrot.slane %v6181, 2
      %v6468 = vsel %vm668, %v6466, %v6467
      %v6469 = vrot.slane %v6182, 2
      %v6470 = vsel %vm668, %v6467, %v6469
      %v6471 = vrot.slane %v6183, 2
      %v6472 = vrot.slane %v6184, 2
      %v6473 = vsel %vm668, %v6471, %v6472
      %v6474 = vrot.slane %v6185, 2
      %v6475 = vsel %vm668, %v6472, %v6474
      %v6476 = vrot.slane %v6186, 2
      %v6477 = vrot.slane %v6187, 2
      %v6478 = vsel %vm668, %v6476, %v6477
      %v6479 = vrot.slane %v6188, 2
      %v6480 = vsel %vm668, %v6477, %v6479
      %v6481 = vrot.slane %v6189, 2
      %v6482 = vrot.slane %v6190, 2
      %v6483 = vsel %vm668, %v6481, %v6482
      %v6484 = vrot.slane %v6191, 2
      %v6485 = vsel %vm668, %v6482, %v6484
      %v6486 = vrot.slane %v6192, 2
      %v6487 = vrot.slane %v6193, 2
      %v6488 = vsel %vm668, %v6486, %v6487
      %v6489 = vrot.slane %v6194, 2
      %v6490 = vsel %vm668, %v6487, %v6489
      %v6491 = vrot.slane %v6195, 2
      %v6492 = vrot.slane %v6196, 2
      %v6493 = vsel %vm668, %v6491, %v6492
      %v6494 = vrot.slane %v6197, 2
      %v6495 = vsel %vm668, %v6492, %v6494
      %v6496 = vrot.slane %v6198, 2
      %v6497 = vrot.slane %v6199, 2
      %v6498 = vsel %vm668, %v6496, %v6497
      %v6499 = vrot.slane %v6200, 2
      %v6500 = vsel %vm668, %v6497, %v6499
      %v6501 = vrot.slane %v6201, 2
      %v6502 = vrot.slane %v6202, 2
      %v6503 = vsel %vm668, %v6501, %v6502
      %v6504 = vrot.slane %v6203, 2
      %v6505 = vsel %vm668, %v6502, %v6504
      %v6506 = vrot.slane %v6204, 2
      %v6507 = vrot.slane %v6205, 2
      %v6508 = vsel %vm668, %v6506, %v6507
      %v6509 = vrot.slane %v6206, 2
      %v6510 = vsel %vm668, %v6507, %v6509
      %v6511 = vrot.slane %v6207, 2
      %v6512 = vrot.slane %v6208, 2
      %v6513 = vsel %vm668, %v6511, %v6512
      %v6514 = vrot.slane %v6209, 2
      %v6515 = vsel %vm668, %v6512, %v6514
      %v6516 = vrot.slane %v6210, 2
      %v6517 = vrot.slane %v6211, 2
      %v6518 = vsel %vm668, %v6516, %v6517
      %v6519 = vrot.slane %v6212, 2
      %v6520 = vsel %vm668, %v6517, %v6519
      %v6521 = vrot.slane %v6213, 2
      %v6522 = vrot.slane %v6214, 2
      %v6523 = vsel %vm668, %v6521, %v6522
      %v6524 = vrot.slane %v6215, 2
      %v6525 = vsel %vm668, %v6522, %v6524
      %6526 = vrot.lane.b32.xlu0 %v6448, 16
      %v6527 = vpop.permute.xlu0 %6526
      %6528 = vrot.lane.b32.xlu0 %v6450, 16
      %v6529 = vpop.permute.xlu0 %6528
      %6530 = vrot.lane.b32.xlu0 %v6453, 16
      %v6531 = vpop.permute.xlu0 %6530
      %6532 = vrot.lane.b32.xlu0 %v6455, 16
      %v6533 = vpop.permute.xlu0 %6532
      %6534 = vrot.lane.b32.xlu0 %v6458, 16
      %v6535 = vpop.permute.xlu0 %6534
      %6536 = vrot.lane.b32.xlu0 %v6460, 16
      %v6537 = vpop.permute.xlu0 %6536
      %6538 = vrot.lane.b32.xlu0 %v6463, 16
      %v6539 = vpop.permute.xlu0 %6538
      %6540 = vrot.lane.b32.xlu0 %v6465, 16
      %v6541 = vpop.permute.xlu0 %6540
      %6542 = vrot.lane.b32.xlu0 %v6468, 16
      %v6543 = vpop.permute.xlu0 %6542
      %6544 = vrot.lane.b32.xlu0 %v6470, 16
      %v6545 = vpop.permute.xlu0 %6544
      %6546 = vrot.lane.b32.xlu0 %v6473, 16
      %v6547 = vpop.permute.xlu0 %6546
      %6548 = vrot.lane.b32.xlu0 %v6475, 16
      %v6549 = vpop.permute.xlu0 %6548
      %6550 = vrot.lane.b32.xlu0 %v6478, 16
      %v6551 = vpop.permute.xlu0 %6550
      %6552 = vrot.lane.b32.xlu0 %v6480, 16
      %v6553 = vpop.permute.xlu0 %6552
      %6554 = vrot.lane.b32.xlu0 %v6483, 16
      %v6555 = vpop.permute.xlu0 %6554
      %6556 = vrot.lane.b32.xlu0 %v6485, 16
      %v6557 = vpop.permute.xlu0 %6556
      %6558 = vrot.lane.b32.xlu0 %v6488, 16
      %v6559 = vpop.permute.xlu0 %6558
      %6560 = vrot.lane.b32.xlu0 %v6490, 16
      %v6561 = vpop.permute.xlu0 %6560
      %6562 = vrot.lane.b32.xlu0 %v6493, 16
      %v6563 = vpop.permute.xlu0 %6562
      %6564 = vrot.lane.b32.xlu0 %v6495, 16
      %v6565 = vpop.permute.xlu0 %6564
      %6566 = vrot.lane.b32.xlu0 %v6498, 16
      %v6567 = vpop.permute.xlu0 %6566
      %6568 = vrot.lane.b32.xlu0 %v6500, 16
      %v6569 = vpop.permute.xlu0 %6568
      %6570 = vrot.lane.b32.xlu0 %v6503, 16
      %v6571 = vpop.permute.xlu0 %6570
      %6572 = vrot.lane.b32.xlu0 %v6505, 16
      %v6573 = vpop.permute.xlu0 %6572
      %6574 = vrot.lane.b32.xlu0 %v6508, 16
      %v6575 = vpop.permute.xlu0 %6574
      %6576 = vrot.lane.b32.xlu0 %v6510, 16
      %v6577 = vpop.permute.xlu0 %6576
      %6578 = vrot.lane.b32.xlu0 %v6513, 16
      %v6579 = vpop.permute.xlu0 %6578
      %6580 = vrot.lane.b32.xlu0 %v6515, 16
      %v6581 = vpop.permute.xlu0 %6580
      %6582 = vrot.lane.b32.xlu0 %v6518, 16
      %v6583 = vpop.permute.xlu0 %6582
      %6584 = vrot.lane.b32.xlu0 %v6520, 16
      %v6585 = vpop.permute.xlu0 %6584
      %6586 = vrot.lane.b32.xlu0 %v6523, 16
      %v6587 = vpop.permute.xlu0 %6586
      %6588 = vrot.lane.b32.xlu0 %v6525, 16
      %v6589 = vpop.permute.xlu0 %6588
      %6624 = vrot.lane.b32.xlu0 %v6171, 24
      %v6625 = vpop.permute.xlu0 %6624
      %6626 = vrot.lane.b32.xlu0 %v6172, 24
      %v6627 = vpop.permute.xlu0 %6626
      %6628 = vrot.lane.b32.xlu0 %v6174, 24
      %v6629 = vpop.permute.xlu0 %6628
      %6630 = vrot.lane.b32.xlu0 %v6175, 24
      %v6631 = vpop.permute.xlu0 %6630
      %6632 = vrot.lane.b32.xlu0 %v6177, 24
      %v6633 = vpop.permute.xlu0 %6632
      %6634 = vrot.lane.b32.xlu0 %v6178, 24
      %v6635 = vpop.permute.xlu0 %6634
      %6636 = vrot.lane.b32.xlu0 %v6180, 24
      %v6637 = vpop.permute.xlu0 %6636
      %6638 = vrot.lane.b32.xlu0 %v6181, 24
      %v6639 = vpop.permute.xlu0 %6638
      %6640 = vrot.lane.b32.xlu0 %v6183, 24
      %v6641 = vpop.permute.xlu0 %6640
      %6642 = vrot.lane.b32.xlu0 %v6184, 24
      %v6643 = vpop.permute.xlu0 %6642
      %6644 = vrot.lane.b32.xlu0 %v6186, 24
      %v6645 = vpop.permute.xlu0 %6644
      %6646 = vrot.lane.b32.xlu0 %v6187, 24
      %v6647 = vpop.permute.xlu0 %6646
      %6648 = vrot.lane.b32.xlu0 %v6189, 24
      %v6649 = vpop.permute.xlu0 %6648
      %6650 = vrot.lane.b32.xlu0 %v6190, 24
      %v6651 = vpop.permute.xlu0 %6650
      %6652 = vrot.lane.b32.xlu0 %v6192, 24
      %v6653 = vpop.permute.xlu0 %6652
      %6654 = vrot.lane.b32.xlu0 %v6193, 24
      %v6655 = vpop.permute.xlu0 %6654
      %6656 = vrot.lane.b32.xlu0 %v6195, 24
      %v6657 = vpop.permute.xlu0 %6656
      %6658 = vrot.lane.b32.xlu0 %v6196, 24
      %v6659 = vpop.permute.xlu0 %6658
      %6660 = vrot.lane.b32.xlu0 %v6198, 24
      %v6661 = vpop.permute.xlu0 %6660
      %6662 = vrot.lane.b32.xlu0 %v6199, 24
      %v6663 = vpop.permute.xlu0 %6662
      %6664 = vrot.lane.b32.xlu0 %v6201, 24
      %v6665 = vpop.permute.xlu0 %6664
      %6666 = vrot.lane.b32.xlu0 %v6202, 24
      %v6667 = vpop.permute.xlu0 %6666
      %6668 = vrot.lane.b32.xlu0 %v6204, 24
      %v6669 = vpop.permute.xlu0 %6668
      %6670 = vrot.lane.b32.xlu0 %v6205, 24
      %v6671 = vpop.permute.xlu0 %6670
      %6672 = vrot.lane.b32.xlu0 %v6207, 24
      %v6673 = vpop.permute.xlu0 %6672
      %6674 = vrot.lane.b32.xlu0 %v6208, 24
      %v6675 = vpop.permute.xlu0 %6674
      %6676 = vrot.lane.b32.xlu0 %v6210, 24
      %v6677 = vpop.permute.xlu0 %6676
      %6678 = vrot.lane.b32.xlu0 %v6211, 24
      %v6679 = vpop.permute.xlu0 %6678
      %6680 = vrot.lane.b32.xlu0 %v6213, 24
      %v6681 = vpop.permute.xlu0 %6680
      %6682 = vrot.lane.b32.xlu0 %v6214, 24
      %v6683 = vpop.permute.xlu0 %6682
      %6684 = vrot.lane.b32.xlu0 %v6216, 24
      %v6685 = vpop.permute.xlu0 %6684
      %6686 = vrot.lane.b32.xlu0 %v6217, 24
      %v6687 = vpop.permute.xlu0 %6686
      %v6721 = vrot.slane %v6216, 1
      %v6722 = vrot.slane %v6217, 1
      %v6723 = vsel %vm491, %v6721, %v6722
      %v6724 = vrot.slane %v6218, 1
      %v6725 = vsel %vm491, %v6722, %v6724
      %6726 = vrot.lane.b32.xlu0 %v6277, 32
      %v6727 = vpop.permute.xlu0 %6726
      %6728 = vrot.lane.b32.xlu0 %v6279, 32
      %v6729 = vpop.permute.xlu0 %6728
      %6730 = vrot.lane.b32.xlu0 %v6282, 32
      %v6731 = vpop.permute.xlu0 %6730
      %6732 = vrot.lane.b32.xlu0 %v6284, 32
      %v6733 = vpop.permute.xlu0 %6732
      %6734 = vrot.lane.b32.xlu0 %v6287, 32
      %v6735 = vpop.permute.xlu0 %6734
      %6736 = vrot.lane.b32.xlu0 %v6289, 32
      %v6737 = vpop.permute.xlu0 %6736
      %6738 = vrot.lane.b32.xlu0 %v6292, 32
      %v6739 = vpop.permute.xlu0 %6738
      %6740 = vrot.lane.b32.xlu0 %v6294, 32
      %v6741 = vpop.permute.xlu0 %6740
      %6742 = vrot.lane.b32.xlu0 %v6297, 32
      %v6743 = vpop.permute.xlu0 %6742
      %6744 = vrot.lane.b32.xlu0 %v6299, 32
      %v6745 = vpop.permute.xlu0 %6744
      %6746 = vrot.lane.b32.xlu0 %v6302, 32
      %v6747 = vpop.permute.xlu0 %6746
      %6748 = vrot.lane.b32.xlu0 %v6304, 32
      %v6749 = vpop.permute.xlu0 %6748
      %6750 = vrot.lane.b32.xlu0 %v6307, 32
      %v6751 = vpop.permute.xlu0 %6750
      %6752 = vrot.lane.b32.xlu0 %v6309, 32
      %v6753 = vpop.permute.xlu0 %6752
      %6754 = vrot.lane.b32.xlu0 %v6312, 32
      %v6755 = vpop.permute.xlu0 %6754
      %6756 = vrot.lane.b32.xlu0 %v6314, 32
      %v6757 = vpop.permute.xlu0 %6756
      %6758 = vrot.lane.b32.xlu0 %v6317, 32
      %v6759 = vpop.permute.xlu0 %6758
      %6760 = vrot.lane.b32.xlu0 %v6319, 32
      %v6761 = vpop.permute.xlu0 %6760
      %6762 = vrot.lane.b32.xlu0 %v6322, 32
      %v6763 = vpop.permute.xlu0 %6762
      %6764 = vrot.lane.b32.xlu0 %v6324, 32
      %v6765 = vpop.permute.xlu0 %6764
      %6766 = vrot.lane.b32.xlu0 %v6327, 32
      %v6767 = vpop.permute.xlu0 %6766
      %6768 = vrot.lane.b32.xlu0 %v6329, 32
      %v6769 = vpop.permute.xlu0 %6768
      %6770 = vrot.lane.b32.xlu0 %v6332, 32
      %v6771 = vpop.permute.xlu0 %6770
      %6772 = vrot.lane.b32.xlu0 %v6334, 32
      %v6773 = vpop.permute.xlu0 %6772
      %6774 = vrot.lane.b32.xlu0 %v6337, 32
      %v6775 = vpop.permute.xlu0 %6774
      %6776 = vrot.lane.b32.xlu0 %v6339, 32
      %v6777 = vpop.permute.xlu0 %6776
      %6778 = vrot.lane.b32.xlu0 %v6342, 32
      %v6779 = vpop.permute.xlu0 %6778
      %6780 = vrot.lane.b32.xlu0 %v6344, 32
      %v6781 = vpop.permute.xlu0 %6780
      %6782 = vrot.lane.b32.xlu0 %v6347, 32
      %v6783 = vpop.permute.xlu0 %6782
      %6784 = vrot.lane.b32.xlu0 %v6349, 32
      %v6785 = vpop.permute.xlu0 %6784
      %6786 = vrot.lane.b32.xlu0 %v6723, 32
      %v6787 = vpop.permute.xlu0 %6786
      %6788 = vrot.lane.b32.xlu0 %v6725, 32
      %v6789 = vpop.permute.xlu0 %6788
      %v6822 = vrot.slane %v6216, 2
      %v6823 = vrot.slane %v6217, 2
      %v6824 = vsel %vm668, %v6822, %v6823
      %v6825 = vrot.slane %v6218, 2
      %v6826 = vsel %vm668, %v6823, %v6825
      %6827 = vrot.lane.b32.xlu0 %v6453, 40
      %v6828 = vpop.permute.xlu0 %6827
      %6829 = vrot.lane.b32.xlu0 %v6455, 40
      %v6830 = vpop.permute.xlu0 %6829
      %6831 = vrot.lane.b32.xlu0 %v6458, 40
      %v6832 = vpop.permute.xlu0 %6831
      %6833 = vrot.lane.b32.xlu0 %v6460, 40
      %v6834 = vpop.permute.xlu0 %6833
      %6835 = vrot.lane.b32.xlu0 %v6463, 40
      %v6836 = vpop.permute.xlu0 %6835
      %6837 = vrot.lane.b32.xlu0 %v6465, 40
      %v6838 = vpop.permute.xlu0 %6837
      %6839 = vrot.lane.b32.xlu0 %v6468, 40
      %v6840 = vpop.permute.xlu0 %6839
      %6841 = vrot.lane.b32.xlu0 %v6470, 40
      %v6842 = vpop.permute.xlu0 %6841
      %6843 = vrot.lane.b32.xlu0 %v6473, 40
      %v6844 = vpop.permute.xlu0 %6843
      %6845 = vrot.lane.b32.xlu0 %v6475, 40
      %v6846 = vpop.permute.xlu0 %6845
      %6847 = vrot.lane.b32.xlu0 %v6478, 40
      %v6848 = vpop.permute.xlu0 %6847
      %6849 = vrot.lane.b32.xlu0 %v6480, 40
      %v6850 = vpop.permute.xlu0 %6849
      %6851 = vrot.lane.b32.xlu0 %v6483, 40
      %v6852 = vpop.permute.xlu0 %6851
      %6853 = vrot.lane.b32.xlu0 %v6485, 40
      %v6854 = vpop.permute.xlu0 %6853
      %6855 = vrot.lane.b32.xlu0 %v6488, 40
      %v6856 = vpop.permute.xlu0 %6855
      %6857 = vrot.lane.b32.xlu0 %v6490, 40
      %v6858 = vpop.permute.xlu0 %6857
      %6859 = vrot.lane.b32.xlu0 %v6493, 40
      %v6860 = vpop.permute.xlu0 %6859
      %6861 = vrot.lane.b32.xlu0 %v6495, 40
      %v6862 = vpop.permute.xlu0 %6861
      %6863 = vrot.lane.b32.xlu0 %v6498, 40
      %v6864 = vpop.permute.xlu0 %6863
      %6865 = vrot.lane.b32.xlu0 %v6500, 40
      %v6866 = vpop.permute.xlu0 %6865
      %6867 = vrot.lane.b32.xlu0 %v6503, 40
      %v6868 = vpop.permute.xlu0 %6867
      %6869 = vrot.lane.b32.xlu0 %v6505, 40
      %v6870 = vpop.permute.xlu0 %6869
      %6871 = vrot.lane.b32.xlu0 %v6508, 40
      %v6872 = vpop.permute.xlu0 %6871
      %6873 = vrot.lane.b32.xlu0 %v6510, 40
      %v6874 = vpop.permute.xlu0 %6873
      %6875 = vrot.lane.b32.xlu0 %v6513, 40
      %v6876 = vpop.permute.xlu0 %6875
      %6877 = vrot.lane.b32.xlu0 %v6515, 40
      %v6878 = vpop.permute.xlu0 %6877
      %6879 = vrot.lane.b32.xlu0 %v6518, 40
      %v6880 = vpop.permute.xlu0 %6879
      %6881 = vrot.lane.b32.xlu0 %v6520, 40
      %v6882 = vpop.permute.xlu0 %6881
      %6883 = vrot.lane.b32.xlu0 %v6523, 40
      %v6884 = vpop.permute.xlu0 %6883
      %6885 = vrot.lane.b32.xlu0 %v6525, 40
      %v6886 = vpop.permute.xlu0 %6885
      %6887 = vrot.lane.b32.xlu0 %v6824, 40
      %v6888 = vpop.permute.xlu0 %6887
      %6889 = vrot.lane.b32.xlu0 %v6826, 40
      %v6890 = vpop.permute.xlu0 %6889
      %6925 = vrot.lane.b32.xlu0 %v6174, 48
      %v6926 = vpop.permute.xlu0 %6925
      %6927 = vrot.lane.b32.xlu0 %v6175, 48
      %v6928 = vpop.permute.xlu0 %6927
      %6929 = vrot.lane.b32.xlu0 %v6177, 48
      %v6930 = vpop.permute.xlu0 %6929
      %6931 = vrot.lane.b32.xlu0 %v6178, 48
      %v6932 = vpop.permute.xlu0 %6931
      %6933 = vrot.lane.b32.xlu0 %v6180, 48
      %v6934 = vpop.permute.xlu0 %6933
      %6935 = vrot.lane.b32.xlu0 %v6181, 48
      %v6936 = vpop.permute.xlu0 %6935
      %6937 = vrot.lane.b32.xlu0 %v6183, 48
      %v6938 = vpop.permute.xlu0 %6937
      %6939 = vrot.lane.b32.xlu0 %v6184, 48
      %v6940 = vpop.permute.xlu0 %6939
      %6941 = vrot.lane.b32.xlu0 %v6186, 48
      %v6942 = vpop.permute.xlu0 %6941
      %6943 = vrot.lane.b32.xlu0 %v6187, 48
      %v6944 = vpop.permute.xlu0 %6943
      %6945 = vrot.lane.b32.xlu0 %v6189, 48
      %v6946 = vpop.permute.xlu0 %6945
      %6947 = vrot.lane.b32.xlu0 %v6190, 48
      %v6948 = vpop.permute.xlu0 %6947
      %6949 = vrot.lane.b32.xlu0 %v6192, 48
      %v6950 = vpop.permute.xlu0 %6949
      %6951 = vrot.lane.b32.xlu0 %v6193, 48
      %v6952 = vpop.permute.xlu0 %6951
      %6953 = vrot.lane.b32.xlu0 %v6195, 48
      %v6954 = vpop.permute.xlu0 %6953
      %6955 = vrot.lane.b32.xlu0 %v6196, 48
      %v6956 = vpop.permute.xlu0 %6955
      %6957 = vrot.lane.b32.xlu0 %v6198, 48
      %v6958 = vpop.permute.xlu0 %6957
      %6959 = vrot.lane.b32.xlu0 %v6199, 48
      %v6960 = vpop.permute.xlu0 %6959
      %6961 = vrot.lane.b32.xlu0 %v6201, 48
      %v6962 = vpop.permute.xlu0 %6961
      %6963 = vrot.lane.b32.xlu0 %v6202, 48
      %v6964 = vpop.permute.xlu0 %6963
      %6965 = vrot.lane.b32.xlu0 %v6204, 48
      %v6966 = vpop.permute.xlu0 %6965
      %6967 = vrot.lane.b32.xlu0 %v6205, 48
      %v6968 = vpop.permute.xlu0 %6967
      %6969 = vrot.lane.b32.xlu0 %v6207, 48
      %v6970 = vpop.permute.xlu0 %6969
      %6971 = vrot.lane.b32.xlu0 %v6208, 48
      %v6972 = vpop.permute.xlu0 %6971
      %6973 = vrot.lane.b32.xlu0 %v6210, 48
      %v6974 = vpop.permute.xlu0 %6973
      %6975 = vrot.lane.b32.xlu0 %v6211, 48
      %v6976 = vpop.permute.xlu0 %6975
      %6977 = vrot.lane.b32.xlu0 %v6213, 48
      %v6978 = vpop.permute.xlu0 %6977
      %6979 = vrot.lane.b32.xlu0 %v6214, 48
      %v6980 = vpop.permute.xlu0 %6979
      %6981 = vrot.lane.b32.xlu0 %v6216, 48
      %v6982 = vpop.permute.xlu0 %6981
      %6983 = vrot.lane.b32.xlu0 %v6217, 48
      %v6984 = vpop.permute.xlu0 %6983
      %6985 = vrot.lane.b32.xlu0 %v6219, 48
      %v6986 = vpop.permute.xlu0 %6985
      %6987 = vrot.lane.b32.xlu0 %v6220, 48
      %v6988 = vpop.permute.xlu0 %6987
      %v7022 = vrot.slane %v6219, 1
      %v7023 = vrot.slane %v6220, 1
      %v7024 = vsel %vm491, %v7022, %v7023
      %v7025 = vrot.slane %v6221, 1
      %v7026 = vsel %vm491, %v7023, %v7025
      %7027 = vrot.lane.b32.xlu0 %v6282, 56
      %v7028 = vpop.permute.xlu0 %7027
      %7029 = vrot.lane.b32.xlu0 %v6284, 56
      %v7030 = vpop.permute.xlu0 %7029
      %7031 = vrot.lane.b32.xlu0 %v6287, 56
      %v7032 = vpop.permute.xlu0 %7031
      %7033 = vrot.lane.b32.xlu0 %v6289, 56
      %v7034 = vpop.permute.xlu0 %7033
      %7035 = vrot.lane.b32.xlu0 %v6292, 56
      %v7036 = vpop.permute.xlu0 %7035
      %7037 = vrot.lane.b32.xlu0 %v6294, 56
      %v7038 = vpop.permute.xlu0 %7037
      %7039 = vrot.lane.b32.xlu0 %v6297, 56
      %v7040 = vpop.permute.xlu0 %7039
      %7041 = vrot.lane.b32.xlu0 %v6299, 56
      %v7042 = vpop.permute.xlu0 %7041
      %7043 = vrot.lane.b32.xlu0 %v6302, 56
      %v7044 = vpop.permute.xlu0 %7043
      %7045 = vrot.lane.b32.xlu0 %v6304, 56
      %v7046 = vpop.permute.xlu0 %7045
      %7047 = vrot.lane.b32.xlu0 %v6307, 56
      %v7048 = vpop.permute.xlu0 %7047
      %7049 = vrot.lane.b32.xlu0 %v6309, 56
      %v7050 = vpop.permute.xlu0 %7049
      %7051 = vrot.lane.b32.xlu0 %v6312, 56
      %v7052 = vpop.permute.xlu0 %7051
      %7053 = vrot.lane.b32.xlu0 %v6314, 56
      %v7054 = vpop.permute.xlu0 %7053
      %7055 = vrot.lane.b32.xlu0 %v6317, 56
      %v7056 = vpop.permute.xlu0 %7055
      %7057 = vrot.lane.b32.xlu0 %v6319, 56
      %v7058 = vpop.permute.xlu0 %7057
      %7059 = vrot.lane.b32.xlu0 %v6322, 56
      %v7060 = vpop.permute.xlu0 %7059
      %7061 = vrot.lane.b32.xlu0 %v6324, 56
      %v7062 = vpop.permute.xlu0 %7061
      %7063 = vrot.lane.b32.xlu0 %v6327, 56
      %v7064 = vpop.permute.xlu0 %7063
      %7065 = vrot.lane.b32.xlu0 %v6329, 56
      %v7066 = vpop.permute.xlu0 %7065
      %7067 = vrot.lane.b32.xlu0 %v6332, 56
      %v7068 = vpop.permute.xlu0 %7067
      %7069 = vrot.lane.b32.xlu0 %v6334, 56
      %v7070 = vpop.permute.xlu0 %7069
      %7071 = vrot.lane.b32.xlu0 %v6337, 56
      %v7072 = vpop.permute.xlu0 %7071
      %7073 = vrot.lane.b32.xlu0 %v6339, 56
      %v7074 = vpop.permute.xlu0 %7073
      %7075 = vrot.lane.b32.xlu0 %v6342, 56
      %v7076 = vpop.permute.xlu0 %7075
      %7077 = vrot.lane.b32.xlu0 %v6344, 56
      %v7078 = vpop.permute.xlu0 %7077
      %7079 = vrot.lane.b32.xlu0 %v6347, 56
      %v7080 = vpop.permute.xlu0 %7079
      %7081 = vrot.lane.b32.xlu0 %v6349, 56
      %v7082 = vpop.permute.xlu0 %7081
      %7083 = vrot.lane.b32.xlu0 %v6723, 56
      %v7084 = vpop.permute.xlu0 %7083
      %7085 = vrot.lane.b32.xlu0 %v6725, 56
      %v7086 = vpop.permute.xlu0 %7085
      %7087 = vrot.lane.b32.xlu0 %v7024, 56
      %v7088 = vpop.permute.xlu0 %7087
      %7089 = vrot.lane.b32.xlu0 %v7026, 56
      %v7090 = vpop.permute.xlu0 %7089
      %v7123 = vrot.slane %v6219, 2
      %v7124 = vrot.slane %v6220, 2
      %v7125 = vsel %vm668, %v7123, %v7124
      %v7126 = vrot.slane %v6221, 2
      %v7127 = vsel %vm668, %v7124, %v7126
      %7128 = vrot.lane.b32.xlu0 %v6458, 64
      %v7129 = vpop.permute.xlu0 %7128
      %7130 = vrot.lane.b32.xlu0 %v6460, 64
      %v7131 = vpop.permute.xlu0 %7130
      %7132 = vrot.lane.b32.xlu0 %v6463, 64
      %v7133 = vpop.permute.xlu0 %7132
      %7134 = vrot.lane.b32.xlu0 %v6465, 64
      %v7135 = vpop.permute.xlu0 %7134
      %7136 = vrot.lane.b32.xlu0 %v6468, 64
      %v7137 = vpop.permute.xlu0 %7136
      %7138 = vrot.lane.b32.xlu0 %v6470, 64
      %v7139 = vpop.permute.xlu0 %7138
      %7140 = vrot.lane.b32.xlu0 %v6473, 64
      %v7141 = vpop.permute.xlu0 %7140
      %7142 = vrot.lane.b32.xlu0 %v6475, 64
      %v7143 = vpop.permute.xlu0 %7142
      %7144 = vrot.lane.b32.xlu0 %v6478, 64
      %v7145 = vpop.permute.xlu0 %7144
      %7146 = vrot.lane.b32.xlu0 %v6480, 64
      %v7147 = vpop.permute.xlu0 %7146
      %7148 = vrot.lane.b32.xlu0 %v6483, 64
      %v7149 = vpop.permute.xlu0 %7148
      %7150 = vrot.lane.b32.xlu0 %v6485, 64
      %v7151 = vpop.permute.xlu0 %7150
      %7152 = vrot.lane.b32.xlu0 %v6488, 64
      %v7153 = vpop.permute.xlu0 %7152
      %7154 = vrot.lane.b32.xlu0 %v6490, 64
      %v7155 = vpop.permute.xlu0 %7154
      %7156 = vrot.lane.b32.xlu0 %v6493, 64
      %v7157 = vpop.permute.xlu0 %7156
      %7158 = vrot.lane.b32.xlu0 %v6495, 64
      %v7159 = vpop.permute.xlu0 %7158
      %7160 = vrot.lane.b32.xlu0 %v6498, 64
      %v7161 = vpop.permute.xlu0 %7160
      %7162 = vrot.lane.b32.xlu0 %v6500, 64
      %v7163 = vpop.permute.xlu0 %7162
      %7164 = vrot.lane.b32.xlu0 %v6503, 64
      %v7165 = vpop.permute.xlu0 %7164
      %7166 = vrot.lane.b32.xlu0 %v6505, 64
      %v7167 = vpop.permute.xlu0 %7166
      %7168 = vrot.lane.b32.xlu0 %v6508, 64
      %v7169 = vpop.permute.xlu0 %7168
      %7170 = vrot.lane.b32.xlu0 %v6510, 64
      %v7171 = vpop.permute.xlu0 %7170
      %7172 = vrot.lane.b32.xlu0 %v6513, 64
      %v7173 = vpop.permute.xlu0 %7172
      %7174 = vrot.lane.b32.xlu0 %v6515, 64
      %v7175 = vpop.permute.xlu0 %7174
      %7176 = vrot.lane.b32.xlu0 %v6518, 64
      %v7177 = vpop.permute.xlu0 %7176
      %7178 = vrot.lane.b32.xlu0 %v6520, 64
      %v7179 = vpop.permute.xlu0 %7178
      %7180 = vrot.lane.b32.xlu0 %v6523, 64
      %v7181 = vpop.permute.xlu0 %7180
      %7182 = vrot.lane.b32.xlu0 %v6525, 64
      %v7183 = vpop.permute.xlu0 %7182
      %7184 = vrot.lane.b32.xlu0 %v6824, 64
      %v7185 = vpop.permute.xlu0 %7184
      %7186 = vrot.lane.b32.xlu0 %v6826, 64
      %v7187 = vpop.permute.xlu0 %7186
      %7188 = vrot.lane.b32.xlu0 %v7125, 64
      %v7189 = vpop.permute.xlu0 %7188
      %7190 = vrot.lane.b32.xlu0 %v7127, 64
      %v7191 = vpop.permute.xlu0 %7190
      %v7224 = vsel %vm333, %v6168, %v6351
      %v7225 = vsel %vm333, %v6169, %v6353
      %v7226 = vsel %vm333, %v6171, %v6355
      %v7227 = vsel %vm333, %v6172, %v6357
      %v7228 = vsel %vm333, %v6174, %v6359
      %v7229 = vsel %vm333, %v6175, %v6361
      %v7230 = vsel %vm333, %v6177, %v6363
      %v7231 = vsel %vm333, %v6178, %v6365
      %v7232 = vsel %vm333, %v6180, %v6367
      %v7233 = vsel %vm333, %v6181, %v6369
      %v7234 = vsel %vm333, %v6183, %v6371
      %v7235 = vsel %vm333, %v6184, %v6373
      %v7236 = vsel %vm333, %v6186, %v6375
      %v7237 = vsel %vm333, %v6187, %v6377
      %v7238 = vsel %vm333, %v6189, %v6379
      %v7239 = vsel %vm333, %v6190, %v6381
      %v7240 = vsel %vm333, %v6192, %v6383
      %v7241 = vsel %vm333, %v6193, %v6385
      %v7242 = vsel %vm333, %v6195, %v6387
      %v7243 = vsel %vm333, %v6196, %v6389
      %v7244 = vsel %vm333, %v6198, %v6391
      %v7245 = vsel %vm333, %v6199, %v6393
      %v7246 = vsel %vm333, %v6201, %v6395
      %v7247 = vsel %vm333, %v6202, %v6397
      %v7248 = vsel %vm333, %v6204, %v6399
      %v7249 = vsel %vm333, %v6205, %v6401
      %v7250 = vsel %vm333, %v6207, %v6403
      %v7251 = vsel %vm333, %v6208, %v6405
      %v7252 = vsel %vm333, %v6210, %v6407
      %v7253 = vsel %vm333, %v6211, %v6409
      %v7254 = vsel %vm333, %v6213, %v6411
      %v7255 = vsel %vm333, %v6214, %v6413
      %v7256 = vsel %vm1545, %v7224, %v6527
      %v7257 = vsel %vm1545, %v7225, %v6529
      %v7258 = vsel %vm1545, %v7226, %v6531
      %v7259 = vsel %vm1545, %v7227, %v6533
      %v7260 = vsel %vm1545, %v7228, %v6535
      %v7261 = vsel %vm1545, %v7229, %v6537
      %v7262 = vsel %vm1545, %v7230, %v6539
      %v7263 = vsel %vm1545, %v7231, %v6541
      %v7264 = vsel %vm1545, %v7232, %v6543
      %v7265 = vsel %vm1545, %v7233, %v6545
      %v7266 = vsel %vm1545, %v7234, %v6547
      %v7267 = vsel %vm1545, %v7235, %v6549
      %v7268 = vsel %vm1545, %v7236, %v6551
      %v7269 = vsel %vm1545, %v7237, %v6553
      %v7270 = vsel %vm1545, %v7238, %v6555
      %v7271 = vsel %vm1545, %v7239, %v6557
      %v7272 = vsel %vm1545, %v7240, %v6559
      %v7273 = vsel %vm1545, %v7241, %v6561
      %v7274 = vsel %vm1545, %v7242, %v6563
      %v7275 = vsel %vm1545, %v7243, %v6565
      %v7276 = vsel %vm1545, %v7244, %v6567
      %v7277 = vsel %vm1545, %v7245, %v6569
      %v7278 = vsel %vm1545, %v7246, %v6571
      %v7279 = vsel %vm1545, %v7247, %v6573
      %v7280 = vsel %vm1545, %v7248, %v6575
      %v7281 = vsel %vm1545, %v7249, %v6577
      %v7282 = vsel %vm1545, %v7250, %v6579
      %v7283 = vsel %vm1545, %v7251, %v6581
      %v7284 = vsel %vm1545, %v7252, %v6583
      %v7285 = vsel %vm1545, %v7253, %v6585
      %v7286 = vsel %vm1545, %v7254, %v6587
      %v7287 = vsel %vm1545, %v7255, %v6589
      %v7288 = vsel %vm1611, %v7256, %v6625
      %v7289 = vsel %vm1611, %v7257, %v6627
      %v7290 = vsel %vm1611, %v7258, %v6629
      %v7291 = vsel %vm1611, %v7259, %v6631
      %v7292 = vsel %vm1611, %v7260, %v6633
      %v7293 = vsel %vm1611, %v7261, %v6635
      %v7294 = vsel %vm1611, %v7262, %v6637
      %v7295 = vsel %vm1611, %v7263, %v6639
      %v7296 = vsel %vm1611, %v7264, %v6641
      %v7297 = vsel %vm1611, %v7265, %v6643
      %v7298 = vsel %vm1611, %v7266, %v6645
      %v7299 = vsel %vm1611, %v7267, %v6647
      %v7300 = vsel %vm1611, %v7268, %v6649
      %v7301 = vsel %vm1611, %v7269, %v6651
      %v7302 = vsel %vm1611, %v7270, %v6653
      %v7303 = vsel %vm1611, %v7271, %v6655
      %v7304 = vsel %vm1611, %v7272, %v6657
      %v7305 = vsel %vm1611, %v7273, %v6659
      %v7306 = vsel %vm1611, %v7274, %v6661
      %v7307 = vsel %vm1611, %v7275, %v6663
      %v7308 = vsel %vm1611, %v7276, %v6665
      %v7309 = vsel %vm1611, %v7277, %v6667
      %v7310 = vsel %vm1611, %v7278, %v6669
      %v7311 = vsel %vm1611, %v7279, %v6671
      %v7312 = vsel %vm1611, %v7280, %v6673
      %v7313 = vsel %vm1611, %v7281, %v6675
      %v7314 = vsel %vm1611, %v7282, %v6677
      %v7315 = vsel %vm1611, %v7283, %v6679
      %v7316 = vsel %vm1611, %v7284, %v6681
      %v7317 = vsel %vm1611, %v7285, %v6683
      %v7318 = vsel %vm1611, %v7286, %v6685
      %v7319 = vsel %vm1611, %v7287, %v6687
      %v7320 = vsel %vm1677, %v7288, %v6727
      %v7321 = vsel %vm1677, %v7289, %v6729
      %v7322 = vsel %vm1677, %v7290, %v6731
      %v7323 = vsel %vm1677, %v7291, %v6733
      %v7324 = vsel %vm1677, %v7292, %v6735
      %v7325 = vsel %vm1677, %v7293, %v6737
      %v7326 = vsel %vm1677, %v7294, %v6739
      %v7327 = vsel %vm1677, %v7295, %v6741
      %v7328 = vsel %vm1677, %v7296, %v6743
      %v7329 = vsel %vm1677, %v7297, %v6745
      %v7330 = vsel %vm1677, %v7298, %v6747
      %v7331 = vsel %vm1677, %v7299, %v6749
      %v7332 = vsel %vm1677, %v7300, %v6751
      %v7333 = vsel %vm1677, %v7301, %v6753
      %v7334 = vsel %vm1677, %v7302, %v6755
      %v7335 = vsel %vm1677, %v7303, %v6757
      %v7336 = vsel %vm1677, %v7304, %v6759
      %v7337 = vsel %vm1677, %v7305, %v6761
      %v7338 = vsel %vm1677, %v7306, %v6763
      %v7339 = vsel %vm1677, %v7307, %v6765
      %v7340 = vsel %vm1677, %v7308, %v6767
      %v7341 = vsel %vm1677, %v7309, %v6769
      %v7342 = vsel %vm1677, %v7310, %v6771
      %v7343 = vsel %vm1677, %v7311, %v6773
      %v7344 = vsel %vm1677, %v7312, %v6775
      %v7345 = vsel %vm1677, %v7313, %v6777
      %v7346 = vsel %vm1677, %v7314, %v6779
      %v7347 = vsel %vm1677, %v7315, %v6781
      %v7348 = vsel %vm1677, %v7316, %v6783
      %v7349 = vsel %vm1677, %v7317, %v6785
      %v7350 = vsel %vm1677, %v7318, %v6787
      %v7351 = vsel %vm1677, %v7319, %v6789
      %v7352 = vsel %vm3505, %v7320, %v6828
      %v7353 = vsel %vm3505, %v7321, %v6830
      %v7354 = vsel %vm3505, %v7322, %v6832
      %v7355 = vsel %vm3505, %v7323, %v6834
      %v7356 = vsel %vm3505, %v7324, %v6836
      %v7357 = vsel %vm3505, %v7325, %v6838
      %v7358 = vsel %vm3505, %v7326, %v6840
      %v7359 = vsel %vm3505, %v7327, %v6842
      %v7360 = vsel %vm3505, %v7328, %v6844
      %v7361 = vsel %vm3505, %v7329, %v6846
      %v7362 = vsel %vm3505, %v7330, %v6848
      %v7363 = vsel %vm3505, %v7331, %v6850
      %v7364 = vsel %vm3505, %v7332, %v6852
      %v7365 = vsel %vm3505, %v7333, %v6854
      %v7366 = vsel %vm3505, %v7334, %v6856
      %v7367 = vsel %vm3505, %v7335, %v6858
      %v7368 = vsel %vm3505, %v7336, %v6860
      %v7369 = vsel %vm3505, %v7337, %v6862
      %v7370 = vsel %vm3505, %v7338, %v6864
      %v7371 = vsel %vm3505, %v7339, %v6866
      %v7372 = vsel %vm3505, %v7340, %v6868
      %v7373 = vsel %vm3505, %v7341, %v6870
      %v7374 = vsel %vm3505, %v7342, %v6872
      %v7375 = vsel %vm3505, %v7343, %v6874
      %v7376 = vsel %vm3505, %v7344, %v6876
      %v7377 = vsel %vm3505, %v7345, %v6878
      %v7378 = vsel %vm3505, %v7346, %v6880
      %v7379 = vsel %vm3505, %v7347, %v6882
      %v7380 = vsel %vm3505, %v7348, %v6884
      %v7381 = vsel %vm3505, %v7349, %v6886
      %v7382 = vsel %vm3505, %v7350, %v6888
      %v7383 = vsel %vm3505, %v7351, %v6890
      %v7384 = vsel %vm3538, %v7352, %v6926
      %v7385 = vsel %vm3538, %v7353, %v6928
      %v7386 = vsel %vm3538, %v7354, %v6930
      %v7387 = vsel %vm3538, %v7355, %v6932
      %v7388 = vsel %vm3538, %v7356, %v6934
      %v7389 = vsel %vm3538, %v7357, %v6936
      %v7390 = vsel %vm3538, %v7358, %v6938
      %v7391 = vsel %vm3538, %v7359, %v6940
      %v7392 = vsel %vm3538, %v7360, %v6942
      %v7393 = vsel %vm3538, %v7361, %v6944
      %v7394 = vsel %vm3538, %v7362, %v6946
      %v7395 = vsel %vm3538, %v7363, %v6948
      %v7396 = vsel %vm3538, %v7364, %v6950
      %v7397 = vsel %vm3538, %v7365, %v6952
      %v7398 = vsel %vm3538, %v7366, %v6954
      %v7399 = vsel %vm3538, %v7367, %v6956
      %v7400 = vsel %vm3538, %v7368, %v6958
      %v7401 = vsel %vm3538, %v7369, %v6960
      %v7402 = vsel %vm3538, %v7370, %v6962
      %v7403 = vsel %vm3538, %v7371, %v6964
      %v7404 = vsel %vm3538, %v7372, %v6966
      %v7405 = vsel %vm3538, %v7373, %v6968
      %v7406 = vsel %vm3538, %v7374, %v6970
      %v7407 = vsel %vm3538, %v7375, %v6972
      %v7408 = vsel %vm3538, %v7376, %v6974
      %v7409 = vsel %vm3538, %v7377, %v6976
      %v7410 = vsel %vm3538, %v7378, %v6978
      %v7411 = vsel %vm3538, %v7379, %v6980
      %v7412 = vsel %vm3538, %v7380, %v6982
      %v7413 = vsel %vm3538, %v7381, %v6984
      %v7414 = vsel %vm3538, %v7382, %v6986
      %v7415 = vsel %vm3538, %v7383, %v6988
      %v7416 = vsel %vm3571, %v7384, %v7028
      %v7417 = vsel %vm3571, %v7385, %v7030
      %v7418 = vsel %vm3571, %v7386, %v7032
      %v7419 = vsel %vm3571, %v7387, %v7034
      %v7420 = vsel %vm3571, %v7388, %v7036
      %v7421 = vsel %vm3571, %v7389, %v7038
      %v7422 = vsel %vm3571, %v7390, %v7040
      %v7423 = vsel %vm3571, %v7391, %v7042
      %v7424 = vsel %vm3571, %v7392, %v7044
      %v7425 = vsel %vm3571, %v7393, %v7046
      %v7426 = vsel %vm3571, %v7394, %v7048
      %v7427 = vsel %vm3571, %v7395, %v7050
      %v7428 = vsel %vm3571, %v7396, %v7052
      %v7429 = vsel %vm3571, %v7397, %v7054
      %v7430 = vsel %vm3571, %v7398, %v7056
      %v7431 = vsel %vm3571, %v7399, %v7058
      %v7432 = vsel %vm3571, %v7400, %v7060
      %v7433 = vsel %vm3571, %v7401, %v7062
      %v7434 = vsel %vm3571, %v7402, %v7064
      %v7435 = vsel %vm3571, %v7403, %v7066
      %v7436 = vsel %vm3571, %v7404, %v7068
      %v7437 = vsel %vm3571, %v7405, %v7070
      %v7438 = vsel %vm3571, %v7406, %v7072
      %v7439 = vsel %vm3571, %v7407, %v7074
      %v7440 = vsel %vm3571, %v7408, %v7076
      %v7441 = vsel %vm3571, %v7409, %v7078
      %v7442 = vsel %vm3571, %v7410, %v7080
      %v7443 = vsel %vm3571, %v7411, %v7082
      %v7444 = vsel %vm3571, %v7412, %v7084
      %v7445 = vsel %vm3571, %v7413, %v7086
      %v7446 = vsel %vm3571, %v7414, %v7088
      %v7447 = vsel %vm3571, %v7415, %v7090
      %v7448 = vsel %vm3604, %v7416, %v7129
      %v7449 = vsel %vm3604, %v7417, %v7131
      %v7450 = vsel %vm3604, %v7418, %v7133
      %v7451 = vsel %vm3604, %v7419, %v7135
      %v7452 = vsel %vm3604, %v7420, %v7137
      %v7453 = vsel %vm3604, %v7421, %v7139
      %v7454 = vsel %vm3604, %v7422, %v7141
      %v7455 = vsel %vm3604, %v7423, %v7143
      %v7456 = vsel %vm3604, %v7424, %v7145
      %v7457 = vsel %vm3604, %v7425, %v7147
      %v7458 = vsel %vm3604, %v7426, %v7149
      %v7459 = vsel %vm3604, %v7427, %v7151
      %v7460 = vsel %vm3604, %v7428, %v7153
      %v7461 = vsel %vm3604, %v7429, %v7155
      %v7462 = vsel %vm3604, %v7430, %v7157
      %v7463 = vsel %vm3604, %v7431, %v7159
      %v7464 = vsel %vm3604, %v7432, %v7161
      %v7465 = vsel %vm3604, %v7433, %v7163
      %v7466 = vsel %vm3604, %v7434, %v7165
      %v7467 = vsel %vm3604, %v7435, %v7167
      %v7468 = vsel %vm3604, %v7436, %v7169
      %v7469 = vsel %vm3604, %v7437, %v7171
      %v7470 = vsel %vm3604, %v7438, %v7173
      %v7471 = vsel %vm3604, %v7439, %v7175
      %v7472 = vsel %vm3604, %v7440, %v7177
      %v7473 = vsel %vm3604, %v7441, %v7179
      %v7474 = vsel %vm3604, %v7442, %v7181
      %v7475 = vsel %vm3604, %v7443, %v7183
      %v7476 = vsel %vm3604, %v7444, %v7185
      %v7477 = vsel %vm3604, %v7445, %v7187
      %v7478 = vsel %vm3604, %v7446, %v7189
      %v7479 = vsel %vm3604, %v7447, %v7191
      %v7480 = vld [vmem:[%s7] sm:$0xff]
      %v7481 = vld [vmem:[%s7 + $0x8] sm:$0xff]
      %v7482 = vld [vmem:[%s7 + $0x10] sm:$0xff]
      %v7483 = vld [vmem:[%s7 + $0x18] sm:$0xff]
      %v7484 = vld [vmem:[%s7 + $0x20] sm:$0xff]
      %v7485 = vld [vmem:[%s7 + $0x28] sm:$0xff]
      %v7486 = vld [vmem:[%s7 + $0x30] sm:$0xff]
      %v7487 = vld [vmem:[%s7 + $0x38] sm:$0xff]
      %v7488 = vld [vmem:[%s7 + $0x40] sm:$0xff]
      %v7489 = vld [vmem:[%s8] sm:$0x1]
      %v7491 = vlaneseq
      %v7492 = vshrl.u32 %v7491, 7
      %v7493 = vsub.s32 0, %v7492
      %v7494 = vrot.slane %v7489, %v7493
      %v7497 = vsel %vm3653, %v7448, 0
      %v7500 = vsel %vm3653, %v7449, 0
      %v7503 = vsel %vm3653, %v7450, 0
      %v7506 = vsel %vm3653, %v7451, 0
      %v7509 = vsel %vm3653, %v7452, 0
      %v7512 = vsel %vm3653, %v7453, 0
      %v7515 = vsel %vm3653, %v7454, 0
      %v7518 = vsel %vm3653, %v7455, 0
      %v7521 = vsel %vm3653, %v7456, 0
      %v7524 = vsel %vm3653, %v7457, 0
      %v7527 = vsel %vm3653, %v7458, 0
      %v7530 = vsel %vm3653, %v7459, 0
      %v7533 = vsel %vm3653, %v7460, 0
      %v7536 = vsel %vm3653, %v7461, 0
      %v7539 = vsel %vm3653, %v7462, 0
      %v7542 = vsel %vm3653, %v7463, 0
      %v7545 = vsel %vm3653, %v7464, 0
      %v7548 = vsel %vm3653, %v7465, 0
      %v7551 = vsel %vm3653, %v7466, 0
      %v7554 = vsel %vm3653, %v7467, 0
      %v7557 = vsel %vm3653, %v7468, 0
      %v7560 = vsel %vm3653, %v7469, 0
      %v7563 = vsel %vm3653, %v7470, 0
      %v7566 = vsel %vm3653, %v7471, 0
      %v7569 = vsel %vm3653, %v7472, 0
      %v7572 = vsel %vm3653, %v7473, 0
      %v7575 = vsel %vm3653, %v7474, 0
      %v7578 = vsel %vm3653, %v7475, 0
      %v7581 = vsel %vm3653, %v7476, 0
      %v7584 = vsel %vm3653, %v7477, 0
      %v7587 = vsel %vm3653, %v7478, 0
      %v7590 = vsel %vm3653, %v7479, 0
      %7592 = vmatprep.subr.mxu0 0.0
      %7593 = vmatpush1.msra.mxu0 %v7480
      %7594 = vmatprep.subr.mxu0 0.0
      %7595 = vmatpush1.msra.mxu0 %v7481
      %7596 = vmatprep.subr.mxu0 0.0
      %7597 = vmatpush1.msra.mxu0 %v7482
      %7598 = vmatprep.subr.mxu0 0.0
      %7599 = vmatpush1.msra.mxu0 %v7483
      %7600 = vmatprep.subr.mxu0 0.0
      %7601 = vmatpush1.msra.mxu0 %v7484
      %7602 = vmatprep.subr.mxu0 0.0
      %7603 = vmatpush1.msra.mxu0 %v7485
      %7604 = vmatprep.subr.mxu0 0.0
      %7605 = vmatpush1.msra.mxu0 %v7486
      %7606 = vmatprep.subr.mxu0 0.0
      %7607 = vmatpush1.msra.mxu0 %v7487
      %7608 = vmatprep.subr.mxu0 0.0
      %7609 = vmatpush1.msra.mxu0 %v7488
      %7610 = vmatprep.subr.mxu0 0.0
      %7611 = vmatpush1.msra.mxu0 0.0
      %7612 = vmatprep.subr.mxu0 0.0
      %7613 = vmatpush1.msra.mxu0 0.0
      %7614 = vmatprep.subr.mxu0 0.0
      %7615 = vmatpush1.msra.mxu0 0.0
      %7616 = vmatprep.subr.mxu0 0.0
      %7617 = vmatpush1.msra.mxu0 0.0
      %7618 = vmatprep.subr.mxu0 0.0
      %7619 = vmatpush1.msra.mxu0 0.0
      %7620 = vmatprep.subr.mxu0 0.0
      %7621 = vmatpush1.msra.mxu0 0.0
      %7622 = vmatprep.subr.mxu0 0.0
      %7623 = vmatpush1.msra.mxu0 0.0
      %7624 = vmatprep.subr.mxu0 0.0
      %7625 = vmatpush1.msra.mxu0 0.0
      %7626 = vmatprep.subr.mxu0 0.0
      %7627 = vmatpush1.msra.mxu0 0.0
      %7628 = vmatprep.subr.mxu0 0.0
      %7629 = vmatpush1.msra.mxu0 0.0
      %7630 = vmatprep.subr.mxu0 0.0
      %7631 = vmatpush1.msra.mxu0 0.0
      %7632 = vmatprep.subr.mxu0 0.0
      %7633 = vmatpush1.msra.mxu0 0.0
      %7634 = vmatprep.subr.mxu0 0.0
      %7635 = vmatpush1.msra.mxu0 0.0
      %7636 = vmatprep.subr.mxu0 0.0
      %7637 = vmatpush1.msra.mxu0 0.0
      %7638 = vmatprep.subr.mxu0 0.0
      %7639 = vmatpush1.msra.mxu0 0.0
      %7640 = vmatprep.subr.mxu0 0.0
      %7641 = vmatpush1.msra.mxu0 0.0
      %7642 = vmatprep.subr.mxu0 0.0
      %7643 = vmatpush1.msra.mxu0 0.0
      %7644 = vmatprep.subr.mxu0 0.0
      %7645 = vmatpush1.msra.mxu0 0.0
      %7646 = vmatprep.subr.mxu0 0.0
      %7647 = vmatpush1.msra.mxu0 0.0
      %7648 = vmatprep.subr.mxu0 0.0
      %7649 = vmatpush1.msra.mxu0 0.0
      %7650 = vmatprep.subr.mxu0 0.0
      %7651 = vmatpush1.msra.mxu0 0.0
      %7652 = vmatprep.subr.mxu0 0.0
      %7653 = vmatpush1.msra.mxu0 0.0
      %7654 = vmatprep.subr.mxu0 0.0
      %7655 = vmatpush1.msra.mxu0 0.0
      %7656 = vmatprep.mubr.f32.mxu0 0.0
      %7657 = vmatmul.mubr.f32.gmra.mrb[0].mxu0 %v7497
      %v7658 = vpop.f32.mrb[0].mxu0
      %v7659 = vadd.f32 %v7494, %v7658
      %v7660 = vpop.f32.mrb[0].mxu0
      %7661 = vmatprep.mubr.f32.mxu0 0.0
      %7662 = vmatmul.mubr.f32.gmra.mrb[0].mxu0 %v7500
      %v7663 = vpop.f32.mrb[0].mxu0
      %v7664 = vadd.f32 %v7494, %v7663
      %v7665 = vpop.f32.mrb[0].mxu0
      %7666 = vmatprep.mubr.f32.mxu0 0.0
      %7667 = vmatmul.mubr.f32.gmra.mrb[0].mxu0 %v7503
      %v7668 = vpop.f32.mrb[0].mxu0
      %v7669 = vadd.f32 %v7494, %v7668
      %v7670 = vpop.f32.mrb[0].mxu0
      %7671 = vmatprep.mubr.f32.mxu0 0.0
      %7672 = vmatmul.mubr.f32.gmra.mrb[0].mxu0 %v7506
      %v7673 = vpop.f32.mrb[0].mxu0
      %v7674 = vadd.f32 %v7494, %v7673
      %v7675 = vpop.f32.mrb[0].mxu0
      %7676 = vmatprep.mubr.f32.mxu0 0.0
      %7677 = vmatmul.mubr.f32.gmra.mrb[0].mxu0 %v7509
      %v7678 = vpop.f32.mrb[0].mxu0
      %v7679 = vadd.f32 %v7494, %v7678
      %v7680 = vpop.f32.mrb[0].mxu0
      %7681 = vmatprep.mubr.f32.mxu0 0.0
      %7682 = vmatmul.mubr.f32.gmra.mrb[0].mxu0 %v7512
      %v7683 = vpop.f32.mrb[0].mxu0
      %v7684 = vadd.f32 %v7494, %v7683
      %v7685 = vpop.f32.mrb[0].mxu0
      %7686 = vmatprep.mubr.f32.mxu0 0.0
      %7687 = vmatmul.mubr.f32.gmra.mrb[0].mxu0 %v7515
      %v7688 = vpop.f32.mrb[0].mxu0
      %v7689 = vadd.f32 %v7494, %v7688
      %v7690 = vpop.f32.mrb[0].mxu0
      %7691 = vmatprep.mubr.f32.mxu0 0.0
      %7692 = vmatmul.mubr.f32.gmra.mrb[0].mxu0 %v7518
      %v7693 = vpop.f32.mrb[0].mxu0
      %v7694 = vadd.f32 %v7494, %v7693
      %v7695 = vpop.f32.mrb[0].mxu0
      %7696 = vmatprep.mubr.f32.mxu0 0.0
      %7697 = vmatmul.mubr.f32.gmra.mrb[0].mxu0 %v7521
      %v7698 = vpop.f32.mrb[0].mxu0
      %v7699 = vadd.f32 %v7494, %v7698
      %v7700 = vpop.f32.mrb[0].mxu0
      %7701 = vmatprep.mubr.f32.mxu0 0.0
      %7702 = vmatmul.mubr.f32.gmra.mrb[0].mxu0 %v7524
      %v7703 = vpop.f32.mrb[0].mxu0
      %v7704 = vadd.f32 %v7494, %v7703
      %v7705 = vpop.f32.mrb[0].mxu0
      %7706 = vmatprep.mubr.f32.mxu0 0.0
      %7707 = vmatmul.mubr.f32.gmra.mrb[0].mxu0 %v7527
      %v7708 = vpop.f32.mrb[0].mxu0
      %v7709 = vadd.f32 %v7494, %v7708
      %v7710 = vpop.f32.mrb[0].mxu0
      %7711 = vmatprep.mubr.f32.mxu0 0.0
      %7712 = vmatmul.mubr.f32.gmra.mrb[0].mxu0 %v7530
      %v7713 = vpop.f32.mrb[0].mxu0
      %v7714 = vadd.f32 %v7494, %v7713
      %v7715 = vpop.f32.mrb[0].mxu0
      %7716 = vmatprep.mubr.f32.mxu0 0.0
      %7717 = vmatmul.mubr.f32.gmra.mrb[0].mxu0 %v7533
      %v7718 = vpop.f32.mrb[0].mxu0
      %v7719 = vadd.f32 %v7494, %v7718
      %v7720 = vpop.f32.mrb[0].mxu0
      %7721 = vmatprep.mubr.f32.mxu0 0.0
      %7722 = vmatmul.mubr.f32.gmra.mrb[0].mxu0 %v7536
      %v7723 = vpop.f32.mrb[0].mxu0
      %v7724 = vadd.f32 %v7494, %v7723
      %v7725 = vpop.f32.mrb[0].mxu0
      %7726 = vmatprep.mubr.f32.mxu0 0.0
      %7727 = vmatmul.mubr.f32.gmra.mrb[0].mxu0 %v7539
      %v7728 = vpop.f32.mrb[0].mxu0
      %v7729 = vadd.f32 %v7494, %v7728
      %v7730 = vpop.f32.mrb[0].mxu0
      %7731 = vmatprep.mubr.f32.mxu0 0.0
      %7732 = vmatmul.mubr.f32.gmra.mrb[0].mxu0 %v7542
      %v7733 = vpop.f32.mrb[0].mxu0
      %v7734 = vadd.f32 %v7494, %v7733
      %v7735 = vpop.f32.mrb[0].mxu0
      %7736 = vmatprep.mubr.f32.mxu0 0.0
      %7737 = vmatmul.mubr.f32.gmra.mrb[0].mxu0 %v7545
      %v7738 = vpop.f32.mrb[0].mxu0
      %v7739 = vadd.f32 %v7494, %v7738
      %v7740 = vpop.f32.mrb[0].mxu0
      %7741 = vmatprep.mubr.f32.mxu0 0.0
      %7742 = vmatmul.mubr.f32.gmra.mrb[0].mxu0 %v7548
      %v7743 = vpop.f32.mrb[0].mxu0
      %v7744 = vadd.f32 %v7494, %v7743
      %v7745 = vpop.f32.mrb[0].mxu0
      %7746 = vmatprep.mubr.f32.mxu0 0.0
      %7747 = vmatmul.mubr.f32.gmra.mrb[0].mxu0 %v7551
      %v7748 = vpop.f32.mrb[0].mxu0
      %v7749 = vadd.f32 %v7494, %v7748
      %v7750 = vpop.f32.mrb[0].mxu0
      %7751 = vmatprep.mubr.f32.mxu0 0.0
      %7752 = vmatmul.mubr.f32.gmra.mrb[0].mxu0 %v7554
      %v7753 = vpop.f32.mrb[0].mxu0
      %v7754 = vadd.f32 %v7494, %v7753
      %v7755 = vpop.f32.mrb[0].mxu0
      %7756 = vmatprep.mubr.f32.mxu0 0.0
      %7757 = vmatmul.mubr.f32.gmra.mrb[0].mxu0 %v7557
      %v7758 = vpop.f32.mrb[0].mxu0
      %v7759 = vadd.f32 %v7494, %v7758
      %v7760 = vpop.f32.mrb[0].mxu0
      %7761 = vmatprep.mubr.f32.mxu0 0.0
      %7762 = vmatmul.mubr.f32.gmra.mrb[0].mxu0 %v7560
      %v7763 = vpop.f32.mrb[0].mxu0
      %v7764 = vadd.f32 %v7494, %v7763
      %v7765 = vpop.f32.mrb[0].mxu0
      %7766 = vmatprep.mubr.f32.mxu0 0.0
      %7767 = vmatmul.mubr.f32.gmra.mrb[0].mxu0 %v7563
      %v7768 = vpop.f32.mrb[0].mxu0
      %v7769 = vadd.f32 %v7494, %v7768
      %v7770 = vpop.f32.mrb[0].mxu0
      %7771 = vmatprep.mubr.f32.mxu0 0.0
      %7772 = vmatmul.mubr.f32.gmra.mrb[0].mxu0 %v7566
      %v7773 = vpop.f32.mrb[0].mxu0
      %v7774 = vadd.f32 %v7494, %v7773
      %v7775 = vpop.f32.mrb[0].mxu0
      %7776 = vmatprep.mubr.f32.mxu0 0.0
      %7777 = vmatmul.mubr.f32.gmra.mrb[0].mxu0 %v7569
      %v7778 = vpop.f32.mrb[0].mxu0
      %v7779 = vadd.f32 %v7494, %v7778
      %v7780 = vpop.f32.mrb[0].mxu0
      %7781 = vmatprep.mubr.f32.mxu0 0.0
      %7782 = vmatmul.mubr.f32.gmra.mrb[0].mxu0 %v7572
      %v7783 = vpop.f32.mrb[0].mxu0
      %v7784 = vadd.f32 %v7494, %v7783
      %v7785 = vpop.f32.mrb[0].mxu0
      %7786 = vmatprep.mubr.f32.mxu0 0.0
      %7787 = vmatmul.mubr.f32.gmra.mrb[0].mxu0 %v7575
      %v7788 = vpop.f32.mrb[0].mxu0
      %v7789 = vadd.f32 %v7494, %v7788
      %v7790 = vpop.f32.mrb[0].mxu0
      %7791 = vmatprep.mubr.f32.mxu0 0.0
      %7792 = vmatmul.mubr.f32.gmra.mrb[0].mxu0 %v7578
      %v7793 = vpop.f32.mrb[0].mxu0
      %v7794 = vadd.f32 %v7494, %v7793
      %v7795 = vpop.f32.mrb[0].mxu0
      %7796 = vmatprep.mubr.f32.mxu0 0.0
      %7797 = vmatmul.mubr.f32.gmra.mrb[0].mxu0 %v7581
      %v7798 = vpop.f32.mrb[0].mxu0
      %v7799 = vadd.f32 %v7494, %v7798
      %v7800 = vpop.f32.mrb[0].mxu0
      %7801 = vmatprep.mubr.f32.mxu0 0.0
      %7802 = vmatmul.mubr.f32.gmra.mrb[0].mxu0 %v7584
      %v7803 = vpop.f32.mrb[0].mxu0
      %v7804 = vadd.f32 %v7494, %v7803
      %v7805 = vpop.f32.mrb[0].mxu0
      %7806 = vmatprep.mubr.f32.mxu0 0.0
      %7807 = vmatmul.mubr.f32.gmra.mrb[0].mxu0 %v7587
      %v7808 = vpop.f32.mrb[0].mxu0
      %v7809 = vadd.f32 %v7494, %v7808
      %v7810 = vpop.f32.mrb[0].mxu0
      %7811 = vmatprep.mubr.f32.mxu0 0.0
      %7812 = vmatmul.mubr.f32.gmra.mrb[0].mxu0 %v7590
      %v7813 = vpop.f32.mrb[0].mxu0
      %v7814 = vadd.f32 %v7494, %v7813
      %v7815 = vpop.f32.mrb[0].mxu0
      %7816 = vdwg.mxu0
      %7849 = vrot.lane.b32.xlu0 %v1890, 120
      %v7850 = vpop.permute.xlu0 %7849
      %7851 = vrot.lane.b32.xlu0 %v1895, 120
      %v7852 = vpop.permute.xlu0 %7851
      %7853 = vrot.lane.b32.xlu0 %v1900, 120
      %v7854 = vpop.permute.xlu0 %7853
      %7855 = vrot.lane.b32.xlu0 %v1905, 120
      %v7856 = vpop.permute.xlu0 %7855
      %7857 = vrot.lane.b32.xlu0 %v1910, 120
      %v7858 = vpop.permute.xlu0 %7857
      %7859 = vrot.lane.b32.xlu0 %v1915, 120
      %v7860 = vpop.permute.xlu0 %7859
      %7861 = vrot.lane.b32.xlu0 %v1920, 120
      %v7862 = vpop.permute.xlu0 %7861
      %7863 = vrot.lane.b32.xlu0 %v1925, 120
      %v7864 = vpop.permute.xlu0 %7863
      %7865 = vrot.lane.b32.xlu0 %v1930, 120
      %v7866 = vpop.permute.xlu0 %7865
      %7867 = vrot.lane.b32.xlu0 %v1935, 120
      %v7868 = vpop.permute.xlu0 %7867
      %7869 = vrot.lane.b32.xlu0 %v1940, 120
      %v7870 = vpop.permute.xlu0 %7869
      %7871 = vrot.lane.b32.xlu0 %v1945, 120
      %v7872 = vpop.permute.xlu0 %7871
      %7873 = vrot.lane.b32.xlu0 %v1950, 120
      %v7874 = vpop.permute.xlu0 %7873
      %7875 = vrot.lane.b32.xlu0 %v1955, 120
      %v7876 = vpop.permute.xlu0 %7875
      %7877 = vrot.lane.b32.xlu0 %v1960, 120
      %v7878 = vpop.permute.xlu0 %7877
      %7879 = vrot.lane.b32.xlu0 %v1965, 120
      %v7880 = vpop.permute.xlu0 %7879
      %7881 = vrot.lane.b32.xlu0 %v1970, 120
      %v7882 = vpop.permute.xlu0 %7881
      %7883 = vrot.lane.b32.xlu0 %v1975, 120
      %v7884 = vpop.permute.xlu0 %7883
      %7885 = vrot.lane.b32.xlu0 %v1980, 120
      %v7886 = vpop.permute.xlu0 %7885
      %7887 = vrot.lane.b32.xlu0 %v1985, 120
      %v7888 = vpop.permute.xlu0 %7887
      %7889 = vrot.lane.b32.xlu0 %v1990, 120
      %v7890 = vpop.permute.xlu0 %7889
      %7891 = vrot.lane.b32.xlu0 %v1995, 120
      %v7892 = vpop.permute.xlu0 %7891
      %7893 = vrot.lane.b32.xlu0 %v2000, 120
      %v7894 = vpop.permute.xlu0 %7893
      %7895 = vrot.lane.b32.xlu0 %v2005, 120
      %v7896 = vpop.permute.xlu0 %7895
      %7897 = vrot.lane.b32.xlu0 %v2010, 120
      %v7898 = vpop.permute.xlu0 %7897
      %7899 = vrot.lane.b32.xlu0 %v2015, 120
      %v7900 = vpop.permute.xlu0 %7899
      %7901 = vrot.lane.b32.xlu0 %v2020, 120
      %v7902 = vpop.permute.xlu0 %7901
      %7903 = vrot.lane.b32.xlu0 %v2025, 120
      %v7904 = vpop.permute.xlu0 %7903
      %7905 = vrot.lane.b32.xlu0 %v2030, 120
      %v7906 = vpop.permute.xlu0 %7905
      %7907 = vrot.lane.b32.xlu0 %v2035, 120
      %v7908 = vpop.permute.xlu0 %7907
      %7909 = vrot.lane.b32.xlu0 %v2040, 120
      %v7910 = vpop.permute.xlu0 %7909
      %7911 = vrot.lane.b32.xlu0 %v2045, 120
      %v7912 = vpop.permute.xlu0 %7911
      %v7945 = vadd.f32 %v7659, %v7850
      %v7946 = vadd.f32 %v7664, %v7852
      %v7947 = vadd.f32 %v7669, %v7854
      %v7948 = vadd.f32 %v7674, %v7856
      %v7949 = vadd.f32 %v7679, %v7858
      %v7950 = vadd.f32 %v7684, %v7860
      %v7951 = vadd.f32 %v7689, %v7862
      %v7952 = vadd.f32 %v7694, %v7864
      %v7953 = vadd.f32 %v7699, %v7866
      %v7954 = vadd.f32 %v7704, %v7868
      %v7955 = vadd.f32 %v7709, %v7870
      %v7956 = vadd.f32 %v7714, %v7872
      %v7957 = vadd.f32 %v7719, %v7874
      %v7958 = vadd.f32 %v7724, %v7876
      %v7959 = vadd.f32 %v7729, %v7878
      %v7960 = vadd.f32 %v7734, %v7880
      %v7961 = vadd.f32 %v7739, %v7882
      %v7962 = vadd.f32 %v7744, %v7884
      %v7963 = vadd.f32 %v7749, %v7886
      %v7964 = vadd.f32 %v7754, %v7888
      %v7965 = vadd.f32 %v7759, %v7890
      %v7966 = vadd.f32 %v7764, %v7892
      %v7967 = vadd.f32 %v7769, %v7894
      %v7968 = vadd.f32 %v7774, %v7896
      %v7969 = vadd.f32 %v7779, %v7898
      %v7970 = vadd.f32 %v7784, %v7900
      %v7971 = vadd.f32 %v7789, %v7902
      %v7972 = vadd.f32 %v7794, %v7904
      %v7973 = vadd.f32 %v7799, %v7906
      %v7974 = vadd.f32 %v7804, %v7908
      %v7975 = vadd.f32 %v7809, %v7910
      %v7976 = vadd.f32 %v7814, %v7912
      %7977 = vst.msk [vmem:[%s332] sm:$0xff] %vm333, %v7945
      %7978 = vst.msk [vmem:[%s332 + $0x8] sm:$0xff] %vm333, %v7946
      %7979 = vst.msk [vmem:[%s332 + $0x10] sm:$0xff] %vm333, %v7947
      %7980 = vst.msk [vmem:[%s332 + $0x18] sm:$0xff] %vm333, %v7948
      %7981 = vst.msk [vmem:[%s332 + $0x20] sm:$0xff] %vm333, %v7949
      %7982 = vst.msk [vmem:[%s332 + $0x28] sm:$0xff] %vm333, %v7950
      %7983 = vst.msk [vmem:[%s332 + $0x30] sm:$0xff] %vm333, %v7951
      %7984 = vst.msk [vmem:[%s332 + $0x38] sm:$0xff] %vm333, %v7952
      %7985 = vst.msk [vmem:[%s332 + $0x40] sm:$0xff] %vm333, %v7953
      %7986 = vst.msk [vmem:[%s332 + $0x48] sm:$0xff] %vm333, %v7954
      %7987 = vst.msk [vmem:[%s332 + $0x50] sm:$0xff] %vm333, %v7955
      %7988 = vst.msk [vmem:[%s332 + $0x58] sm:$0xff] %vm333, %v7956
      %7989 = vst.msk [vmem:[%s332 + $0x60] sm:$0xff] %vm333, %v7957
      %7990 = vst.msk [vmem:[%s332 + $0x68] sm:$0xff] %vm333, %v7958
      %7991 = vst.msk [vmem:[%s332 + $0x70] sm:$0xff] %vm333, %v7959
      %7992 = vst.msk [vmem:[%s332 + $0x78] sm:$0xff] %vm333, %v7960
      %7993 = vst.msk [vmem:[%s332 + $0x80] sm:$0xff] %vm333, %v7961
      %7994 = vst.msk [vmem:[%s332 + $0x88] sm:$0xff] %vm333, %v7962
      %7995 = vst.msk [vmem:[%s332 + $0x90] sm:$0xff] %vm333, %v7963
      %7996 = vst.msk [vmem:[%s332 + $0x98] sm:$0xff] %vm333, %v7964
      %7997 = vst.msk [vmem:[%s332 + $0xa0] sm:$0xff] %vm333, %v7965
      %7998 = vst.msk [vmem:[%s332 + $0xa8] sm:$0xff] %vm333, %v7966
      %7999 = vst.msk [vmem:[%s332 + $0xb0] sm:$0xff] %vm333, %v7967
      %8000 = vst.msk [vmem:[%s332 + $0xb8] sm:$0xff] %vm333, %v7968
      %8001 = vst.msk [vmem:[%s332 + $0xc0] sm:$0xff] %vm333, %v7969
      %8002 = vst.msk [vmem:[%s332 + $0xc8] sm:$0xff] %vm333, %v7970
      %8003 = vst.msk [vmem:[%s332 + $0xd0] sm:$0xff] %vm333, %v7971
      %8004 = vst.msk [vmem:[%s332 + $0xd8] sm:$0xff] %vm333, %v7972
      %8005 = vst.msk [vmem:[%s332 + $0xe0] sm:$0xff] %vm333, %v7973
      %8006 = vst.msk [vmem:[%s332 + $0xe8] sm:$0xff] %vm333, %v7974
      %8007 = vst.msk [vmem:[%s332 + $0xf0] sm:$0xff] %vm333, %v7975
      %8008 = vst.msk [vmem:[%s332 + $0xf8] sm:$0xff] %vm333, %v7976
      %p8009 = scmp.lt.s32.totalorder %s20, 1
      %s8010 = scalar_select %p8009, %s20, 1
      %s8011 = smul.addr %s8010, 32
      %s8012 = smul.addr %s8011, 8
      %s8013 = scalar_lea.vmem %s9, %s8012
      // Predicated region
      $region57: #{tpu_custom_call.1} parent=55 // pred_check
        %p8014 = pneg %p232
      $region58: #{tpu_custom_call.1} parent=55 // pred_check_branch
        %8016 = sbr.rel (%p8014) target = $region60
      $region59: #{tpu_custom_call.1} parent=55 // pred_region
        _
      $region60: #{tpu_custom_call.1} parent=55 // pred_fallthru
        _
    $region56: #{tpu_custom_call.1} parent=5 // pred_fallthru
      _
    %p8017 = scmp.le.s32.totalorder 2, %s15
    // Predicated region
    $region61: #{tpu_custom_call.1} parent=5 // pred_check
      %p8018 = pneg %p8017
    $region62: #{tpu_custom_call.1} parent=5 // pred_check_branch
      %8020 = sbr.rel (%p8018) target = $region64
    $region63: #{tpu_custom_call.1} parent=5 // pred_region
      %s8021 = ssub.s32 %s15, 2
      // Predicated region
      $region65: #{tpu_custom_call.1} parent=63 // pred_check
        %p8022 = pneg %p238
      $region66: #{tpu_custom_call.1} parent=63 // pred_check_branch
        %8024 = sbr.rel (%p8022) target = $region68
      $region67: #{tpu_custom_call.1} parent=63 // pred_region
        %p8025 = scmp.lt.s32.totalorder %s21, 1
        %s8026 = scalar_select %p8025, %s21, 1
        %s8027 = smul.addr %s8026, 32
        %s8028 = smul.addr %s8027, 8
        %s8029 = scalar_lea.vmem %s9, %s8028
      $region68: #{tpu_custom_call.1} parent=63 // pred_fallthru
        _
    $region64: #{tpu_custom_call.1} parent=5 // pred_fallthru
      _
  $region6: #{tpu_custom_call.1} parent=0 // loop_footer
    %s19 = sadd.s32 1, %s15
  $region7: #{tpu_custom_call.1} parent=0 // loop_footer_branch
    %14 = sbr.rel target = $region3
  $region8: #{tpu_custom_call.1} parent=0 // loop_exit
    _

</llo_original>
